<compile_context>
chip_gen: v5e
topology: v5e:2x2
jax: 0.10.0
libtpu: 0.0.40
codegen_flags: <defaults>
</compile_context>

<pallas_src>
import jax
import jax.numpy as jnp
from jax import lax
from jax.experimental import pallas as pl
from jax.experimental.pallas import tpu as pltpu

LAYERS = [16, 64, 640, 1000, 4096]
_SQRT2 = 1.4142135623730951
_HID_PAD = 1024   # 1000 -> 1024 (lane-dense padding of the last hidden dim)
_TN = 2048        # output-column tile of the (1024, 4096) layer -> grid=(2,)


def _gelu_exact(x):
    # nn.GELU() default = exact (erf) GELU
    return 0.5 * x * (1.0 + lax.erf(x / _SQRT2))


# --------------------------------------------------------------------------
# Fused kernel: layers 0..2 (recomputed per step, resident weights) + one
# bf16 weight slab of the final 1024 -> 4096 layer.
# --------------------------------------------------------------------------
def _mlp_kernel(x_ref, w1_ref, b1_ref, w2_ref, b2_ref, w3_ref, b3_ref,
                w4_ref, b4_ref, o_ref):
    # ---- head (Linear+GELU x3), everything already in VMEM ----
    h = jnp.dot(x_ref[...], w1_ref[...], preferred_element_type=jnp.float32)
    h = _gelu_exact(h + b1_ref[...])
    h = jnp.dot(h, w2_ref[...], preferred_element_type=jnp.float32)
    h = _gelu_exact(h + b2_ref[...])
    h = jnp.dot(h.astype(jnp.bfloat16), w3_ref[...],
                preferred_element_type=jnp.float32)
    h = _gelu_exact(h + b3_ref[...])
    # ---- tail slab: (B, K) bf16 @ (K, tn) bf16 -> f32 ----
    acc = jnp.dot(h.astype(jnp.bfloat16), w4_ref[...],
                  preferred_element_type=jnp.float32)
    o_ref[...] = (acc + b4_ref[...]).astype(o_ref.dtype)


def mlpzxy_pallas(x, head_params, w4_blocked, b4):
    (w1, b1), (w2, b2), (w3, b3) = head_params
    B = x.shape[0]
    nb, K, tn = w4_blocked.shape
    N = nb * tn

    # Advisory cost estimate so the XLA scheduler can overlap this tiny,
    # launch-overhead-sensitive kernel with surrounding ops.
    flops = 2 * B * (LAYERS[0] * LAYERS[1] + LAYERS[1] * LAYERS[2]
                     + LAYERS[2] * _HID_PAD + _HID_PAD * N)
    transcendentals = B * (LAYERS[1] + LAYERS[2] + _HID_PAD)
    bytes_accessed = (x.size * 4
                      + w1.size * 4 + b1.size * 4
                      + w2.size * 4 + b2.size * 4
                      + w3.size * 2 + b3.size * 4      # w3 is bf16
                      + w4_blocked.size * 2 + b4.size * 4  # w4 is bf16
                      + B * N * 4)

    return pl.pallas_call(
        _mlp_kernel,
        out_shape=jax.ShapeDtypeStruct((B, N), jnp.float32),
        grid_spec=pltpu.PrefetchScalarGridSpec(
            num_scalar_prefetch=0,
            grid=(nb,),
            in_specs=[
                # Resident blocks (constant index_map -> DMA'd once).
                pl.BlockSpec(x.shape,  lambda j: (0, 0)),
                pl.BlockSpec(w1.shape, lambda j: (0, 0)),
                pl.BlockSpec(b1.shape, lambda j: (0, 0)),
                pl.BlockSpec(w2.shape, lambda j: (0, 0)),
                pl.BlockSpec(b2.shape, lambda j: (0, 0)),
                pl.BlockSpec(w3.shape, lambda j: (0, 0)),
                pl.BlockSpec(b3.shape, lambda j: (0, 0)),
                # Streamed bf16 weight slab: pre-blocked (nb, K, tn), so each
                # grid step DMAs one fully contiguous 4 MB slab.
                pl.BlockSpec((None, K, tn), lambda j: (j, 0, 0)),
                pl.BlockSpec((1, tn), lambda j: (0, j)),
            ],
            out_specs=pl.BlockSpec((B, tn), lambda j: (0, j)),
        ),
        compiler_params=pltpu.CompilerParams(
            dimension_semantics=("parallel",),
            vmem_limit_bytes=32 * 1024 * 1024,
        ),
        cost_estimate=pl.CostEstimate(
            flops=flops,
            transcendentals=transcendentals,
            bytes_accessed=bytes_accessed,
        ),
    )(x, w1, b1, w2, b2, w3, b3, w4_blocked, b4)


mlpzxy_forward = jax.jit(mlpzxy_pallas)


# --------------------------------------------------------------------------
# Parameters (mirrors the torch module's init) and host-side prep.
# --------------------------------------------------------------------------
def init_params(key, layers=LAYERS):
    """Weights: kaiming_normal_(mode='fan_out', nonlinearity='relu')
       -> std = sqrt(2 / out_features); stored as (in, out).
       Biases: torch Linear default U(-1/sqrt(fan_in), 1/sqrt(fan_in))
       (the module's _initialize_weights does not touch Linear biases)."""
    params = []
    for i in range(len(layers) - 1):
        fan_in, fan_out = layers[i], layers[i + 1]
        key, kw, kb = jax.random.split(key, 3)
        std = (2.0 / fan_out) ** 0.5
        w = std * jax.random.normal(kw, (fan_in, fan_out), dtype=jnp.float32)
        bound = 1.0 / (fan_in ** 0.5)
        b = jax.random.uniform(kb, (fan_out,), dtype=jnp.float32,
                               minval=-bound, maxval=bound)
        params.append((w, b))
    return params


def prepare_params(params, tn=_TN):
    """Pad the 1000-wide hidden dim to 1024 (exact: GELU(0)=0, zeroed w4 rows
    contribute nothing), cast the two dominant weights (w3, w4) to bf16, and
    pre-block w4 to (N//tn, K, tn) so slab DMAs are contiguous."""
    (w1, b1), (w2, b2), (w3, b3), (w4, b4) = params
    pad = _HID_PAD - w3.shape[1]
    w3p = jnp.pad(w3, ((0, 0), (0, pad))).astype(jnp.bfloat16)
    b3p = jnp.pad(b3, ((0, pad),))
    w4p = jnp.pad(w4, ((0, pad), (0, 0))).astype(jnp.bfloat16)
    K, N = w4p.shape
    assert N % tn == 0
    w4_blocked = w4p.reshape(K, N // tn, tn).transpose(1, 0, 2)   # (nb, K, tn)
    head = ((w1, b1.reshape(1, -1)),
            (w2, b2.reshape(1, -1)),
            (w3p, b3p.reshape(1, -1)))
    return head, w4_blocked, b4.reshape(1, -1)


# --------------------------------------------------------------------------
# References.
# --------------------------------------------------------------------------
def _reference_mirrored(x, head_params, w4_blocked, b4):
    """Same math as the kernel (padded dims, bf16 operands for layers 3/4),
    in plain XLA f32."""
    (w1, b1), (w2, b2), (w3, b3) = head_params
    h = _gelu_exact(x @ w1 + b1)
    h = _gelu_exact(h @ w2 + b2)
    h = h.astype(jnp.bfloat16).astype(jnp.float32)
    h = _gelu_exact(h @ w3.astype(jnp.float32) + b3)
    nb, K, tn = w4_blocked.shape
    w4 = w4_blocked.transpose(1, 0, 2).reshape(K, nb * tn).astype(jnp.float32)
    h = h.astype(jnp.bfloat16).astype(jnp.float32)
    return h @ w4 + b4


def _reference_full_f32(x, params):
    """Original-module math in full f32 (no padding, no bf16)."""
    n = len(params)
    h = x
    for i, (w, b) in enumerate(params):
        h = h @ w + b
        if i < n - 1:
            h = _gelu_exact(h)
    return h


if __name__ == "__main__":
    key = jax.random.PRNGKey(0)
    kx, kp = jax.random.split(key)

    batch = 8
    x = jax.random.normal(kx, (batch, LAYERS[0]), dtype=jnp.float32)
    params = init_params(kp)
    head_params, w4_blocked, b4 = prepare_params(params)

    out = jax.block_until_ready(mlpzxy_forward(x, head_params, w4_blocked, b4))
    assert out.shape == (batch, LAYERS[-1]), out.shape

    ref_m = _reference_mirrored(x, head_params, w4_blocked, b4)
    err_m = float(jnp.max(jnp.abs(out - ref_m)))
    assert err_m < 5e-3, f"max abs err vs mirrored reference {err_m}"

    ref_f = _reference_full_f32(x, params)
    err_f = float(jnp.max(jnp.abs(out - ref_f)))
    assert err_f < 3e-2, f"max abs err vs full-f32 reference {err_f}"

    print("KERNEL_OK")
</pallas_src>

<mosaic_0001>
module attributes {stable_mosaic.version = 11 : i64} {
  func.func @_mlp_kernel(%arg0: i32, %arg1: memref<8x16xf32, #tpu.memory_space<vmem>>, %arg2: memref<16x64xf32, #tpu.memory_space<vmem>>, %arg3: memref<1x64xf32, #tpu.memory_space<vmem>>, %arg4: memref<64x640xf32, #tpu.memory_space<vmem>>, %arg5: memref<1x640xf32, #tpu.memory_space<vmem>>, %arg6: memref<640x1024xbf16, #tpu.memory_space<vmem>>, %arg7: memref<1x1024xf32, #tpu.memory_space<vmem>>, %arg8: memref<1x1024x2048xbf16, #tpu.memory_space<vmem>>, %arg9: memref<1x2048xf32, #tpu.memory_space<vmem>>, %arg10: memref<8x2048xf32, #tpu.memory_space<vmem>>) attributes {dimension_semantics = [#tpu.dimension_semantics<parallel>], iteration_bounds = array<i64: 2>, scalar_prefetch = 0 : i64, scratch_operands = 0 : i64, tpu.core_type = #tpu.core_type<tc>, window_params = [{pipeline_mode = #tpu.pipeline_mode<synchronous>, transform_indices = @transform_0, window_bounds = array<i64: 8, 16>}, {pipeline_mode = #tpu.pipeline_mode<synchronous>, transform_indices = @transform_1, window_bounds = array<i64: 16, 64>}, {pipeline_mode = #tpu.pipeline_mode<synchronous>, transform_indices = @transform_2, window_bounds = array<i64: 1, 64>}, {pipeline_mode = #tpu.pipeline_mode<synchronous>, transform_indices = @transform_3, window_bounds = array<i64: 64, 640>}, {pipeline_mode = #tpu.pipeline_mode<synchronous>, transform_indices = @transform_4, window_bounds = array<i64: 1, 640>}, {pipeline_mode = #tpu.pipeline_mode<synchronous>, transform_indices = @transform_5, window_bounds = array<i64: 640, 1024>}, {pipeline_mode = #tpu.pipeline_mode<synchronous>, transform_indices = @transform_6, window_bounds = array<i64: 1, 1024>}, {transform_indices = @transform_7, window_bounds = array<i64: 1, 1024, 2048>}, {transform_indices = @transform_8, window_bounds = array<i64: 1, 2048>}, {transform_indices = @transform_9, window_bounds = array<i64: 8, 2048>}]} {
    %c0 = arith.constant 0 : index
    %c0_0 = arith.constant 0 : index
    %0 = vector.load %arg1[%c0, %c0_0] : memref<8x16xf32, #tpu.memory_space<vmem>>, vector<8x16xf32>
    %c0_1 = arith.constant 0 : index
    %c0_2 = arith.constant 0 : index
    %1 = vector.load %arg2[%c0_1, %c0_2] : memref<16x64xf32, #tpu.memory_space<vmem>>, vector<16x64xf32>
    %cst = arith.constant dense<0.000000e+00> : vector<8x64xf32>
    %2 = tpu.matmul %0, %1, %cst {dimension_numbers = #tpu.dot_dimension_numbers<[1], [0], [0], [1], [0, 0, 1, 1], [], []>} : vector<8x16xf32>, vector<16x64xf32>, vector<8x64xf32> -> vector<8x64xf32>
    %c0_3 = arith.constant 0 : index
    %c0_4 = arith.constant 0 : index
    %3 = vector.load %arg3[%c0_3, %c0_4] : memref<1x64xf32, #tpu.memory_space<vmem>>, vector<1x64xf32>
    %4 = vector.broadcast %3 : vector<1x64xf32> to vector<8x64xf32>
    %5 = arith.addf %2, %4 : vector<8x64xf32>
    %cst_5 = arith.constant 5.000000e-01 : f32
    %6 = vector.broadcast %cst_5 : f32 to vector<8x64xf32>
    %7 = arith.mulf %6, %5 : vector<8x64xf32>
    %cst_6 = arith.constant 1.41421354 : f32
    %8 = vector.broadcast %cst_6 : f32 to vector<8x64xf32>
    %9 = arith.divf %5, %8 : vector<8x64xf32>
    %10 = math.erf %9 : vector<8x64xf32>
    %cst_7 = arith.constant 1.000000e+00 : f32
    %11 = vector.broadcast %cst_7 : f32 to vector<8x64xf32>
    %12 = arith.addf %11, %10 : vector<8x64xf32>
    %13 = arith.mulf %7, %12 : vector<8x64xf32>
    %c0_8 = arith.constant 0 : index
    %c0_9 = arith.constant 0 : index
    %14 = vector.load %arg4[%c0_8, %c0_9] : memref<64x640xf32, #tpu.memory_space<vmem>>, vector<64x640xf32>
    %cst_10 = arith.constant dense<0.000000e+00> : vector<8x640xf32>
    %15 = tpu.matmul %13, %14, %cst_10 {dimension_numbers = #tpu.dot_dimension_numbers<[1], [0], [0], [1], [0, 0, 1, 1], [], []>} : vector<8x64xf32>, vector<64x640xf32>, vector<8x640xf32> -> vector<8x640xf32>
    %c0_11 = arith.constant 0 : index
    %c0_12 = arith.constant 0 : index
    %16 = vector.load %arg5[%c0_11, %c0_12] : memref<1x640xf32, #tpu.memory_space<vmem>>, vector<1x640xf32>
    %17 = vector.broadcast %16 : vector<1x640xf32> to vector<8x640xf32>
    %18 = arith.addf %15, %17 : vector<8x640xf32>
    %cst_13 = arith.constant 5.000000e-01 : f32
    %19 = vector.broadcast %cst_13 : f32 to vector<8x640xf32>
    %20 = arith.mulf %19, %18 : vector<8x640xf32>
    %cst_14 = arith.constant 1.41421354 : f32
    %21 = vector.broadcast %cst_14 : f32 to vector<8x640xf32>
    %22 = arith.divf %18, %21 : vector<8x640xf32>
    %23 = math.erf %22 : vector<8x640xf32>
    %cst_15 = arith.constant 1.000000e+00 : f32
    %24 = vector.broadcast %cst_15 : f32 to vector<8x640xf32>
    %25 = arith.addf %24, %23 : vector<8x640xf32>
    %26 = arith.mulf %20, %25 : vector<8x640xf32>
    %27 = arith.truncf %26 : vector<8x640xf32> to vector<8x640xbf16>
    %c0_16 = arith.constant 0 : index
    %c0_17 = arith.constant 0 : index
    %28 = vector.load %arg6[%c0_16, %c0_17] : memref<640x1024xbf16, #tpu.memory_space<vmem>>, vector<640x1024xbf16>
    %cst_18 = arith.constant dense<0.000000e+00> : vector<8x1024xf32>
    %29 = tpu.matmul %27, %28, %cst_18 {dimension_numbers = #tpu.dot_dimension_numbers<[1], [0], [0], [1], [0, 0, 1, 1], [], []>} : vector<8x640xbf16>, vector<640x1024xbf16>, vector<8x1024xf32> -> vector<8x1024xf32>
    %c0_19 = arith.constant 0 : index
    %c0_20 = arith.constant 0 : index
    %30 = vector.load %arg7[%c0_19, %c0_20] : memref<1x1024xf32, #tpu.memory_space<vmem>>, vector<1x1024xf32>
    %31 = vector.broadcast %30 : vector<1x1024xf32> to vector<8x1024xf32>
    %32 = arith.addf %29, %31 : vector<8x1024xf32>
    %cst_21 = arith.constant 5.000000e-01 : f32
    %33 = vector.broadcast %cst_21 : f32 to vector<8x1024xf32>
    %34 = arith.mulf %33, %32 : vector<8x1024xf32>
    %cst_22 = arith.constant 1.41421354 : f32
    %35 = vector.broadcast %cst_22 : f32 to vector<8x1024xf32>
    %36 = arith.divf %32, %35 : vector<8x1024xf32>
    %37 = math.erf %36 : vector<8x1024xf32>
    %cst_23 = arith.constant 1.000000e+00 : f32
    %38 = vector.broadcast %cst_23 : f32 to vector<8x1024xf32>
    %39 = arith.addf %38, %37 : vector<8x1024xf32>
    %40 = arith.mulf %34, %39 : vector<8x1024xf32>
    %41 = arith.truncf %40 : vector<8x1024xf32> to vector<8x1024xbf16>
    %c0_24 = arith.constant 0 : index
    %c0_25 = arith.constant 0 : index
    %c0_26 = arith.constant 0 : index
    %42 = vector.load %arg8[%c0_24, %c0_25, %c0_26] : memref<1x1024x2048xbf16, #tpu.memory_space<vmem>>, vector<1x1024x2048xbf16>
    %43 = vector.shape_cast %42 : vector<1x1024x2048xbf16> to vector<1024x2048xbf16>
    %cst_27 = arith.constant dense<0.000000e+00> : vector<8x2048xf32>
    %44 = tpu.matmul %41, %43, %cst_27 {dimension_numbers = #tpu.dot_dimension_numbers<[1], [0], [0], [1], [0, 0, 1, 1], [], []>} : vector<8x1024xbf16>, vector<1024x2048xbf16>, vector<8x2048xf32> -> vector<8x2048xf32>
    %c0_28 = arith.constant 0 : index
    %c0_29 = arith.constant 0 : index
    %45 = vector.load %arg9[%c0_28, %c0_29] : memref<1x2048xf32, #tpu.memory_space<vmem>>, vector<1x2048xf32>
    %46 = vector.broadcast %45 : vector<1x2048xf32> to vector<8x2048xf32>
    %47 = arith.addf %44, %46 : vector<8x2048xf32>
    %c0_30 = arith.constant 0 : index
    %c0_31 = arith.constant 0 : index
    %48 = vector.load %arg10[%c0_30, %c0_31] : memref<8x2048xf32, #tpu.memory_space<vmem>>, vector<8x2048xf32>
    tpu.vector_store %arg10[%c0_30, %c0_31], %47 {strides = array<i32>} : memref<8x2048xf32, #tpu.memory_space<vmem>>, vector<8x2048xf32>,
    return
  }
  func.func @transform_0(%arg0: i32) -> (i32, i32) {
    %c0_i32 = arith.constant 0 : i32
    %c0_i32_0 = arith.constant 0 : i32
    %c0_i32_1 = arith.constant 0 : i32
    return %c0_i32, %c0_i32_0 : i32, i32
  }
  func.func @transform_1(%arg0: i32) -> (i32, i32) {
    %c0_i32 = arith.constant 0 : i32
    %c0_i32_0 = arith.constant 0 : i32
    %c0_i32_1 = arith.constant 0 : i32
    return %c0_i32, %c0_i32_0 : i32, i32
  }
  func.func @transform_2(%arg0: i32) -> (i32, i32) {
    %c0_i32 = arith.constant 0 : i32
    %c0_i32_0 = arith.constant 0 : i32
    %c0_i32_1 = arith.constant 0 : i32
    return %c0_i32, %c0_i32_0 : i32, i32
  }
  func.func @transform_3(%arg0: i32) -> (i32, i32) {
    %c0_i32 = arith.constant 0 : i32
    %c0_i32_0 = arith.constant 0 : i32
    %c0_i32_1 = arith.constant 0 : i32
    return %c0_i32, %c0_i32_0 : i32, i32
  }
  func.func @transform_4(%arg0: i32) -> (i32, i32) {
    %c0_i32 = arith.constant 0 : i32
    %c0_i32_0 = arith.constant 0 : i32
    %c0_i32_1 = arith.constant 0 : i32
    return %c0_i32, %c0_i32_0 : i32, i32
  }
  func.func @transform_5(%arg0: i32) -> (i32, i32) {
    %c0_i32 = arith.constant 0 : i32
    %c0_i32_0 = arith.constant 0 : i32
    %c0_i32_1 = arith.constant 0 : i32
    return %c0_i32, %c0_i32_0 : i32, i32
  }
  func.func @transform_6(%arg0: i32) -> (i32, i32) {
    %c0_i32 = arith.constant 0 : i32
    %c0_i32_0 = arith.constant 0 : i32
    %c0_i32_1 = arith.constant 0 : i32
    return %c0_i32, %c0_i32_0 : i32, i32
  }
  func.func @transform_7(%arg0: i32) -> (i32, i32, i32) {
    %c0_i32 = arith.constant 0 : i32
    %c0_i32_0 = arith.constant 0 : i32
    %c0_i32_1 = arith.constant 0 : i32
    return %arg0, %c0_i32, %c0_i32_0 : i32, i32, i32
  }
  func.func @transform_8(%arg0: i32) -> (i32, i32) {
    %c0_i32 = arith.constant 0 : i32
    %c0_i32_0 = arith.constant 0 : i32
    return %c0_i32, %arg0 : i32, i32
  }
  func.func @transform_9(%arg0: i32) -> (i32, i32) {
    %c0_i32 = arith.constant 0 : i32
    %c0_i32_0 = arith.constant 0 : i32
    return %c0_i32, %arg0 : i32, i32
  }
}

</mosaic_0001>

<llo_original>
// kernel: mlpzxy_pallas.1
$region0: #{mlpzxy_pallas.1}
  #allocation0 [shape = 'u32[]', space=smem, size = 0x4, offset = 0x4, fixed_abs, tag = 'smem constant byte address 0x4 - core index']
  #allocation1 [shape = 'u32[72,128]{1,0:T(1,128)}', space=vmem, size = 0x9000, scoped, tag = 'internal scratch']
  %s0 = inlined_call_operand.hbm [shape: f32[8,16], index: 0, kind: input, shape index: {}]
  %s1 = inlined_call_operand.hbm [shape: f32[16,64], index: 1, kind: input, shape index: {}]
  %s2 = inlined_call_operand.hbm [shape: f32[1,64], index: 2, kind: input, shape index: {}]
  %s3 = inlined_call_operand.hbm [shape: f32[64,640], index: 3, kind: input, shape index: {}]
  %s4 = inlined_call_operand.hbm [shape: f32[1,640], index: 4, kind: input, shape index: {}]
  %s5 = inlined_call_operand.hbm [shape: bf16[640,1024], index: 5, kind: input, shape index: {}]
  %s6 = inlined_call_operand.hbm [shape: f32[1,1024], index: 6, kind: input, shape index: {}]
  %s7 = inlined_call_operand.hbm [shape: bf16[2,1024,2048], index: 7, kind: input, shape index: {}]
  %s8 = inlined_call_operand.hbm [shape: f32[1,4096], index: 8, kind: input, shape index: {}]
  %s9 = inlined_call_operand.hbm [shape: f32[8,4096], index: 9, kind: output, shape index: {}]
  %s10 = sld [smem:[#allocation0]]
  $region105: #{mlpzxy_pallas.1} parent=0
    _
  %s12 = ssub.s32 1, %s10
  %s13 = scalar_select 0, %s12, %s10
  $region1: #{mlpzxy_pallas.1} parent=0
    #allocation2 [shape = 'u8[4096]{0}', space=vmem, size = 0x1000, scoped, tag = 'input window, operand 0, single buffered']
    #allocation3 [shape = 's32[2]{0}', space=sflag, size = 0x8, scoped, tag = 'scoped memory for mlpzxy_pallas.1']
    #allocation4 [shape = 's32[2]{0}', space=sflag, size = 0x8, scoped, tag = 'scoped memory for mlpzxy_pallas.1']
    #allocation5 [shape = 'u8[8192]{0}', space=vmem, size = 0x2000, scoped, tag = 'input window, operand 1, single buffered']
    #allocation6 [shape = 's32[1]{0}', space=sflag, size = 0x4, scoped, tag = 'scoped memory for mlpzxy_pallas.1']
    #allocation7 [shape = 'u8[512]{0}', space=vmem, size = 0x400, scoped, tag = 'input window, operand 2, single buffered']
    #allocation8 [shape = 'u8[163840]{0}', space=vmem, size = 0x28000, scoped, tag = 'input window, operand 3, single buffered']
    #allocation9 [shape = 's32[1]{0}', space=sflag, size = 0x4, scoped, tag = 'scoped memory for mlpzxy_pallas.1']
    #allocation10 [shape = 'u8[2560]{0}', space=vmem, size = 0xc00, scoped, tag = 'input window, operand 4, single buffered']
    #allocation11 [shape = 'u8[1310720]{0}', space=vmem, size = 0x140000, scoped, tag = 'input window, operand 5, single buffered']
    #allocation12 [shape = 's32[1]{0}', space=sflag, size = 0x4, scoped, tag = 'scoped memory for mlpzxy_pallas.1']
    #allocation13 [shape = 'u8[4096]{0}', space=vmem, size = 0x1000, scoped, tag = 'input window, operand 6, single buffered']
    #allocation14 [shape = 'u8[8388608]{0}', space=vmem, size = 0x800000, scoped, tag = 'input window, operand 7']
    #allocation15 [shape = 's32[2]{0}', space=sflag, size = 0x8, scoped, tag = 'scoped memory for mlpzxy_pallas.1']
    #allocation16 [shape = 'u8[16384]{0}', space=vmem, size = 0x4000, scoped, tag = 'input window, operand 8']
    #allocation17 [shape = 'u8[131072]{0}', space=vmem, size = 0x20000, scoped, tag = 'output window, operand 0']
    %14 = vsyncpa [#allocation3], 0
    %15 = vsyncpa [#allocation6], 0
    %16 = vsyncpa [#allocation9], 0
    %17 = vsyncpa [#allocation12], 0
    %18 = vsyncpa [#allocation15], 0
    %s19 = scalar_lea.sflag [#allocation15], 1
    %20 = vsyncpa %s19, 0
    %21 = vsyncpa [#allocation4], 0
    %s22 = scalar_lea.sflag [#allocation4], 1
    %23 = vsyncpa %s22, 0
    loop: start=0, step=1, limit=4
    $region2: #{mlpzxy_pallas.1} parent=1 // loop_pre_header
      _
    $region3: #{mlpzxy_pallas.1} parent=1 // loop_header
      %s25 = sphi 0, %s29
      %p26 = scmp.ge.s32.totalorder %s25, 4
      %s33 = sphi 0, %s33
      %s35 = sphi 0, %s33
      %s36 = sphi 0, %s35
      %s50 = sphi 0, %s36
      %s54 = sphi 0, %s54
      %s56 = sphi 0, %s54
      %s57 = sphi 0, %s56
      %s71 = sphi 0, %s57
      %s75 = sphi 0, %s75
      %s77 = sphi 0, %s75
      %s78 = sphi 0, %s77
      %s92 = sphi 0, %s78
      %s96 = sphi 0, %s96
      %s98 = sphi 0, %s96
      %s99 = sphi 0, %s98
      %s113 = sphi 0, %s99
      %s117 = sphi 0, %s117
      %s119 = sphi 0, %s117
      %s120 = sphi 0, %s119
      %s134 = sphi 0, %s120
      %s138 = sphi 0, %s138
      %s140 = sphi 0, %s138
      %s141 = sphi 0, %s140
      %s155 = sphi 0, %s141
      %s159 = sphi 0, %s159
      %s161 = sphi 0, %s159
      %s162 = sphi 0, %s161
      %s176 = sphi 0, %s162
      %s182 = sphi 0, %s184
      %s185 = sphi 0, %s182
      %s186 = sphi 0, %s185
      %s202 = sphi 0, %s186
      %s208 = sphi 0, %s210
      %s211 = sphi 0, %s208
      %s212 = sphi 0, %s211
      %s228 = sphi 0, %s212
      %s234 = sphi 0, %s236
      %s237 = sphi 0, %s234
      %s238 = sphi 0, %s237
      %s254 = sphi 0, %s238
    $region4: #{mlpzxy_pallas.1} parent=1 // loop_header_branch
      %28 = sbr.rel (%p26) target = $region8
    $region5: #{mlpzxy_pallas.1} parent=1 // loop_body
      %s30 = ssub.s32 %s25, 1
      %s31 = ssub.s32 %s25, 2
      %s32 = sadd.s32 %s25, 1
      %s34 = sadd.s32 %s33, 1
      %p37 = scmp.eq.s32.totalorder %s25, 1
      %p38 = scmp.ne.s32.totalorder %s33, %s35
      %p39 = scmp.eq.s32.totalorder %s25, 0
      %p40 = por %p38, %p39
      %p41 = scmp.ne.s32.totalorder %s33, %s35
      %p42 = scmp.eq.s32.totalorder %s30, 1
      %p43 = por %p41, %p42
      %p44 = scmp.ne.s32.totalorder %s35, %s36
      %p45 = scmp.eq.s32.totalorder %s30, 0
      %p46 = por %p44, %p45
      %p47 = scmp.ne.s32.totalorder %s35, %s36
      %p48 = scmp.eq.s32.totalorder %s31, 1
      %p49 = por %p47, %p48
      %p51 = scmp.ne.s32.totalorder %s36, %s50
      %p52 = scmp.eq.s32.totalorder %s31, 0
      %p53 = por %p51, %p52
      %s55 = sadd.s32 %s54, 1
      %p58 = scmp.eq.s32.totalorder %s25, 1
      %p59 = scmp.ne.s32.totalorder %s54, %s56
      %p60 = scmp.eq.s32.totalorder %s25, 0
      %p61 = por %p59, %p60
      %p62 = scmp.ne.s32.totalorder %s54, %s56
      %p63 = scmp.eq.s32.totalorder %s30, 1
      %p64 = por %p62, %p63
      %p65 = scmp.ne.s32.totalorder %s56, %s57
      %p66 = scmp.eq.s32.totalorder %s30, 0
      %p67 = por %p65, %p66
      %p68 = scmp.ne.s32.totalorder %s56, %s57
      %p69 = scmp.eq.s32.totalorder %s31, 1
      %p70 = por %p68, %p69
      %p72 = scmp.ne.s32.totalorder %s57, %s71
      %p73 = scmp.eq.s32.totalorder %s31, 0
      %p74 = por %p72, %p73
      %s76 = sadd.s32 %s75, 1
      %p79 = scmp.eq.s32.totalorder %s25, 1
      %p80 = scmp.ne.s32.totalorder %s75, %s77
      %p81 = scmp.eq.s32.totalorder %s25, 0
      %p82 = por %p80, %p81
      %p83 = scmp.ne.s32.totalorder %s75, %s77
      %p84 = scmp.eq.s32.totalorder %s30, 1
      %p85 = por %p83, %p84
      %p86 = scmp.ne.s32.totalorder %s77, %s78
      %p87 = scmp.eq.s32.totalorder %s30, 0
      %p88 = por %p86, %p87
      %p89 = scmp.ne.s32.totalorder %s77, %s78
      %p90 = scmp.eq.s32.totalorder %s31, 1
      %p91 = por %p89, %p90
      %p93 = scmp.ne.s32.totalorder %s78, %s92
      %p94 = scmp.eq.s32.totalorder %s31, 0
      %p95 = por %p93, %p94
      %s97 = sadd.s32 %s96, 1
      %p100 = scmp.eq.s32.totalorder %s25, 1
      %p101 = scmp.ne.s32.totalorder %s96, %s98
      %p102 = scmp.eq.s32.totalorder %s25, 0
      %p103 = por %p101, %p102
      %p104 = scmp.ne.s32.totalorder %s96, %s98
      %p105 = scmp.eq.s32.totalorder %s30, 1
      %p106 = por %p104, %p105
      %p107 = scmp.ne.s32.totalorder %s98, %s99
      %p108 = scmp.eq.s32.totalorder %s30, 0
      %p109 = por %p107, %p108
      %p110 = scmp.ne.s32.totalorder %s98, %s99
      %p111 = scmp.eq.s32.totalorder %s31, 1
      %p112 = por %p110, %p111
      %p114 = scmp.ne.s32.totalorder %s99, %s113
      %p115 = scmp.eq.s32.totalorder %s31, 0
      %p116 = por %p114, %p115
      %s118 = sadd.s32 %s117, 1
      %p121 = scmp.eq.s32.totalorder %s25, 1
      %p122 = scmp.ne.s32.totalorder %s117, %s119
      %p123 = scmp.eq.s32.totalorder %s25, 0
      %p124 = por %p122, %p123
      %p125 = scmp.ne.s32.totalorder %s117, %s119
      %p126 = scmp.eq.s32.totalorder %s30, 1
      %p127 = por %p125, %p126
      %p128 = scmp.ne.s32.totalorder %s119, %s120
      %p129 = scmp.eq.s32.totalorder %s30, 0
      %p130 = por %p128, %p129
      %p131 = scmp.ne.s32.totalorder %s119, %s120
      %p132 = scmp.eq.s32.totalorder %s31, 1
      %p133 = por %p131, %p132
      %p135 = scmp.ne.s32.totalorder %s120, %s134
      %p136 = scmp.eq.s32.totalorder %s31, 0
      %p137 = por %p135, %p136
      %s139 = sadd.s32 %s138, 1
      %p142 = scmp.eq.s32.totalorder %s25, 1
      %p143 = scmp.ne.s32.totalorder %s138, %s140
      %p144 = scmp.eq.s32.totalorder %s25, 0
      %p145 = por %p143, %p144
      %p146 = scmp.ne.s32.totalorder %s138, %s140
      %p147 = scmp.eq.s32.totalorder %s30, 1
      %p148 = por %p146, %p147
      %p149 = scmp.ne.s32.totalorder %s140, %s141
      %p150 = scmp.eq.s32.totalorder %s30, 0
      %p151 = por %p149, %p150
      %p152 = scmp.ne.s32.totalorder %s140, %s141
      %p153 = scmp.eq.s32.totalorder %s31, 1
      %p154 = por %p152, %p153
      %p156 = scmp.ne.s32.totalorder %s141, %s155
      %p157 = scmp.eq.s32.totalorder %s31, 0
      %p158 = por %p156, %p157
      %s160 = sadd.s32 %s159, 1
      %p163 = scmp.eq.s32.totalorder %s25, 1
      %p164 = scmp.ne.s32.totalorder %s159, %s161
      %p165 = scmp.eq.s32.totalorder %s25, 0
      %p166 = por %p164, %p165
      %p167 = scmp.ne.s32.totalorder %s159, %s161
      %p168 = scmp.eq.s32.totalorder %s30, 1
      %p169 = por %p167, %p168
      %p170 = scmp.ne.s32.totalorder %s161, %s162
      %p171 = scmp.eq.s32.totalorder %s30, 0
      %p172 = por %p170, %p171
      %p173 = scmp.ne.s32.totalorder %s161, %s162
      %p174 = scmp.eq.s32.totalorder %s31, 1
      %p175 = por %p173, %p174
      %p177 = scmp.ne.s32.totalorder %s162, %s176
      %p178 = scmp.eq.s32.totalorder %s31, 0
      %p179 = por %p177, %p178
      %s180 = ssub.s32 %s25, %s32
      %p181 = scmp.eq.s32.totalorder %s180, 0
      %s183 = sadd.s32 %s182, 1
      %s184 = scalar_select %p181, %s182, %s183
      %p187 = pneg %p181
      %p188 = scmp.eq.s32.totalorder %s25, 1
      %p189 = por %p187, %p188
      %p190 = scmp.ne.s32.totalorder %s182, %s185
      %p191 = scmp.eq.s32.totalorder %s25, 0
      %p192 = por %p190, %p191
      %p193 = scmp.ne.s32.totalorder %s182, %s185
      %p194 = scmp.eq.s32.totalorder %s30, 1
      %p195 = por %p193, %p194
      %p196 = scmp.ne.s32.totalorder %s185, %s186
      %p197 = scmp.eq.s32.totalorder %s30, 0
      %p198 = por %p196, %p197
      %p199 = scmp.ne.s32.totalorder %s185, %s186
      %p200 = scmp.eq.s32.totalorder %s31, 1
      %p201 = por %p199, %p200
      %p203 = scmp.ne.s32.totalorder %s186, %s202
      %p204 = scmp.eq.s32.totalorder %s31, 0
      %p205 = por %p203, %p204
      %s206 = ssub.s32 %s25, %s32
      %p207 = scmp.eq.s32.totalorder %s206, 0
      %s209 = sadd.s32 %s208, 1
      %s210 = scalar_select %p207, %s208, %s209
      %p213 = pneg %p207
      %p214 = scmp.eq.s32.totalorder %s25, 1
      %p215 = por %p213, %p214
      %p216 = scmp.ne.s32.totalorder %s208, %s211
      %p217 = scmp.eq.s32.totalorder %s25, 0
      %p218 = por %p216, %p217
      %p219 = scmp.ne.s32.totalorder %s208, %s211
      %p220 = scmp.eq.s32.totalorder %s30, 1
      %p221 = por %p219, %p220
      %p222 = scmp.ne.s32.totalorder %s211, %s212
      %p223 = scmp.eq.s32.totalorder %s30, 0
      %p224 = por %p222, %p223
      %p225 = scmp.ne.s32.totalorder %s211, %s212
      %p226 = scmp.eq.s32.totalorder %s31, 1
      %p227 = por %p225, %p226
      %p229 = scmp.ne.s32.totalorder %s212, %s228
      %p230 = scmp.eq.s32.totalorder %s31, 0
      %p231 = por %p229, %p230
      %s232 = ssub.s32 %s25, %s32
      %p233 = scmp.eq.s32.totalorder %s232, 0
      %s235 = sadd.s32 %s234, 1
      %s236 = scalar_select %p233, %s234, %s235
      %p239 = pneg %p233
      %p240 = scmp.eq.s32.totalorder %s25, 1
      %p241 = por %p239, %p240
      %p242 = scmp.ne.s32.totalorder %s234, %s237
      %p243 = scmp.eq.s32.totalorder %s25, 0
      %p244 = por %p242, %p243
      %p245 = scmp.ne.s32.totalorder %s234, %s237
      %p246 = scmp.eq.s32.totalorder %s30, 1
      %p247 = por %p245, %p246
      %p248 = scmp.ne.s32.totalorder %s237, %s238
      %p249 = scmp.eq.s32.totalorder %s30, 0
      %p250 = por %p248, %p249
      %p251 = scmp.ne.s32.totalorder %s237, %s238
      %p252 = scmp.eq.s32.totalorder %s31, 1
      %p253 = por %p251, %p252
      %p255 = scmp.ne.s32.totalorder %s238, %s254
      %p256 = scmp.eq.s32.totalorder %s31, 0
      %p257 = por %p255, %p256
      %p258 = scmp.le.s32.totalorder 1, %s25
      %p259 = scmp.lt.s32.totalorder %s25, 3
      %p260 = pnand %p258, %p259
      %p261 = pneg %p260
      // Predicated region
      $region9: #{mlpzxy_pallas.1} parent=5 // pred_check
        _
      $region10: #{mlpzxy_pallas.1} parent=5 // pred_check_branch
        %263 = sbr.rel (%p260) target = $region12
      $region11: #{mlpzxy_pallas.1} parent=5 // pred_region
        %s264 = ssub.s32 %s25, 1
        // Predicated region
        $region13: #{mlpzxy_pallas.1} parent=11 // pred_check
          %p265 = pneg %p46
        $region14: #{mlpzxy_pallas.1} parent=11 // pred_check_branch
          %267 = sbr.rel (%p265) target = $region16
        $region15: #{mlpzxy_pallas.1} parent=11 // pred_region
          %269 = vsyncadd [#allocation3], 0
          %s271 = sshll.u32 %s0, 4
          %s272 = int_to_ptr.hbm [resolvable:$true] %s271
          %s273 = sshll.u32 [#allocation2], 4
          %s274 = int_to_ptr.vmem [resolvable:$true] %s273
          %276 = dma.hbm_to_vmem [thread:$0]  %s272, 128, %s274, [#allocation3]
        $region16: #{mlpzxy_pallas.1} parent=11 // pred_fallthru
          _
        // Predicated region
        $region17: #{mlpzxy_pallas.1} parent=11 // pred_check
          %p277 = pneg %p67
        $region18: #{mlpzxy_pallas.1} parent=11 // pred_check_branch
          %279 = sbr.rel (%p277) target = $region20
        $region19: #{mlpzxy_pallas.1} parent=11 // pred_region
          %281 = vsyncadd [#allocation6], 0
          %s282 = sshll.u32 %s1, 4
          %s283 = int_to_ptr.hbm [resolvable:$true] %s282
          %s284 = sshll.u32 [#allocation5], 4
          %s285 = int_to_ptr.vmem [resolvable:$true] %s284
          %290 = dma.hbm_to_vmem [thread:$0]  %s283, 256, %s285, [#allocation6], 128, 128, 8
        $region20: #{mlpzxy_pallas.1} parent=11 // pred_fallthru
          _
        // Predicated region
        $region21: #{mlpzxy_pallas.1} parent=11 // pred_check
          %p291 = pneg %p88
        $region22: #{mlpzxy_pallas.1} parent=11 // pred_check_branch
          %293 = sbr.rel (%p291) target = $region24
        $region23: #{mlpzxy_pallas.1} parent=11 // pred_region
          %295 = vsyncadd [#allocation6], 0
          %s297 = sshll.u32 %s2, 4
          %s298 = int_to_ptr.hbm [resolvable:$true] %s297
          %s299 = sshll.u32 [#allocation7], 4
          %s300 = int_to_ptr.vmem [resolvable:$true] %s299
          %302 = dma.hbm_to_vmem [thread:$0]  %s298, 16, %s300, [#allocation6]
        $region24: #{mlpzxy_pallas.1} parent=11 // pred_fallthru
          _
        // Predicated region
        $region25: #{mlpzxy_pallas.1} parent=11 // pred_check
          %p303 = pneg %p109
        $region26: #{mlpzxy_pallas.1} parent=11 // pred_check_branch
          %305 = sbr.rel (%p303) target = $region28
        $region27: #{mlpzxy_pallas.1} parent=11 // pred_region
          %307 = vsyncadd [#allocation9], 0
          %s308 = sshll.u32 %s3, 4
          %s309 = int_to_ptr.hbm [resolvable:$true] %s308
          %s310 = sshll.u32 [#allocation8], 4
          %s311 = int_to_ptr.vmem [resolvable:$true] %s310
          %316 = dma.hbm_to_vmem [thread:$0]  %s309, 5120, %s311, [#allocation9], 640, 640, 40
        $region28: #{mlpzxy_pallas.1} parent=11 // pred_fallthru
          _
        // Predicated region
        $region29: #{mlpzxy_pallas.1} parent=11 // pred_check
          %p317 = pneg %p130
        $region30: #{mlpzxy_pallas.1} parent=11 // pred_check_branch
          %319 = sbr.rel (%p317) target = $region32
        $region31: #{mlpzxy_pallas.1} parent=11 // pred_region
          %321 = vsyncadd [#allocation9], 0
          %s323 = sshll.u32 %s4, 4
          %s324 = int_to_ptr.hbm [resolvable:$true] %s323
          %s325 = sshll.u32 [#allocation10], 4
          %s326 = int_to_ptr.vmem [resolvable:$true] %s325
          %328 = dma.hbm_to_vmem [thread:$0]  %s324, 80, %s326, [#allocation9]
        $region32: #{mlpzxy_pallas.1} parent=11 // pred_fallthru
          _
        // Predicated region
        $region33: #{mlpzxy_pallas.1} parent=11 // pred_check
          %p329 = pneg %p151
        $region34: #{mlpzxy_pallas.1} parent=11 // pred_check_branch
          %331 = sbr.rel (%p329) target = $region36
        $region35: #{mlpzxy_pallas.1} parent=11 // pred_region
          %333 = vsyncadd [#allocation12], 0
          %s334 = sshll.u32 %s5, 4
          %s335 = int_to_ptr.hbm [resolvable:$true] %s334
          %s336 = sshll.u32 [#allocation11], 4
          %s337 = int_to_ptr.vmem [resolvable:$true] %s336
          %342 = dma.hbm_to_vmem [thread:$0]  %s335, 40960, %s337, [#allocation12], 512, 512, 32
        $region36: #{mlpzxy_pallas.1} parent=11 // pred_fallthru
          _
        // Predicated region
        $region37: #{mlpzxy_pallas.1} parent=11 // pred_check
          %p343 = pneg %p172
        $region38: #{mlpzxy_pallas.1} parent=11 // pred_check_branch
          %345 = sbr.rel (%p343) target = $region40
        $region39: #{mlpzxy_pallas.1} parent=11 // pred_region
          %347 = vsyncadd [#allocation12], 0
          %s349 = sshll.u32 %s6, 4
          %s350 = int_to_ptr.hbm [resolvable:$true] %s349
          %s351 = sshll.u32 [#allocation13], 4
          %s352 = int_to_ptr.vmem [resolvable:$true] %s351
          %354 = dma.hbm_to_vmem [thread:$0]  %s350, 128, %s352, [#allocation12]
        $region40: #{mlpzxy_pallas.1} parent=11 // pred_fallthru
          _
      $region12: #{mlpzxy_pallas.1} parent=5 // pred_fallthru
        _
      %p355 = scmp.lt.s32.totalorder %s25, 2
      // Predicated region
      $region41: #{mlpzxy_pallas.1} parent=5 // pred_check
        %p356 = pneg %p355
      $region42: #{mlpzxy_pallas.1} parent=5 // pred_check_branch
        %358 = sbr.rel (%p356) target = $region44
      $region43: #{mlpzxy_pallas.1} parent=5 // pred_region
        // Predicated region
        $region45: #{mlpzxy_pallas.1} parent=43 // pred_check
          %p359 = pneg %p192
        $region46: #{mlpzxy_pallas.1} parent=43 // pred_check_branch
          %361 = sbr.rel (%p359) target = $region48
        $region47: #{mlpzxy_pallas.1} parent=43 // pred_region
          %s362 = sand.u32 %s25, 1
          %s363 = scalar_lea.sflag [#allocation15], %s362
          %s364 = sand.u32 %s182, 1
          %s365 = smul.addr %s364, 8192
          %s366 = scalar_lea.vmem [#allocation14], %s365
          %368 = vsyncadd %s363, 0
          %s369 = smul.addr %s25, 2048
          %s370 = smul.addr %s369, 4
          %s371 = scalar_lea.hbm %s7, %s370
          %s372 = sshll.u32 %s371, 4
          %s373 = int_to_ptr.hbm [resolvable:$true] %s372
          %s374 = sshll.u32 %s366, 4
          %s375 = int_to_ptr.vmem [resolvable:$true] %s374
          %380 = dma.hbm_to_vmem [thread:$0]  %s373, 131072, %s375, %s363, 1024, 1024, 64
        $region48: #{mlpzxy_pallas.1} parent=43 // pred_fallthru
          _
        // Predicated region
        $region49: #{mlpzxy_pallas.1} parent=43 // pred_check
          %p381 = pneg %p218
        $region50: #{mlpzxy_pallas.1} parent=43 // pred_check_branch
          %383 = sbr.rel (%p381) target = $region52
        $region51: #{mlpzxy_pallas.1} parent=43 // pred_region
          %s384 = sand.u32 %s25, 1
          %s385 = scalar_lea.sflag [#allocation15], %s384
          %s386 = sand.u32 %s208, 1
          %s387 = smul.addr %s386, 16
          %s388 = scalar_lea.vmem [#allocation16], %s387
          %s389 = smul.u32 16, %s25
          %391 = vsyncadd %s385, 0
          %s392 = scalar_lea.hbm %s8, %s389
          %s394 = sshll.u32 %s392, 4
          %s395 = int_to_ptr.hbm [resolvable:$true] %s394
          %s396 = sshll.u32 %s388, 4
          %s397 = int_to_ptr.vmem [resolvable:$true] %s396
          %399 = dma.hbm_to_vmem [thread:$0]  %s395, 256, %s397, %s385
        $region52: #{mlpzxy_pallas.1} parent=43 // pred_fallthru
          _
      $region44: #{mlpzxy_pallas.1} parent=5 // pred_fallthru
        _
      %p400 = scmp.le.s32.totalorder 1, %s25
      %p401 = scmp.lt.s32.totalorder %s25, 3
      %p402 = pnand %p400, %p401
      %p403 = pneg %p402
      // Predicated region
      $region53: #{mlpzxy_pallas.1} parent=5 // pred_check
        _
      $region54: #{mlpzxy_pallas.1} parent=5 // pred_check_branch
        %405 = sbr.rel (%p402) target = $region56
      $region55: #{mlpzxy_pallas.1} parent=5 // pred_region
        %s406 = ssub.s32 %s25, 1
        // Predicated region
        $region57: #{mlpzxy_pallas.1} parent=55 // pred_check
          %p407 = pneg %p46
        $region58: #{mlpzxy_pallas.1} parent=55 // pred_check_branch
          %409 = sbr.rel (%p407) target = $region60
        $region59: #{mlpzxy_pallas.1} parent=55 // pred_region
          %411 = dma.done [#allocation3], 128
        $region60: #{mlpzxy_pallas.1} parent=55 // pred_fallthru
          _
        // Predicated region
        $region61: #{mlpzxy_pallas.1} parent=55 // pred_check
          %p412 = pneg %p67
        $region62: #{mlpzxy_pallas.1} parent=55 // pred_check_branch
          %414 = sbr.rel (%p412) target = $region64
        $region63: #{mlpzxy_pallas.1} parent=55 // pred_region
          %416 = dma.done [#allocation6], 256
        $region64: #{mlpzxy_pallas.1} parent=55 // pred_fallthru
          _
        // Predicated region
        $region65: #{mlpzxy_pallas.1} parent=55 // pred_check
          %p417 = pneg %p88
        $region66: #{mlpzxy_pallas.1} parent=55 // pred_check_branch
          %419 = sbr.rel (%p417) target = $region68
        $region67: #{mlpzxy_pallas.1} parent=55 // pred_region
          %421 = dma.done [#allocation6], 16
        $region68: #{mlpzxy_pallas.1} parent=55 // pred_fallthru
          _
        // Predicated region
        $region69: #{mlpzxy_pallas.1} parent=55 // pred_check
          %p422 = pneg %p109
        $region70: #{mlpzxy_pallas.1} parent=55 // pred_check_branch
          %424 = sbr.rel (%p422) target = $region72
        $region71: #{mlpzxy_pallas.1} parent=55 // pred_region
          %426 = dma.done [#allocation9], 5120
        $region72: #{mlpzxy_pallas.1} parent=55 // pred_fallthru
          _
        // Predicated region
        $region73: #{mlpzxy_pallas.1} parent=55 // pred_check
          %p427 = pneg %p130
        $region74: #{mlpzxy_pallas.1} parent=55 // pred_check_branch
          %429 = sbr.rel (%p427) target = $region76
        $region75: #{mlpzxy_pallas.1} parent=55 // pred_region
          %431 = dma.done [#allocation9], 80
        $region76: #{mlpzxy_pallas.1} parent=55 // pred_fallthru
          _
        // Predicated region
        $region77: #{mlpzxy_pallas.1} parent=55 // pred_check
          %p432 = pneg %p151
        $region78: #{mlpzxy_pallas.1} parent=55 // pred_check_branch
          %434 = sbr.rel (%p432) target = $region80
        $region79: #{mlpzxy_pallas.1} parent=55 // pred_region
          %436 = dma.done [#allocation12], 40960
        $region80: #{mlpzxy_pallas.1} parent=55 // pred_fallthru
          _
        // Predicated region
        $region81: #{mlpzxy_pallas.1} parent=55 // pred_check
          %p437 = pneg %p172
        $region82: #{mlpzxy_pallas.1} parent=55 // pred_check_branch
          %439 = sbr.rel (%p437) target = $region84
        $region83: #{mlpzxy_pallas.1} parent=55 // pred_region
          %441 = dma.done [#allocation12], 128
        $region84: #{mlpzxy_pallas.1} parent=55 // pred_fallthru
          _
        %s442 = sand.u32 %s30, 1
        %s443 = scalar_lea.sflag [#allocation15], %s442
        %s444 = sand.u32 %s185, 1
        %s445 = smul.addr %s444, 8192
        %s446 = scalar_lea.vmem [#allocation14], %s445
        // Predicated region
        $region85: #{mlpzxy_pallas.1} parent=55 // pred_check
          %p447 = pneg %p198
        $region86: #{mlpzxy_pallas.1} parent=55 // pred_check_branch
          %449 = sbr.rel (%p447) target = $region88
        $region87: #{mlpzxy_pallas.1} parent=55 // pred_region
          %451 = dma.done %s443, 131072
        $region88: #{mlpzxy_pallas.1} parent=55 // pred_fallthru
          _
        %s452 = sand.u32 %s30, 1
        %s453 = scalar_lea.sflag [#allocation15], %s452
        %s454 = sand.u32 %s211, 1
        %s455 = smul.addr %s454, 16
        %s456 = scalar_lea.vmem [#allocation16], %s455
        // Predicated region
        $region89: #{mlpzxy_pallas.1} parent=55 // pred_check
          %p457 = pneg %p224
        $region90: #{mlpzxy_pallas.1} parent=55 // pred_check_branch
          %459 = sbr.rel (%p457) target = $region92
        $region91: #{mlpzxy_pallas.1} parent=55 // pred_region
          %461 = dma.done %s453, 256
        $region92: #{mlpzxy_pallas.1} parent=55 // pred_fallthru
          _
        %p462 = pneg %p46
        %p463 = pneg %p43
        %p464 = pneg %p67
        %p465 = pneg %p64
        %p466 = pneg %p88
        %p467 = pneg %p85
        %p468 = pneg %p109
        %p469 = pneg %p106
        %p470 = pneg %p130
        %p471 = pneg %p127
        %p472 = pneg %p151
        %p473 = pneg %p148
        %p474 = pneg %p172
        %p475 = pneg %p169
        %s476 = sand.u32 %s30, 1
        %s477 = scalar_lea.sflag [#allocation15], %s476
        %s478 = sand.u32 %s185, 1
        %s479 = smul.addr %s478, 8192
        %s480 = scalar_lea.vmem [#allocation14], %s479
        %p481 = pneg %p198
        %p482 = pneg %p195
        %s483 = sand.u32 %s30, 1
        %s484 = scalar_lea.sflag [#allocation15], %s483
        %s485 = sand.u32 %s211, 1
        %s486 = smul.addr %s485, 16
        %s487 = scalar_lea.vmem [#allocation16], %s486
        %p488 = pneg %p224
        %p489 = pneg %p221
        %p490 = pneg %p250
        %p491 = pneg %p247
        %s492 = sand.u32 %s237, 1
        %s493 = scalar_lea.sflag [#allocation4], %s492
        %s494 = sand.u32 %s237, 1
        %s495 = smul.addr %s494, 128
        %s496 = scalar_lea.vmem [#allocation17], %s495
        %s497 = smul.u32 16, %s30
        %s498 = smul.u32 16, %s30
        %v499 = vld [vmem:[#allocation2] sm:$0xff]
        %v500 = vld [vmem:[#allocation5] sm:$0xff]
        %v501 = vld [vmem:[#allocation5 + $0x8] sm:$0xff]
        %v502 = vld [vmem:[#allocation7] sm:$0x1]
        %v504 = vperm.slane %v502, 0
        %vm506 = vcmask 130048
        %v508 = vsel %vm506, %v499, 0
        %510 = vmatpush.msra.mxu0 0.0
        %511 = vmatpush.msra.mxu0 0.0
        %512 = vmatpush.msra.mxu0 0.0
        %513 = vmatpush.msra.mxu0 0.0
        %514 = vmatpush.msra.mxu0 0.0
        %515 = vmatpush.msra.mxu0 0.0
        %516 = vmatpush.msra.mxu0 0.0
        %517 = vmatpush.msra.mxu0 0.0
        %518 = vmatpush.msra.mxu0 0.0
        %519 = vmatpush.msra.mxu0 0.0
        %520 = vmatpush.msra.mxu0 0.0
        %521 = vmatpush.msra.mxu0 0.0
        %522 = vmatpush.msra.mxu0 0.0
        %523 = vmatpush.msra.mxu0 0.0
        %524 = vmatpush.msra.mxu0 %v501
        %525 = vmatpush.msra.mxu0 %v500
        %526 = vmatmul.f32.gmra.mxu0 %v508
        %v527 = vpop.f32.mrf.mxu0
        %v528 = vadd.f32 %v504, %v527
        %529 = vdwg.mxu0
        %v530 = vmul.f32 %v528, 0.5
        %v531 = vrcp.pop 1.4142135
        %v532 = vmul.f32 1.4142135, %v531
        %v533 = vsub.f32 1.0, %v532
        %v534 = vmul.f32 %v531, %v533
        %v535 = vadd.f32 %v531, %v534
        %vm536 = vweird.f32 %v531
        %v537 = vsel %vm536, %v531, %v535
        %v538 = vmul.f32 %v528, %v537
        %v539 = vmul.f32 %v538, %v538
        %v540 = vmin.f32 16.0, %v539
        %v541 = vmul.f32 %v540, 2.1237322e-06
        %v542 = vadd.f32 %v541, 0.00028619796
        %v543 = vmul.f32 %v540, %v542
        %v544 = vadd.f32 %v543, 0.0036580483
        %v545 = vmul.f32 %v540, %v544
        %v546 = vadd.f32 %v545, 0.05243302
        %v547 = vmul.f32 %v540, %v546
        %v548 = vadd.f32 %v547, 0.18741608
        %v549 = vmul.f32 %v540, %v548
        %v550 = vadd.f32 %v549, 1.1283791
        %v551 = vmul.f32 %v538, %v550
        %v552 = vmul.f32 %v540, 3.8918573e-05
        %v553 = vadd.f32 %v552, 0.001143296
        %v554 = vmul.f32 %v540, %v553
        %v555 = vadd.f32 %v554, 0.014752088
        %v556 = vmul.f32 %v540, %v555
        %v557 = vadd.f32 %v556, 0.112945676
        %v558 = vmul.f32 %v540, %v557
        %v559 = vadd.f32 %v558, 0.4994258
        %v560 = vmul.f32 %v540, %v559
        %v561 = vadd.f32 %v560, 1.0
        %v562 = vrcp.pop %v561
        %v563 = vmul.f32 %v561, %v562
        %v564 = vsub.f32 1.0, %v563
        %v565 = vmul.f32 %v562, %v564
        %v566 = vadd.f32 %v562, %v565
        %vm567 = vweird.f32 %v561
        %vm568 = vweird.f32 %v562
        %vm569 = vmor %vm567, %vm568
        %v570 = vsel %vm569, %v562, %v566
        %v571 = vand.u32 2147483647, %v561
        %vm572 = vcmp.eq.f32.partialorder %v571, 8.507059e+37
        %v573 = vand.u32 %v561, 2147483648
        %v574 = vor.u32 1.1754944e-38, %v573
        %v575 = vsel %vm572, %v574, %v570
        %v576 = vmul.f32 %v551, %v575
        %v577 = vmin.f32 %v576, 1.0
        %v578 = vmax.f32 %v577, -1.0
        %v579 = vadd.f32 %v578, 1.0
        %v580 = vmul.f32 %v530, %v579
        %v581 = vld [vmem:[#allocation8] sm:$0xff]
        %v582 = vld [vmem:[#allocation8 + $0x8] sm:$0xff]
        %v583 = vld [vmem:[#allocation8 + $0x10] sm:$0xff]
        %v584 = vld [vmem:[#allocation8 + $0x18] sm:$0xff]
        %v585 = vld [vmem:[#allocation8 + $0x20] sm:$0xff]
        %v586 = vld [vmem:[#allocation8 + $0x28] sm:$0xff]
        %v587 = vld [vmem:[#allocation8 + $0x30] sm:$0xff]
        %v588 = vld [vmem:[#allocation8 + $0x38] sm:$0xff]
        %v589 = vld [vmem:[#allocation8 + $0x40] sm:$0xff]
        %v590 = vld [vmem:[#allocation8 + $0x48] sm:$0xff]
        %v591 = vld [vmem:[#allocation8 + $0x50] sm:$0xff]
        %v592 = vld [vmem:[#allocation8 + $0x58] sm:$0xff]
        %v593 = vld [vmem:[#allocation8 + $0x60] sm:$0xff]
        %v594 = vld [vmem:[#allocation8 + $0x68] sm:$0xff]
        %v595 = vld [vmem:[#allocation8 + $0x70] sm:$0xff]
        %v596 = vld [vmem:[#allocation8 + $0x78] sm:$0xff]
        %v597 = vld [vmem:[#allocation8 + $0x80] sm:$0xff]
        %v598 = vld [vmem:[#allocation8 + $0x88] sm:$0xff]
        %v599 = vld [vmem:[#allocation8 + $0x90] sm:$0xff]
        %v600 = vld [vmem:[#allocation8 + $0x98] sm:$0xff]
        %v601 = vld [vmem:[#allocation8 + $0xa0] sm:$0xff]
        %v602 = vld [vmem:[#allocation8 + $0xa8] sm:$0xff]
        %v603 = vld [vmem:[#allocation8 + $0xb0] sm:$0xff]
        %v604 = vld [vmem:[#allocation8 + $0xb8] sm:$0xff]
        %v605 = vld [vmem:[#allocation8 + $0xc0] sm:$0xff]
        %v606 = vld [vmem:[#allocation8 + $0xc8] sm:$0xff]
        %v607 = vld [vmem:[#allocation8 + $0xd0] sm:$0xff]
        %v608 = vld [vmem:[#allocation8 + $0xd8] sm:$0xff]
        %v609 = vld [vmem:[#allocation8 + $0xe0] sm:$0xff]
        %v610 = vld [vmem:[#allocation8 + $0xe8] sm:$0xff]
        %v611 = vld [vmem:[#allocation8 + $0xf0] sm:$0xff]
        %v612 = vld [vmem:[#allocation8 + $0xf8] sm:$0xff]
        %v613 = vld [vmem:[#allocation8 + $0x100] sm:$0xff]
        %v614 = vld [vmem:[#allocation8 + $0x108] sm:$0xff]
        %v615 = vld [vmem:[#allocation8 + $0x110] sm:$0xff]
        %v616 = vld [vmem:[#allocation8 + $0x118] sm:$0xff]
        %v617 = vld [vmem:[#allocation8 + $0x120] sm:$0xff]
        %v618 = vld [vmem:[#allocation8 + $0x128] sm:$0xff]
        %v619 = vld [vmem:[#allocation8 + $0x130] sm:$0xff]
        %v620 = vld [vmem:[#allocation8 + $0x138] sm:$0xff]
        %v621 = vld [vmem:[#allocation10] sm:$0x1f]
        %v623 = vperm.slane %v621, 0
        %v624 = vperm.slane %v621, 1
        %v625 = vperm.slane %v621, 2
        %v626 = vperm.slane %v621, 3
        %v627 = vperm.slane %v621, 4
        %vm633 = vcmask 523264
        %v635 = vsel %vm633, %v580, 0
        %637 = vmatpush.msra.mxu0 0.0
        %638 = vmatpush.msra.mxu0 0.0
        %639 = vmatpush.msra.mxu0 0.0
        %640 = vmatpush.msra.mxu0 0.0
        %641 = vmatpush.msra.mxu0 0.0
        %642 = vmatpush.msra.mxu0 0.0
        %643 = vmatpush.msra.mxu0 0.0
        %644 = vmatpush.msra.mxu0 0.0
        %645 = vmatpush.msra.mxu0 %v616
        %646 = vmatpush.msra.mxu0 %v611
        %647 = vmatpush.msra.mxu0 %v606
        %648 = vmatpush.msra.mxu0 %v601
        %649 = vmatpush.msra.mxu0 %v596
        %650 = vmatpush.msra.mxu0 %v591
        %651 = vmatpush.msra.mxu0 %v586
        %652 = vmatpush.msra.mxu0 %v581
        %653 = vmatmul.f32.gmra.mxu0 %v635
        %v654 = vpop.f32.mrf.mxu0
        %v655 = vadd.f32 %v623, %v654
        %656 = vdwg.mxu0
        %657 = vmatpush.msra.mxu0 0.0
        %658 = vmatpush.msra.mxu0 0.0
        %659 = vmatpush.msra.mxu0 0.0
        %660 = vmatpush.msra.mxu0 0.0
        %661 = vmatpush.msra.mxu0 0.0
        %662 = vmatpush.msra.mxu0 0.0
        %663 = vmatpush.msra.mxu0 0.0
        %664 = vmatpush.msra.mxu0 0.0
        %665 = vmatpush.msra.mxu0 %v617
        %666 = vmatpush.msra.mxu0 %v612
        %667 = vmatpush.msra.mxu0 %v607
        %668 = vmatpush.msra.mxu0 %v602
        %669 = vmatpush.msra.mxu0 %v597
        %670 = vmatpush.msra.mxu0 %v592
        %671 = vmatpush.msra.mxu0 %v587
        %672 = vmatpush.msra.mxu0 %v582
        %673 = vmatmul.f32.gmra.mxu0 %v635
        %v674 = vpop.f32.mrf.mxu0
        %v675 = vadd.f32 %v624, %v674
        %676 = vdwg.mxu0
        %677 = vmatpush.msra.mxu0 0.0
        %678 = vmatpush.msra.mxu0 0.0
        %679 = vmatpush.msra.mxu0 0.0
        %680 = vmatpush.msra.mxu0 0.0
        %681 = vmatpush.msra.mxu0 0.0
        %682 = vmatpush.msra.mxu0 0.0
        %683 = vmatpush.msra.mxu0 0.0
        %684 = vmatpush.msra.mxu0 0.0
        %685 = vmatpush.msra.mxu0 %v618
        %686 = vmatpush.msra.mxu0 %v613
        %687 = vmatpush.msra.mxu0 %v608
        %688 = vmatpush.msra.mxu0 %v603
        %689 = vmatpush.msra.mxu0 %v598
        %690 = vmatpush.msra.mxu0 %v593
        %691 = vmatpush.msra.mxu0 %v588
        %692 = vmatpush.msra.mxu0 %v583
        %693 = vmatmul.f32.gmra.mxu0 %v635
        %v694 = vpop.f32.mrf.mxu0
        %v695 = vadd.f32 %v625, %v694
        %696 = vdwg.mxu0
        %697 = vmatpush.msra.mxu0 0.0
        %698 = vmatpush.msra.mxu0 0.0
        %699 = vmatpush.msra.mxu0 0.0
        %700 = vmatpush.msra.mxu0 0.0
        %701 = vmatpush.msra.mxu0 0.0
        %702 = vmatpush.msra.mxu0 0.0
        %703 = vmatpush.msra.mxu0 0.0
        %704 = vmatpush.msra.mxu0 0.0
        %705 = vmatpush.msra.mxu0 %v619
        %706 = vmatpush.msra.mxu0 %v614
        %707 = vmatpush.msra.mxu0 %v609
        %708 = vmatpush.msra.mxu0 %v604
        %709 = vmatpush.msra.mxu0 %v599
        %710 = vmatpush.msra.mxu0 %v594
        %711 = vmatpush.msra.mxu0 %v589
        %712 = vmatpush.msra.mxu0 %v584
        %713 = vmatmul.f32.gmra.mxu0 %v635
        %v714 = vpop.f32.mrf.mxu0
        %v715 = vadd.f32 %v626, %v714
        %716 = vdwg.mxu0
        %717 = vmatpush.msra.mxu0 0.0
        %718 = vmatpush.msra.mxu0 0.0
        %719 = vmatpush.msra.mxu0 0.0
        %720 = vmatpush.msra.mxu0 0.0
        %721 = vmatpush.msra.mxu0 0.0
        %722 = vmatpush.msra.mxu0 0.0
        %723 = vmatpush.msra.mxu0 0.0
        %724 = vmatpush.msra.mxu0 0.0
        %725 = vmatpush.msra.mxu0 %v620
        %726 = vmatpush.msra.mxu0 %v615
        %727 = vmatpush.msra.mxu0 %v610
        %728 = vmatpush.msra.mxu0 %v605
        %729 = vmatpush.msra.mxu0 %v600
        %730 = vmatpush.msra.mxu0 %v595
        %731 = vmatpush.msra.mxu0 %v590
        %732 = vmatpush.msra.mxu0 %v585
        %733 = vmatmul.f32.gmra.mxu0 %v635
        %v734 = vpop.f32.mrf.mxu0
        %v735 = vadd.f32 %v627, %v734
        %736 = vdwg.mxu0
        %v737 = vmul.f32 %v655, 0.5
        %v738 = vmul.f32 %v675, 0.5
        %v739 = vmul.f32 %v695, 0.5
        %v740 = vmul.f32 %v715, 0.5
        %v741 = vmul.f32 %v735, 0.5
        %v742 = vmul.f32 %v655, %v537
        %v743 = vmul.f32 %v675, %v537
        %v744 = vmul.f32 %v695, %v537
        %v745 = vmul.f32 %v715, %v537
        %v746 = vmul.f32 %v735, %v537
        %v747 = vmul.f32 %v742, %v742
        %v748 = vmin.f32 16.0, %v747
        %v749 = vmul.f32 %v748, 2.1237322e-06
        %v750 = vadd.f32 %v749, 0.00028619796
        %v751 = vmul.f32 %v748, %v750
        %v752 = vadd.f32 %v751, 0.0036580483
        %v753 = vmul.f32 %v748, %v752
        %v754 = vadd.f32 %v753, 0.05243302
        %v755 = vmul.f32 %v748, %v754
        %v756 = vadd.f32 %v755, 0.18741608
        %v757 = vmul.f32 %v748, %v756
        %v758 = vadd.f32 %v757, 1.1283791
        %v759 = vmul.f32 %v742, %v758
        %v760 = vmul.f32 %v748, 3.8918573e-05
        %v761 = vadd.f32 %v760, 0.001143296
        %v762 = vmul.f32 %v748, %v761
        %v763 = vadd.f32 %v762, 0.014752088
        %v764 = vmul.f32 %v748, %v763
        %v765 = vadd.f32 %v764, 0.112945676
        %v766 = vmul.f32 %v748, %v765
        %v767 = vadd.f32 %v766, 0.4994258
        %v768 = vmul.f32 %v748, %v767
        %v769 = vadd.f32 %v768, 1.0
        %v770 = vrcp.pop %v769
        %v771 = vmul.f32 %v769, %v770
        %v772 = vsub.f32 1.0, %v771
        %v773 = vmul.f32 %v770, %v772
        %v774 = vadd.f32 %v770, %v773
        %vm775 = vweird.f32 %v769
        %vm776 = vweird.f32 %v770
        %vm777 = vmor %vm775, %vm776
        %v778 = vsel %vm777, %v770, %v774
        %v779 = vand.u32 2147483647, %v769
        %vm780 = vcmp.eq.f32.partialorder %v779, 8.507059e+37
        %v781 = vand.u32 %v769, 2147483648
        %v782 = vor.u32 1.1754944e-38, %v781
        %v783 = vsel %vm780, %v782, %v778
        %v784 = vmul.f32 %v759, %v783
        %v785 = vmin.f32 %v784, 1.0
        %v786 = vmax.f32 %v785, -1.0
        %v787 = vmul.f32 %v743, %v743
        %v788 = vmin.f32 16.0, %v787
        %v789 = vmul.f32 %v788, 2.1237322e-06
        %v790 = vadd.f32 %v789, 0.00028619796
        %v791 = vmul.f32 %v788, %v790
        %v792 = vadd.f32 %v791, 0.0036580483
        %v793 = vmul.f32 %v788, %v792
        %v794 = vadd.f32 %v793, 0.05243302
        %v795 = vmul.f32 %v788, %v794
        %v796 = vadd.f32 %v795, 0.18741608
        %v797 = vmul.f32 %v788, %v796
        %v798 = vadd.f32 %v797, 1.1283791
        %v799 = vmul.f32 %v743, %v798
        %v800 = vmul.f32 %v788, 3.8918573e-05
        %v801 = vadd.f32 %v800, 0.001143296
        %v802 = vmul.f32 %v788, %v801
        %v803 = vadd.f32 %v802, 0.014752088
        %v804 = vmul.f32 %v788, %v803
        %v805 = vadd.f32 %v804, 0.112945676
        %v806 = vmul.f32 %v788, %v805
        %v807 = vadd.f32 %v806, 0.4994258
        %v808 = vmul.f32 %v788, %v807
        %v809 = vadd.f32 %v808, 1.0
        %v810 = vrcp.pop %v809
        %v811 = vmul.f32 %v809, %v810
        %v812 = vsub.f32 1.0, %v811
        %v813 = vmul.f32 %v810, %v812
        %v814 = vadd.f32 %v810, %v813
        %vm815 = vweird.f32 %v809
        %vm816 = vweird.f32 %v810
        %vm817 = vmor %vm815, %vm816
        %v818 = vsel %vm817, %v810, %v814
        %v819 = vand.u32 2147483647, %v809
        %vm820 = vcmp.eq.f32.partialorder %v819, 8.507059e+37
        %v821 = vand.u32 %v809, 2147483648
        %v822 = vor.u32 1.1754944e-38, %v821
        %v823 = vsel %vm820, %v822, %v818
        %v824 = vmul.f32 %v799, %v823
        %v825 = vmin.f32 %v824, 1.0
        %v826 = vmax.f32 %v825, -1.0
        %v827 = vmul.f32 %v744, %v744
        %v828 = vmin.f32 16.0, %v827
        %v829 = vmul.f32 %v828, 2.1237322e-06
        %v830 = vadd.f32 %v829, 0.00028619796
        %v831 = vmul.f32 %v828, %v830
        %v832 = vadd.f32 %v831, 0.0036580483
        %v833 = vmul.f32 %v828, %v832
        %v834 = vadd.f32 %v833, 0.05243302
        %v835 = vmul.f32 %v828, %v834
        %v836 = vadd.f32 %v835, 0.18741608
        %v837 = vmul.f32 %v828, %v836
        %v838 = vadd.f32 %v837, 1.1283791
        %v839 = vmul.f32 %v744, %v838
        %v840 = vmul.f32 %v828, 3.8918573e-05
        %v841 = vadd.f32 %v840, 0.001143296
        %v842 = vmul.f32 %v828, %v841
        %v843 = vadd.f32 %v842, 0.014752088
        %v844 = vmul.f32 %v828, %v843
        %v845 = vadd.f32 %v844, 0.112945676
        %v846 = vmul.f32 %v828, %v845
        %v847 = vadd.f32 %v846, 0.4994258
        %v848 = vmul.f32 %v828, %v847
        %v849 = vadd.f32 %v848, 1.0
        %v850 = vrcp.pop %v849
        %v851 = vmul.f32 %v849, %v850
        %v852 = vsub.f32 1.0, %v851
        %v853 = vmul.f32 %v850, %v852
        %v854 = vadd.f32 %v850, %v853
        %vm855 = vweird.f32 %v849
        %vm856 = vweird.f32 %v850
        %vm857 = vmor %vm855, %vm856
        %v858 = vsel %vm857, %v850, %v854
        %v859 = vand.u32 2147483647, %v849
        %vm860 = vcmp.eq.f32.partialorder %v859, 8.507059e+37
        %v861 = vand.u32 %v849, 2147483648
        %v862 = vor.u32 1.1754944e-38, %v861
        %v863 = vsel %vm860, %v862, %v858
        %v864 = vmul.f32 %v839, %v863
        %v865 = vmin.f32 %v864, 1.0
        %v866 = vmax.f32 %v865, -1.0
        %v867 = vmul.f32 %v745, %v745
        %v868 = vmin.f32 16.0, %v867
        %v869 = vmul.f32 %v868, 2.1237322e-06
        %v870 = vadd.f32 %v869, 0.00028619796
        %v871 = vmul.f32 %v868, %v870
        %v872 = vadd.f32 %v871, 0.0036580483
        %v873 = vmul.f32 %v868, %v872
        %v874 = vadd.f32 %v873, 0.05243302
        %v875 = vmul.f32 %v868, %v874
        %v876 = vadd.f32 %v875, 0.18741608
        %v877 = vmul.f32 %v868, %v876
        %v878 = vadd.f32 %v877, 1.1283791
        %v879 = vmul.f32 %v745, %v878
        %v880 = vmul.f32 %v868, 3.8918573e-05
        %v881 = vadd.f32 %v880, 0.001143296
        %v882 = vmul.f32 %v868, %v881
        %v883 = vadd.f32 %v882, 0.014752088
        %v884 = vmul.f32 %v868, %v883
        %v885 = vadd.f32 %v884, 0.112945676
        %v886 = vmul.f32 %v868, %v885
        %v887 = vadd.f32 %v886, 0.4994258
        %v888 = vmul.f32 %v868, %v887
        %v889 = vadd.f32 %v888, 1.0
        %v890 = vrcp.pop %v889
        %v891 = vmul.f32 %v889, %v890
        %v892 = vsub.f32 1.0, %v891
        %v893 = vmul.f32 %v890, %v892
        %v894 = vadd.f32 %v890, %v893
        %vm895 = vweird.f32 %v889
        %vm896 = vweird.f32 %v890
        %vm897 = vmor %vm895, %vm896
        %v898 = vsel %vm897, %v890, %v894
        %v899 = vand.u32 2147483647, %v889
        %vm900 = vcmp.eq.f32.partialorder %v899, 8.507059e+37
        %v901 = vand.u32 %v889, 2147483648
        %v902 = vor.u32 1.1754944e-38, %v901
        %v903 = vsel %vm900, %v902, %v898
        %v904 = vmul.f32 %v879, %v903
        %v905 = vmin.f32 %v904, 1.0
        %v906 = vmax.f32 %v905, -1.0
        %v907 = vmul.f32 %v746, %v746
        %v908 = vmin.f32 16.0, %v907
        %v909 = vmul.f32 %v908, 2.1237322e-06
        %v910 = vadd.f32 %v909, 0.00028619796
        %v911 = vmul.f32 %v908, %v910
        %v912 = vadd.f32 %v911, 0.0036580483
        %v913 = vmul.f32 %v908, %v912
        %v914 = vadd.f32 %v913, 0.05243302
        %v915 = vmul.f32 %v908, %v914
        %v916 = vadd.f32 %v915, 0.18741608
        %v917 = vmul.f32 %v908, %v916
        %v918 = vadd.f32 %v917, 1.1283791
        %v919 = vmul.f32 %v746, %v918
        %v920 = vmul.f32 %v908, 3.8918573e-05
        %v921 = vadd.f32 %v920, 0.001143296
        %v922 = vmul.f32 %v908, %v921
        %v923 = vadd.f32 %v922, 0.014752088
        %v924 = vmul.f32 %v908, %v923
        %v925 = vadd.f32 %v924, 0.112945676
        %v926 = vmul.f32 %v908, %v925
        %v927 = vadd.f32 %v926, 0.4994258
        %v928 = vmul.f32 %v908, %v927
        %v929 = vadd.f32 %v928, 1.0
        %v930 = vrcp.pop %v929
        %v931 = vmul.f32 %v929, %v930
        %v932 = vsub.f32 1.0, %v931
        %v933 = vmul.f32 %v930, %v932
        %v934 = vadd.f32 %v930, %v933
        %vm935 = vweird.f32 %v929
        %vm936 = vweird.f32 %v930
        %vm937 = vmor %vm935, %vm936
        %v938 = vsel %vm937, %v930, %v934
        %v939 = vand.u32 2147483647, %v929
        %vm940 = vcmp.eq.f32.partialorder %v939, 8.507059e+37
        %v941 = vand.u32 %v929, 2147483648
        %v942 = vor.u32 1.1754944e-38, %v941
        %v943 = vsel %vm940, %v942, %v938
        %v944 = vmul.f32 %v919, %v943
        %v945 = vmin.f32 %v944, 1.0
        %v946 = vmax.f32 %v945, -1.0
        %v947 = vadd.f32 %v786, 1.0
        %v948 = vadd.f32 %v826, 1.0
        %v949 = vadd.f32 %v866, 1.0
        %v950 = vadd.f32 %v906, 1.0
        %v951 = vadd.f32 %v946, 1.0
        %v952 = vmul.f32 %v737, %v947
        %v953 = vmul.f32 %v738, %v948
        %v954 = vmul.f32 %v739, %v949
        %v955 = vmul.f32 %v740, %v950
        %v956 = vmul.f32 %v741, %v951
        %v957 = vpack.c.bf16 %v952, %v952
        %v958 = vpack.c.bf16 %v953, %v953
        %v959 = vpack.c.bf16 %v954, %v954
        %v960 = vpack.c.bf16 %v955, %v955
        %v961 = vpack.c.bf16 %v956, %v956
        %v962 = vld [vmem:[#allocation11] sm:$0xff]
        %v963 = vld [vmem:[#allocation11 + $0x8] sm:$0xff]
        %v964 = vld [vmem:[#allocation11 + $0x10] sm:$0xff]
        %v965 = vld [vmem:[#allocation11 + $0x18] sm:$0xff]
        %v966 = vld [vmem:[#allocation11 + $0x20] sm:$0xff]
        %v967 = vld [vmem:[#allocation11 + $0x28] sm:$0xff]
        %v968 = vld [vmem:[#allocation11 + $0x30] sm:$0xff]
        %v969 = vld [vmem:[#allocation11 + $0x38] sm:$0xff]
        %v970 = vld [vmem:[#allocation11 + $0x40] sm:$0xff]
        %v971 = vld [vmem:[#allocation11 + $0x48] sm:$0xff]
        %v972 = vld [vmem:[#allocation11 + $0x50] sm:$0xff]
        %v973 = vld [vmem:[#allocation11 + $0x58] sm:$0xff]
        %v974 = vld [vmem:[#allocation11 + $0x60] sm:$0xff]
        %v975 = vld [vmem:[#allocation11 + $0x68] sm:$0xff]
        %v976 = vld [vmem:[#allocation11 + $0x70] sm:$0xff]
        %v977 = vld [vmem:[#allocation11 + $0x78] sm:$0xff]
        %v978 = vld [vmem:[#allocation11 + $0x80] sm:$0xff]
        %v979 = vld [vmem:[#allocation11 + $0x88] sm:$0xff]
        %v980 = vld [vmem:[#allocation11 + $0x90] sm:$0xff]
        %v981 = vld [vmem:[#allocation11 + $0x98] sm:$0xff]
        %v982 = vld [vmem:[#allocation11 + $0xa0] sm:$0xff]
        %v983 = vld [vmem:[#allocation11 + $0xa8] sm:$0xff]
        %v984 = vld [vmem:[#allocation11 + $0xb0] sm:$0xff]
        %v985 = vld [vmem:[#allocation11 + $0xb8] sm:$0xff]
        %v986 = vld [vmem:[#allocation11 + $0xc0] sm:$0xff]
        %v987 = vld [vmem:[#allocation11 + $0xc8] sm:$0xff]
        %v988 = vld [vmem:[#allocation11 + $0xd0] sm:$0xff]
        %v989 = vld [vmem:[#allocation11 + $0xd8] sm:$0xff]
        %v990 = vld [vmem:[#allocation11 + $0xe0] sm:$0xff]
        %v991 = vld [vmem:[#allocation11 + $0xe8] sm:$0xff]
        %v992 = vld [vmem:[#allocation11 + $0xf0] sm:$0xff]
        %v993 = vld [vmem:[#allocation11 + $0xf8] sm:$0xff]
        %v994 = vld [vmem:[#allocation11 + $0x100] sm:$0xff]
        %v995 = vld [vmem:[#allocation11 + $0x108] sm:$0xff]
        %v996 = vld [vmem:[#allocation11 + $0x110] sm:$0xff]
        %v997 = vld [vmem:[#allocation11 + $0x118] sm:$0xff]
        %v998 = vld [vmem:[#allocation11 + $0x120] sm:$0xff]
        %v999 = vld [vmem:[#allocation11 + $0x128] sm:$0xff]
        %v1000 = vld [vmem:[#allocation11 + $0x130] sm:$0xff]
        %v1001 = vld [vmem:[#allocation11 + $0x138] sm:$0xff]
        %v1002 = vld [vmem:[#allocation11 + $0x140] sm:$0xff]
        %v1003 = vld [vmem:[#allocation11 + $0x148] sm:$0xff]
        %v1004 = vld [vmem:[#allocation11 + $0x150] sm:$0xff]
        %v1005 = vld [vmem:[#allocation11 + $0x158] sm:$0xff]
        %v1006 = vld [vmem:[#allocation11 + $0x160] sm:$0xff]
        %v1007 = vld [vmem:[#allocation11 + $0x168] sm:$0xff]
        %v1008 = vld [vmem:[#allocation11 + $0x170] sm:$0xff]
        %v1009 = vld [vmem:[#allocation11 + $0x178] sm:$0xff]
        %v1010 = vld [vmem:[#allocation11 + $0x180] sm:$0xff]
        %v1011 = vld [vmem:[#allocation11 + $0x188] sm:$0xff]
        %v1012 = vld [vmem:[#allocation11 + $0x190] sm:$0xff]
        %v1013 = vld [vmem:[#allocation11 + $0x198] sm:$0xff]
        %v1014 = vld [vmem:[#allocation11 + $0x1a0] sm:$0xff]
        %v1015 = vld [vmem:[#allocation11 + $0x1a8] sm:$0xff]
        %v1016 = vld [vmem:[#allocation11 + $0x1b0] sm:$0xff]
        %v1017 = vld [vmem:[#allocation11 + $0x1b8] sm:$0xff]
        %v1018 = vld [vmem:[#allocation11 + $0x1c0] sm:$0xff]
        %v1019 = vld [vmem:[#allocation11 + $0x1c8] sm:$0xff]
        %v1020 = vld [vmem:[#allocation11 + $0x1d0] sm:$0xff]
        %v1021 = vld [vmem:[#allocation11 + $0x1d8] sm:$0xff]
        %v1022 = vld [vmem:[#allocation11 + $0x1e0] sm:$0xff]
        %v1023 = vld [vmem:[#allocation11 + $0x1e8] sm:$0xff]
        %v1024 = vld [vmem:[#allocation11 + $0x1f0] sm:$0xff]
        %v1025 = vld [vmem:[#allocation11 + $0x1f8] sm:$0xff]
        %v1026 = vld [vmem:[#allocation11 + $0x200] sm:$0xff]
        %v1027 = vld [vmem:[#allocation11 + $0x208] sm:$0xff]
        %v1028 = vld [vmem:[#allocation11 + $0x210] sm:$0xff]
        %v1029 = vld [vmem:[#allocation11 + $0x218] sm:$0xff]
        %v1030 = vld [vmem:[#allocation11 + $0x220] sm:$0xff]
        %v1031 = vld [vmem:[#allocation11 + $0x228] sm:$0xff]
        %v1032 = vld [vmem:[#allocation11 + $0x230] sm:$0xff]
        %v1033 = vld [vmem:[#allocation11 + $0x238] sm:$0xff]
        %v1034 = vld [vmem:[#allocation11 + $0x240] sm:$0xff]
        %v1035 = vld [vmem:[#allocation11 + $0x248] sm:$0xff]
        %v1036 = vld [vmem:[#allocation11 + $0x250] sm:$0xff]
        %v1037 = vld [vmem:[#allocation11 + $0x258] sm:$0xff]
        %v1038 = vld [vmem:[#allocation11 + $0x260] sm:$0xff]
        %v1039 = vld [vmem:[#allocation11 + $0x268] sm:$0xff]
        %v1040 = vld [vmem:[#allocation11 + $0x270] sm:$0xff]
        %v1041 = vld [vmem:[#allocation11 + $0x278] sm:$0xff]
        %v1042 = vld [vmem:[#allocation11 + $0x280] sm:$0xff]
        %v1043 = vld [vmem:[#allocation11 + $0x288] sm:$0xff]
        %v1044 = vld [vmem:[#allocation11 + $0x290] sm:$0xff]
        %v1045 = vld [vmem:[#allocation11 + $0x298] sm:$0xff]
        %v1046 = vld [vmem:[#allocation11 + $0x2a0] sm:$0xff]
        %v1047 = vld [vmem:[#allocation11 + $0x2a8] sm:$0xff]
        %v1048 = vld [vmem:[#allocation11 + $0x2b0] sm:$0xff]
        %v1049 = vld [vmem:[#allocation11 + $0x2b8] sm:$0xff]
        %v1050 = vld [vmem:[#allocation11 + $0x2c0] sm:$0xff]
        %v1051 = vld [vmem:[#allocation11 + $0x2c8] sm:$0xff]
        %v1052 = vld [vmem:[#allocation11 + $0x2d0] sm:$0xff]
        %v1053 = vld [vmem:[#allocation11 + $0x2d8] sm:$0xff]
        %v1054 = vld [vmem:[#allocation11 + $0x2e0] sm:$0xff]
        %v1055 = vld [vmem:[#allocation11 + $0x2e8] sm:$0xff]
        %v1056 = vld [vmem:[#allocation11 + $0x2f0] sm:$0xff]
        %v1057 = vld [vmem:[#allocation11 + $0x2f8] sm:$0xff]
        %v1058 = vld [vmem:[#allocation11 + $0x300] sm:$0xff]
        %v1059 = vld [vmem:[#allocation11 + $0x308] sm:$0xff]
        %v1060 = vld [vmem:[#allocation11 + $0x310] sm:$0xff]
        %v1061 = vld [vmem:[#allocation11 + $0x318] sm:$0xff]
        %v1062 = vld [vmem:[#allocation11 + $0x320] sm:$0xff]
        %v1063 = vld [vmem:[#allocation11 + $0x328] sm:$0xff]
        %v1064 = vld [vmem:[#allocation11 + $0x330] sm:$0xff]
        %v1065 = vld [vmem:[#allocation11 + $0x338] sm:$0xff]
        %v1066 = vld [vmem:[#allocation11 + $0x340] sm:$0xff]
        %v1067 = vld [vmem:[#allocation11 + $0x348] sm:$0xff]
        %v1068 = vld [vmem:[#allocation11 + $0x350] sm:$0xff]
        %v1069 = vld [vmem:[#allocation11 + $0x358] sm:$0xff]
        %v1070 = vld [vmem:[#allocation11 + $0x360] sm:$0xff]
        %v1071 = vld [vmem:[#allocation11 + $0x368] sm:$0xff]
        %v1072 = vld [vmem:[#allocation11 + $0x370] sm:$0xff]
        %v1073 = vld [vmem:[#allocation11 + $0x378] sm:$0xff]
        %v1074 = vld [vmem:[#allocation11 + $0x380] sm:$0xff]
        %v1075 = vld [vmem:[#allocation11 + $0x388] sm:$0xff]
        %v1076 = vld [vmem:[#allocation11 + $0x390] sm:$0xff]
        %v1077 = vld [vmem:[#allocation11 + $0x398] sm:$0xff]
        %v1078 = vld [vmem:[#allocation11 + $0x3a0] sm:$0xff]
        %v1079 = vld [vmem:[#allocation11 + $0x3a8] sm:$0xff]
        %v1080 = vld [vmem:[#allocation11 + $0x3b0] sm:$0xff]
        %v1081 = vld [vmem:[#allocation11 + $0x3b8] sm:$0xff]
        %v1082 = vld [vmem:[#allocation11 + $0x3c0] sm:$0xff]
        %v1083 = vld [vmem:[#allocation11 + $0x3c8] sm:$0xff]
        %v1084 = vld [vmem:[#allocation11 + $0x3d0] sm:$0xff]
        %v1085 = vld [vmem:[#allocation11 + $0x3d8] sm:$0xff]
        %v1086 = vld [vmem:[#allocation11 + $0x3e0] sm:$0xff]
        %v1087 = vld [vmem:[#allocation11 + $0x3e8] sm:$0xff]
        %v1088 = vld [vmem:[#allocation11 + $0x3f0] sm:$0xff]
        %v1089 = vld [vmem:[#allocation11 + $0x3f8] sm:$0xff]
        %v1090 = vld [vmem:[#allocation11 + $0x400] sm:$0xff]
        %v1091 = vld [vmem:[#allocation11 + $0x408] sm:$0xff]
        %v1092 = vld [vmem:[#allocation11 + $0x410] sm:$0xff]
        %v1093 = vld [vmem:[#allocation11 + $0x418] sm:$0xff]
        %v1094 = vld [vmem:[#allocation11 + $0x420] sm:$0xff]
        %v1095 = vld [vmem:[#allocation11 + $0x428] sm:$0xff]
        %v1096 = vld [vmem:[#allocation11 + $0x430] sm:$0xff]
        %v1097 = vld [vmem:[#allocation11 + $0x438] sm:$0xff]
        %v1098 = vld [vmem:[#allocation11 + $0x440] sm:$0xff]
        %v1099 = vld [vmem:[#allocation11 + $0x448] sm:$0xff]
        %v1100 = vld [vmem:[#allocation11 + $0x450] sm:$0xff]
        %v1101 = vld [vmem:[#allocation11 + $0x458] sm:$0xff]
        %v1102 = vld [vmem:[#allocation11 + $0x460] sm:$0xff]
        %v1103 = vld [vmem:[#allocation11 + $0x468] sm:$0xff]
        %v1104 = vld [vmem:[#allocation11 + $0x470] sm:$0xff]
        %v1105 = vld [vmem:[#allocation11 + $0x478] sm:$0xff]
        %v1106 = vld [vmem:[#allocation11 + $0x480] sm:$0xff]
        %v1107 = vld [vmem:[#allocation11 + $0x488] sm:$0xff]
        %v1108 = vld [vmem:[#allocation11 + $0x490] sm:$0xff]
        %v1109 = vld [vmem:[#allocation11 + $0x498] sm:$0xff]
        %v1110 = vld [vmem:[#allocation11 + $0x4a0] sm:$0xff]
        %v1111 = vld [vmem:[#allocation11 + $0x4a8] sm:$0xff]
        %v1112 = vld [vmem:[#allocation11 + $0x4b0] sm:$0xff]
        %v1113 = vld [vmem:[#allocation11 + $0x4b8] sm:$0xff]
        %v1114 = vld [vmem:[#allocation11 + $0x4c0] sm:$0xff]
        %v1115 = vld [vmem:[#allocation11 + $0x4c8] sm:$0xff]
        %v1116 = vld [vmem:[#allocation11 + $0x4d0] sm:$0xff]
        %v1117 = vld [vmem:[#allocation11 + $0x4d8] sm:$0xff]
        %v1118 = vld [vmem:[#allocation11 + $0x4e0] sm:$0xff]
        %v1119 = vld [vmem:[#allocation11 + $0x4e8] sm:$0xff]
        %v1120 = vld [vmem:[#allocation11 + $0x4f0] sm:$0xff]
        %v1121 = vld [vmem:[#allocation11 + $0x4f8] sm:$0xff]
        %v1122 = vld [vmem:[#allocation11 + $0x500] sm:$0xff]
        %v1123 = vld [vmem:[#allocation11 + $0x508] sm:$0xff]
        %v1124 = vld [vmem:[#allocation11 + $0x510] sm:$0xff]
        %v1125 = vld [vmem:[#allocation11 + $0x518] sm:$0xff]
        %v1126 = vld [vmem:[#allocation11 + $0x520] sm:$0xff]
        %v1127 = vld [vmem:[#allocation11 + $0x528] sm:$0xff]
        %v1128 = vld [vmem:[#allocation11 + $0x530] sm:$0xff]
        %v1129 = vld [vmem:[#allocation11 + $0x538] sm:$0xff]
        %v1130 = vld [vmem:[#allocation11 + $0x540] sm:$0xff]
        %v1131 = vld [vmem:[#allocation11 + $0x548] sm:$0xff]
        %v1132 = vld [vmem:[#allocation11 + $0x550] sm:$0xff]
        %v1133 = vld [vmem:[#allocation11 + $0x558] sm:$0xff]
        %v1134 = vld [vmem:[#allocation11 + $0x560] sm:$0xff]
        %v1135 = vld [vmem:[#allocation11 + $0x568] sm:$0xff]
        %v1136 = vld [vmem:[#allocation11 + $0x570] sm:$0xff]
        %v1137 = vld [vmem:[#allocation11 + $0x578] sm:$0xff]
        %v1138 = vld [vmem:[#allocation11 + $0x580] sm:$0xff]
        %v1139 = vld [vmem:[#allocation11 + $0x588] sm:$0xff]
        %v1140 = vld [vmem:[#allocation11 + $0x590] sm:$0xff]
        %v1141 = vld [vmem:[#allocation11 + $0x598] sm:$0xff]
        %v1142 = vld [vmem:[#allocation11 + $0x5a0] sm:$0xff]
        %v1143 = vld [vmem:[#allocation11 + $0x5a8] sm:$0xff]
        %v1144 = vld [vmem:[#allocation11 + $0x5b0] sm:$0xff]
        %v1145 = vld [vmem:[#allocation11 + $0x5b8] sm:$0xff]
        %v1146 = vld [vmem:[#allocation11 + $0x5c0] sm:$0xff]
        %v1147 = vld [vmem:[#allocation11 + $0x5c8] sm:$0xff]
        %v1148 = vld [vmem:[#allocation11 + $0x5d0] sm:$0xff]
        %v1149 = vld [vmem:[#allocation11 + $0x5d8] sm:$0xff]
        %v1150 = vld [vmem:[#allocation11 + $0x5e0] sm:$0xff]
        %v1151 = vld [vmem:[#allocation11 + $0x5e8] sm:$0xff]
        %v1152 = vld [vmem:[#allocation11 + $0x5f0] sm:$0xff]
        %v1153 = vld [vmem:[#allocation11 + $0x5f8] sm:$0xff]
        %v1154 = vld [vmem:[#allocation11 + $0x600] sm:$0xff]
        %v1155 = vld [vmem:[#allocation11 + $0x608] sm:$0xff]
        %v1156 = vld [vmem:[#allocation11 + $0x610] sm:$0xff]
        %v1157 = vld [vmem:[#allocation11 + $0x618] sm:$0xff]
        %v1158 = vld [vmem:[#allocation11 + $0x620] sm:$0xff]
        %v1159 = vld [vmem:[#allocation11 + $0x628] sm:$0xff]
        %v1160 = vld [vmem:[#allocation11 + $0x630] sm:$0xff]
        %v1161 = vld [vmem:[#allocation11 + $0x638] sm:$0xff]
        %v1162 = vld [vmem:[#allocation11 + $0x640] sm:$0xff]
        %v1163 = vld [vmem:[#allocation11 + $0x648] sm:$0xff]
        %v1164 = vld [vmem:[#allocation11 + $0x650] sm:$0xff]
        %v1165 = vld [vmem:[#allocation11 + $0x658] sm:$0xff]
        %v1166 = vld [vmem:[#allocation11 + $0x660] sm:$0xff]
        %v1167 = vld [vmem:[#allocation11 + $0x668] sm:$0xff]
        %v1168 = vld [vmem:[#allocation11 + $0x670] sm:$0xff]
        %v1169 = vld [vmem:[#allocation11 + $0x678] sm:$0xff]
        %v1170 = vld [vmem:[#allocation11 + $0x680] sm:$0xff]
        %v1171 = vld [vmem:[#allocation11 + $0x688] sm:$0xff]
        %v1172 = vld [vmem:[#allocation11 + $0x690] sm:$0xff]
        %v1173 = vld [vmem:[#allocation11 + $0x698] sm:$0xff]
        %v1174 = vld [vmem:[#allocation11 + $0x6a0] sm:$0xff]
        %v1175 = vld [vmem:[#allocation11 + $0x6a8] sm:$0xff]
        %v1176 = vld [vmem:[#allocation11 + $0x6b0] sm:$0xff]
        %v1177 = vld [vmem:[#allocation11 + $0x6b8] sm:$0xff]
        %v1178 = vld [vmem:[#allocation11 + $0x6c0] sm:$0xff]
        %v1179 = vld [vmem:[#allocation11 + $0x6c8] sm:$0xff]
        %v1180 = vld [vmem:[#allocation11 + $0x6d0] sm:$0xff]
        %v1181 = vld [vmem:[#allocation11 + $0x6d8] sm:$0xff]
        %v1182 = vld [vmem:[#allocation11 + $0x6e0] sm:$0xff]
        %v1183 = vld [vmem:[#allocation11 + $0x6e8] sm:$0xff]
        %v1184 = vld [vmem:[#allocation11 + $0x6f0] sm:$0xff]
        %v1185 = vld [vmem:[#allocation11 + $0x6f8] sm:$0xff]
        %v1186 = vld [vmem:[#allocation11 + $0x700] sm:$0xff]
        %v1187 = vld [vmem:[#allocation11 + $0x708] sm:$0xff]
        %v1188 = vld [vmem:[#allocation11 + $0x710] sm:$0xff]
        %v1189 = vld [vmem:[#allocation11 + $0x718] sm:$0xff]
        %v1190 = vld [vmem:[#allocation11 + $0x720] sm:$0xff]
        %v1191 = vld [vmem:[#allocation11 + $0x728] sm:$0xff]
        %v1192 = vld [vmem:[#allocation11 + $0x730] sm:$0xff]
        %v1193 = vld [vmem:[#allocation11 + $0x738] sm:$0xff]
        %v1194 = vld [vmem:[#allocation11 + $0x740] sm:$0xff]
        %v1195 = vld [vmem:[#allocation11 + $0x748] sm:$0xff]
        %v1196 = vld [vmem:[#allocation11 + $0x750] sm:$0xff]
        %v1197 = vld [vmem:[#allocation11 + $0x758] sm:$0xff]
        %v1198 = vld [vmem:[#allocation11 + $0x760] sm:$0xff]
        %v1199 = vld [vmem:[#allocation11 + $0x768] sm:$0xff]
        %v1200 = vld [vmem:[#allocation11 + $0x770] sm:$0xff]
        %v1201 = vld [vmem:[#allocation11 + $0x778] sm:$0xff]
        %v1202 = vld [vmem:[#allocation11 + $0x780] sm:$0xff]
        %v1203 = vld [vmem:[#allocation11 + $0x788] sm:$0xff]
        %v1204 = vld [vmem:[#allocation11 + $0x790] sm:$0xff]
        %v1205 = vld [vmem:[#allocation11 + $0x798] sm:$0xff]
        %v1206 = vld [vmem:[#allocation11 + $0x7a0] sm:$0xff]
        %v1207 = vld [vmem:[#allocation11 + $0x7a8] sm:$0xff]
        %v1208 = vld [vmem:[#allocation11 + $0x7b0] sm:$0xff]
        %v1209 = vld [vmem:[#allocation11 + $0x7b8] sm:$0xff]
        %v1210 = vld [vmem:[#allocation11 + $0x7c0] sm:$0xff]
        %v1211 = vld [vmem:[#allocation11 + $0x7c8] sm:$0xff]
        %v1212 = vld [vmem:[#allocation11 + $0x7d0] sm:$0xff]
        %v1213 = vld [vmem:[#allocation11 + $0x7d8] sm:$0xff]
        %v1214 = vld [vmem:[#allocation11 + $0x7e0] sm:$0xff]
        %v1215 = vld [vmem:[#allocation11 + $0x7e8] sm:$0xff]
        %v1216 = vld [vmem:[#allocation11 + $0x7f0] sm:$0xff]
        %v1217 = vld [vmem:[#allocation11 + $0x7f8] sm:$0xff]
        %v1218 = vld [vmem:[#allocation11 + $0x800] sm:$0xff]
        %v1219 = vld [vmem:[#allocation11 + $0x808] sm:$0xff]
        %v1220 = vld [vmem:[#allocation11 + $0x810] sm:$0xff]
        %v1221 = vld [vmem:[#allocation11 + $0x818] sm:$0xff]
        %v1222 = vld [vmem:[#allocation11 + $0x820] sm:$0xff]
        %v1223 = vld [vmem:[#allocation11 + $0x828] sm:$0xff]
        %v1224 = vld [vmem:[#allocation11 + $0x830] sm:$0xff]
        %v1225 = vld [vmem:[#allocation11 + $0x838] sm:$0xff]
        %v1226 = vld [vmem:[#allocation11 + $0x840] sm:$0xff]
        %v1227 = vld [vmem:[#allocation11 + $0x848] sm:$0xff]
        %v1228 = vld [vmem:[#allocation11 + $0x850] sm:$0xff]
        %v1229 = vld [vmem:[#allocation11 + $0x858] sm:$0xff]
        %v1230 = vld [vmem:[#allocation11 + $0x860] sm:$0xff]
        %v1231 = vld [vmem:[#allocation11 + $0x868] sm:$0xff]
        %v1232 = vld [vmem:[#allocation11 + $0x870] sm:$0xff]
        %v1233 = vld [vmem:[#allocation11 + $0x878] sm:$0xff]
        %v1234 = vld [vmem:[#allocation11 + $0x880] sm:$0xff]
        %v1235 = vld [vmem:[#allocation11 + $0x888] sm:$0xff]
        %v1236 = vld [vmem:[#allocation11 + $0x890] sm:$0xff]
        %v1237 = vld [vmem:[#allocation11 + $0x898] sm:$0xff]
        %v1238 = vld [vmem:[#allocation11 + $0x8a0] sm:$0xff]
        %v1239 = vld [vmem:[#allocation11 + $0x8a8] sm:$0xff]
        %v1240 = vld [vmem:[#allocation11 + $0x8b0] sm:$0xff]
        %v1241 = vld [vmem:[#allocation11 + $0x8b8] sm:$0xff]
        %v1242 = vld [vmem:[#allocation11 + $0x8c0] sm:$0xff]
        %v1243 = vld [vmem:[#allocation11 + $0x8c8] sm:$0xff]
        %v1244 = vld [vmem:[#allocation11 + $0x8d0] sm:$0xff]
        %v1245 = vld [vmem:[#allocation11 + $0x8d8] sm:$0xff]
        %v1246 = vld [vmem:[#allocation11 + $0x8e0] sm:$0xff]
        %v1247 = vld [vmem:[#allocation11 + $0x8e8] sm:$0xff]
        %v1248 = vld [vmem:[#allocation11 + $0x8f0] sm:$0xff]
        %v1249 = vld [vmem:[#allocation11 + $0x8f8] sm:$0xff]
        %v1250 = vld [vmem:[#allocation11 + $0x900] sm:$0xff]
        %v1251 = vld [vmem:[#allocation11 + $0x908] sm:$0xff]
        %v1252 = vld [vmem:[#allocation11 + $0x910] sm:$0xff]
        %v1253 = vld [vmem:[#allocation11 + $0x918] sm:$0xff]
        %v1254 = vld [vmem:[#allocation11 + $0x920] sm:$0xff]
        %v1255 = vld [vmem:[#allocation11 + $0x928] sm:$0xff]
        %v1256 = vld [vmem:[#allocation11 + $0x930] sm:$0xff]
        %v1257 = vld [vmem:[#allocation11 + $0x938] sm:$0xff]
        %v1258 = vld [vmem:[#allocation11 + $0x940] sm:$0xff]
        %v1259 = vld [vmem:[#allocation11 + $0x948] sm:$0xff]
        %v1260 = vld [vmem:[#allocation11 + $0x950] sm:$0xff]
        %v1261 = vld [vmem:[#allocation11 + $0x958] sm:$0xff]
        %v1262 = vld [vmem:[#allocation11 + $0x960] sm:$0xff]
        %v1263 = vld [vmem:[#allocation11 + $0x968] sm:$0xff]
        %v1264 = vld [vmem:[#allocation11 + $0x970] sm:$0xff]
        %v1265 = vld [vmem:[#allocation11 + $0x978] sm:$0xff]
        %v1266 = vld [vmem:[#allocation11 + $0x980] sm:$0xff]
        %v1267 = vld [vmem:[#allocation11 + $0x988] sm:$0xff]
        %v1268 = vld [vmem:[#allocation11 + $0x990] sm:$0xff]
        %v1269 = vld [vmem:[#allocation11 + $0x998] sm:$0xff]
        %v1270 = vld [vmem:[#allocation11 + $0x9a0] sm:$0xff]
        %v1271 = vld [vmem:[#allocation11 + $0x9a8] sm:$0xff]
        %v1272 = vld [vmem:[#allocation11 + $0x9b0] sm:$0xff]
        %v1273 = vld [vmem:[#allocation11 + $0x9b8] sm:$0xff]
        %v1274 = vld [vmem:[#allocation11 + $0x9c0] sm:$0xff]
        %v1275 = vld [vmem:[#allocation11 + $0x9c8] sm:$0xff]
        %v1276 = vld [vmem:[#allocation11 + $0x9d0] sm:$0xff]
        %v1277 = vld [vmem:[#allocation11 + $0x9d8] sm:$0xff]
        %v1278 = vld [vmem:[#allocation11 + $0x9e0] sm:$0xff]
        %v1279 = vld [vmem:[#allocation11 + $0x9e8] sm:$0xff]
        %v1280 = vld [vmem:[#allocation11 + $0x9f0] sm:$0xff]
        %v1281 = vld [vmem:[#allocation11 + $0x9f8] sm:$0xff]
        %v1282 = vld [vmem:[#allocation13] sm:$0xff]
        %v1284 = vperm.slane %v1282, 0
        %v1285 = vperm.slane %v1282, 1
        %v1286 = vperm.slane %v1282, 2
        %v1287 = vperm.slane %v1282, 3
        %v1288 = vperm.slane %v1282, 4
        %v1289 = vperm.slane %v1282, 5
        %v1290 = vperm.slane %v1282, 6
        %v1291 = vperm.slane %v1282, 7
        %v1620 = vunpack.c.l.b16 %v962
        %v1621 = vunpack.c.h.b16 %v962
        %v1622 = vunpack.c.l.b16 %v963
        %v1623 = vunpack.c.h.b16 %v963
        %v1624 = vunpack.c.l.b16 %v964
        %v1625 = vunpack.c.h.b16 %v964
        %v1626 = vunpack.c.l.b16 %v965
        %v1627 = vunpack.c.h.b16 %v965
        %v1628 = vunpack.c.l.b16 %v966
        %v1629 = vunpack.c.h.b16 %v966
        %v1630 = vunpack.c.l.b16 %v967
        %v1631 = vunpack.c.h.b16 %v967
        %v1632 = vunpack.c.l.b16 %v968
        %v1633 = vunpack.c.h.b16 %v968
        %v1634 = vunpack.c.l.b16 %v969
        %v1635 = vunpack.c.h.b16 %v969
        %v1636 = vunpack.c.l.b16 %v970
        %v1637 = vunpack.c.h.b16 %v970
        %v1638 = vunpack.c.l.b16 %v971
        %v1639 = vunpack.c.h.b16 %v971
        %v1640 = vunpack.c.l.b16 %v972
        %v1641 = vunpack.c.h.b16 %v972
        %v1642 = vunpack.c.l.b16 %v973
        %v1643 = vunpack.c.h.b16 %v973
        %v1644 = vunpack.c.l.b16 %v974
        %v1645 = vunpack.c.h.b16 %v974
        %v1646 = vunpack.c.l.b16 %v975
        %v1647 = vunpack.c.h.b16 %v975
        %v1648 = vunpack.c.l.b16 %v976
        %v1649 = vunpack.c.h.b16 %v976
        %v1650 = vunpack.c.l.b16 %v977
        %v1651 = vunpack.c.h.b16 %v977
        %v1652 = vunpack.c.l.b16 %v978
        %v1653 = vunpack.c.h.b16 %v978
        %v1654 = vunpack.c.l.b16 %v979
        %v1655 = vunpack.c.h.b16 %v979
        %v1656 = vunpack.c.l.b16 %v980
        %v1657 = vunpack.c.h.b16 %v980
        %v1658 = vunpack.c.l.b16 %v981
        %v1659 = vunpack.c.h.b16 %v981
        %v1660 = vunpack.c.l.b16 %v982
        %v1661 = vunpack.c.h.b16 %v982
        %v1662 = vunpack.c.l.b16 %v983
        %v1663 = vunpack.c.h.b16 %v983
        %v1664 = vunpack.c.l.b16 %v984
        %v1665 = vunpack.c.h.b16 %v984
        %v1666 = vunpack.c.l.b16 %v985
        %v1667 = vunpack.c.h.b16 %v985
        %v1668 = vunpack.c.l.b16 %v986
        %v1669 = vunpack.c.h.b16 %v986
        %v1670 = vunpack.c.l.b16 %v987
        %v1671 = vunpack.c.h.b16 %v987
        %v1672 = vunpack.c.l.b16 %v988
        %v1673 = vunpack.c.h.b16 %v988
        %v1674 = vunpack.c.l.b16 %v989
        %v1675 = vunpack.c.h.b16 %v989
        %v1676 = vunpack.c.l.b16 %v990
        %v1677 = vunpack.c.h.b16 %v990
        %v1678 = vunpack.c.l.b16 %v991
        %v1679 = vunpack.c.h.b16 %v991
        %v1680 = vunpack.c.l.b16 %v992
        %v1681 = vunpack.c.h.b16 %v992
        %v1682 = vunpack.c.l.b16 %v993
        %v1683 = vunpack.c.h.b16 %v993
        %v1684 = vunpack.c.l.b16 %v994
        %v1685 = vunpack.c.h.b16 %v994
        %v1686 = vunpack.c.l.b16 %v995
        %v1687 = vunpack.c.h.b16 %v995
        %v1688 = vunpack.c.l.b16 %v996
        %v1689 = vunpack.c.h.b16 %v996
        %v1690 = vunpack.c.l.b16 %v997
        %v1691 = vunpack.c.h.b16 %v997
        %v1692 = vunpack.c.l.b16 %v998
        %v1693 = vunpack.c.h.b16 %v998
        %v1694 = vunpack.c.l.b16 %v999
        %v1695 = vunpack.c.h.b16 %v999
        %v1696 = vunpack.c.l.b16 %v1000
        %v1697 = vunpack.c.h.b16 %v1000
        %v1698 = vunpack.c.l.b16 %v1001
        %v1699 = vunpack.c.h.b16 %v1001
        %v1700 = vunpack.c.l.b16 %v1002
        %v1701 = vunpack.c.h.b16 %v1002
        %v1702 = vunpack.c.l.b16 %v1003
        %v1703 = vunpack.c.h.b16 %v1003
        %v1704 = vunpack.c.l.b16 %v1004
        %v1705 = vunpack.c.h.b16 %v1004
        %v1706 = vunpack.c.l.b16 %v1005
        %v1707 = vunpack.c.h.b16 %v1005
        %v1708 = vunpack.c.l.b16 %v1006
        %v1709 = vunpack.c.h.b16 %v1006
        %v1710 = vunpack.c.l.b16 %v1007
        %v1711 = vunpack.c.h.b16 %v1007
        %v1712 = vunpack.c.l.b16 %v1008
        %v1713 = vunpack.c.h.b16 %v1008
        %v1714 = vunpack.c.l.b16 %v1009
        %v1715 = vunpack.c.h.b16 %v1009
        %v1716 = vunpack.c.l.b16 %v1010
        %v1717 = vunpack.c.h.b16 %v1010
        %v1718 = vunpack.c.l.b16 %v1011
        %v1719 = vunpack.c.h.b16 %v1011
        %v1720 = vunpack.c.l.b16 %v1012
        %v1721 = vunpack.c.h.b16 %v1012
        %v1722 = vunpack.c.l.b16 %v1013
        %v1723 = vunpack.c.h.b16 %v1013
        %v1724 = vunpack.c.l.b16 %v1014
        %v1725 = vunpack.c.h.b16 %v1014
        %v1726 = vunpack.c.l.b16 %v1015
        %v1727 = vunpack.c.h.b16 %v1015
        %v1728 = vunpack.c.l.b16 %v1016
        %v1729 = vunpack.c.h.b16 %v1016
        %v1730 = vunpack.c.l.b16 %v1017
        %v1731 = vunpack.c.h.b16 %v1017
        %v1732 = vunpack.c.l.b16 %v1018
        %v1733 = vunpack.c.h.b16 %v1018
        %v1734 = vunpack.c.l.b16 %v1019
        %v1735 = vunpack.c.h.b16 %v1019
        %v1736 = vunpack.c.l.b16 %v1020
        %v1737 = vunpack.c.h.b16 %v1020
        %v1738 = vunpack.c.l.b16 %v1021
        %v1739 = vunpack.c.h.b16 %v1021
        %v1740 = vunpack.c.l.b16 %v1022
        %v1741 = vunpack.c.h.b16 %v1022
        %v1742 = vunpack.c.l.b16 %v1023
        %v1743 = vunpack.c.h.b16 %v1023
        %v1744 = vunpack.c.l.b16 %v1024
        %v1745 = vunpack.c.h.b16 %v1024
        %v1746 = vunpack.c.l.b16 %v1025
        %v1747 = vunpack.c.h.b16 %v1025
        %v1748 = vunpack.c.l.b16 %v1026
        %v1749 = vunpack.c.h.b16 %v1026
        %v1750 = vunpack.c.l.b16 %v1027
        %v1751 = vunpack.c.h.b16 %v1027
        %v1752 = vunpack.c.l.b16 %v1028
        %v1753 = vunpack.c.h.b16 %v1028
        %v1754 = vunpack.c.l.b16 %v1029
        %v1755 = vunpack.c.h.b16 %v1029
        %v1756 = vunpack.c.l.b16 %v1030
        %v1757 = vunpack.c.h.b16 %v1030
        %v1758 = vunpack.c.l.b16 %v1031
        %v1759 = vunpack.c.h.b16 %v1031
        %v1760 = vunpack.c.l.b16 %v1032
        %v1761 = vunpack.c.h.b16 %v1032
        %v1762 = vunpack.c.l.b16 %v1033
        %v1763 = vunpack.c.h.b16 %v1033
        %v1764 = vunpack.c.l.b16 %v1034
        %v1765 = vunpack.c.h.b16 %v1034
        %v1766 = vunpack.c.l.b16 %v1035
        %v1767 = vunpack.c.h.b16 %v1035
        %v1768 = vunpack.c.l.b16 %v1036
        %v1769 = vunpack.c.h.b16 %v1036
        %v1770 = vunpack.c.l.b16 %v1037
        %v1771 = vunpack.c.h.b16 %v1037
        %v1772 = vunpack.c.l.b16 %v1038
        %v1773 = vunpack.c.h.b16 %v1038
        %v1774 = vunpack.c.l.b16 %v1039
        %v1775 = vunpack.c.h.b16 %v1039
        %v1776 = vunpack.c.l.b16 %v1040
        %v1777 = vunpack.c.h.b16 %v1040
        %v1778 = vunpack.c.l.b16 %v1041
        %v1779 = vunpack.c.h.b16 %v1041
        %v1780 = vunpack.c.l.b16 %v1042
        %v1781 = vunpack.c.h.b16 %v1042
        %v1782 = vunpack.c.l.b16 %v1043
        %v1783 = vunpack.c.h.b16 %v1043
        %v1784 = vunpack.c.l.b16 %v1044
        %v1785 = vunpack.c.h.b16 %v1044
        %v1786 = vunpack.c.l.b16 %v1045
        %v1787 = vunpack.c.h.b16 %v1045
        %v1788 = vunpack.c.l.b16 %v1046
        %v1789 = vunpack.c.h.b16 %v1046
        %v1790 = vunpack.c.l.b16 %v1047
        %v1791 = vunpack.c.h.b16 %v1047
        %v1792 = vunpack.c.l.b16 %v1048
        %v1793 = vunpack.c.h.b16 %v1048
        %v1794 = vunpack.c.l.b16 %v1049
        %v1795 = vunpack.c.h.b16 %v1049
        %v1796 = vunpack.c.l.b16 %v1050
        %v1797 = vunpack.c.h.b16 %v1050
        %v1798 = vunpack.c.l.b16 %v1051
        %v1799 = vunpack.c.h.b16 %v1051
        %v1800 = vunpack.c.l.b16 %v1052
        %v1801 = vunpack.c.h.b16 %v1052
        %v1802 = vunpack.c.l.b16 %v1053
        %v1803 = vunpack.c.h.b16 %v1053
        %v1804 = vunpack.c.l.b16 %v1054
        %v1805 = vunpack.c.h.b16 %v1054
        %v1806 = vunpack.c.l.b16 %v1055
        %v1807 = vunpack.c.h.b16 %v1055
        %v1808 = vunpack.c.l.b16 %v1056
        %v1809 = vunpack.c.h.b16 %v1056
        %v1810 = vunpack.c.l.b16 %v1057
        %v1811 = vunpack.c.h.b16 %v1057
        %v1812 = vunpack.c.l.b16 %v1058
        %v1813 = vunpack.c.h.b16 %v1058
        %v1814 = vunpack.c.l.b16 %v1059
        %v1815 = vunpack.c.h.b16 %v1059
        %v1816 = vunpack.c.l.b16 %v1060
        %v1817 = vunpack.c.h.b16 %v1060
        %v1818 = vunpack.c.l.b16 %v1061
        %v1819 = vunpack.c.h.b16 %v1061
        %v1820 = vunpack.c.l.b16 %v1062
        %v1821 = vunpack.c.h.b16 %v1062
        %v1822 = vunpack.c.l.b16 %v1063
        %v1823 = vunpack.c.h.b16 %v1063
        %v1824 = vunpack.c.l.b16 %v1064
        %v1825 = vunpack.c.h.b16 %v1064
        %v1826 = vunpack.c.l.b16 %v1065
        %v1827 = vunpack.c.h.b16 %v1065
        %v1828 = vunpack.c.l.b16 %v1066
        %v1829 = vunpack.c.h.b16 %v1066
        %v1830 = vunpack.c.l.b16 %v1067
        %v1831 = vunpack.c.h.b16 %v1067
        %v1832 = vunpack.c.l.b16 %v1068
        %v1833 = vunpack.c.h.b16 %v1068
        %v1834 = vunpack.c.l.b16 %v1069
        %v1835 = vunpack.c.h.b16 %v1069
        %v1836 = vunpack.c.l.b16 %v1070
        %v1837 = vunpack.c.h.b16 %v1070
        %v1838 = vunpack.c.l.b16 %v1071
        %v1839 = vunpack.c.h.b16 %v1071
        %v1840 = vunpack.c.l.b16 %v1072
        %v1841 = vunpack.c.h.b16 %v1072
        %v1842 = vunpack.c.l.b16 %v1073
        %v1843 = vunpack.c.h.b16 %v1073
        %v1844 = vunpack.c.l.b16 %v1074
        %v1845 = vunpack.c.h.b16 %v1074
        %v1846 = vunpack.c.l.b16 %v1075
        %v1847 = vunpack.c.h.b16 %v1075
        %v1848 = vunpack.c.l.b16 %v1076
        %v1849 = vunpack.c.h.b16 %v1076
        %v1850 = vunpack.c.l.b16 %v1077
        %v1851 = vunpack.c.h.b16 %v1077
        %v1852 = vunpack.c.l.b16 %v1078
        %v1853 = vunpack.c.h.b16 %v1078
        %v1854 = vunpack.c.l.b16 %v1079
        %v1855 = vunpack.c.h.b16 %v1079
        %v1856 = vunpack.c.l.b16 %v1080
        %v1857 = vunpack.c.h.b16 %v1080
        %v1858 = vunpack.c.l.b16 %v1081
        %v1859 = vunpack.c.h.b16 %v1081
        %v1860 = vunpack.c.l.b16 %v1082
        %v1861 = vunpack.c.h.b16 %v1082
        %v1862 = vunpack.c.l.b16 %v1083
        %v1863 = vunpack.c.h.b16 %v1083
        %v1864 = vunpack.c.l.b16 %v1084
        %v1865 = vunpack.c.h.b16 %v1084
        %v1866 = vunpack.c.l.b16 %v1085
        %v1867 = vunpack.c.h.b16 %v1085
        %v1868 = vunpack.c.l.b16 %v1086
        %v1869 = vunpack.c.h.b16 %v1086
        %v1870 = vunpack.c.l.b16 %v1087
        %v1871 = vunpack.c.h.b16 %v1087
        %v1872 = vunpack.c.l.b16 %v1088
        %v1873 = vunpack.c.h.b16 %v1088
        %v1874 = vunpack.c.l.b16 %v1089
        %v1875 = vunpack.c.h.b16 %v1089
        %v1876 = vunpack.c.l.b16 %v1090
        %v1877 = vunpack.c.h.b16 %v1090
        %v1878 = vunpack.c.l.b16 %v1091
        %v1879 = vunpack.c.h.b16 %v1091
        %v1880 = vunpack.c.l.b16 %v1092
        %v1881 = vunpack.c.h.b16 %v1092
        %v1882 = vunpack.c.l.b16 %v1093
        %v1883 = vunpack.c.h.b16 %v1093
        %v1884 = vunpack.c.l.b16 %v1094
        %v1885 = vunpack.c.h.b16 %v1094
        %v1886 = vunpack.c.l.b16 %v1095
        %v1887 = vunpack.c.h.b16 %v1095
        %v1888 = vunpack.c.l.b16 %v1096
        %v1889 = vunpack.c.h.b16 %v1096
        %v1890 = vunpack.c.l.b16 %v1097
        %v1891 = vunpack.c.h.b16 %v1097
        %v1892 = vunpack.c.l.b16 %v1098
        %v1893 = vunpack.c.h.b16 %v1098
        %v1894 = vunpack.c.l.b16 %v1099
        %v1895 = vunpack.c.h.b16 %v1099
        %v1896 = vunpack.c.l.b16 %v1100
        %v1897 = vunpack.c.h.b16 %v1100
        %v1898 = vunpack.c.l.b16 %v1101
        %v1899 = vunpack.c.h.b16 %v1101
        %v1900 = vunpack.c.l.b16 %v1102
        %v1901 = vunpack.c.h.b16 %v1102
        %v1902 = vunpack.c.l.b16 %v1103
        %v1903 = vunpack.c.h.b16 %v1103
        %v1904 = vunpack.c.l.b16 %v1104
        %v1905 = vunpack.c.h.b16 %v1104
        %v1906 = vunpack.c.l.b16 %v1105
        %v1907 = vunpack.c.h.b16 %v1105
        %v1908 = vunpack.c.l.b16 %v1106
        %v1909 = vunpack.c.h.b16 %v1106
        %v1910 = vunpack.c.l.b16 %v1107
        %v1911 = vunpack.c.h.b16 %v1107
        %v1912 = vunpack.c.l.b16 %v1108
        %v1913 = vunpack.c.h.b16 %v1108
        %v1914 = vunpack.c.l.b16 %v1109
        %v1915 = vunpack.c.h.b16 %v1109
        %v1916 = vunpack.c.l.b16 %v1110
        %v1917 = vunpack.c.h.b16 %v1110
        %v1918 = vunpack.c.l.b16 %v1111
        %v1919 = vunpack.c.h.b16 %v1111
        %v1920 = vunpack.c.l.b16 %v1112
        %v1921 = vunpack.c.h.b16 %v1112
        %v1922 = vunpack.c.l.b16 %v1113
        %v1923 = vunpack.c.h.b16 %v1113
        %v1924 = vunpack.c.l.b16 %v1114
        %v1925 = vunpack.c.h.b16 %v1114
        %v1926 = vunpack.c.l.b16 %v1115
        %v1927 = vunpack.c.h.b16 %v1115
        %v1928 = vunpack.c.l.b16 %v1116
        %v1929 = vunpack.c.h.b16 %v1116
        %v1930 = vunpack.c.l.b16 %v1117
        %v1931 = vunpack.c.h.b16 %v1117
        %v1932 = vunpack.c.l.b16 %v1118
        %v1933 = vunpack.c.h.b16 %v1118
        %v1934 = vunpack.c.l.b16 %v1119
        %v1935 = vunpack.c.h.b16 %v1119
        %v1936 = vunpack.c.l.b16 %v1120
        %v1937 = vunpack.c.h.b16 %v1120
        %v1938 = vunpack.c.l.b16 %v1121
        %v1939 = vunpack.c.h.b16 %v1121
        %v1940 = vunpack.c.l.b16 %v1122
        %v1941 = vunpack.c.h.b16 %v1122
        %v1942 = vunpack.c.l.b16 %v1123
        %v1943 = vunpack.c.h.b16 %v1123
        %v1944 = vunpack.c.l.b16 %v1124
        %v1945 = vunpack.c.h.b16 %v1124
        %v1946 = vunpack.c.l.b16 %v1125
        %v1947 = vunpack.c.h.b16 %v1125
        %v1948 = vunpack.c.l.b16 %v1126
        %v1949 = vunpack.c.h.b16 %v1126
        %v1950 = vunpack.c.l.b16 %v1127
        %v1951 = vunpack.c.h.b16 %v1127
        %v1952 = vunpack.c.l.b16 %v1128
        %v1953 = vunpack.c.h.b16 %v1128
        %v1954 = vunpack.c.l.b16 %v1129
        %v1955 = vunpack.c.h.b16 %v1129
        %v1956 = vunpack.c.l.b16 %v1130
        %v1957 = vunpack.c.h.b16 %v1130
        %v1958 = vunpack.c.l.b16 %v1131
        %v1959 = vunpack.c.h.b16 %v1131
        %v1960 = vunpack.c.l.b16 %v1132
        %v1961 = vunpack.c.h.b16 %v1132
        %v1962 = vunpack.c.l.b16 %v1133
        %v1963 = vunpack.c.h.b16 %v1133
        %v1964 = vunpack.c.l.b16 %v1134
        %v1965 = vunpack.c.h.b16 %v1134
        %v1966 = vunpack.c.l.b16 %v1135
        %v1967 = vunpack.c.h.b16 %v1135
        %v1968 = vunpack.c.l.b16 %v1136
        %v1969 = vunpack.c.h.b16 %v1136
        %v1970 = vunpack.c.l.b16 %v1137
        %v1971 = vunpack.c.h.b16 %v1137
        %v1972 = vunpack.c.l.b16 %v1138
        %v1973 = vunpack.c.h.b16 %v1138
        %v1974 = vunpack.c.l.b16 %v1139
        %v1975 = vunpack.c.h.b16 %v1139
        %v1976 = vunpack.c.l.b16 %v1140
        %v1977 = vunpack.c.h.b16 %v1140
        %v1978 = vunpack.c.l.b16 %v1141
        %v1979 = vunpack.c.h.b16 %v1141
        %v1980 = vunpack.c.l.b16 %v1142
        %v1981 = vunpack.c.h.b16 %v1142
        %v1982 = vunpack.c.l.b16 %v1143
        %v1983 = vunpack.c.h.b16 %v1143
        %v1984 = vunpack.c.l.b16 %v1144
        %v1985 = vunpack.c.h.b16 %v1144
        %v1986 = vunpack.c.l.b16 %v1145
        %v1987 = vunpack.c.h.b16 %v1145
        %v1988 = vunpack.c.l.b16 %v1146
        %v1989 = vunpack.c.h.b16 %v1146
        %v1990 = vunpack.c.l.b16 %v1147
        %v1991 = vunpack.c.h.b16 %v1147
        %v1992 = vunpack.c.l.b16 %v1148
        %v1993 = vunpack.c.h.b16 %v1148
        %v1994 = vunpack.c.l.b16 %v1149
        %v1995 = vunpack.c.h.b16 %v1149
        %v1996 = vunpack.c.l.b16 %v1150
        %v1997 = vunpack.c.h.b16 %v1150
        %v1998 = vunpack.c.l.b16 %v1151
        %v1999 = vunpack.c.h.b16 %v1151
        %v2000 = vunpack.c.l.b16 %v1152
        %v2001 = vunpack.c.h.b16 %v1152
        %v2002 = vunpack.c.l.b16 %v1153
        %v2003 = vunpack.c.h.b16 %v1153
        %v2004 = vunpack.c.l.b16 %v1154
        %v2005 = vunpack.c.h.b16 %v1154
        %v2006 = vunpack.c.l.b16 %v1155
        %v2007 = vunpack.c.h.b16 %v1155
        %v2008 = vunpack.c.l.b16 %v1156
        %v2009 = vunpack.c.h.b16 %v1156
        %v2010 = vunpack.c.l.b16 %v1157
        %v2011 = vunpack.c.h.b16 %v1157
        %v2012 = vunpack.c.l.b16 %v1158
        %v2013 = vunpack.c.h.b16 %v1158
        %v2014 = vunpack.c.l.b16 %v1159
        %v2015 = vunpack.c.h.b16 %v1159
        %v2016 = vunpack.c.l.b16 %v1160
        %v2017 = vunpack.c.h.b16 %v1160
        %v2018 = vunpack.c.l.b16 %v1161
        %v2019 = vunpack.c.h.b16 %v1161
        %v2020 = vunpack.c.l.b16 %v1162
        %v2021 = vunpack.c.h.b16 %v1162
        %v2022 = vunpack.c.l.b16 %v1163
        %v2023 = vunpack.c.h.b16 %v1163
        %v2024 = vunpack.c.l.b16 %v1164
        %v2025 = vunpack.c.h.b16 %v1164
        %v2026 = vunpack.c.l.b16 %v1165
        %v2027 = vunpack.c.h.b16 %v1165
        %v2028 = vunpack.c.l.b16 %v1166
        %v2029 = vunpack.c.h.b16 %v1166
        %v2030 = vunpack.c.l.b16 %v1167
        %v2031 = vunpack.c.h.b16 %v1167
        %v2032 = vunpack.c.l.b16 %v1168
        %v2033 = vunpack.c.h.b16 %v1168
        %v2034 = vunpack.c.l.b16 %v1169
        %v2035 = vunpack.c.h.b16 %v1169
        %v2036 = vunpack.c.l.b16 %v1170
        %v2037 = vunpack.c.h.b16 %v1170
        %v2038 = vunpack.c.l.b16 %v1171
        %v2039 = vunpack.c.h.b16 %v1171
        %v2040 = vunpack.c.l.b16 %v1172
        %v2041 = vunpack.c.h.b16 %v1172
        %v2042 = vunpack.c.l.b16 %v1173
        %v2043 = vunpack.c.h.b16 %v1173
        %v2044 = vunpack.c.l.b16 %v1174
        %v2045 = vunpack.c.h.b16 %v1174
        %v2046 = vunpack.c.l.b16 %v1175
        %v2047 = vunpack.c.h.b16 %v1175
        %v2048 = vunpack.c.l.b16 %v1176
        %v2049 = vunpack.c.h.b16 %v1176
        %v2050 = vunpack.c.l.b16 %v1177
        %v2051 = vunpack.c.h.b16 %v1177
        %v2052 = vunpack.c.l.b16 %v1178
        %v2053 = vunpack.c.h.b16 %v1178
        %v2054 = vunpack.c.l.b16 %v1179
        %v2055 = vunpack.c.h.b16 %v1179
        %v2056 = vunpack.c.l.b16 %v1180
        %v2057 = vunpack.c.h.b16 %v1180
        %v2058 = vunpack.c.l.b16 %v1181
        %v2059 = vunpack.c.h.b16 %v1181
        %v2060 = vunpack.c.l.b16 %v1182
        %v2061 = vunpack.c.h.b16 %v1182
        %v2062 = vunpack.c.l.b16 %v1183
        %v2063 = vunpack.c.h.b16 %v1183
        %v2064 = vunpack.c.l.b16 %v1184
        %v2065 = vunpack.c.h.b16 %v1184
        %v2066 = vunpack.c.l.b16 %v1185
        %v2067 = vunpack.c.h.b16 %v1185
        %v2068 = vunpack.c.l.b16 %v1186
        %v2069 = vunpack.c.h.b16 %v1186
        %v2070 = vunpack.c.l.b16 %v1187
        %v2071 = vunpack.c.h.b16 %v1187
        %v2072 = vunpack.c.l.b16 %v1188
        %v2073 = vunpack.c.h.b16 %v1188
        %v2074 = vunpack.c.l.b16 %v1189
        %v2075 = vunpack.c.h.b16 %v1189
        %v2076 = vunpack.c.l.b16 %v1190
        %v2077 = vunpack.c.h.b16 %v1190
        %v2078 = vunpack.c.l.b16 %v1191
        %v2079 = vunpack.c.h.b16 %v1191
        %v2080 = vunpack.c.l.b16 %v1192
        %v2081 = vunpack.c.h.b16 %v1192
        %v2082 = vunpack.c.l.b16 %v1193
        %v2083 = vunpack.c.h.b16 %v1193
        %v2084 = vunpack.c.l.b16 %v1194
        %v2085 = vunpack.c.h.b16 %v1194
        %v2086 = vunpack.c.l.b16 %v1195
        %v2087 = vunpack.c.h.b16 %v1195
        %v2088 = vunpack.c.l.b16 %v1196
        %v2089 = vunpack.c.h.b16 %v1196
        %v2090 = vunpack.c.l.b16 %v1197
        %v2091 = vunpack.c.h.b16 %v1197
        %v2092 = vunpack.c.l.b16 %v1198
        %v2093 = vunpack.c.h.b16 %v1198
        %v2094 = vunpack.c.l.b16 %v1199
        %v2095 = vunpack.c.h.b16 %v1199
        %v2096 = vunpack.c.l.b16 %v1200
        %v2097 = vunpack.c.h.b16 %v1200
        %v2098 = vunpack.c.l.b16 %v1201
        %v2099 = vunpack.c.h.b16 %v1201
        %v2100 = vunpack.c.l.b16 %v1202
        %v2101 = vunpack.c.h.b16 %v1202
        %v2102 = vunpack.c.l.b16 %v1203
        %v2103 = vunpack.c.h.b16 %v1203
        %v2104 = vunpack.c.l.b16 %v1204
        %v2105 = vunpack.c.h.b16 %v1204
        %v2106 = vunpack.c.l.b16 %v1205
        %v2107 = vunpack.c.h.b16 %v1205
        %v2108 = vunpack.c.l.b16 %v1206
        %v2109 = vunpack.c.h.b16 %v1206
        %v2110 = vunpack.c.l.b16 %v1207
        %v2111 = vunpack.c.h.b16 %v1207
        %v2112 = vunpack.c.l.b16 %v1208
        %v2113 = vunpack.c.h.b16 %v1208
        %v2114 = vunpack.c.l.b16 %v1209
        %v2115 = vunpack.c.h.b16 %v1209
        %v2116 = vunpack.c.l.b16 %v1210
        %v2117 = vunpack.c.h.b16 %v1210
        %v2118 = vunpack.c.l.b16 %v1211
        %v2119 = vunpack.c.h.b16 %v1211
        %v2120 = vunpack.c.l.b16 %v1212
        %v2121 = vunpack.c.h.b16 %v1212
        %v2122 = vunpack.c.l.b16 %v1213
        %v2123 = vunpack.c.h.b16 %v1213
        %v2124 = vunpack.c.l.b16 %v1214
        %v2125 = vunpack.c.h.b16 %v1214
        %v2126 = vunpack.c.l.b16 %v1215
        %v2127 = vunpack.c.h.b16 %v1215
        %v2128 = vunpack.c.l.b16 %v1216
        %v2129 = vunpack.c.h.b16 %v1216
        %v2130 = vunpack.c.l.b16 %v1217
        %v2131 = vunpack.c.h.b16 %v1217
        %v2132 = vunpack.c.l.b16 %v1218
        %v2133 = vunpack.c.h.b16 %v1218
        %v2134 = vunpack.c.l.b16 %v1219
        %v2135 = vunpack.c.h.b16 %v1219
        %v2136 = vunpack.c.l.b16 %v1220
        %v2137 = vunpack.c.h.b16 %v1220
        %v2138 = vunpack.c.l.b16 %v1221
        %v2139 = vunpack.c.h.b16 %v1221
        %v2140 = vunpack.c.l.b16 %v1222
        %v2141 = vunpack.c.h.b16 %v1222
        %v2142 = vunpack.c.l.b16 %v1223
        %v2143 = vunpack.c.h.b16 %v1223
        %v2144 = vunpack.c.l.b16 %v1224
        %v2145 = vunpack.c.h.b16 %v1224
        %v2146 = vunpack.c.l.b16 %v1225
        %v2147 = vunpack.c.h.b16 %v1225
        %v2148 = vunpack.c.l.b16 %v1226
        %v2149 = vunpack.c.h.b16 %v1226
        %v2150 = vunpack.c.l.b16 %v1227
        %v2151 = vunpack.c.h.b16 %v1227
        %v2152 = vunpack.c.l.b16 %v1228
        %v2153 = vunpack.c.h.b16 %v1228
        %v2154 = vunpack.c.l.b16 %v1229
        %v2155 = vunpack.c.h.b16 %v1229
        %v2156 = vunpack.c.l.b16 %v1230
        %v2157 = vunpack.c.h.b16 %v1230
        %v2158 = vunpack.c.l.b16 %v1231
        %v2159 = vunpack.c.h.b16 %v1231
        %v2160 = vunpack.c.l.b16 %v1232
        %v2161 = vunpack.c.h.b16 %v1232
        %v2162 = vunpack.c.l.b16 %v1233
        %v2163 = vunpack.c.h.b16 %v1233
        %v2164 = vunpack.c.l.b16 %v1234
        %v2165 = vunpack.c.h.b16 %v1234
        %v2166 = vunpack.c.l.b16 %v1235
        %v2167 = vunpack.c.h.b16 %v1235
        %v2168 = vunpack.c.l.b16 %v1236
        %v2169 = vunpack.c.h.b16 %v1236
        %v2170 = vunpack.c.l.b16 %v1237
        %v2171 = vunpack.c.h.b16 %v1237
        %v2172 = vunpack.c.l.b16 %v1238
        %v2173 = vunpack.c.h.b16 %v1238
        %v2174 = vunpack.c.l.b16 %v1239
        %v2175 = vunpack.c.h.b16 %v1239
        %v2176 = vunpack.c.l.b16 %v1240
        %v2177 = vunpack.c.h.b16 %v1240
        %v2178 = vunpack.c.l.b16 %v1241
        %v2179 = vunpack.c.h.b16 %v1241
        %v2180 = vunpack.c.l.b16 %v1242
        %v2181 = vunpack.c.h.b16 %v1242
        %v2182 = vunpack.c.l.b16 %v1243
        %v2183 = vunpack.c.h.b16 %v1243
        %v2184 = vunpack.c.l.b16 %v1244
        %v2185 = vunpack.c.h.b16 %v1244
        %v2186 = vunpack.c.l.b16 %v1245
        %v2187 = vunpack.c.h.b16 %v1245
        %v2188 = vunpack.c.l.b16 %v1246
        %v2189 = vunpack.c.h.b16 %v1246
        %v2190 = vunpack.c.l.b16 %v1247
        %v2191 = vunpack.c.h.b16 %v1247
        %v2192 = vunpack.c.l.b16 %v1248
        %v2193 = vunpack.c.h.b16 %v1248
        %v2194 = vunpack.c.l.b16 %v1249
        %v2195 = vunpack.c.h.b16 %v1249
        %v2196 = vunpack.c.l.b16 %v1250
        %v2197 = vunpack.c.h.b16 %v1250
        %v2198 = vunpack.c.l.b16 %v1251
        %v2199 = vunpack.c.h.b16 %v1251
        %v2200 = vunpack.c.l.b16 %v1252
        %v2201 = vunpack.c.h.b16 %v1252
        %v2202 = vunpack.c.l.b16 %v1253
        %v2203 = vunpack.c.h.b16 %v1253
        %v2204 = vunpack.c.l.b16 %v1254
        %v2205 = vunpack.c.h.b16 %v1254
        %v2206 = vunpack.c.l.b16 %v1255
        %v2207 = vunpack.c.h.b16 %v1255
        %v2208 = vunpack.c.l.b16 %v1256
        %v2209 = vunpack.c.h.b16 %v1256
        %v2210 = vunpack.c.l.b16 %v1257
        %v2211 = vunpack.c.h.b16 %v1257
        %v2212 = vunpack.c.l.b16 %v1258
        %v2213 = vunpack.c.h.b16 %v1258
        %v2214 = vunpack.c.l.b16 %v1259
        %v2215 = vunpack.c.h.b16 %v1259
        %v2216 = vunpack.c.l.b16 %v1260
        %v2217 = vunpack.c.h.b16 %v1260
        %v2218 = vunpack.c.l.b16 %v1261
        %v2219 = vunpack.c.h.b16 %v1261
        %v2220 = vunpack.c.l.b16 %v1262
        %v2221 = vunpack.c.h.b16 %v1262
        %v2222 = vunpack.c.l.b16 %v1263
        %v2223 = vunpack.c.h.b16 %v1263
        %v2224 = vunpack.c.l.b16 %v1264
        %v2225 = vunpack.c.h.b16 %v1264
        %v2226 = vunpack.c.l.b16 %v1265
        %v2227 = vunpack.c.h.b16 %v1265
        %v2228 = vunpack.c.l.b16 %v1266
        %v2229 = vunpack.c.h.b16 %v1266
        %v2230 = vunpack.c.l.b16 %v1267
        %v2231 = vunpack.c.h.b16 %v1267
        %v2232 = vunpack.c.l.b16 %v1268
        %v2233 = vunpack.c.h.b16 %v1268
        %v2234 = vunpack.c.l.b16 %v1269
        %v2235 = vunpack.c.h.b16 %v1269
        %v2236 = vunpack.c.l.b16 %v1270
        %v2237 = vunpack.c.h.b16 %v1270
        %v2238 = vunpack.c.l.b16 %v1271
        %v2239 = vunpack.c.h.b16 %v1271
        %v2240 = vunpack.c.l.b16 %v1272
        %v2241 = vunpack.c.h.b16 %v1272
        %v2242 = vunpack.c.l.b16 %v1273
        %v2243 = vunpack.c.h.b16 %v1273
        %v2244 = vunpack.c.l.b16 %v1274
        %v2245 = vunpack.c.h.b16 %v1274
        %v2246 = vunpack.c.l.b16 %v1275
        %v2247 = vunpack.c.h.b16 %v1275
        %v2248 = vunpack.c.l.b16 %v1276
        %v2249 = vunpack.c.h.b16 %v1276
        %v2250 = vunpack.c.l.b16 %v1277
        %v2251 = vunpack.c.h.b16 %v1277
        %v2252 = vunpack.c.l.b16 %v1278
        %v2253 = vunpack.c.h.b16 %v1278
        %v2254 = vunpack.c.l.b16 %v1279
        %v2255 = vunpack.c.h.b16 %v1279
        %v2256 = vunpack.c.l.b16 %v1280
        %v2257 = vunpack.c.h.b16 %v1280
        %v2258 = vunpack.c.l.b16 %v1281
        %v2259 = vunpack.c.h.b16 %v1281
        %v2260 = vpack.c.b16 %v1628, %v1620
        %v2261 = vpack.c.b16 %v1629, %v1621
        %v2262 = vpack.c.b16 %v1630, %v1622
        %v2263 = vpack.c.b16 %v1631, %v1623
        %v2264 = vpack.c.b16 %v1632, %v1624
        %v2265 = vpack.c.b16 %v1633, %v1625
        %v2266 = vpack.c.b16 %v1634, %v1626
        %v2267 = vpack.c.b16 %v1635, %v1627
        %v2268 = vpack.c.b16 %v1644, %v1636
        %v2269 = vpack.c.b16 %v1645, %v1637
        %v2270 = vpack.c.b16 %v1646, %v1638
        %v2271 = vpack.c.b16 %v1647, %v1639
        %v2272 = vpack.c.b16 %v1648, %v1640
        %v2273 = vpack.c.b16 %v1649, %v1641
        %v2274 = vpack.c.b16 %v1650, %v1642
        %v2275 = vpack.c.b16 %v1651, %v1643
        %v2276 = vpack.c.b16 %v1660, %v1652
        %v2277 = vpack.c.b16 %v1661, %v1653
        %v2278 = vpack.c.b16 %v1662, %v1654
        %v2279 = vpack.c.b16 %v1663, %v1655
        %v2280 = vpack.c.b16 %v1664, %v1656
        %v2281 = vpack.c.b16 %v1665, %v1657
        %v2282 = vpack.c.b16 %v1666, %v1658
        %v2283 = vpack.c.b16 %v1667, %v1659
        %v2284 = vpack.c.b16 %v1676, %v1668
        %v2285 = vpack.c.b16 %v1677, %v1669
        %v2286 = vpack.c.b16 %v1678, %v1670
        %v2287 = vpack.c.b16 %v1679, %v1671
        %v2288 = vpack.c.b16 %v1680, %v1672
        %v2289 = vpack.c.b16 %v1681, %v1673
        %v2290 = vpack.c.b16 %v1682, %v1674
        %v2291 = vpack.c.b16 %v1683, %v1675
        %v2292 = vpack.c.b16 %v1692, %v1684
        %v2293 = vpack.c.b16 %v1693, %v1685
        %v2294 = vpack.c.b16 %v1694, %v1686
        %v2295 = vpack.c.b16 %v1695, %v1687
        %v2296 = vpack.c.b16 %v1696, %v1688
        %v2297 = vpack.c.b16 %v1697, %v1689
        %v2298 = vpack.c.b16 %v1698, %v1690
        %v2299 = vpack.c.b16 %v1699, %v1691
        %v2300 = vpack.c.b16 %v1708, %v1700
        %v2301 = vpack.c.b16 %v1709, %v1701
        %v2302 = vpack.c.b16 %v1710, %v1702
        %v2303 = vpack.c.b16 %v1711, %v1703
        %v2304 = vpack.c.b16 %v1712, %v1704
        %v2305 = vpack.c.b16 %v1713, %v1705
        %v2306 = vpack.c.b16 %v1714, %v1706
        %v2307 = vpack.c.b16 %v1715, %v1707
        %v2308 = vpack.c.b16 %v1724, %v1716
        %v2309 = vpack.c.b16 %v1725, %v1717
        %v2310 = vpack.c.b16 %v1726, %v1718
        %v2311 = vpack.c.b16 %v1727, %v1719
        %v2312 = vpack.c.b16 %v1728, %v1720
        %v2313 = vpack.c.b16 %v1729, %v1721
        %v2314 = vpack.c.b16 %v1730, %v1722
        %v2315 = vpack.c.b16 %v1731, %v1723
        %v2316 = vpack.c.b16 %v1740, %v1732
        %v2317 = vpack.c.b16 %v1741, %v1733
        %v2318 = vpack.c.b16 %v1742, %v1734
        %v2319 = vpack.c.b16 %v1743, %v1735
        %v2320 = vpack.c.b16 %v1744, %v1736
        %v2321 = vpack.c.b16 %v1745, %v1737
        %v2322 = vpack.c.b16 %v1746, %v1738
        %v2323 = vpack.c.b16 %v1747, %v1739
        %v2324 = vpack.c.b16 %v1756, %v1748
        %v2325 = vpack.c.b16 %v1757, %v1749
        %v2326 = vpack.c.b16 %v1758, %v1750
        %v2327 = vpack.c.b16 %v1759, %v1751
        %v2328 = vpack.c.b16 %v1760, %v1752
        %v2329 = vpack.c.b16 %v1761, %v1753
        %v2330 = vpack.c.b16 %v1762, %v1754
        %v2331 = vpack.c.b16 %v1763, %v1755
        %v2332 = vpack.c.b16 %v1772, %v1764
        %v2333 = vpack.c.b16 %v1773, %v1765
        %v2334 = vpack.c.b16 %v1774, %v1766
        %v2335 = vpack.c.b16 %v1775, %v1767
        %v2336 = vpack.c.b16 %v1776, %v1768
        %v2337 = vpack.c.b16 %v1777, %v1769
        %v2338 = vpack.c.b16 %v1778, %v1770
        %v2339 = vpack.c.b16 %v1779, %v1771
        %v2340 = vpack.c.b16 %v1788, %v1780
        %v2341 = vpack.c.b16 %v1789, %v1781
        %v2342 = vpack.c.b16 %v1790, %v1782
        %v2343 = vpack.c.b16 %v1791, %v1783
        %v2344 = vpack.c.b16 %v1792, %v1784
        %v2345 = vpack.c.b16 %v1793, %v1785
        %v2346 = vpack.c.b16 %v1794, %v1786
        %v2347 = vpack.c.b16 %v1795, %v1787
        %v2348 = vpack.c.b16 %v1804, %v1796
        %v2349 = vpack.c.b16 %v1805, %v1797
        %v2350 = vpack.c.b16 %v1806, %v1798
        %v2351 = vpack.c.b16 %v1807, %v1799
        %v2352 = vpack.c.b16 %v1808, %v1800
        %v2353 = vpack.c.b16 %v1809, %v1801
        %v2354 = vpack.c.b16 %v1810, %v1802
        %v2355 = vpack.c.b16 %v1811, %v1803
        %v2356 = vpack.c.b16 %v1820, %v1812
        %v2357 = vpack.c.b16 %v1821, %v1813
        %v2358 = vpack.c.b16 %v1822, %v1814
        %v2359 = vpack.c.b16 %v1823, %v1815
        %v2360 = vpack.c.b16 %v1824, %v1816
        %v2361 = vpack.c.b16 %v1825, %v1817
        %v2362 = vpack.c.b16 %v1826, %v1818
        %v2363 = vpack.c.b16 %v1827, %v1819
        %v2364 = vpack.c.b16 %v1836, %v1828
        %v2365 = vpack.c.b16 %v1837, %v1829
        %v2366 = vpack.c.b16 %v1838, %v1830
        %v2367 = vpack.c.b16 %v1839, %v1831
        %v2368 = vpack.c.b16 %v1840, %v1832
        %v2369 = vpack.c.b16 %v1841, %v1833
        %v2370 = vpack.c.b16 %v1842, %v1834
        %v2371 = vpack.c.b16 %v1843, %v1835
        %v2372 = vpack.c.b16 %v1852, %v1844
        %v2373 = vpack.c.b16 %v1853, %v1845
        %v2374 = vpack.c.b16 %v1854, %v1846
        %v2375 = vpack.c.b16 %v1855, %v1847
        %v2376 = vpack.c.b16 %v1856, %v1848
        %v2377 = vpack.c.b16 %v1857, %v1849
        %v2378 = vpack.c.b16 %v1858, %v1850
        %v2379 = vpack.c.b16 %v1859, %v1851
        %v2380 = vpack.c.b16 %v1868, %v1860
        %v2381 = vpack.c.b16 %v1869, %v1861
        %v2382 = vpack.c.b16 %v1870, %v1862
        %v2383 = vpack.c.b16 %v1871, %v1863
        %v2384 = vpack.c.b16 %v1872, %v1864
        %v2385 = vpack.c.b16 %v1873, %v1865
        %v2386 = vpack.c.b16 %v1874, %v1866
        %v2387 = vpack.c.b16 %v1875, %v1867
        %v2388 = vpack.c.b16 %v1884, %v1876
        %v2389 = vpack.c.b16 %v1885, %v1877
        %v2390 = vpack.c.b16 %v1886, %v1878
        %v2391 = vpack.c.b16 %v1887, %v1879
        %v2392 = vpack.c.b16 %v1888, %v1880
        %v2393 = vpack.c.b16 %v1889, %v1881
        %v2394 = vpack.c.b16 %v1890, %v1882
        %v2395 = vpack.c.b16 %v1891, %v1883
        %v2396 = vpack.c.b16 %v1900, %v1892
        %v2397 = vpack.c.b16 %v1901, %v1893
        %v2398 = vpack.c.b16 %v1902, %v1894
        %v2399 = vpack.c.b16 %v1903, %v1895
        %v2400 = vpack.c.b16 %v1904, %v1896
        %v2401 = vpack.c.b16 %v1905, %v1897
        %v2402 = vpack.c.b16 %v1906, %v1898
        %v2403 = vpack.c.b16 %v1907, %v1899
        %v2404 = vpack.c.b16 %v1916, %v1908
        %v2405 = vpack.c.b16 %v1917, %v1909
        %v2406 = vpack.c.b16 %v1918, %v1910
        %v2407 = vpack.c.b16 %v1919, %v1911
        %v2408 = vpack.c.b16 %v1920, %v1912
        %v2409 = vpack.c.b16 %v1921, %v1913
        %v2410 = vpack.c.b16 %v1922, %v1914
        %v2411 = vpack.c.b16 %v1923, %v1915
        %v2412 = vpack.c.b16 %v1932, %v1924
        %v2413 = vpack.c.b16 %v1933, %v1925
        %v2414 = vpack.c.b16 %v1934, %v1926
        %v2415 = vpack.c.b16 %v1935, %v1927
        %v2416 = vpack.c.b16 %v1936, %v1928
        %v2417 = vpack.c.b16 %v1937, %v1929
        %v2418 = vpack.c.b16 %v1938, %v1930
        %v2419 = vpack.c.b16 %v1939, %v1931
        %v2420 = vpack.c.b16 %v1948, %v1940
        %v2421 = vpack.c.b16 %v1949, %v1941
        %v2422 = vpack.c.b16 %v1950, %v1942
        %v2423 = vpack.c.b16 %v1951, %v1943
        %v2424 = vpack.c.b16 %v1952, %v1944
        %v2425 = vpack.c.b16 %v1953, %v1945
        %v2426 = vpack.c.b16 %v1954, %v1946
        %v2427 = vpack.c.b16 %v1955, %v1947
        %v2428 = vpack.c.b16 %v1964, %v1956
        %v2429 = vpack.c.b16 %v1965, %v1957
        %v2430 = vpack.c.b16 %v1966, %v1958
        %v2431 = vpack.c.b16 %v1967, %v1959
        %v2432 = vpack.c.b16 %v1968, %v1960
        %v2433 = vpack.c.b16 %v1969, %v1961
        %v2434 = vpack.c.b16 %v1970, %v1962
        %v2435 = vpack.c.b16 %v1971, %v1963
        %v2436 = vpack.c.b16 %v1980, %v1972
        %v2437 = vpack.c.b16 %v1981, %v1973
        %v2438 = vpack.c.b16 %v1982, %v1974
        %v2439 = vpack.c.b16 %v1983, %v1975
        %v2440 = vpack.c.b16 %v1984, %v1976
        %v2441 = vpack.c.b16 %v1985, %v1977
        %v2442 = vpack.c.b16 %v1986, %v1978
        %v2443 = vpack.c.b16 %v1987, %v1979
        %v2444 = vpack.c.b16 %v1996, %v1988
        %v2445 = vpack.c.b16 %v1997, %v1989
        %v2446 = vpack.c.b16 %v1998, %v1990
        %v2447 = vpack.c.b16 %v1999, %v1991
        %v2448 = vpack.c.b16 %v2000, %v1992
        %v2449 = vpack.c.b16 %v2001, %v1993
        %v2450 = vpack.c.b16 %v2002, %v1994
        %v2451 = vpack.c.b16 %v2003, %v1995
        %v2452 = vpack.c.b16 %v2012, %v2004
        %v2453 = vpack.c.b16 %v2013, %v2005
        %v2454 = vpack.c.b16 %v2014, %v2006
        %v2455 = vpack.c.b16 %v2015, %v2007
        %v2456 = vpack.c.b16 %v2016, %v2008
        %v2457 = vpack.c.b16 %v2017, %v2009
        %v2458 = vpack.c.b16 %v2018, %v2010
        %v2459 = vpack.c.b16 %v2019, %v2011
        %v2460 = vpack.c.b16 %v2028, %v2020
        %v2461 = vpack.c.b16 %v2029, %v2021
        %v2462 = vpack.c.b16 %v2030, %v2022
        %v2463 = vpack.c.b16 %v2031, %v2023
        %v2464 = vpack.c.b16 %v2032, %v2024
        %v2465 = vpack.c.b16 %v2033, %v2025
        %v2466 = vpack.c.b16 %v2034, %v2026
        %v2467 = vpack.c.b16 %v2035, %v2027
        %v2468 = vpack.c.b16 %v2044, %v2036
        %v2469 = vpack.c.b16 %v2045, %v2037
        %v2470 = vpack.c.b16 %v2046, %v2038
        %v2471 = vpack.c.b16 %v2047, %v2039
        %v2472 = vpack.c.b16 %v2048, %v2040
        %v2473 = vpack.c.b16 %v2049, %v2041
        %v2474 = vpack.c.b16 %v2050, %v2042
        %v2475 = vpack.c.b16 %v2051, %v2043
        %v2476 = vpack.c.b16 %v2060, %v2052
        %v2477 = vpack.c.b16 %v2061, %v2053
        %v2478 = vpack.c.b16 %v2062, %v2054
        %v2479 = vpack.c.b16 %v2063, %v2055
        %v2480 = vpack.c.b16 %v2064, %v2056
        %v2481 = vpack.c.b16 %v2065, %v2057
        %v2482 = vpack.c.b16 %v2066, %v2058
        %v2483 = vpack.c.b16 %v2067, %v2059
        %v2484 = vpack.c.b16 %v2076, %v2068
        %v2485 = vpack.c.b16 %v2077, %v2069
        %v2486 = vpack.c.b16 %v2078, %v2070
        %v2487 = vpack.c.b16 %v2079, %v2071
        %v2488 = vpack.c.b16 %v2080, %v2072
        %v2489 = vpack.c.b16 %v2081, %v2073
        %v2490 = vpack.c.b16 %v2082, %v2074
        %v2491 = vpack.c.b16 %v2083, %v2075
        %v2492 = vpack.c.b16 %v2092, %v2084
        %v2493 = vpack.c.b16 %v2093, %v2085
        %v2494 = vpack.c.b16 %v2094, %v2086
        %v2495 = vpack.c.b16 %v2095, %v2087
        %v2496 = vpack.c.b16 %v2096, %v2088
        %v2497 = vpack.c.b16 %v2097, %v2089
        %v2498 = vpack.c.b16 %v2098, %v2090
        %v2499 = vpack.c.b16 %v2099, %v2091
        %v2500 = vpack.c.b16 %v2108, %v2100
        %v2501 = vpack.c.b16 %v2109, %v2101
        %v2502 = vpack.c.b16 %v2110, %v2102
        %v2503 = vpack.c.b16 %v2111, %v2103
        %v2504 = vpack.c.b16 %v2112, %v2104
        %v2505 = vpack.c.b16 %v2113, %v2105
        %v2506 = vpack.c.b16 %v2114, %v2106
        %v2507 = vpack.c.b16 %v2115, %v2107
        %v2508 = vpack.c.b16 %v2124, %v2116
        %v2509 = vpack.c.b16 %v2125, %v2117
        %v2510 = vpack.c.b16 %v2126, %v2118
        %v2511 = vpack.c.b16 %v2127, %v2119
        %v2512 = vpack.c.b16 %v2128, %v2120
        %v2513 = vpack.c.b16 %v2129, %v2121
        %v2514 = vpack.c.b16 %v2130, %v2122
        %v2515 = vpack.c.b16 %v2131, %v2123
        %v2516 = vpack.c.b16 %v2140, %v2132
        %v2517 = vpack.c.b16 %v2141, %v2133
        %v2518 = vpack.c.b16 %v2142, %v2134
        %v2519 = vpack.c.b16 %v2143, %v2135
        %v2520 = vpack.c.b16 %v2144, %v2136
        %v2521 = vpack.c.b16 %v2145, %v2137
        %v2522 = vpack.c.b16 %v2146, %v2138
        %v2523 = vpack.c.b16 %v2147, %v2139
        %v2524 = vpack.c.b16 %v2156, %v2148
        %v2525 = vpack.c.b16 %v2157, %v2149
        %v2526 = vpack.c.b16 %v2158, %v2150
        %v2527 = vpack.c.b16 %v2159, %v2151
        %v2528 = vpack.c.b16 %v2160, %v2152
        %v2529 = vpack.c.b16 %v2161, %v2153
        %v2530 = vpack.c.b16 %v2162, %v2154
        %v2531 = vpack.c.b16 %v2163, %v2155
        %v2532 = vpack.c.b16 %v2172, %v2164
        %v2533 = vpack.c.b16 %v2173, %v2165
        %v2534 = vpack.c.b16 %v2174, %v2166
        %v2535 = vpack.c.b16 %v2175, %v2167
        %v2536 = vpack.c.b16 %v2176, %v2168
        %v2537 = vpack.c.b16 %v2177, %v2169
        %v2538 = vpack.c.b16 %v2178, %v2170
        %v2539 = vpack.c.b16 %v2179, %v2171
        %v2540 = vpack.c.b16 %v2188, %v2180
        %v2541 = vpack.c.b16 %v2189, %v2181
        %v2542 = vpack.c.b16 %v2190, %v2182
        %v2543 = vpack.c.b16 %v2191, %v2183
        %v2544 = vpack.c.b16 %v2192, %v2184
        %v2545 = vpack.c.b16 %v2193, %v2185
        %v2546 = vpack.c.b16 %v2194, %v2186
        %v2547 = vpack.c.b16 %v2195, %v2187
        %v2548 = vpack.c.b16 %v2204, %v2196
        %v2549 = vpack.c.b16 %v2205, %v2197
        %v2550 = vpack.c.b16 %v2206, %v2198
        %v2551 = vpack.c.b16 %v2207, %v2199
        %v2552 = vpack.c.b16 %v2208, %v2200
        %v2553 = vpack.c.b16 %v2209, %v2201
        %v2554 = vpack.c.b16 %v2210, %v2202
        %v2555 = vpack.c.b16 %v2211, %v2203
        %v2556 = vpack.c.b16 %v2220, %v2212
        %v2557 = vpack.c.b16 %v2221, %v2213
        %v2558 = vpack.c.b16 %v2222, %v2214
        %v2559 = vpack.c.b16 %v2223, %v2215
        %v2560 = vpack.c.b16 %v2224, %v2216
        %v2561 = vpack.c.b16 %v2225, %v2217
        %v2562 = vpack.c.b16 %v2226, %v2218
        %v2563 = vpack.c.b16 %v2227, %v2219
        %v2564 = vpack.c.b16 %v2236, %v2228
        %v2565 = vpack.c.b16 %v2237, %v2229
        %v2566 = vpack.c.b16 %v2238, %v2230
        %v2567 = vpack.c.b16 %v2239, %v2231
        %v2568 = vpack.c.b16 %v2240, %v2232
        %v2569 = vpack.c.b16 %v2241, %v2233
        %v2570 = vpack.c.b16 %v2242, %v2234
        %v2571 = vpack.c.b16 %v2243, %v2235
        %v2572 = vpack.c.b16 %v2252, %v2244
        %v2573 = vpack.c.b16 %v2253, %v2245
        %v2574 = vpack.c.b16 %v2254, %v2246
        %v2575 = vpack.c.b16 %v2255, %v2247
        %v2576 = vpack.c.b16 %v2256, %v2248
        %v2577 = vpack.c.b16 %v2257, %v2249
        %v2578 = vpack.c.b16 %v2258, %v2250
        %v2579 = vpack.c.b16 %v2259, %v2251
        %2900 = vmatpush.bf16.msra.mxu0 %v2316
        %2901 = vmatpush.bf16.msra.mxu0 %v2308
        %2902 = vmatpush.bf16.msra.mxu0 %v2300
        %2903 = vmatpush.bf16.msra.mxu0 %v2292
        %2904 = vmatpush.bf16.msra.mxu0 %v2284
        %2905 = vmatpush.bf16.msra.mxu0 %v2276
        %2906 = vmatpush.bf16.msra.mxu0 %v2268
        %2907 = vmatpush.bf16.msra.mxu0 %v2260
        %2908 = vmatmul.bf16.gmra.mxu0 %v957
        %v2909 = vpop.f32.mrf.mxu0
        %v2910 = vadd.f32 %v1284, %v2909
        %v2911 = vpop.f32.mrf.mxu0
        %2912 = vdwg.mxu0
        %2913 = vmatpush.bf16.msra.mxu0 %v2380
        %2914 = vmatpush.bf16.msra.mxu0 %v2372
        %2915 = vmatpush.bf16.msra.mxu0 %v2364
        %2916 = vmatpush.bf16.msra.mxu0 %v2356
        %2917 = vmatpush.bf16.msra.mxu0 %v2348
        %2918 = vmatpush.bf16.msra.mxu0 %v2340
        %2919 = vmatpush.bf16.msra.mxu0 %v2332
        %2920 = vmatpush.bf16.msra.mxu0 %v2324
        %2921 = vmatmul.bf16.gmra.mxu0 %v958
        %v2922 = vpop.f32.mrf.mxu0
        %v2923 = vadd.f32 %v2910, %v2922
        %v2924 = vpop.f32.mrf.mxu0
        %2925 = vdwg.mxu0
        %2926 = vmatpush.bf16.msra.mxu0 %v2444
        %2927 = vmatpush.bf16.msra.mxu0 %v2436
        %2928 = vmatpush.bf16.msra.mxu0 %v2428
        %2929 = vmatpush.bf16.msra.mxu0 %v2420
        %2930 = vmatpush.bf16.msra.mxu0 %v2412
        %2931 = vmatpush.bf16.msra.mxu0 %v2404
        %2932 = vmatpush.bf16.msra.mxu0 %v2396
        %2933 = vmatpush.bf16.msra.mxu0 %v2388
        %2934 = vmatmul.bf16.gmra.mxu0 %v959
        %v2935 = vpop.f32.mrf.mxu0
        %v2936 = vadd.f32 %v2923, %v2935
        %v2937 = vpop.f32.mrf.mxu0
        %2938 = vdwg.mxu0
        %2939 = vmatpush.bf16.msra.mxu0 %v2508
        %2940 = vmatpush.bf16.msra.mxu0 %v2500
        %2941 = vmatpush.bf16.msra.mxu0 %v2492
        %2942 = vmatpush.bf16.msra.mxu0 %v2484
        %2943 = vmatpush.bf16.msra.mxu0 %v2476
        %2944 = vmatpush.bf16.msra.mxu0 %v2468
        %2945 = vmatpush.bf16.msra.mxu0 %v2460
        %2946 = vmatpush.bf16.msra.mxu0 %v2452
        %2947 = vmatmul.bf16.gmra.mxu0 %v960
        %v2948 = vpop.f32.mrf.mxu0
        %v2949 = vadd.f32 %v2936, %v2948
        %v2950 = vpop.f32.mrf.mxu0
        %2951 = vdwg.mxu0
        %2952 = vmatpush.bf16.msra.mxu0 %v2572
        %2953 = vmatpush.bf16.msra.mxu0 %v2564
        %2954 = vmatpush.bf16.msra.mxu0 %v2556
        %2955 = vmatpush.bf16.msra.mxu0 %v2548
        %2956 = vmatpush.bf16.msra.mxu0 %v2540
        %2957 = vmatpush.bf16.msra.mxu0 %v2532
        %2958 = vmatpush.bf16.msra.mxu0 %v2524
        %2959 = vmatpush.bf16.msra.mxu0 %v2516
        %2960 = vmatmul.bf16.gmra.mxu0 %v961
        %v2961 = vpop.f32.mrf.mxu0
        %v2962 = vadd.f32 %v2949, %v2961
        %v2963 = vpop.f32.mrf.mxu0
        %2964 = vdwg.mxu0
        %2965 = vmatpush.bf16.msra.mxu0 %v2317
        %2966 = vmatpush.bf16.msra.mxu0 %v2309
        %2967 = vmatpush.bf16.msra.mxu0 %v2301
        %2968 = vmatpush.bf16.msra.mxu0 %v2293
        %2969 = vmatpush.bf16.msra.mxu0 %v2285
        %2970 = vmatpush.bf16.msra.mxu0 %v2277
        %2971 = vmatpush.bf16.msra.mxu0 %v2269
        %2972 = vmatpush.bf16.msra.mxu0 %v2261
        %2973 = vmatmul.bf16.gmra.mxu0 %v957
        %v2974 = vpop.f32.mrf.mxu0
        %v2975 = vadd.f32 %v1285, %v2974
        %v2976 = vpop.f32.mrf.mxu0
        %2977 = vdwg.mxu0
        %2978 = vmatpush.bf16.msra.mxu0 %v2381
        %2979 = vmatpush.bf16.msra.mxu0 %v2373
        %2980 = vmatpush.bf16.msra.mxu0 %v2365
        %2981 = vmatpush.bf16.msra.mxu0 %v2357
        %2982 = vmatpush.bf16.msra.mxu0 %v2349
        %2983 = vmatpush.bf16.msra.mxu0 %v2341
        %2984 = vmatpush.bf16.msra.mxu0 %v2333
        %2985 = vmatpush.bf16.msra.mxu0 %v2325
        %2986 = vmatmul.bf16.gmra.mxu0 %v958
        %v2987 = vpop.f32.mrf.mxu0
        %v2988 = vadd.f32 %v2975, %v2987
        %v2989 = vpop.f32.mrf.mxu0
        %2990 = vdwg.mxu0
        %2991 = vmatpush.bf16.msra.mxu0 %v2445
        %2992 = vmatpush.bf16.msra.mxu0 %v2437
        %2993 = vmatpush.bf16.msra.mxu0 %v2429
        %2994 = vmatpush.bf16.msra.mxu0 %v2421
        %2995 = vmatpush.bf16.msra.mxu0 %v2413
        %2996 = vmatpush.bf16.msra.mxu0 %v2405
        %2997 = vmatpush.bf16.msra.mxu0 %v2397
        %2998 = vmatpush.bf16.msra.mxu0 %v2389
        %2999 = vmatmul.bf16.gmra.mxu0 %v959
        %v3000 = vpop.f32.mrf.mxu0
        %v3001 = vadd.f32 %v2988, %v3000
        %v3002 = vpop.f32.mrf.mxu0
        %3003 = vdwg.mxu0
        %3004 = vmatpush.bf16.msra.mxu0 %v2509
        %3005 = vmatpush.bf16.msra.mxu0 %v2501
        %3006 = vmatpush.bf16.msra.mxu0 %v2493
        %3007 = vmatpush.bf16.msra.mxu0 %v2485
        %3008 = vmatpush.bf16.msra.mxu0 %v2477
        %3009 = vmatpush.bf16.msra.mxu0 %v2469
        %3010 = vmatpush.bf16.msra.mxu0 %v2461
        %3011 = vmatpush.bf16.msra.mxu0 %v2453
        %3012 = vmatmul.bf16.gmra.mxu0 %v960
        %v3013 = vpop.f32.mrf.mxu0
        %v3014 = vadd.f32 %v3001, %v3013
        %v3015 = vpop.f32.mrf.mxu0
        %3016 = vdwg.mxu0
        %3017 = vmatpush.bf16.msra.mxu0 %v2573
        %3018 = vmatpush.bf16.msra.mxu0 %v2565
        %3019 = vmatpush.bf16.msra.mxu0 %v2557
        %3020 = vmatpush.bf16.msra.mxu0 %v2549
        %3021 = vmatpush.bf16.msra.mxu0 %v2541
        %3022 = vmatpush.bf16.msra.mxu0 %v2533
        %3023 = vmatpush.bf16.msra.mxu0 %v2525
        %3024 = vmatpush.bf16.msra.mxu0 %v2517
        %3025 = vmatmul.bf16.gmra.mxu0 %v961
        %v3026 = vpop.f32.mrf.mxu0
        %v3027 = vadd.f32 %v3014, %v3026
        %v3028 = vpop.f32.mrf.mxu0
        %3029 = vdwg.mxu0
        %3030 = vmatpush.bf16.msra.mxu0 %v2318
        %3031 = vmatpush.bf16.msra.mxu0 %v2310
        %3032 = vmatpush.bf16.msra.mxu0 %v2302
        %3033 = vmatpush.bf16.msra.mxu0 %v2294
        %3034 = vmatpush.bf16.msra.mxu0 %v2286
        %3035 = vmatpush.bf16.msra.mxu0 %v2278
        %3036 = vmatpush.bf16.msra.mxu0 %v2270
        %3037 = vmatpush.bf16.msra.mxu0 %v2262
        %3038 = vmatmul.bf16.gmra.mxu0 %v957
        %v3039 = vpop.f32.mrf.mxu0
        %v3040 = vadd.f32 %v1286, %v3039
        %v3041 = vpop.f32.mrf.mxu0
        %3042 = vdwg.mxu0
        %3043 = vmatpush.bf16.msra.mxu0 %v2382
        %3044 = vmatpush.bf16.msra.mxu0 %v2374
        %3045 = vmatpush.bf16.msra.mxu0 %v2366
        %3046 = vmatpush.bf16.msra.mxu0 %v2358
        %3047 = vmatpush.bf16.msra.mxu0 %v2350
        %3048 = vmatpush.bf16.msra.mxu0 %v2342
        %3049 = vmatpush.bf16.msra.mxu0 %v2334
        %3050 = vmatpush.bf16.msra.mxu0 %v2326
        %3051 = vmatmul.bf16.gmra.mxu0 %v958
        %v3052 = vpop.f32.mrf.mxu0
        %v3053 = vadd.f32 %v3040, %v3052
        %v3054 = vpop.f32.mrf.mxu0
        %3055 = vdwg.mxu0
        %3056 = vmatpush.bf16.msra.mxu0 %v2446
        %3057 = vmatpush.bf16.msra.mxu0 %v2438
        %3058 = vmatpush.bf16.msra.mxu0 %v2430
        %3059 = vmatpush.bf16.msra.mxu0 %v2422
        %3060 = vmatpush.bf16.msra.mxu0 %v2414
        %3061 = vmatpush.bf16.msra.mxu0 %v2406
        %3062 = vmatpush.bf16.msra.mxu0 %v2398
        %3063 = vmatpush.bf16.msra.mxu0 %v2390
        %3064 = vmatmul.bf16.gmra.mxu0 %v959
        %v3065 = vpop.f32.mrf.mxu0
        %v3066 = vadd.f32 %v3053, %v3065
        %v3067 = vpop.f32.mrf.mxu0
        %3068 = vdwg.mxu0
        %3069 = vmatpush.bf16.msra.mxu0 %v2510
        %3070 = vmatpush.bf16.msra.mxu0 %v2502
        %3071 = vmatpush.bf16.msra.mxu0 %v2494
        %3072 = vmatpush.bf16.msra.mxu0 %v2486
        %3073 = vmatpush.bf16.msra.mxu0 %v2478
        %3074 = vmatpush.bf16.msra.mxu0 %v2470
        %3075 = vmatpush.bf16.msra.mxu0 %v2462
        %3076 = vmatpush.bf16.msra.mxu0 %v2454
        %3077 = vmatmul.bf16.gmra.mxu0 %v960
        %v3078 = vpop.f32.mrf.mxu0
        %v3079 = vadd.f32 %v3066, %v3078
        %v3080 = vpop.f32.mrf.mxu0
        %3081 = vdwg.mxu0
        %3082 = vmatpush.bf16.msra.mxu0 %v2574
        %3083 = vmatpush.bf16.msra.mxu0 %v2566
        %3084 = vmatpush.bf16.msra.mxu0 %v2558
        %3085 = vmatpush.bf16.msra.mxu0 %v2550
        %3086 = vmatpush.bf16.msra.mxu0 %v2542
        %3087 = vmatpush.bf16.msra.mxu0 %v2534
        %3088 = vmatpush.bf16.msra.mxu0 %v2526
        %3089 = vmatpush.bf16.msra.mxu0 %v2518
        %3090 = vmatmul.bf16.gmra.mxu0 %v961
        %v3091 = vpop.f32.mrf.mxu0
        %v3092 = vadd.f32 %v3079, %v3091
        %v3093 = vpop.f32.mrf.mxu0
        %3094 = vdwg.mxu0
        %3095 = vmatpush.bf16.msra.mxu0 %v2319
        %3096 = vmatpush.bf16.msra.mxu0 %v2311
        %3097 = vmatpush.bf16.msra.mxu0 %v2303
        %3098 = vmatpush.bf16.msra.mxu0 %v2295
        %3099 = vmatpush.bf16.msra.mxu0 %v2287
        %3100 = vmatpush.bf16.msra.mxu0 %v2279
        %3101 = vmatpush.bf16.msra.mxu0 %v2271
        %3102 = vmatpush.bf16.msra.mxu0 %v2263
        %3103 = vmatmul.bf16.gmra.mxu0 %v957
        %v3104 = vpop.f32.mrf.mxu0
        %v3105 = vadd.f32 %v1287, %v3104
        %v3106 = vpop.f32.mrf.mxu0
        %3107 = vdwg.mxu0
        %3108 = vmatpush.bf16.msra.mxu0 %v2383
        %3109 = vmatpush.bf16.msra.mxu0 %v2375
        %3110 = vmatpush.bf16.msra.mxu0 %v2367
        %3111 = vmatpush.bf16.msra.mxu0 %v2359
        %3112 = vmatpush.bf16.msra.mxu0 %v2351
        %3113 = vmatpush.bf16.msra.mxu0 %v2343
        %3114 = vmatpush.bf16.msra.mxu0 %v2335
        %3115 = vmatpush.bf16.msra.mxu0 %v2327
        %3116 = vmatmul.bf16.gmra.mxu0 %v958
        %v3117 = vpop.f32.mrf.mxu0
        %v3118 = vadd.f32 %v3105, %v3117
        %v3119 = vpop.f32.mrf.mxu0
        %3120 = vdwg.mxu0
        %3121 = vmatpush.bf16.msra.mxu0 %v2447
        %3122 = vmatpush.bf16.msra.mxu0 %v2439
        %3123 = vmatpush.bf16.msra.mxu0 %v2431
        %3124 = vmatpush.bf16.msra.mxu0 %v2423
        %3125 = vmatpush.bf16.msra.mxu0 %v2415
        %3126 = vmatpush.bf16.msra.mxu0 %v2407
        %3127 = vmatpush.bf16.msra.mxu0 %v2399
        %3128 = vmatpush.bf16.msra.mxu0 %v2391
        %3129 = vmatmul.bf16.gmra.mxu0 %v959
        %v3130 = vpop.f32.mrf.mxu0
        %v3131 = vadd.f32 %v3118, %v3130
        %v3132 = vpop.f32.mrf.mxu0
        %3133 = vdwg.mxu0
        %3134 = vmatpush.bf16.msra.mxu0 %v2511
        %3135 = vmatpush.bf16.msra.mxu0 %v2503
        %3136 = vmatpush.bf16.msra.mxu0 %v2495
        %3137 = vmatpush.bf16.msra.mxu0 %v2487
        %3138 = vmatpush.bf16.msra.mxu0 %v2479
        %3139 = vmatpush.bf16.msra.mxu0 %v2471
        %3140 = vmatpush.bf16.msra.mxu0 %v2463
        %3141 = vmatpush.bf16.msra.mxu0 %v2455
        %3142 = vmatmul.bf16.gmra.mxu0 %v960
        %v3143 = vpop.f32.mrf.mxu0
        %v3144 = vadd.f32 %v3131, %v3143
        %v3145 = vpop.f32.mrf.mxu0
        %3146 = vdwg.mxu0
        %3147 = vmatpush.bf16.msra.mxu0 %v2575
        %3148 = vmatpush.bf16.msra.mxu0 %v2567
        %3149 = vmatpush.bf16.msra.mxu0 %v2559
        %3150 = vmatpush.bf16.msra.mxu0 %v2551
        %3151 = vmatpush.bf16.msra.mxu0 %v2543
        %3152 = vmatpush.bf16.msra.mxu0 %v2535
        %3153 = vmatpush.bf16.msra.mxu0 %v2527
        %3154 = vmatpush.bf16.msra.mxu0 %v2519
        %3155 = vmatmul.bf16.gmra.mxu0 %v961
        %v3156 = vpop.f32.mrf.mxu0
        %v3157 = vadd.f32 %v3144, %v3156
        %v3158 = vpop.f32.mrf.mxu0
        %3159 = vdwg.mxu0
        %3160 = vmatpush.bf16.msra.mxu0 %v2320
        %3161 = vmatpush.bf16.msra.mxu0 %v2312
        %3162 = vmatpush.bf16.msra.mxu0 %v2304
        %3163 = vmatpush.bf16.msra.mxu0 %v2296
        %3164 = vmatpush.bf16.msra.mxu0 %v2288
        %3165 = vmatpush.bf16.msra.mxu0 %v2280
        %3166 = vmatpush.bf16.msra.mxu0 %v2272
        %3167 = vmatpush.bf16.msra.mxu0 %v2264
        %3168 = vmatmul.bf16.gmra.mxu0 %v957
        %v3169 = vpop.f32.mrf.mxu0
        %v3170 = vadd.f32 %v1288, %v3169
        %v3171 = vpop.f32.mrf.mxu0
        %3172 = vdwg.mxu0
        %3173 = vmatpush.bf16.msra.mxu0 %v2384
        %3174 = vmatpush.bf16.msra.mxu0 %v2376
        %3175 = vmatpush.bf16.msra.mxu0 %v2368
        %3176 = vmatpush.bf16.msra.mxu0 %v2360
        %3177 = vmatpush.bf16.msra.mxu0 %v2352
        %3178 = vmatpush.bf16.msra.mxu0 %v2344
        %3179 = vmatpush.bf16.msra.mxu0 %v2336
        %3180 = vmatpush.bf16.msra.mxu0 %v2328
        %3181 = vmatmul.bf16.gmra.mxu0 %v958
        %v3182 = vpop.f32.mrf.mxu0
        %v3183 = vadd.f32 %v3170, %v3182
        %v3184 = vpop.f32.mrf.mxu0
        %3185 = vdwg.mxu0
        %3186 = vmatpush.bf16.msra.mxu0 %v2448
        %3187 = vmatpush.bf16.msra.mxu0 %v2440
        %3188 = vmatpush.bf16.msra.mxu0 %v2432
        %3189 = vmatpush.bf16.msra.mxu0 %v2424
        %3190 = vmatpush.bf16.msra.mxu0 %v2416
        %3191 = vmatpush.bf16.msra.mxu0 %v2408
        %3192 = vmatpush.bf16.msra.mxu0 %v2400
        %3193 = vmatpush.bf16.msra.mxu0 %v2392
        %3194 = vmatmul.bf16.gmra.mxu0 %v959
        %v3195 = vpop.f32.mrf.mxu0
        %v3196 = vadd.f32 %v3183, %v3195
        %v3197 = vpop.f32.mrf.mxu0
        %3198 = vdwg.mxu0
        %3199 = vmatpush.bf16.msra.mxu0 %v2512
        %3200 = vmatpush.bf16.msra.mxu0 %v2504
        %3201 = vmatpush.bf16.msra.mxu0 %v2496
        %3202 = vmatpush.bf16.msra.mxu0 %v2488
        %3203 = vmatpush.bf16.msra.mxu0 %v2480
        %3204 = vmatpush.bf16.msra.mxu0 %v2472
        %3205 = vmatpush.bf16.msra.mxu0 %v2464
        %3206 = vmatpush.bf16.msra.mxu0 %v2456
        %3207 = vmatmul.bf16.gmra.mxu0 %v960
        %v3208 = vpop.f32.mrf.mxu0
        %v3209 = vadd.f32 %v3196, %v3208
        %v3210 = vpop.f32.mrf.mxu0
        %3211 = vdwg.mxu0
        %3212 = vmatpush.bf16.msra.mxu0 %v2576
        %3213 = vmatpush.bf16.msra.mxu0 %v2568
        %3214 = vmatpush.bf16.msra.mxu0 %v2560
        %3215 = vmatpush.bf16.msra.mxu0 %v2552
        %3216 = vmatpush.bf16.msra.mxu0 %v2544
        %3217 = vmatpush.bf16.msra.mxu0 %v2536
        %3218 = vmatpush.bf16.msra.mxu0 %v2528
        %3219 = vmatpush.bf16.msra.mxu0 %v2520
        %3220 = vmatmul.bf16.gmra.mxu0 %v961
        %v3221 = vpop.f32.mrf.mxu0
        %v3222 = vadd.f32 %v3209, %v3221
        %v3223 = vpop.f32.mrf.mxu0
        %3224 = vdwg.mxu0
        %3225 = vmatpush.bf16.msra.mxu0 %v2321
        %3226 = vmatpush.bf16.msra.mxu0 %v2313
        %3227 = vmatpush.bf16.msra.mxu0 %v2305
        %3228 = vmatpush.bf16.msra.mxu0 %v2297
        %3229 = vmatpush.bf16.msra.mxu0 %v2289
        %3230 = vmatpush.bf16.msra.mxu0 %v2281
        %3231 = vmatpush.bf16.msra.mxu0 %v2273
        %3232 = vmatpush.bf16.msra.mxu0 %v2265
        %3233 = vmatmul.bf16.gmra.mxu0 %v957
        %v3234 = vpop.f32.mrf.mxu0
        %v3235 = vadd.f32 %v1289, %v3234
        %v3236 = vpop.f32.mrf.mxu0
        %3237 = vdwg.mxu0
        %3238 = vmatpush.bf16.msra.mxu0 %v2385
        %3239 = vmatpush.bf16.msra.mxu0 %v2377
        %3240 = vmatpush.bf16.msra.mxu0 %v2369
        %3241 = vmatpush.bf16.msra.mxu0 %v2361
        %3242 = vmatpush.bf16.msra.mxu0 %v2353
        %3243 = vmatpush.bf16.msra.mxu0 %v2345
        %3244 = vmatpush.bf16.msra.mxu0 %v2337
        %3245 = vmatpush.bf16.msra.mxu0 %v2329
        %3246 = vmatmul.bf16.gmra.mxu0 %v958
        %v3247 = vpop.f32.mrf.mxu0
        %v3248 = vadd.f32 %v3235, %v3247
        %v3249 = vpop.f32.mrf.mxu0
        %3250 = vdwg.mxu0
        %3251 = vmatpush.bf16.msra.mxu0 %v2449
        %3252 = vmatpush.bf16.msra.mxu0 %v2441
        %3253 = vmatpush.bf16.msra.mxu0 %v2433
        %3254 = vmatpush.bf16.msra.mxu0 %v2425
        %3255 = vmatpush.bf16.msra.mxu0 %v2417
        %3256 = vmatpush.bf16.msra.mxu0 %v2409
        %3257 = vmatpush.bf16.msra.mxu0 %v2401
        %3258 = vmatpush.bf16.msra.mxu0 %v2393
        %3259 = vmatmul.bf16.gmra.mxu0 %v959
        %v3260 = vpop.f32.mrf.mxu0
        %v3261 = vadd.f32 %v3248, %v3260
        %v3262 = vpop.f32.mrf.mxu0
        %3263 = vdwg.mxu0
        %3264 = vmatpush.bf16.msra.mxu0 %v2513
        %3265 = vmatpush.bf16.msra.mxu0 %v2505
        %3266 = vmatpush.bf16.msra.mxu0 %v2497
        %3267 = vmatpush.bf16.msra.mxu0 %v2489
        %3268 = vmatpush.bf16.msra.mxu0 %v2481
        %3269 = vmatpush.bf16.msra.mxu0 %v2473
        %3270 = vmatpush.bf16.msra.mxu0 %v2465
        %3271 = vmatpush.bf16.msra.mxu0 %v2457
        %3272 = vmatmul.bf16.gmra.mxu0 %v960
        %v3273 = vpop.f32.mrf.mxu0
        %v3274 = vadd.f32 %v3261, %v3273
        %v3275 = vpop.f32.mrf.mxu0
        %3276 = vdwg.mxu0
        %3277 = vmatpush.bf16.msra.mxu0 %v2577
        %3278 = vmatpush.bf16.msra.mxu0 %v2569
        %3279 = vmatpush.bf16.msra.mxu0 %v2561
        %3280 = vmatpush.bf16.msra.mxu0 %v2553
        %3281 = vmatpush.bf16.msra.mxu0 %v2545
        %3282 = vmatpush.bf16.msra.mxu0 %v2537
        %3283 = vmatpush.bf16.msra.mxu0 %v2529
        %3284 = vmatpush.bf16.msra.mxu0 %v2521
        %3285 = vmatmul.bf16.gmra.mxu0 %v961
        %v3286 = vpop.f32.mrf.mxu0
        %v3287 = vadd.f32 %v3274, %v3286
        %v3288 = vpop.f32.mrf.mxu0
        %3289 = vdwg.mxu0
        %3290 = vmatpush.bf16.msra.mxu0 %v2322
        %3291 = vmatpush.bf16.msra.mxu0 %v2314
        %3292 = vmatpush.bf16.msra.mxu0 %v2306
        %3293 = vmatpush.bf16.msra.mxu0 %v2298
        %3294 = vmatpush.bf16.msra.mxu0 %v2290
        %3295 = vmatpush.bf16.msra.mxu0 %v2282
        %3296 = vmatpush.bf16.msra.mxu0 %v2274
        %3297 = vmatpush.bf16.msra.mxu0 %v2266
        %3298 = vmatmul.bf16.gmra.mxu0 %v957
        %v3299 = vpop.f32.mrf.mxu0
        %v3300 = vadd.f32 %v1290, %v3299
        %v3301 = vpop.f32.mrf.mxu0
        %3302 = vdwg.mxu0
        %3303 = vmatpush.bf16.msra.mxu0 %v2386
        %3304 = vmatpush.bf16.msra.mxu0 %v2378
        %3305 = vmatpush.bf16.msra.mxu0 %v2370
        %3306 = vmatpush.bf16.msra.mxu0 %v2362
        %3307 = vmatpush.bf16.msra.mxu0 %v2354
        %3308 = vmatpush.bf16.msra.mxu0 %v2346
        %3309 = vmatpush.bf16.msra.mxu0 %v2338
        %3310 = vmatpush.bf16.msra.mxu0 %v2330
        %3311 = vmatmul.bf16.gmra.mxu0 %v958
        %v3312 = vpop.f32.mrf.mxu0
        %v3313 = vadd.f32 %v3300, %v3312
        %v3314 = vpop.f32.mrf.mxu0
        %3315 = vdwg.mxu0
        %3316 = vmatpush.bf16.msra.mxu0 %v2450
        %3317 = vmatpush.bf16.msra.mxu0 %v2442
        %3318 = vmatpush.bf16.msra.mxu0 %v2434
        %3319 = vmatpush.bf16.msra.mxu0 %v2426
        %3320 = vmatpush.bf16.msra.mxu0 %v2418
        %3321 = vmatpush.bf16.msra.mxu0 %v2410
        %3322 = vmatpush.bf16.msra.mxu0 %v2402
        %3323 = vmatpush.bf16.msra.mxu0 %v2394
        %3324 = vmatmul.bf16.gmra.mxu0 %v959
        %v3325 = vpop.f32.mrf.mxu0
        %v3326 = vadd.f32 %v3313, %v3325
        %v3327 = vpop.f32.mrf.mxu0
        %3328 = vdwg.mxu0
        %3329 = vmatpush.bf16.msra.mxu0 %v2514
        %3330 = vmatpush.bf16.msra.mxu0 %v2506
        %3331 = vmatpush.bf16.msra.mxu0 %v2498
        %3332 = vmatpush.bf16.msra.mxu0 %v2490
        %3333 = vmatpush.bf16.msra.mxu0 %v2482
        %3334 = vmatpush.bf16.msra.mxu0 %v2474
        %3335 = vmatpush.bf16.msra.mxu0 %v2466
        %3336 = vmatpush.bf16.msra.mxu0 %v2458
        %3337 = vmatmul.bf16.gmra.mxu0 %v960
        %v3338 = vpop.f32.mrf.mxu0
        %v3339 = vadd.f32 %v3326, %v3338
        %v3340 = vpop.f32.mrf.mxu0
        %3341 = vdwg.mxu0
        %3342 = vmatpush.bf16.msra.mxu0 %v2578
        %3343 = vmatpush.bf16.msra.mxu0 %v2570
        %3344 = vmatpush.bf16.msra.mxu0 %v2562
        %3345 = vmatpush.bf16.msra.mxu0 %v2554
        %3346 = vmatpush.bf16.msra.mxu0 %v2546
        %3347 = vmatpush.bf16.msra.mxu0 %v2538
        %3348 = vmatpush.bf16.msra.mxu0 %v2530
        %3349 = vmatpush.bf16.msra.mxu0 %v2522
        %3350 = vmatmul.bf16.gmra.mxu0 %v961
        %v3351 = vpop.f32.mrf.mxu0
        %v3352 = vadd.f32 %v3339, %v3351
        %v3353 = vpop.f32.mrf.mxu0
        %3354 = vdwg.mxu0
        %3355 = vmatpush.bf16.msra.mxu0 %v2323
        %3356 = vmatpush.bf16.msra.mxu0 %v2315
        %3357 = vmatpush.bf16.msra.mxu0 %v2307
        %3358 = vmatpush.bf16.msra.mxu0 %v2299
        %3359 = vmatpush.bf16.msra.mxu0 %v2291
        %3360 = vmatpush.bf16.msra.mxu0 %v2283
        %3361 = vmatpush.bf16.msra.mxu0 %v2275
        %3362 = vmatpush.bf16.msra.mxu0 %v2267
        %3363 = vmatmul.bf16.gmra.mxu0 %v957
        %v3364 = vpop.f32.mrf.mxu0
        %v3365 = vadd.f32 %v1291, %v3364
        %v3366 = vpop.f32.mrf.mxu0
        %3367 = vdwg.mxu0
        %3368 = vmatpush.bf16.msra.mxu0 %v2387
        %3369 = vmatpush.bf16.msra.mxu0 %v2379
        %3370 = vmatpush.bf16.msra.mxu0 %v2371
        %3371 = vmatpush.bf16.msra.mxu0 %v2363
        %3372 = vmatpush.bf16.msra.mxu0 %v2355
        %3373 = vmatpush.bf16.msra.mxu0 %v2347
        %3374 = vmatpush.bf16.msra.mxu0 %v2339
        %3375 = vmatpush.bf16.msra.mxu0 %v2331
        %3376 = vmatmul.bf16.gmra.mxu0 %v958
        %v3377 = vpop.f32.mrf.mxu0
        %v3378 = vadd.f32 %v3365, %v3377
        %v3379 = vpop.f32.mrf.mxu0
        %3380 = vdwg.mxu0
        %3381 = vmatpush.bf16.msra.mxu0 %v2451
        %3382 = vmatpush.bf16.msra.mxu0 %v2443
        %3383 = vmatpush.bf16.msra.mxu0 %v2435
        %3384 = vmatpush.bf16.msra.mxu0 %v2427
        %3385 = vmatpush.bf16.msra.mxu0 %v2419
        %3386 = vmatpush.bf16.msra.mxu0 %v2411
        %3387 = vmatpush.bf16.msra.mxu0 %v2403
        %3388 = vmatpush.bf16.msra.mxu0 %v2395
        %3389 = vmatmul.bf16.gmra.mxu0 %v959
        %v3390 = vpop.f32.mrf.mxu0
        %v3391 = vadd.f32 %v3378, %v3390
        %v3392 = vpop.f32.mrf.mxu0
        %3393 = vdwg.mxu0
        %3394 = vmatpush.bf16.msra.mxu0 %v2515
        %3395 = vmatpush.bf16.msra.mxu0 %v2507
        %3396 = vmatpush.bf16.msra.mxu0 %v2499
        %3397 = vmatpush.bf16.msra.mxu0 %v2491
        %3398 = vmatpush.bf16.msra.mxu0 %v2483
        %3399 = vmatpush.bf16.msra.mxu0 %v2475
        %3400 = vmatpush.bf16.msra.mxu0 %v2467
        %3401 = vmatpush.bf16.msra.mxu0 %v2459
        %3402 = vmatmul.bf16.gmra.mxu0 %v960
        %v3403 = vpop.f32.mrf.mxu0
        %v3404 = vadd.f32 %v3391, %v3403
        %v3405 = vpop.f32.mrf.mxu0
        %3406 = vdwg.mxu0
        %3407 = vmatpush.bf16.msra.mxu0 %v2579
        %3408 = vmatpush.bf16.msra.mxu0 %v2571
        %3409 = vmatpush.bf16.msra.mxu0 %v2563
        %3410 = vmatpush.bf16.msra.mxu0 %v2555
        %3411 = vmatpush.bf16.msra.mxu0 %v2547
        %3412 = vmatpush.bf16.msra.mxu0 %v2539
        %3413 = vmatpush.bf16.msra.mxu0 %v2531
        %3414 = vmatpush.bf16.msra.mxu0 %v2523
        %3415 = vmatmul.bf16.gmra.mxu0 %v961
        %v3416 = vpop.f32.mrf.mxu0
        %v3417 = vadd.f32 %v3404, %v3416
        %v3418 = vpop.f32.mrf.mxu0
        %3419 = vdwg.mxu0
        %v3420 = vmul.f32 %v2962, 0.5
        %v3421 = vmul.f32 %v3027, 0.5
        %v3422 = vmul.f32 %v3092, 0.5
        %v3423 = vmul.f32 %v3157, 0.5
        %v3424 = vmul.f32 %v3222, 0.5
        %v3425 = vmul.f32 %v3287, 0.5
        %v3426 = vmul.f32 %v3352, 0.5
        %v3427 = vmul.f32 %v3417, 0.5
        %v3428 = vmul.f32 %v2962, %v537
        %v3429 = vmul.f32 %v3027, %v537
        %v3430 = vmul.f32 %v3092, %v537
        %v3431 = vmul.f32 %v3157, %v537
        %v3432 = vmul.f32 %v3222, %v537
        %v3433 = vmul.f32 %v3287, %v537
        %v3434 = vmul.f32 %v3352, %v537
        %v3435 = vmul.f32 %v3417, %v537
        %v3436 = vmul.f32 %v3428, %v3428
        %v3437 = vmin.f32 16.0, %v3436
        %v3438 = vmul.f32 %v3437, 2.1237322e-06
        %v3439 = vadd.f32 %v3438, 0.00028619796
        %v3440 = vmul.f32 %v3437, %v3439
        %v3441 = vadd.f32 %v3440, 0.0036580483
        %v3442 = vmul.f32 %v3437, %v3441
        %v3443 = vadd.f32 %v3442, 0.05243302
        %v3444 = vmul.f32 %v3437, %v3443
        %v3445 = vadd.f32 %v3444, 0.18741608
        %v3446 = vmul.f32 %v3437, %v3445
        %v3447 = vadd.f32 %v3446, 1.1283791
        %v3448 = vmul.f32 %v3428, %v3447
        %v3449 = vmul.f32 %v3437, 3.8918573e-05
        %v3450 = vadd.f32 %v3449, 0.001143296
        %v3451 = vmul.f32 %v3437, %v3450
        %v3452 = vadd.f32 %v3451, 0.014752088
        %v3453 = vmul.f32 %v3437, %v3452
        %v3454 = vadd.f32 %v3453, 0.112945676
        %v3455 = vmul.f32 %v3437, %v3454
        %v3456 = vadd.f32 %v3455, 0.4994258
        %v3457 = vmul.f32 %v3437, %v3456
        %v3458 = vadd.f32 %v3457, 1.0
        %v3459 = vrcp.pop %v3458
        %v3460 = vmul.f32 %v3458, %v3459
        %v3461 = vsub.f32 1.0, %v3460
        %v3462 = vmul.f32 %v3459, %v3461
        %v3463 = vadd.f32 %v3459, %v3462
        %vm3464 = vweird.f32 %v3458
        %vm3465 = vweird.f32 %v3459
        %vm3466 = vmor %vm3464, %vm3465
        %v3467 = vsel %vm3466, %v3459, %v3463
        %v3468 = vand.u32 2147483647, %v3458
        %vm3469 = vcmp.eq.f32.partialorder %v3468, 8.507059e+37
        %v3470 = vand.u32 %v3458, 2147483648
        %v3471 = vor.u32 1.1754944e-38, %v3470
        %v3472 = vsel %vm3469, %v3471, %v3467
        %v3473 = vmul.f32 %v3448, %v3472
        %v3474 = vmin.f32 %v3473, 1.0
        %v3475 = vmax.f32 %v3474, -1.0
        %v3476 = vmul.f32 %v3429, %v3429
        %v3477 = vmin.f32 16.0, %v3476
        %v3478 = vmul.f32 %v3477, 2.1237322e-06
        %v3479 = vadd.f32 %v3478, 0.00028619796
        %v3480 = vmul.f32 %v3477, %v3479
        %v3481 = vadd.f32 %v3480, 0.0036580483
        %v3482 = vmul.f32 %v3477, %v3481
        %v3483 = vadd.f32 %v3482, 0.05243302
        %v3484 = vmul.f32 %v3477, %v3483
        %v3485 = vadd.f32 %v3484, 0.18741608
        %v3486 = vmul.f32 %v3477, %v3485
        %v3487 = vadd.f32 %v3486, 1.1283791
        %v3488 = vmul.f32 %v3429, %v3487
        %v3489 = vmul.f32 %v3477, 3.8918573e-05
        %v3490 = vadd.f32 %v3489, 0.001143296
        %v3491 = vmul.f32 %v3477, %v3490
        %v3492 = vadd.f32 %v3491, 0.014752088
        %v3493 = vmul.f32 %v3477, %v3492
        %v3494 = vadd.f32 %v3493, 0.112945676
        %v3495 = vmul.f32 %v3477, %v3494
        %v3496 = vadd.f32 %v3495, 0.4994258
        %v3497 = vmul.f32 %v3477, %v3496
        %v3498 = vadd.f32 %v3497, 1.0
        %v3499 = vrcp.pop %v3498
        %v3500 = vmul.f32 %v3498, %v3499
        %v3501 = vsub.f32 1.0, %v3500
        %v3502 = vmul.f32 %v3499, %v3501
        %v3503 = vadd.f32 %v3499, %v3502
        %vm3504 = vweird.f32 %v3498
        %vm3505 = vweird.f32 %v3499
        %vm3506 = vmor %vm3504, %vm3505
        %v3507 = vsel %vm3506, %v3499, %v3503
        %v3508 = vand.u32 2147483647, %v3498
        %vm3509 = vcmp.eq.f32.partialorder %v3508, 8.507059e+37
        %v3510 = vand.u32 %v3498, 2147483648
        %v3511 = vor.u32 1.1754944e-38, %v3510
        %v3512 = vsel %vm3509, %v3511, %v3507
        %v3513 = vmul.f32 %v3488, %v3512
        %v3514 = vmin.f32 %v3513, 1.0
        %v3515 = vmax.f32 %v3514, -1.0
        %v3516 = vmul.f32 %v3430, %v3430
        %v3517 = vmin.f32 16.0, %v3516
        %v3518 = vmul.f32 %v3517, 2.1237322e-06
        %v3519 = vadd.f32 %v3518, 0.00028619796
        %v3520 = vmul.f32 %v3517, %v3519
        %v3521 = vadd.f32 %v3520, 0.0036580483
        %v3522 = vmul.f32 %v3517, %v3521
        %v3523 = vadd.f32 %v3522, 0.05243302
        %v3524 = vmul.f32 %v3517, %v3523
        %v3525 = vadd.f32 %v3524, 0.18741608
        %v3526 = vmul.f32 %v3517, %v3525
        %v3527 = vadd.f32 %v3526, 1.1283791
        %v3528 = vmul.f32 %v3430, %v3527
        %v3529 = vmul.f32 %v3517, 3.8918573e-05
        %v3530 = vadd.f32 %v3529, 0.001143296
        %v3531 = vmul.f32 %v3517, %v3530
        %v3532 = vadd.f32 %v3531, 0.014752088
        %v3533 = vmul.f32 %v3517, %v3532
        %v3534 = vadd.f32 %v3533, 0.112945676
        %v3535 = vmul.f32 %v3517, %v3534
        %v3536 = vadd.f32 %v3535, 0.4994258
        %v3537 = vmul.f32 %v3517, %v3536
        %v3538 = vadd.f32 %v3537, 1.0
        %v3539 = vrcp.pop %v3538
        %v3540 = vmul.f32 %v3538, %v3539
        %v3541 = vsub.f32 1.0, %v3540
        %v3542 = vmul.f32 %v3539, %v3541
        %v3543 = vadd.f32 %v3539, %v3542
        %vm3544 = vweird.f32 %v3538
        %vm3545 = vweird.f32 %v3539
        %vm3546 = vmor %vm3544, %vm3545
        %v3547 = vsel %vm3546, %v3539, %v3543
        %v3548 = vand.u32 2147483647, %v3538
        %vm3549 = vcmp.eq.f32.partialorder %v3548, 8.507059e+37
        %v3550 = vand.u32 %v3538, 2147483648
        %v3551 = vor.u32 1.1754944e-38, %v3550
        %v3552 = vsel %vm3549, %v3551, %v3547
        %v3553 = vmul.f32 %v3528, %v3552
        %v3554 = vmin.f32 %v3553, 1.0
        %v3555 = vmax.f32 %v3554, -1.0
        %v3556 = vmul.f32 %v3431, %v3431
        %v3557 = vmin.f32 16.0, %v3556
        %v3558 = vmul.f32 %v3557, 2.1237322e-06
        %v3559 = vadd.f32 %v3558, 0.00028619796
        %v3560 = vmul.f32 %v3557, %v3559
        %v3561 = vadd.f32 %v3560, 0.0036580483
        %v3562 = vmul.f32 %v3557, %v3561
        %v3563 = vadd.f32 %v3562, 0.05243302
        %v3564 = vmul.f32 %v3557, %v3563
        %v3565 = vadd.f32 %v3564, 0.18741608
        %v3566 = vmul.f32 %v3557, %v3565
        %v3567 = vadd.f32 %v3566, 1.1283791
        %v3568 = vmul.f32 %v3431, %v3567
        %v3569 = vmul.f32 %v3557, 3.8918573e-05
        %v3570 = vadd.f32 %v3569, 0.001143296
        %v3571 = vmul.f32 %v3557, %v3570
        %v3572 = vadd.f32 %v3571, 0.014752088
        %v3573 = vmul.f32 %v3557, %v3572
        %v3574 = vadd.f32 %v3573, 0.112945676
        %v3575 = vmul.f32 %v3557, %v3574
        %v3576 = vadd.f32 %v3575, 0.4994258
        %v3577 = vmul.f32 %v3557, %v3576
        %v3578 = vadd.f32 %v3577, 1.0
        %v3579 = vrcp.pop %v3578
        %v3580 = vmul.f32 %v3578, %v3579
        %v3581 = vsub.f32 1.0, %v3580
        %v3582 = vmul.f32 %v3579, %v3581
        %v3583 = vadd.f32 %v3579, %v3582
        %vm3584 = vweird.f32 %v3578
        %vm3585 = vweird.f32 %v3579
        %vm3586 = vmor %vm3584, %vm3585
        %v3587 = vsel %vm3586, %v3579, %v3583
        %v3588 = vand.u32 2147483647, %v3578
        %vm3589 = vcmp.eq.f32.partialorder %v3588, 8.507059e+37
        %v3590 = vand.u32 %v3578, 2147483648
        %v3591 = vor.u32 1.1754944e-38, %v3590
        %v3592 = vsel %vm3589, %v3591, %v3587
        %v3593 = vmul.f32 %v3568, %v3592
        %v3594 = vmin.f32 %v3593, 1.0
        %v3595 = vmax.f32 %v3594, -1.0
        %v3596 = vmul.f32 %v3432, %v3432
        %v3597 = vmin.f32 16.0, %v3596
        %v3598 = vmul.f32 %v3597, 2.1237322e-06
        %v3599 = vadd.f32 %v3598, 0.00028619796
        %v3600 = vmul.f32 %v3597, %v3599
        %v3601 = vadd.f32 %v3600, 0.0036580483
        %v3602 = vmul.f32 %v3597, %v3601
        %v3603 = vadd.f32 %v3602, 0.05243302
        %v3604 = vmul.f32 %v3597, %v3603
        %v3605 = vadd.f32 %v3604, 0.18741608
        %v3606 = vmul.f32 %v3597, %v3605
        %v3607 = vadd.f32 %v3606, 1.1283791
        %v3608 = vmul.f32 %v3432, %v3607
        %v3609 = vmul.f32 %v3597, 3.8918573e-05
        %v3610 = vadd.f32 %v3609, 0.001143296
        %v3611 = vmul.f32 %v3597, %v3610
        %v3612 = vadd.f32 %v3611, 0.014752088
        %v3613 = vmul.f32 %v3597, %v3612
        %v3614 = vadd.f32 %v3613, 0.112945676
        %v3615 = vmul.f32 %v3597, %v3614
        %v3616 = vadd.f32 %v3615, 0.4994258
        %v3617 = vmul.f32 %v3597, %v3616
        %v3618 = vadd.f32 %v3617, 1.0
        %v3619 = vrcp.pop %v3618
        %v3620 = vmul.f32 %v3618, %v3619
        %v3621 = vsub.f32 1.0, %v3620
        %v3622 = vmul.f32 %v3619, %v3621
        %v3623 = vadd.f32 %v3619, %v3622
        %vm3624 = vweird.f32 %v3618
        %vm3625 = vweird.f32 %v3619
        %vm3626 = vmor %vm3624, %vm3625
        %v3627 = vsel %vm3626, %v3619, %v3623
        %v3628 = vand.u32 2147483647, %v3618
        %vm3629 = vcmp.eq.f32.partialorder %v3628, 8.507059e+37
        %v3630 = vand.u32 %v3618, 2147483648
        %v3631 = vor.u32 1.1754944e-38, %v3630
        %v3632 = vsel %vm3629, %v3631, %v3627
        %v3633 = vmul.f32 %v3608, %v3632
        %v3634 = vmin.f32 %v3633, 1.0
        %v3635 = vmax.f32 %v3634, -1.0
        %v3636 = vmul.f32 %v3433, %v3433
        %v3637 = vmin.f32 16.0, %v3636
        %v3638 = vmul.f32 %v3637, 2.1237322e-06
        %v3639 = vadd.f32 %v3638, 0.00028619796
        %v3640 = vmul.f32 %v3637, %v3639
        %v3641 = vadd.f32 %v3640, 0.0036580483
        %v3642 = vmul.f32 %v3637, %v3641
        %v3643 = vadd.f32 %v3642, 0.05243302
        %v3644 = vmul.f32 %v3637, %v3643
        %v3645 = vadd.f32 %v3644, 0.18741608
        %v3646 = vmul.f32 %v3637, %v3645
        %v3647 = vadd.f32 %v3646, 1.1283791
        %v3648 = vmul.f32 %v3433, %v3647
        %v3649 = vmul.f32 %v3637, 3.8918573e-05
        %v3650 = vadd.f32 %v3649, 0.001143296
        %v3651 = vmul.f32 %v3637, %v3650
        %v3652 = vadd.f32 %v3651, 0.014752088
        %v3653 = vmul.f32 %v3637, %v3652
        %v3654 = vadd.f32 %v3653, 0.112945676
        %v3655 = vmul.f32 %v3637, %v3654
        %v3656 = vadd.f32 %v3655, 0.4994258
        %v3657 = vmul.f32 %v3637, %v3656
        %v3658 = vadd.f32 %v3657, 1.0
        %v3659 = vrcp.pop %v3658
        %v3660 = vmul.f32 %v3658, %v3659
        %v3661 = vsub.f32 1.0, %v3660
        %v3662 = vmul.f32 %v3659, %v3661
        %v3663 = vadd.f32 %v3659, %v3662
        %vm3664 = vweird.f32 %v3658
        %vm3665 = vweird.f32 %v3659
        %vm3666 = vmor %vm3664, %vm3665
        %v3667 = vsel %vm3666, %v3659, %v3663
        %v3668 = vand.u32 2147483647, %v3658
        %vm3669 = vcmp.eq.f32.partialorder %v3668, 8.507059e+37
        %v3670 = vand.u32 %v3658, 2147483648
        %v3671 = vor.u32 1.1754944e-38, %v3670
        %v3672 = vsel %vm3669, %v3671, %v3667
        %v3673 = vmul.f32 %v3648, %v3672
        %v3674 = vmin.f32 %v3673, 1.0
        %v3675 = vmax.f32 %v3674, -1.0
        %v3676 = vmul.f32 %v3434, %v3434
        %v3677 = vmin.f32 16.0, %v3676
        %v3678 = vmul.f32 %v3677, 2.1237322e-06
        %v3679 = vadd.f32 %v3678, 0.00028619796
        %v3680 = vmul.f32 %v3677, %v3679
        %v3681 = vadd.f32 %v3680, 0.0036580483
        %v3682 = vmul.f32 %v3677, %v3681
        %v3683 = vadd.f32 %v3682, 0.05243302
        %v3684 = vmul.f32 %v3677, %v3683
        %v3685 = vadd.f32 %v3684, 0.18741608
        %v3686 = vmul.f32 %v3677, %v3685
        %v3687 = vadd.f32 %v3686, 1.1283791
        %v3688 = vmul.f32 %v3434, %v3687
        %v3689 = vmul.f32 %v3677, 3.8918573e-05
        %v3690 = vadd.f32 %v3689, 0.001143296
        %v3691 = vmul.f32 %v3677, %v3690
        %v3692 = vadd.f32 %v3691, 0.014752088
        %v3693 = vmul.f32 %v3677, %v3692
        %v3694 = vadd.f32 %v3693, 0.112945676
        %v3695 = vmul.f32 %v3677, %v3694
        %v3696 = vadd.f32 %v3695, 0.4994258
        %v3697 = vmul.f32 %v3677, %v3696
        %v3698 = vadd.f32 %v3697, 1.0
        %v3699 = vrcp.pop %v3698
        %v3700 = vmul.f32 %v3698, %v3699
        %v3701 = vsub.f32 1.0, %v3700
        %v3702 = vmul.f32 %v3699, %v3701
        %v3703 = vadd.f32 %v3699, %v3702
        %vm3704 = vweird.f32 %v3698
        %vm3705 = vweird.f32 %v3699
        %vm3706 = vmor %vm3704, %vm3705
        %v3707 = vsel %vm3706, %v3699, %v3703
        %v3708 = vand.u32 2147483647, %v3698
        %vm3709 = vcmp.eq.f32.partialorder %v3708, 8.507059e+37
        %v3710 = vand.u32 %v3698, 2147483648
        %v3711 = vor.u32 1.1754944e-38, %v3710
        %v3712 = vsel %vm3709, %v3711, %v3707
        %v3713 = vmul.f32 %v3688, %v3712
        %v3714 = vmin.f32 %v3713, 1.0
        %v3715 = vmax.f32 %v3714, -1.0
        %v3716 = vmul.f32 %v3435, %v3435
        %v3717 = vmin.f32 16.0, %v3716
        %v3718 = vmul.f32 %v3717, 2.1237322e-06
        %v3719 = vadd.f32 %v3718, 0.00028619796
        %v3720 = vmul.f32 %v3717, %v3719
        %v3721 = vadd.f32 %v3720, 0.0036580483
        %v3722 = vmul.f32 %v3717, %v3721
        %v3723 = vadd.f32 %v3722, 0.05243302
        %v3724 = vmul.f32 %v3717, %v3723
        %v3725 = vadd.f32 %v3724, 0.18741608
        %v3726 = vmul.f32 %v3717, %v3725
        %v3727 = vadd.f32 %v3726, 1.1283791
        %v3728 = vmul.f32 %v3435, %v3727
        %v3729 = vmul.f32 %v3717, 3.8918573e-05
        %v3730 = vadd.f32 %v3729, 0.001143296
        %v3731 = vmul.f32 %v3717, %v3730
        %v3732 = vadd.f32 %v3731, 0.014752088
        %v3733 = vmul.f32 %v3717, %v3732
        %v3734 = vadd.f32 %v3733, 0.112945676
        %v3735 = vmul.f32 %v3717, %v3734
        %v3736 = vadd.f32 %v3735, 0.4994258
        %v3737 = vmul.f32 %v3717, %v3736
        %v3738 = vadd.f32 %v3737, 1.0
        %v3739 = vrcp.pop %v3738
        %v3740 = vmul.f32 %v3738, %v3739
        %v3741 = vsub.f32 1.0, %v3740
        %v3742 = vmul.f32 %v3739, %v3741
        %v3743 = vadd.f32 %v3739, %v3742
        %vm3744 = vweird.f32 %v3738
        %vm3745 = vweird.f32 %v3739
        %vm3746 = vmor %vm3744, %vm3745
        %v3747 = vsel %vm3746, %v3739, %v3743
        %v3748 = vand.u32 2147483647, %v3738
        %vm3749 = vcmp.eq.f32.partialorder %v3748, 8.507059e+37
        %v3750 = vand.u32 %v3738, 2147483648
        %v3751 = vor.u32 1.1754944e-38, %v3750
        %v3752 = vsel %vm3749, %v3751, %v3747
        %v3753 = vmul.f32 %v3728, %v3752
        %v3754 = vmin.f32 %v3753, 1.0
        %v3755 = vmax.f32 %v3754, -1.0
        %v3756 = vadd.f32 %v3475, 1.0
        %v3757 = vadd.f32 %v3515, 1.0
        %v3758 = vadd.f32 %v3555, 1.0
        %v3759 = vadd.f32 %v3595, 1.0
        %v3760 = vadd.f32 %v3635, 1.0
        %v3761 = vadd.f32 %v3675, 1.0
        %v3762 = vadd.f32 %v3715, 1.0
        %v3763 = vadd.f32 %v3755, 1.0
        %v3764 = vmul.f32 %v3420, %v3756
        %v3765 = vmul.f32 %v3421, %v3757
        %v3766 = vmul.f32 %v3422, %v3758
        %v3767 = vmul.f32 %v3423, %v3759
        %v3768 = vmul.f32 %v3424, %v3760
        %v3769 = vmul.f32 %v3425, %v3761
        %v3770 = vmul.f32 %v3426, %v3762
        %v3771 = vmul.f32 %v3427, %v3763
        %v3772 = vpack.c.bf16 %v3764, %v3764
        %v3773 = vpack.c.bf16 %v3765, %v3765
        %v3774 = vpack.c.bf16 %v3766, %v3766
        %v3775 = vpack.c.bf16 %v3767, %v3767
        %v3776 = vpack.c.bf16 %v3768, %v3768
        %v3777 = vpack.c.bf16 %v3769, %v3769
        %v3778 = vpack.c.bf16 %v3770, %v3770
        %v3779 = vpack.c.bf16 %v3771, %v3771
        %v3780 = vld [vmem:[%s446] sm:$0xff]
        %v3781 = vld [vmem:[%s446 + $0x8] sm:$0xff]
        %v3782 = vld [vmem:[%s446 + $0x10] sm:$0xff]
        %v3783 = vld [vmem:[%s446 + $0x18] sm:$0xff]
        %v3784 = vld [vmem:[%s446 + $0x20] sm:$0xff]
        %v3785 = vld [vmem:[%s446 + $0x28] sm:$0xff]
        %v3786 = vld [vmem:[%s446 + $0x30] sm:$0xff]
        %v3787 = vld [vmem:[%s446 + $0x38] sm:$0xff]
        %v3788 = vld [vmem:[%s446 + $0x40] sm:$0xff]
        %v3789 = vld [vmem:[%s446 + $0x48] sm:$0xff]
        %v3790 = vld [vmem:[%s446 + $0x50] sm:$0xff]
        %v3791 = vld [vmem:[%s446 + $0x58] sm:$0xff]
        %v3792 = vld [vmem:[%s446 + $0x60] sm:$0xff]
        %v3793 = vld [vmem:[%s446 + $0x68] sm:$0xff]
        %v3794 = vld [vmem:[%s446 + $0x70] sm:$0xff]
        %v3795 = vld [vmem:[%s446 + $0x78] sm:$0xff]
        %v3796 = vld [vmem:[%s446 + $0x80] sm:$0xff]
        %v3797 = vld [vmem:[%s446 + $0x88] sm:$0xff]
        %v3798 = vld [vmem:[%s446 + $0x90] sm:$0xff]
        %v3799 = vld [vmem:[%s446 + $0x98] sm:$0xff]
        %v3800 = vld [vmem:[%s446 + $0xa0] sm:$0xff]
        %v3801 = vld [vmem:[%s446 + $0xa8] sm:$0xff]
        %v3802 = vld [vmem:[%s446 + $0xb0] sm:$0xff]
        %v3803 = vld [vmem:[%s446 + $0xb8] sm:$0xff]
        %v3804 = vld [vmem:[%s446 + $0xc0] sm:$0xff]
        %v3805 = vld [vmem:[%s446 + $0xc8] sm:$0xff]
        %v3806 = vld [vmem:[%s446 + $0xd0] sm:$0xff]
        %v3807 = vld [vmem:[%s446 + $0xd8] sm:$0xff]
        %v3808 = vld [vmem:[%s446 + $0xe0] sm:$0xff]
        %v3809 = vld [vmem:[%s446 + $0xe8] sm:$0xff]
        %v3810 = vld [vmem:[%s446 + $0xf0] sm:$0xff]
        %v3811 = vld [vmem:[%s446 + $0xf8] sm:$0xff]
        %v3812 = vld [vmem:[%s446 + $0x100] sm:$0xff]
        %v3813 = vld [vmem:[%s446 + $0x108] sm:$0xff]
        %v3814 = vld [vmem:[%s446 + $0x110] sm:$0xff]
        %v3815 = vld [vmem:[%s446 + $0x118] sm:$0xff]
        %v3816 = vld [vmem:[%s446 + $0x120] sm:$0xff]
        %v3817 = vld [vmem:[%s446 + $0x128] sm:$0xff]
        %v3818 = vld [vmem:[%s446 + $0x130] sm:$0xff]
        %v3819 = vld [vmem:[%s446 + $0x138] sm:$0xff]
        %v3820 = vld [vmem:[%s446 + $0x140] sm:$0xff]
        %v3821 = vld [vmem:[%s446 + $0x148] sm:$0xff]
        %v3822 = vld [vmem:[%s446 + $0x150] sm:$0xff]
        %v3823 = vld [vmem:[%s446 + $0x158] sm:$0xff]
        %v3824 = vld [vmem:[%s446 + $0x160] sm:$0xff]
        %v3825 = vld [vmem:[%s446 + $0x168] sm:$0xff]
        %v3826 = vld [vmem:[%s446 + $0x170] sm:$0xff]
        %v3827 = vld [vmem:[%s446 + $0x178] sm:$0xff]
        %v3828 = vld [vmem:[%s446 + $0x180] sm:$0xff]
        %v3829 = vld [vmem:[%s446 + $0x188] sm:$0xff]
        %v3830 = vld [vmem:[%s446 + $0x190] sm:$0xff]
        %v3831 = vld [vmem:[%s446 + $0x198] sm:$0xff]
        %v3832 = vld [vmem:[%s446 + $0x1a0] sm:$0xff]
        %v3833 = vld [vmem:[%s446 + $0x1a8] sm:$0xff]
        %v3834 = vld [vmem:[%s446 + $0x1b0] sm:$0xff]
        %v3835 = vld [vmem:[%s446 + $0x1b8] sm:$0xff]
        %v3836 = vld [vmem:[%s446 + $0x1c0] sm:$0xff]
        %v3837 = vld [vmem:[%s446 + $0x1c8] sm:$0xff]
        %v3838 = vld [vmem:[%s446 + $0x1d0] sm:$0xff]
        %v3839 = vld [vmem:[%s446 + $0x1d8] sm:$0xff]
        %v3840 = vld [vmem:[%s446 + $0x1e0] sm:$0xff]
        %v3841 = vld [vmem:[%s446 + $0x1e8] sm:$0xff]
        %v3842 = vld [vmem:[%s446 + $0x1f0] sm:$0xff]
        %v3843 = vld [vmem:[%s446 + $0x1f8] sm:$0xff]
        %v3844 = vld [vmem:[%s446 + $0x200] sm:$0xff]
        %v3845 = vld [vmem:[%s446 + $0x208] sm:$0xff]
        %v3846 = vld [vmem:[%s446 + $0x210] sm:$0xff]
        %v3847 = vld [vmem:[%s446 + $0x218] sm:$0xff]
        %v3848 = vld [vmem:[%s446 + $0x220] sm:$0xff]
        %v3849 = vld [vmem:[%s446 + $0x228] sm:$0xff]
        %v3850 = vld [vmem:[%s446 + $0x230] sm:$0xff]
        %v3851 = vld [vmem:[%s446 + $0x238] sm:$0xff]
        %v3852 = vld [vmem:[%s446 + $0x240] sm:$0xff]
        %v3853 = vld [vmem:[%s446 + $0x248] sm:$0xff]
        %v3854 = vld [vmem:[%s446 + $0x250] sm:$0xff]
        %v3855 = vld [vmem:[%s446 + $0x258] sm:$0xff]
        %v3856 = vld [vmem:[%s446 + $0x260] sm:$0xff]
        %v3857 = vld [vmem:[%s446 + $0x268] sm:$0xff]
        %v3858 = vld [vmem:[%s446 + $0x270] sm:$0xff]
        %v3859 = vld [vmem:[%s446 + $0x278] sm:$0xff]
        %v3860 = vld [vmem:[%s446 + $0x280] sm:$0xff]
        %v3861 = vld [vmem:[%s446 + $0x288] sm:$0xff]
        %v3862 = vld [vmem:[%s446 + $0x290] sm:$0xff]
        %v3863 = vld [vmem:[%s446 + $0x298] sm:$0xff]
        %v3864 = vld [vmem:[%s446 + $0x2a0] sm:$0xff]
        %v3865 = vld [vmem:[%s446 + $0x2a8] sm:$0xff]
        %v3866 = vld [vmem:[%s446 + $0x2b0] sm:$0xff]
        %v3867 = vld [vmem:[%s446 + $0x2b8] sm:$0xff]
        %v3868 = vld [vmem:[%s446 + $0x2c0] sm:$0xff]
        %v3869 = vld [vmem:[%s446 + $0x2c8] sm:$0xff]
        %v3870 = vld [vmem:[%s446 + $0x2d0] sm:$0xff]
        %v3871 = vld [vmem:[%s446 + $0x2d8] sm:$0xff]
        %v3872 = vld [vmem:[%s446 + $0x2e0] sm:$0xff]
        %v3873 = vld [vmem:[%s446 + $0x2e8] sm:$0xff]
        %v3874 = vld [vmem:[%s446 + $0x2f0] sm:$0xff]
        %v3875 = vld [vmem:[%s446 + $0x2f8] sm:$0xff]
        %v3876 = vld [vmem:[%s446 + $0x300] sm:$0xff]
        %v3877 = vld [vmem:[%s446 + $0x308] sm:$0xff]
        %v3878 = vld [vmem:[%s446 + $0x310] sm:$0xff]
        %v3879 = vld [vmem:[%s446 + $0x318] sm:$0xff]
        %v3880 = vld [vmem:[%s446 + $0x320] sm:$0xff]
        %v3881 = vld [vmem:[%s446 + $0x328] sm:$0xff]
        %v3882 = vld [vmem:[%s446 + $0x330] sm:$0xff]
        %v3883 = vld [vmem:[%s446 + $0x338] sm:$0xff]
        %v3884 = vld [vmem:[%s446 + $0x340] sm:$0xff]
        %v3885 = vld [vmem:[%s446 + $0x348] sm:$0xff]
        %v3886 = vld [vmem:[%s446 + $0x350] sm:$0xff]
        %v3887 = vld [vmem:[%s446 + $0x358] sm:$0xff]
        %v3888 = vld [vmem:[%s446 + $0x360] sm:$0xff]
        %v3889 = vld [vmem:[%s446 + $0x368] sm:$0xff]
        %v3890 = vld [vmem:[%s446 + $0x370] sm:$0xff]
        %v3891 = vld [vmem:[%s446 + $0x378] sm:$0xff]
        %v3892 = vld [vmem:[%s446 + $0x380] sm:$0xff]
        %v3893 = vld [vmem:[%s446 + $0x388] sm:$0xff]
        %v3894 = vld [vmem:[%s446 + $0x390] sm:$0xff]
        %v3895 = vld [vmem:[%s446 + $0x398] sm:$0xff]
        %v3896 = vld [vmem:[%s446 + $0x3a0] sm:$0xff]
        %v3897 = vld [vmem:[%s446 + $0x3a8] sm:$0xff]
        %v3898 = vld [vmem:[%s446 + $0x3b0] sm:$0xff]
        %v3899 = vld [vmem:[%s446 + $0x3b8] sm:$0xff]
        %v3900 = vld [vmem:[%s446 + $0x3c0] sm:$0xff]
        %v3901 = vld [vmem:[%s446 + $0x3c8] sm:$0xff]
        %v3902 = vld [vmem:[%s446 + $0x3d0] sm:$0xff]
        %v3903 = vld [vmem:[%s446 + $0x3d8] sm:$0xff]
        %v3904 = vld [vmem:[%s446 + $0x3e0] sm:$0xff]
        %v3905 = vld [vmem:[%s446 + $0x3e8] sm:$0xff]
        %v3906 = vld [vmem:[%s446 + $0x3f0] sm:$0xff]
        %v3907 = vld [vmem:[%s446 + $0x3f8] sm:$0xff]
        %v3908 = vld [vmem:[%s446 + $0x400] sm:$0xff]
        %v3909 = vld [vmem:[%s446 + $0x408] sm:$0xff]
        %v3910 = vld [vmem:[%s446 + $0x410] sm:$0xff]
        %v3911 = vld [vmem:[%s446 + $0x418] sm:$0xff]
        %v3912 = vld [vmem:[%s446 + $0x420] sm:$0xff]
        %v3913 = vld [vmem:[%s446 + $0x428] sm:$0xff]
        %v3914 = vld [vmem:[%s446 + $0x430] sm:$0xff]
        %v3915 = vld [vmem:[%s446 + $0x438] sm:$0xff]
        %v3916 = vld [vmem:[%s446 + $0x440] sm:$0xff]
        %v3917 = vld [vmem:[%s446 + $0x448] sm:$0xff]
        %v3918 = vld [vmem:[%s446 + $0x450] sm:$0xff]
        %v3919 = vld [vmem:[%s446 + $0x458] sm:$0xff]
        %v3920 = vld [vmem:[%s446 + $0x460] sm:$0xff]
        %v3921 = vld [vmem:[%s446 + $0x468] sm:$0xff]
        %v3922 = vld [vmem:[%s446 + $0x470] sm:$0xff]
        %v3923 = vld [vmem:[%s446 + $0x478] sm:$0xff]
        %v3924 = vld [vmem:[%s446 + $0x480] sm:$0xff]
        %v3925 = vld [vmem:[%s446 + $0x488] sm:$0xff]
        %v3926 = vld [vmem:[%s446 + $0x490] sm:$0xff]
        %v3927 = vld [vmem:[%s446 + $0x498] sm:$0xff]
        %v3928 = vld [vmem:[%s446 + $0x4a0] sm:$0xff]
        %v3929 = vld [vmem:[%s446 + $0x4a8] sm:$0xff]
        %v3930 = vld [vmem:[%s446 + $0x4b0] sm:$0xff]
        %v3931 = vld [vmem:[%s446 + $0x4b8] sm:$0xff]
        %v3932 = vld [vmem:[%s446 + $0x4c0] sm:$0xff]
        %v3933 = vld [vmem:[%s446 + $0x4c8] sm:$0xff]
        %v3934 = vld [vmem:[%s446 + $0x4d0] sm:$0xff]
        %v3935 = vld [vmem:[%s446 + $0x4d8] sm:$0xff]
        %v3936 = vld [vmem:[%s446 + $0x4e0] sm:$0xff]
        %v3937 = vld [vmem:[%s446 + $0x4e8] sm:$0xff]
        %v3938 = vld [vmem:[%s446 + $0x4f0] sm:$0xff]
        %v3939 = vld [vmem:[%s446 + $0x4f8] sm:$0xff]
        %v3940 = vld [vmem:[%s446 + $0x500] sm:$0xff]
        %v3941 = vld [vmem:[%s446 + $0x508] sm:$0xff]
        %v3942 = vld [vmem:[%s446 + $0x510] sm:$0xff]
        %v3943 = vld [vmem:[%s446 + $0x518] sm:$0xff]
        %v3944 = vld [vmem:[%s446 + $0x520] sm:$0xff]
        %v3945 = vld [vmem:[%s446 + $0x528] sm:$0xff]
        %v3946 = vld [vmem:[%s446 + $0x530] sm:$0xff]
        %v3947 = vld [vmem:[%s446 + $0x538] sm:$0xff]
        %v3948 = vld [vmem:[%s446 + $0x540] sm:$0xff]
        %v3949 = vld [vmem:[%s446 + $0x548] sm:$0xff]
        %v3950 = vld [vmem:[%s446 + $0x550] sm:$0xff]
        %v3951 = vld [vmem:[%s446 + $0x558] sm:$0xff]
        %v3952 = vld [vmem:[%s446 + $0x560] sm:$0xff]
        %v3953 = vld [vmem:[%s446 + $0x568] sm:$0xff]
        %v3954 = vld [vmem:[%s446 + $0x570] sm:$0xff]
        %v3955 = vld [vmem:[%s446 + $0x578] sm:$0xff]
        %v3956 = vld [vmem:[%s446 + $0x580] sm:$0xff]
        %v3957 = vld [vmem:[%s446 + $0x588] sm:$0xff]
        %v3958 = vld [vmem:[%s446 + $0x590] sm:$0xff]
        %v3959 = vld [vmem:[%s446 + $0x598] sm:$0xff]
        %v3960 = vld [vmem:[%s446 + $0x5a0] sm:$0xff]
        %v3961 = vld [vmem:[%s446 + $0x5a8] sm:$0xff]
        %v3962 = vld [vmem:[%s446 + $0x5b0] sm:$0xff]
        %v3963 = vld [vmem:[%s446 + $0x5b8] sm:$0xff]
        %v3964 = vld [vmem:[%s446 + $0x5c0] sm:$0xff]
        %v3965 = vld [vmem:[%s446 + $0x5c8] sm:$0xff]
        %v3966 = vld [vmem:[%s446 + $0x5d0] sm:$0xff]
        %v3967 = vld [vmem:[%s446 + $0x5d8] sm:$0xff]
        %v3968 = vld [vmem:[%s446 + $0x5e0] sm:$0xff]
        %v3969 = vld [vmem:[%s446 + $0x5e8] sm:$0xff]
        %v3970 = vld [vmem:[%s446 + $0x5f0] sm:$0xff]
        %v3971 = vld [vmem:[%s446 + $0x5f8] sm:$0xff]
        %v3972 = vld [vmem:[%s446 + $0x600] sm:$0xff]
        %v3973 = vld [vmem:[%s446 + $0x608] sm:$0xff]
        %v3974 = vld [vmem:[%s446 + $0x610] sm:$0xff]
        %v3975 = vld [vmem:[%s446 + $0x618] sm:$0xff]
        %v3976 = vld [vmem:[%s446 + $0x620] sm:$0xff]
        %v3977 = vld [vmem:[%s446 + $0x628] sm:$0xff]
        %v3978 = vld [vmem:[%s446 + $0x630] sm:$0xff]
        %v3979 = vld [vmem:[%s446 + $0x638] sm:$0xff]
        %v3980 = vld [vmem:[%s446 + $0x640] sm:$0xff]
        %v3981 = vld [vmem:[%s446 + $0x648] sm:$0xff]
        %v3982 = vld [vmem:[%s446 + $0x650] sm:$0xff]
        %v3983 = vld [vmem:[%s446 + $0x658] sm:$0xff]
        %v3984 = vld [vmem:[%s446 + $0x660] sm:$0xff]
        %v3985 = vld [vmem:[%s446 + $0x668] sm:$0xff]
        %v3986 = vld [vmem:[%s446 + $0x670] sm:$0xff]
        %v3987 = vld [vmem:[%s446 + $0x678] sm:$0xff]
        %v3988 = vld [vmem:[%s446 + $0x680] sm:$0xff]
        %v3989 = vld [vmem:[%s446 + $0x688] sm:$0xff]
        %v3990 = vld [vmem:[%s446 + $0x690] sm:$0xff]
        %v3991 = vld [vmem:[%s446 + $0x698] sm:$0xff]
        %v3992 = vld [vmem:[%s446 + $0x6a0] sm:$0xff]
        %v3993 = vld [vmem:[%s446 + $0x6a8] sm:$0xff]
        %v3994 = vld [vmem:[%s446 + $0x6b0] sm:$0xff]
        %v3995 = vld [vmem:[%s446 + $0x6b8] sm:$0xff]
        %v3996 = vld [vmem:[%s446 + $0x6c0] sm:$0xff]
        %v3997 = vld [vmem:[%s446 + $0x6c8] sm:$0xff]
        %v3998 = vld [vmem:[%s446 + $0x6d0] sm:$0xff]
        %v3999 = vld [vmem:[%s446 + $0x6d8] sm:$0xff]
        %v4000 = vld [vmem:[%s446 + $0x6e0] sm:$0xff]
        %v4001 = vld [vmem:[%s446 + $0x6e8] sm:$0xff]
        %v4002 = vld [vmem:[%s446 + $0x6f0] sm:$0xff]
        %v4003 = vld [vmem:[%s446 + $0x6f8] sm:$0xff]
        %v4004 = vld [vmem:[%s446 + $0x700] sm:$0xff]
        %v4005 = vld [vmem:[%s446 + $0x708] sm:$0xff]
        %v4006 = vld [vmem:[%s446 + $0x710] sm:$0xff]
        %v4007 = vld [vmem:[%s446 + $0x718] sm:$0xff]
        %v4008 = vld [vmem:[%s446 + $0x720] sm:$0xff]
        %v4009 = vld [vmem:[%s446 + $0x728] sm:$0xff]
        %v4010 = vld [vmem:[%s446 + $0x730] sm:$0xff]
        %v4011 = vld [vmem:[%s446 + $0x738] sm:$0xff]
        %v4012 = vld [vmem:[%s446 + $0x740] sm:$0xff]
        %v4013 = vld [vmem:[%s446 + $0x748] sm:$0xff]
        %v4014 = vld [vmem:[%s446 + $0x750] sm:$0xff]
        %v4015 = vld [vmem:[%s446 + $0x758] sm:$0xff]
        %v4016 = vld [vmem:[%s446 + $0x760] sm:$0xff]
        %v4017 = vld [vmem:[%s446 + $0x768] sm:$0xff]
        %v4018 = vld [vmem:[%s446 + $0x770] sm:$0xff]
        %v4019 = vld [vmem:[%s446 + $0x778] sm:$0xff]
        %v4020 = vld [vmem:[%s446 + $0x780] sm:$0xff]
        %v4021 = vld [vmem:[%s446 + $0x788] sm:$0xff]
        %v4022 = vld [vmem:[%s446 + $0x790] sm:$0xff]
        %v4023 = vld [vmem:[%s446 + $0x798] sm:$0xff]
        %v4024 = vld [vmem:[%s446 + $0x7a0] sm:$0xff]
        %v4025 = vld [vmem:[%s446 + $0x7a8] sm:$0xff]
        %v4026 = vld [vmem:[%s446 + $0x7b0] sm:$0xff]
        %v4027 = vld [vmem:[%s446 + $0x7b8] sm:$0xff]
        %v4028 = vld [vmem:[%s446 + $0x7c0] sm:$0xff]
        %v4029 = vld [vmem:[%s446 + $0x7c8] sm:$0xff]
        %v4030 = vld [vmem:[%s446 + $0x7d0] sm:$0xff]
        %v4031 = vld [vmem:[%s446 + $0x7d8] sm:$0xff]
        %v4032 = vld [vmem:[%s446 + $0x7e0] sm:$0xff]
        %v4033 = vld [vmem:[%s446 + $0x7e8] sm:$0xff]
        %v4034 = vld [vmem:[%s446 + $0x7f0] sm:$0xff]
        %v4035 = vld [vmem:[%s446 + $0x7f8] sm:$0xff]
        %v4036 = vld [vmem:[%s446 + $0x800] sm:$0xff]
        %v4037 = vld [vmem:[%s446 + $0x808] sm:$0xff]
        %v4038 = vld [vmem:[%s446 + $0x810] sm:$0xff]
        %v4039 = vld [vmem:[%s446 + $0x818] sm:$0xff]
        %v4040 = vld [vmem:[%s446 + $0x820] sm:$0xff]
        %v4041 = vld [vmem:[%s446 + $0x828] sm:$0xff]
        %v4042 = vld [vmem:[%s446 + $0x830] sm:$0xff]
        %v4043 = vld [vmem:[%s446 + $0x838] sm:$0xff]
        %v4044 = vld [vmem:[%s446 + $0x840] sm:$0xff]
        %v4045 = vld [vmem:[%s446 + $0x848] sm:$0xff]
        %v4046 = vld [vmem:[%s446 + $0x850] sm:$0xff]
        %v4047 = vld [vmem:[%s446 + $0x858] sm:$0xff]
        %v4048 = vld [vmem:[%s446 + $0x860] sm:$0xff]
        %v4049 = vld [vmem:[%s446 + $0x868] sm:$0xff]
        %v4050 = vld [vmem:[%s446 + $0x870] sm:$0xff]
        %v4051 = vld [vmem:[%s446 + $0x878] sm:$0xff]
        %v4052 = vld [vmem:[%s446 + $0x880] sm:$0xff]
        %v4053 = vld [vmem:[%s446 + $0x888] sm:$0xff]
        %v4054 = vld [vmem:[%s446 + $0x890] sm:$0xff]
        %v4055 = vld [vmem:[%s446 + $0x898] sm:$0xff]
        %v4056 = vld [vmem:[%s446 + $0x8a0] sm:$0xff]
        %v4057 = vld [vmem:[%s446 + $0x8a8] sm:$0xff]
        %v4058 = vld [vmem:[%s446 + $0x8b0] sm:$0xff]
        %v4059 = vld [vmem:[%s446 + $0x8b8] sm:$0xff]
        %v4060 = vld [vmem:[%s446 + $0x8c0] sm:$0xff]
        %v4061 = vld [vmem:[%s446 + $0x8c8] sm:$0xff]
        %v4062 = vld [vmem:[%s446 + $0x8d0] sm:$0xff]
        %v4063 = vld [vmem:[%s446 + $0x8d8] sm:$0xff]
        %v4064 = vld [vmem:[%s446 + $0x8e0] sm:$0xff]
        %v4065 = vld [vmem:[%s446 + $0x8e8] sm:$0xff]
        %v4066 = vld [vmem:[%s446 + $0x8f0] sm:$0xff]
        %v4067 = vld [vmem:[%s446 + $0x8f8] sm:$0xff]
        %v4068 = vld [vmem:[%s446 + $0x900] sm:$0xff]
        %v4069 = vld [vmem:[%s446 + $0x908] sm:$0xff]
        %v4070 = vld [vmem:[%s446 + $0x910] sm:$0xff]
        %v4071 = vld [vmem:[%s446 + $0x918] sm:$0xff]
        %v4072 = vld [vmem:[%s446 + $0x920] sm:$0xff]
        %v4073 = vld [vmem:[%s446 + $0x928] sm:$0xff]
        %v4074 = vld [vmem:[%s446 + $0x930] sm:$0xff]
        %v4075 = vld [vmem:[%s446 + $0x938] sm:$0xff]
        %v4076 = vld [vmem:[%s446 + $0x940] sm:$0xff]
        %v4077 = vld [vmem:[%s446 + $0x948] sm:$0xff]
        %v4078 = vld [vmem:[%s446 + $0x950] sm:$0xff]
        %v4079 = vld [vmem:[%s446 + $0x958] sm:$0xff]
        %v4080 = vld [vmem:[%s446 + $0x960] sm:$0xff]
        %v4081 = vld [vmem:[%s446 + $0x968] sm:$0xff]
        %v4082 = vld [vmem:[%s446 + $0x970] sm:$0xff]
        %v4083 = vld [vmem:[%s446 + $0x978] sm:$0xff]
        %v4084 = vld [vmem:[%s446 + $0x980] sm:$0xff]
        %v4085 = vld [vmem:[%s446 + $0x988] sm:$0xff]
        %v4086 = vld [vmem:[%s446 + $0x990] sm:$0xff]
        %v4087 = vld [vmem:[%s446 + $0x998] sm:$0xff]
        %v4088 = vld [vmem:[%s446 + $0x9a0] sm:$0xff]
        %v4089 = vld [vmem:[%s446 + $0x9a8] sm:$0xff]
        %v4090 = vld [vmem:[%s446 + $0x9b0] sm:$0xff]
        %v4091 = vld [vmem:[%s446 + $0x9b8] sm:$0xff]
        %v4092 = vld [vmem:[%s446 + $0x9c0] sm:$0xff]
        %v4093 = vld [vmem:[%s446 + $0x9c8] sm:$0xff]
        %v4094 = vld [vmem:[%s446 + $0x9d0] sm:$0xff]
        %v4095 = vld [vmem:[%s446 + $0x9d8] sm:$0xff]
        %v4096 = vld [vmem:[%s446 + $0x9e0] sm:$0xff]
        %v4097 = vld [vmem:[%s446 + $0x9e8] sm:$0xff]
        %v4098 = vld [vmem:[%s446 + $0x9f0] sm:$0xff]
        %v4099 = vld [vmem:[%s446 + $0x9f8] sm:$0xff]
        %v4100 = vld [vmem:[%s446 + $0xa00] sm:$0xff]
        %v4101 = vld [vmem:[%s446 + $0xa08] sm:$0xff]
        %v4102 = vld [vmem:[%s446 + $0xa10] sm:$0xff]
        %v4103 = vld [vmem:[%s446 + $0xa18] sm:$0xff]
        %v4104 = vld [vmem:[%s446 + $0xa20] sm:$0xff]
        %v4105 = vld [vmem:[%s446 + $0xa28] sm:$0xff]
        %v4106 = vld [vmem:[%s446 + $0xa30] sm:$0xff]
        %v4107 = vld [vmem:[%s446 + $0xa38] sm:$0xff]
        %v4108 = vld [vmem:[%s446 + $0xa40] sm:$0xff]
        %v4109 = vld [vmem:[%s446 + $0xa48] sm:$0xff]
        %v4110 = vld [vmem:[%s446 + $0xa50] sm:$0xff]
        %v4111 = vld [vmem:[%s446 + $0xa58] sm:$0xff]
        %v4112 = vld [vmem:[%s446 + $0xa60] sm:$0xff]
        %v4113 = vld [vmem:[%s446 + $0xa68] sm:$0xff]
        %v4114 = vld [vmem:[%s446 + $0xa70] sm:$0xff]
        %v4115 = vld [vmem:[%s446 + $0xa78] sm:$0xff]
        %v4116 = vld [vmem:[%s446 + $0xa80] sm:$0xff]
        %v4117 = vld [vmem:[%s446 + $0xa88] sm:$0xff]
        %v4118 = vld [vmem:[%s446 + $0xa90] sm:$0xff]
        %v4119 = vld [vmem:[%s446 + $0xa98] sm:$0xff]
        %v4120 = vld [vmem:[%s446 + $0xaa0] sm:$0xff]
        %v4121 = vld [vmem:[%s446 + $0xaa8] sm:$0xff]
        %v4122 = vld [vmem:[%s446 + $0xab0] sm:$0xff]
        %v4123 = vld [vmem:[%s446 + $0xab8] sm:$0xff]
        %v4124 = vld [vmem:[%s446 + $0xac0] sm:$0xff]
        %v4125 = vld [vmem:[%s446 + $0xac8] sm:$0xff]
        %v4126 = vld [vmem:[%s446 + $0xad0] sm:$0xff]
        %v4127 = vld [vmem:[%s446 + $0xad8] sm:$0xff]
        %v4128 = vld [vmem:[%s446 + $0xae0] sm:$0xff]
        %v4129 = vld [vmem:[%s446 + $0xae8] sm:$0xff]
        %v4130 = vld [vmem:[%s446 + $0xaf0] sm:$0xff]
        %v4131 = vld [vmem:[%s446 + $0xaf8] sm:$0xff]
        %v4132 = vld [vmem:[%s446 + $0xb00] sm:$0xff]
        %v4133 = vld [vmem:[%s446 + $0xb08] sm:$0xff]
        %v4134 = vld [vmem:[%s446 + $0xb10] sm:$0xff]
        %v4135 = vld [vmem:[%s446 + $0xb18] sm:$0xff]
        %v4136 = vld [vmem:[%s446 + $0xb20] sm:$0xff]
        %v4137 = vld [vmem:[%s446 + $0xb28] sm:$0xff]
        %v4138 = vld [vmem:[%s446 + $0xb30] sm:$0xff]
        %v4139 = vld [vmem:[%s446 + $0xb38] sm:$0xff]
        %v4140 = vld [vmem:[%s446 + $0xb40] sm:$0xff]
        %v4141 = vld [vmem:[%s446 + $0xb48] sm:$0xff]
        %v4142 = vld [vmem:[%s446 + $0xb50] sm:$0xff]
        %v4143 = vld [vmem:[%s446 + $0xb58] sm:$0xff]
        %v4144 = vld [vmem:[%s446 + $0xb60] sm:$0xff]
        %v4145 = vld [vmem:[%s446 + $0xb68] sm:$0xff]
        %v4146 = vld [vmem:[%s446 + $0xb70] sm:$0xff]
        %v4147 = vld [vmem:[%s446 + $0xb78] sm:$0xff]
        %v4148 = vld [vmem:[%s446 + $0xb80] sm:$0xff]
        %v4149 = vld [vmem:[%s446 + $0xb88] sm:$0xff]
        %v4150 = vld [vmem:[%s446 + $0xb90] sm:$0xff]
        %v4151 = vld [vmem:[%s446 + $0xb98] sm:$0xff]
        %v4152 = vld [vmem:[%s446 + $0xba0] sm:$0xff]
        %v4153 = vld [vmem:[%s446 + $0xba8] sm:$0xff]
        %v4154 = vld [vmem:[%s446 + $0xbb0] sm:$0xff]
        %v4155 = vld [vmem:[%s446 + $0xbb8] sm:$0xff]
        %v4156 = vld [vmem:[%s446 + $0xbc0] sm:$0xff]
        %v4157 = vld [vmem:[%s446 + $0xbc8] sm:$0xff]
        %v4158 = vld [vmem:[%s446 + $0xbd0] sm:$0xff]
        %v4159 = vld [vmem:[%s446 + $0xbd8] sm:$0xff]
        %v4160 = vld [vmem:[%s446 + $0xbe0] sm:$0xff]
        %v4161 = vld [vmem:[%s446 + $0xbe8] sm:$0xff]
        %v4162 = vld [vmem:[%s446 + $0xbf0] sm:$0xff]
        %v4163 = vld [vmem:[%s446 + $0xbf8] sm:$0xff]
        %v4164 = vld [vmem:[%s446 + $0xc00] sm:$0xff]
        %v4165 = vld [vmem:[%s446 + $0xc08] sm:$0xff]
        %v4166 = vld [vmem:[%s446 + $0xc10] sm:$0xff]
        %v4167 = vld [vmem:[%s446 + $0xc18] sm:$0xff]
        %v4168 = vld [vmem:[%s446 + $0xc20] sm:$0xff]
        %v4169 = vld [vmem:[%s446 + $0xc28] sm:$0xff]
        %v4170 = vld [vmem:[%s446 + $0xc30] sm:$0xff]
        %v4171 = vld [vmem:[%s446 + $0xc38] sm:$0xff]
        %v4172 = vld [vmem:[%s446 + $0xc40] sm:$0xff]
        %v4173 = vld [vmem:[%s446 + $0xc48] sm:$0xff]
        %v4174 = vld [vmem:[%s446 + $0xc50] sm:$0xff]
        %v4175 = vld [vmem:[%s446 + $0xc58] sm:$0xff]
        %v4176 = vld [vmem:[%s446 + $0xc60] sm:$0xff]
        %v4177 = vld [vmem:[%s446 + $0xc68] sm:$0xff]
        %v4178 = vld [vmem:[%s446 + $0xc70] sm:$0xff]
        %v4179 = vld [vmem:[%s446 + $0xc78] sm:$0xff]
        %v4180 = vld [vmem:[%s446 + $0xc80] sm:$0xff]
        %v4181 = vld [vmem:[%s446 + $0xc88] sm:$0xff]
        %v4182 = vld [vmem:[%s446 + $0xc90] sm:$0xff]
        %v4183 = vld [vmem:[%s446 + $0xc98] sm:$0xff]
        %v4184 = vld [vmem:[%s446 + $0xca0] sm:$0xff]
        %v4185 = vld [vmem:[%s446 + $0xca8] sm:$0xff]
        %v4186 = vld [vmem:[%s446 + $0xcb0] sm:$0xff]
        %v4187 = vld [vmem:[%s446 + $0xcb8] sm:$0xff]
        %v4188 = vld [vmem:[%s446 + $0xcc0] sm:$0xff]
        %v4189 = vld [vmem:[%s446 + $0xcc8] sm:$0xff]
        %v4190 = vld [vmem:[%s446 + $0xcd0] sm:$0xff]
        %v4191 = vld [vmem:[%s446 + $0xcd8] sm:$0xff]
        %v4192 = vld [vmem:[%s446 + $0xce0] sm:$0xff]
        %v4193 = vld [vmem:[%s446 + $0xce8] sm:$0xff]
        %v4194 = vld [vmem:[%s446 + $0xcf0] sm:$0xff]
        %v4195 = vld [vmem:[%s446 + $0xcf8] sm:$0xff]
        %v4196 = vld [vmem:[%s446 + $0xd00] sm:$0xff]
        %v4197 = vld [vmem:[%s446 + $0xd08] sm:$0xff]
        %v4198 = vld [vmem:[%s446 + $0xd10] sm:$0xff]
        %v4199 = vld [vmem:[%s446 + $0xd18] sm:$0xff]
        %v4200 = vld [vmem:[%s446 + $0xd20] sm:$0xff]
        %v4201 = vld [vmem:[%s446 + $0xd28] sm:$0xff]
        %v4202 = vld [vmem:[%s446 + $0xd30] sm:$0xff]
        %v4203 = vld [vmem:[%s446 + $0xd38] sm:$0xff]
        %v4204 = vld [vmem:[%s446 + $0xd40] sm:$0xff]
        %v4205 = vld [vmem:[%s446 + $0xd48] sm:$0xff]
        %v4206 = vld [vmem:[%s446 + $0xd50] sm:$0xff]
        %v4207 = vld [vmem:[%s446 + $0xd58] sm:$0xff]
        %v4208 = vld [vmem:[%s446 + $0xd60] sm:$0xff]
        %v4209 = vld [vmem:[%s446 + $0xd68] sm:$0xff]
        %v4210 = vld [vmem:[%s446 + $0xd70] sm:$0xff]
        %v4211 = vld [vmem:[%s446 + $0xd78] sm:$0xff]
        %v4212 = vld [vmem:[%s446 + $0xd80] sm:$0xff]
        %v4213 = vld [vmem:[%s446 + $0xd88] sm:$0xff]
        %v4214 = vld [vmem:[%s446 + $0xd90] sm:$0xff]
        %v4215 = vld [vmem:[%s446 + $0xd98] sm:$0xff]
        %v4216 = vld [vmem:[%s446 + $0xda0] sm:$0xff]
        %v4217 = vld [vmem:[%s446 + $0xda8] sm:$0xff]
        %v4218 = vld [vmem:[%s446 + $0xdb0] sm:$0xff]
        %v4219 = vld [vmem:[%s446 + $0xdb8] sm:$0xff]
        %v4220 = vld [vmem:[%s446 + $0xdc0] sm:$0xff]
        %v4221 = vld [vmem:[%s446 + $0xdc8] sm:$0xff]
        %v4222 = vld [vmem:[%s446 + $0xdd0] sm:$0xff]
        %v4223 = vld [vmem:[%s446 + $0xdd8] sm:$0xff]
        %v4224 = vld [vmem:[%s446 + $0xde0] sm:$0xff]
        %v4225 = vld [vmem:[%s446 + $0xde8] sm:$0xff]
        %v4226 = vld [vmem:[%s446 + $0xdf0] sm:$0xff]
        %v4227 = vld [vmem:[%s446 + $0xdf8] sm:$0xff]
        %v4228 = vld [vmem:[%s446 + $0xe00] sm:$0xff]
        %v4229 = vld [vmem:[%s446 + $0xe08] sm:$0xff]
        %v4230 = vld [vmem:[%s446 + $0xe10] sm:$0xff]
        %v4231 = vld [vmem:[%s446 + $0xe18] sm:$0xff]
        %v4232 = vld [vmem:[%s446 + $0xe20] sm:$0xff]
        %v4233 = vld [vmem:[%s446 + $0xe28] sm:$0xff]
        %v4234 = vld [vmem:[%s446 + $0xe30] sm:$0xff]
        %v4235 = vld [vmem:[%s446 + $0xe38] sm:$0xff]
        %v4236 = vld [vmem:[%s446 + $0xe40] sm:$0xff]
        %v4237 = vld [vmem:[%s446 + $0xe48] sm:$0xff]
        %v4238 = vld [vmem:[%s446 + $0xe50] sm:$0xff]
        %v4239 = vld [vmem:[%s446 + $0xe58] sm:$0xff]
        %v4240 = vld [vmem:[%s446 + $0xe60] sm:$0xff]
        %v4241 = vld [vmem:[%s446 + $0xe68] sm:$0xff]
        %v4242 = vld [vmem:[%s446 + $0xe70] sm:$0xff]
        %v4243 = vld [vmem:[%s446 + $0xe78] sm:$0xff]
        %v4244 = vld [vmem:[%s446 + $0xe80] sm:$0xff]
        %v4245 = vld [vmem:[%s446 + $0xe88] sm:$0xff]
        %v4246 = vld [vmem:[%s446 + $0xe90] sm:$0xff]
        %v4247 = vld [vmem:[%s446 + $0xe98] sm:$0xff]
        %v4248 = vld [vmem:[%s446 + $0xea0] sm:$0xff]
        %v4249 = vld [vmem:[%s446 + $0xea8] sm:$0xff]
        %v4250 = vld [vmem:[%s446 + $0xeb0] sm:$0xff]
        %v4251 = vld [vmem:[%s446 + $0xeb8] sm:$0xff]
        %v4252 = vld [vmem:[%s446 + $0xec0] sm:$0xff]
        %v4253 = vld [vmem:[%s446 + $0xec8] sm:$0xff]
        %v4254 = vld [vmem:[%s446 + $0xed0] sm:$0xff]
        %v4255 = vld [vmem:[%s446 + $0xed8] sm:$0xff]
        %v4256 = vld [vmem:[%s446 + $0xee0] sm:$0xff]
        %v4257 = vld [vmem:[%s446 + $0xee8] sm:$0xff]
        %v4258 = vld [vmem:[%s446 + $0xef0] sm:$0xff]
        %v4259 = vld [vmem:[%s446 + $0xef8] sm:$0xff]
        %v4260 = vld [vmem:[%s446 + $0xf00] sm:$0xff]
        %v4261 = vld [vmem:[%s446 + $0xf08] sm:$0xff]
        %v4262 = vld [vmem:[%s446 + $0xf10] sm:$0xff]
        %v4263 = vld [vmem:[%s446 + $0xf18] sm:$0xff]
        %v4264 = vld [vmem:[%s446 + $0xf20] sm:$0xff]
        %v4265 = vld [vmem:[%s446 + $0xf28] sm:$0xff]
        %v4266 = vld [vmem:[%s446 + $0xf30] sm:$0xff]
        %v4267 = vld [vmem:[%s446 + $0xf38] sm:$0xff]
        %v4268 = vld [vmem:[%s446 + $0xf40] sm:$0xff]
        %v4269 = vld [vmem:[%s446 + $0xf48] sm:$0xff]
        %v4270 = vld [vmem:[%s446 + $0xf50] sm:$0xff]
        %v4271 = vld [vmem:[%s446 + $0xf58] sm:$0xff]
        %v4272 = vld [vmem:[%s446 + $0xf60] sm:$0xff]
        %v4273 = vld [vmem:[%s446 + $0xf68] sm:$0xff]
        %v4274 = vld [vmem:[%s446 + $0xf70] sm:$0xff]
        %v4275 = vld [vmem:[%s446 + $0xf78] sm:$0xff]
        %v4276 = vld [vmem:[%s446 + $0xf80] sm:$0xff]
        %v4277 = vld [vmem:[%s446 + $0xf88] sm:$0xff]
        %v4278 = vld [vmem:[%s446 + $0xf90] sm:$0xff]
        %v4279 = vld [vmem:[%s446 + $0xf98] sm:$0xff]
        %v4280 = vld [vmem:[%s446 + $0xfa0] sm:$0xff]
        %v4281 = vld [vmem:[%s446 + $0xfa8] sm:$0xff]
        %v4282 = vld [vmem:[%s446 + $0xfb0] sm:$0xff]
        %v4283 = vld [vmem:[%s446 + $0xfb8] sm:$0xff]
        %v4284 = vld [vmem:[%s446 + $0xfc0] sm:$0xff]
        %v4285 = vld [vmem:[%s446 + $0xfc8] sm:$0xff]
        %v4286 = vld [vmem:[%s446 + $0xfd0] sm:$0xff]
        %v4287 = vld [vmem:[%s446 + $0xfd8] sm:$0xff]
        %v4288 = vld [vmem:[%s446 + $0xfe0] sm:$0xff]
        %v4289 = vld [vmem:[%s446 + $0xfe8] sm:$0xff]
        %v4290 = vld [vmem:[%s446 + $0xff0] sm:$0xff]
        %v4291 = vld [vmem:[%s446 + $0xff8] sm:$0xff]
        %v4292 = vld [vmem:[%s446 + $0x1000] sm:$0xff]
        %v4293 = vld [vmem:[%s446 + $0x1008] sm:$0xff]
        %v4294 = vld [vmem:[%s446 + $0x1010] sm:$0xff]
        %v4295 = vld [vmem:[%s446 + $0x1018] sm:$0xff]
        %v4296 = vld [vmem:[%s446 + $0x1020] sm:$0xff]
        %v4297 = vld [vmem:[%s446 + $0x1028] sm:$0xff]
        %v4298 = vld [vmem:[%s446 + $0x1030] sm:$0xff]
        %v4299 = vld [vmem:[%s446 + $0x1038] sm:$0xff]
        %v4300 = vld [vmem:[%s446 + $0x1040] sm:$0xff]
        %v4301 = vld [vmem:[%s446 + $0x1048] sm:$0xff]
        %v4302 = vld [vmem:[%s446 + $0x1050] sm:$0xff]
        %v4303 = vld [vmem:[%s446 + $0x1058] sm:$0xff]
        %v4304 = vld [vmem:[%s446 + $0x1060] sm:$0xff]
        %v4305 = vld [vmem:[%s446 + $0x1068] sm:$0xff]
        %v4306 = vld [vmem:[%s446 + $0x1070] sm:$0xff]
        %v4307 = vld [vmem:[%s446 + $0x1078] sm:$0xff]
        %v4308 = vld [vmem:[%s446 + $0x1080] sm:$0xff]
        %v4309 = vld [vmem:[%s446 + $0x1088] sm:$0xff]
        %v4310 = vld [vmem:[%s446 + $0x1090] sm:$0xff]
        %v4311 = vld [vmem:[%s446 + $0x1098] sm:$0xff]
        %v4312 = vld [vmem:[%s446 + $0x10a0] sm:$0xff]
        %v4313 = vld [vmem:[%s446 + $0x10a8] sm:$0xff]
        %v4314 = vld [vmem:[%s446 + $0x10b0] sm:$0xff]
        %v4315 = vld [vmem:[%s446 + $0x10b8] sm:$0xff]
        %v4316 = vld [vmem:[%s446 + $0x10c0] sm:$0xff]
        %v4317 = vld [vmem:[%s446 + $0x10c8] sm:$0xff]
        %v4318 = vld [vmem:[%s446 + $0x10d0] sm:$0xff]
        %v4319 = vld [vmem:[%s446 + $0x10d8] sm:$0xff]
        %v4320 = vld [vmem:[%s446 + $0x10e0] sm:$0xff]
        %v4321 = vld [vmem:[%s446 + $0x10e8] sm:$0xff]
        %v4322 = vld [vmem:[%s446 + $0x10f0] sm:$0xff]
        %v4323 = vld [vmem:[%s446 + $0x10f8] sm:$0xff]
        %v4324 = vld [vmem:[%s446 + $0x1100] sm:$0xff]
        %v4325 = vld [vmem:[%s446 + $0x1108] sm:$0xff]
        %v4326 = vld [vmem:[%s446 + $0x1110] sm:$0xff]
        %v4327 = vld [vmem:[%s446 + $0x1118] sm:$0xff]
        %v4328 = vld [vmem:[%s446 + $0x1120] sm:$0xff]
        %v4329 = vld [vmem:[%s446 + $0x1128] sm:$0xff]
        %v4330 = vld [vmem:[%s446 + $0x1130] sm:$0xff]
        %v4331 = vld [vmem:[%s446 + $0x1138] sm:$0xff]
        %v4332 = vld [vmem:[%s446 + $0x1140] sm:$0xff]
        %v4333 = vld [vmem:[%s446 + $0x1148] sm:$0xff]
        %v4334 = vld [vmem:[%s446 + $0x1150] sm:$0xff]
        %v4335 = vld [vmem:[%s446 + $0x1158] sm:$0xff]
        %v4336 = vld [vmem:[%s446 + $0x1160] sm:$0xff]
        %v4337 = vld [vmem:[%s446 + $0x1168] sm:$0xff]
        %v4338 = vld [vmem:[%s446 + $0x1170] sm:$0xff]
        %v4339 = vld [vmem:[%s446 + $0x1178] sm:$0xff]
        %v4340 = vld [vmem:[%s446 + $0x1180] sm:$0xff]
        %v4341 = vld [vmem:[%s446 + $0x1188] sm:$0xff]
        %v4342 = vld [vmem:[%s446 + $0x1190] sm:$0xff]
        %v4343 = vld [vmem:[%s446 + $0x1198] sm:$0xff]
        %v4344 = vld [vmem:[%s446 + $0x11a0] sm:$0xff]
        %v4345 = vld [vmem:[%s446 + $0x11a8] sm:$0xff]
        %v4346 = vld [vmem:[%s446 + $0x11b0] sm:$0xff]
        %v4347 = vld [vmem:[%s446 + $0x11b8] sm:$0xff]
        %v4348 = vld [vmem:[%s446 + $0x11c0] sm:$0xff]
        %v4349 = vld [vmem:[%s446 + $0x11c8] sm:$0xff]
        %v4350 = vld [vmem:[%s446 + $0x11d0] sm:$0xff]
        %v4351 = vld [vmem:[%s446 + $0x11d8] sm:$0xff]
        %v4352 = vld [vmem:[%s446 + $0x11e0] sm:$0xff]
        %v4353 = vld [vmem:[%s446 + $0x11e8] sm:$0xff]
        %v4354 = vld [vmem:[%s446 + $0x11f0] sm:$0xff]
        %v4355 = vld [vmem:[%s446 + $0x11f8] sm:$0xff]
        %v4356 = vld [vmem:[%s446 + $0x1200] sm:$0xff]
        %v4357 = vld [vmem:[%s446 + $0x1208] sm:$0xff]
        %v4358 = vld [vmem:[%s446 + $0x1210] sm:$0xff]
        %v4359 = vld [vmem:[%s446 + $0x1218] sm:$0xff]
        %v4360 = vld [vmem:[%s446 + $0x1220] sm:$0xff]
        %v4361 = vld [vmem:[%s446 + $0x1228] sm:$0xff]
        %v4362 = vld [vmem:[%s446 + $0x1230] sm:$0xff]
        %v4363 = vld [vmem:[%s446 + $0x1238] sm:$0xff]
        %v4364 = vld [vmem:[%s446 + $0x1240] sm:$0xff]
        %v4365 = vld [vmem:[%s446 + $0x1248] sm:$0xff]
        %v4366 = vld [vmem:[%s446 + $0x1250] sm:$0xff]
        %v4367 = vld [vmem:[%s446 + $0x1258] sm:$0xff]
        %v4368 = vld [vmem:[%s446 + $0x1260] sm:$0xff]
        %v4369 = vld [vmem:[%s446 + $0x1268] sm:$0xff]
        %v4370 = vld [vmem:[%s446 + $0x1270] sm:$0xff]
        %v4371 = vld [vmem:[%s446 + $0x1278] sm:$0xff]
        %v4372 = vld [vmem:[%s446 + $0x1280] sm:$0xff]
        %v4373 = vld [vmem:[%s446 + $0x1288] sm:$0xff]
        %v4374 = vld [vmem:[%s446 + $0x1290] sm:$0xff]
        %v4375 = vld [vmem:[%s446 + $0x1298] sm:$0xff]
        %v4376 = vld [vmem:[%s446 + $0x12a0] sm:$0xff]
        %v4377 = vld [vmem:[%s446 + $0x12a8] sm:$0xff]
        %v4378 = vld [vmem:[%s446 + $0x12b0] sm:$0xff]
        %v4379 = vld [vmem:[%s446 + $0x12b8] sm:$0xff]
        %v4380 = vld [vmem:[%s446 + $0x12c0] sm:$0xff]
        %v4381 = vld [vmem:[%s446 + $0x12c8] sm:$0xff]
        %v4382 = vld [vmem:[%s446 + $0x12d0] sm:$0xff]
        %v4383 = vld [vmem:[%s446 + $0x12d8] sm:$0xff]
        %v4384 = vld [vmem:[%s446 + $0x12e0] sm:$0xff]
        %v4385 = vld [vmem:[%s446 + $0x12e8] sm:$0xff]
        %v4386 = vld [vmem:[%s446 + $0x12f0] sm:$0xff]
        %v4387 = vld [vmem:[%s446 + $0x12f8] sm:$0xff]
        %v4388 = vld [vmem:[%s446 + $0x1300] sm:$0xff]
        %v4389 = vld [vmem:[%s446 + $0x1308] sm:$0xff]
        %v4390 = vld [vmem:[%s446 + $0x1310] sm:$0xff]
        %v4391 = vld [vmem:[%s446 + $0x1318] sm:$0xff]
        %v4392 = vld [vmem:[%s446 + $0x1320] sm:$0xff]
        %v4393 = vld [vmem:[%s446 + $0x1328] sm:$0xff]
        %v4394 = vld [vmem:[%s446 + $0x1330] sm:$0xff]
        %v4395 = vld [vmem:[%s446 + $0x1338] sm:$0xff]
        %v4396 = vld [vmem:[%s446 + $0x1340] sm:$0xff]
        %v4397 = vld [vmem:[%s446 + $0x1348] sm:$0xff]
        %v4398 = vld [vmem:[%s446 + $0x1350] sm:$0xff]
        %v4399 = vld [vmem:[%s446 + $0x1358] sm:$0xff]
        %v4400 = vld [vmem:[%s446 + $0x1360] sm:$0xff]
        %v4401 = vld [vmem:[%s446 + $0x1368] sm:$0xff]
        %v4402 = vld [vmem:[%s446 + $0x1370] sm:$0xff]
        %v4403 = vld [vmem:[%s446 + $0x1378] sm:$0xff]
        %v4404 = vld [vmem:[%s446 + $0x1380] sm:$0xff]
        %v4405 = vld [vmem:[%s446 + $0x1388] sm:$0xff]
        %v4406 = vld [vmem:[%s446 + $0x1390] sm:$0xff]
        %v4407 = vld [vmem:[%s446 + $0x1398] sm:$0xff]
        %v4408 = vld [vmem:[%s446 + $0x13a0] sm:$0xff]
        %v4409 = vld [vmem:[%s446 + $0x13a8] sm:$0xff]
        %v4410 = vld [vmem:[%s446 + $0x13b0] sm:$0xff]
        %v4411 = vld [vmem:[%s446 + $0x13b8] sm:$0xff]
        %v4412 = vld [vmem:[%s446 + $0x13c0] sm:$0xff]
        %v4413 = vld [vmem:[%s446 + $0x13c8] sm:$0xff]
        %v4414 = vld [vmem:[%s446 + $0x13d0] sm:$0xff]
        %v4415 = vld [vmem:[%s446 + $0x13d8] sm:$0xff]
        %v4416 = vld [vmem:[%s446 + $0x13e0] sm:$0xff]
        %v4417 = vld [vmem:[%s446 + $0x13e8] sm:$0xff]
        %v4418 = vld [vmem:[%s446 + $0x13f0] sm:$0xff]
        %v4419 = vld [vmem:[%s446 + $0x13f8] sm:$0xff]
        %v4420 = vld [vmem:[%s446 + $0x1400] sm:$0xff]
        %v4421 = vld [vmem:[%s446 + $0x1408] sm:$0xff]
        %v4422 = vld [vmem:[%s446 + $0x1410] sm:$0xff]
        %v4423 = vld [vmem:[%s446 + $0x1418] sm:$0xff]
        %v4424 = vld [vmem:[%s446 + $0x1420] sm:$0xff]
        %v4425 = vld [vmem:[%s446 + $0x1428] sm:$0xff]
        %v4426 = vld [vmem:[%s446 + $0x1430] sm:$0xff]
        %v4427 = vld [vmem:[%s446 + $0x1438] sm:$0xff]
        %v4428 = vld [vmem:[%s446 + $0x1440] sm:$0xff]
        %v4429 = vld [vmem:[%s446 + $0x1448] sm:$0xff]
        %v4430 = vld [vmem:[%s446 + $0x1450] sm:$0xff]
        %v4431 = vld [vmem:[%s446 + $0x1458] sm:$0xff]
        %v4432 = vld [vmem:[%s446 + $0x1460] sm:$0xff]
        %v4433 = vld [vmem:[%s446 + $0x1468] sm:$0xff]
        %v4434 = vld [vmem:[%s446 + $0x1470] sm:$0xff]
        %v4435 = vld [vmem:[%s446 + $0x1478] sm:$0xff]
        %v4436 = vld [vmem:[%s446 + $0x1480] sm:$0xff]
        %v4437 = vld [vmem:[%s446 + $0x1488] sm:$0xff]
        %v4438 = vld [vmem:[%s446 + $0x1490] sm:$0xff]
        %v4439 = vld [vmem:[%s446 + $0x1498] sm:$0xff]
        %v4440 = vld [vmem:[%s446 + $0x14a0] sm:$0xff]
        %v4441 = vld [vmem:[%s446 + $0x14a8] sm:$0xff]
        %v4442 = vld [vmem:[%s446 + $0x14b0] sm:$0xff]
        %v4443 = vld [vmem:[%s446 + $0x14b8] sm:$0xff]
        %v4444 = vld [vmem:[%s446 + $0x14c0] sm:$0xff]
        %v4445 = vld [vmem:[%s446 + $0x14c8] sm:$0xff]
        %v4446 = vld [vmem:[%s446 + $0x14d0] sm:$0xff]
        %v4447 = vld [vmem:[%s446 + $0x14d8] sm:$0xff]
        %v4448 = vld [vmem:[%s446 + $0x14e0] sm:$0xff]
        %v4449 = vld [vmem:[%s446 + $0x14e8] sm:$0xff]
        %v4450 = vld [vmem:[%s446 + $0x14f0] sm:$0xff]
        %v4451 = vld [vmem:[%s446 + $0x14f8] sm:$0xff]
        %v4452 = vld [vmem:[%s446 + $0x1500] sm:$0xff]
        %v4453 = vld [vmem:[%s446 + $0x1508] sm:$0xff]
        %v4454 = vld [vmem:[%s446 + $0x1510] sm:$0xff]
        %v4455 = vld [vmem:[%s446 + $0x1518] sm:$0xff]
        %v4456 = vld [vmem:[%s446 + $0x1520] sm:$0xff]
        %v4457 = vld [vmem:[%s446 + $0x1528] sm:$0xff]
        %v4458 = vld [vmem:[%s446 + $0x1530] sm:$0xff]
        %v4459 = vld [vmem:[%s446 + $0x1538] sm:$0xff]
        %v4460 = vld [vmem:[%s446 + $0x1540] sm:$0xff]
        %v4461 = vld [vmem:[%s446 + $0x1548] sm:$0xff]
        %v4462 = vld [vmem:[%s446 + $0x1550] sm:$0xff]
        %v4463 = vld [vmem:[%s446 + $0x1558] sm:$0xff]
        %v4464 = vld [vmem:[%s446 + $0x1560] sm:$0xff]
        %v4465 = vld [vmem:[%s446 + $0x1568] sm:$0xff]
        %v4466 = vld [vmem:[%s446 + $0x1570] sm:$0xff]
        %v4467 = vld [vmem:[%s446 + $0x1578] sm:$0xff]
        %v4468 = vld [vmem:[%s446 + $0x1580] sm:$0xff]
        %v4469 = vld [vmem:[%s446 + $0x1588] sm:$0xff]
        %v4470 = vld [vmem:[%s446 + $0x1590] sm:$0xff]
        %v4471 = vld [vmem:[%s446 + $0x1598] sm:$0xff]
        %v4472 = vld [vmem:[%s446 + $0x15a0] sm:$0xff]
        %v4473 = vld [vmem:[%s446 + $0x15a8] sm:$0xff]
        %v4474 = vld [vmem:[%s446 + $0x15b0] sm:$0xff]
        %v4475 = vld [vmem:[%s446 + $0x15b8] sm:$0xff]
        %v4476 = vld [vmem:[%s446 + $0x15c0] sm:$0xff]
        %v4477 = vld [vmem:[%s446 + $0x15c8] sm:$0xff]
        %v4478 = vld [vmem:[%s446 + $0x15d0] sm:$0xff]
        %v4479 = vld [vmem:[%s446 + $0x15d8] sm:$0xff]
        %v4480 = vld [vmem:[%s446 + $0x15e0] sm:$0xff]
        %v4481 = vld [vmem:[%s446 + $0x15e8] sm:$0xff]
        %v4482 = vld [vmem:[%s446 + $0x15f0] sm:$0xff]
        %v4483 = vld [vmem:[%s446 + $0x15f8] sm:$0xff]
        %v4484 = vld [vmem:[%s446 + $0x1600] sm:$0xff]
        %v4485 = vld [vmem:[%s446 + $0x1608] sm:$0xff]
        %v4486 = vld [vmem:[%s446 + $0x1610] sm:$0xff]
        %v4487 = vld [vmem:[%s446 + $0x1618] sm:$0xff]
        %v4488 = vld [vmem:[%s446 + $0x1620] sm:$0xff]
        %v4489 = vld [vmem:[%s446 + $0x1628] sm:$0xff]
        %v4490 = vld [vmem:[%s446 + $0x1630] sm:$0xff]
        %v4491 = vld [vmem:[%s446 + $0x1638] sm:$0xff]
        %v4492 = vld [vmem:[%s446 + $0x1640] sm:$0xff]
        %v4493 = vld [vmem:[%s446 + $0x1648] sm:$0xff]
        %v4494 = vld [vmem:[%s446 + $0x1650] sm:$0xff]
        %v4495 = vld [vmem:[%s446 + $0x1658] sm:$0xff]
        %v4496 = vld [vmem:[%s446 + $0x1660] sm:$0xff]
        %v4497 = vld [vmem:[%s446 + $0x1668] sm:$0xff]
        %v4498 = vld [vmem:[%s446 + $0x1670] sm:$0xff]
        %v4499 = vld [vmem:[%s446 + $0x1678] sm:$0xff]
        %v4500 = vld [vmem:[%s446 + $0x1680] sm:$0xff]
        %v4501 = vld [vmem:[%s446 + $0x1688] sm:$0xff]
        %v4502 = vld [vmem:[%s446 + $0x1690] sm:$0xff]
        %v4503 = vld [vmem:[%s446 + $0x1698] sm:$0xff]
        %v4504 = vld [vmem:[%s446 + $0x16a0] sm:$0xff]
        %v4505 = vld [vmem:[%s446 + $0x16a8] sm:$0xff]
        %v4506 = vld [vmem:[%s446 + $0x16b0] sm:$0xff]
        %v4507 = vld [vmem:[%s446 + $0x16b8] sm:$0xff]
        %v4508 = vld [vmem:[%s446 + $0x16c0] sm:$0xff]
        %v4509 = vld [vmem:[%s446 + $0x16c8] sm:$0xff]
        %v4510 = vld [vmem:[%s446 + $0x16d0] sm:$0xff]
        %v4511 = vld [vmem:[%s446 + $0x16d8] sm:$0xff]
        %v4512 = vld [vmem:[%s446 + $0x16e0] sm:$0xff]
        %v4513 = vld [vmem:[%s446 + $0x16e8] sm:$0xff]
        %v4514 = vld [vmem:[%s446 + $0x16f0] sm:$0xff]
        %v4515 = vld [vmem:[%s446 + $0x16f8] sm:$0xff]
        %v4516 = vld [vmem:[%s446 + $0x1700] sm:$0xff]
        %v4517 = vld [vmem:[%s446 + $0x1708] sm:$0xff]
        %v4518 = vld [vmem:[%s446 + $0x1710] sm:$0xff]
        %v4519 = vld [vmem:[%s446 + $0x1718] sm:$0xff]
        %v4520 = vld [vmem:[%s446 + $0x1720] sm:$0xff]
        %v4521 = vld [vmem:[%s446 + $0x1728] sm:$0xff]
        %v4522 = vld [vmem:[%s446 + $0x1730] sm:$0xff]
        %v4523 = vld [vmem:[%s446 + $0x1738] sm:$0xff]
        %v4524 = vld [vmem:[%s446 + $0x1740] sm:$0xff]
        %v4525 = vld [vmem:[%s446 + $0x1748] sm:$0xff]
        %v4526 = vld [vmem:[%s446 + $0x1750] sm:$0xff]
        %v4527 = vld [vmem:[%s446 + $0x1758] sm:$0xff]
        %v4528 = vld [vmem:[%s446 + $0x1760] sm:$0xff]
        %v4529 = vld [vmem:[%s446 + $0x1768] sm:$0xff]
        %v4530 = vld [vmem:[%s446 + $0x1770] sm:$0xff]
        %v4531 = vld [vmem:[%s446 + $0x1778] sm:$0xff]
        %v4532 = vld [vmem:[%s446 + $0x1780] sm:$0xff]
        %v4533 = vld [vmem:[%s446 + $0x1788] sm:$0xff]
        %v4534 = vld [vmem:[%s446 + $0x1790] sm:$0xff]
        %v4535 = vld [vmem:[%s446 + $0x1798] sm:$0xff]
        %v4536 = vld [vmem:[%s446 + $0x17a0] sm:$0xff]
        %v4537 = vld [vmem:[%s446 + $0x17a8] sm:$0xff]
        %v4538 = vld [vmem:[%s446 + $0x17b0] sm:$0xff]
        %v4539 = vld [vmem:[%s446 + $0x17b8] sm:$0xff]
        %v4540 = vld [vmem:[%s446 + $0x17c0] sm:$0xff]
        %v4541 = vld [vmem:[%s446 + $0x17c8] sm:$0xff]
        %v4542 = vld [vmem:[%s446 + $0x17d0] sm:$0xff]
        %v4543 = vld [vmem:[%s446 + $0x17d8] sm:$0xff]
        %v4544 = vld [vmem:[%s446 + $0x17e0] sm:$0xff]
        %v4545 = vld [vmem:[%s446 + $0x17e8] sm:$0xff]
        %v4546 = vld [vmem:[%s446 + $0x17f0] sm:$0xff]
        %v4547 = vld [vmem:[%s446 + $0x17f8] sm:$0xff]
        %v4548 = vld [vmem:[%s446 + $0x1800] sm:$0xff]
        %v4549 = vld [vmem:[%s446 + $0x1808] sm:$0xff]
        %v4550 = vld [vmem:[%s446 + $0x1810] sm:$0xff]
        %v4551 = vld [vmem:[%s446 + $0x1818] sm:$0xff]
        %v4552 = vld [vmem:[%s446 + $0x1820] sm:$0xff]
        %v4553 = vld [vmem:[%s446 + $0x1828] sm:$0xff]
        %v4554 = vld [vmem:[%s446 + $0x1830] sm:$0xff]
        %v4555 = vld [vmem:[%s446 + $0x1838] sm:$0xff]
        %v4556 = vld [vmem:[%s446 + $0x1840] sm:$0xff]
        %v4557 = vld [vmem:[%s446 + $0x1848] sm:$0xff]
        %v4558 = vld [vmem:[%s446 + $0x1850] sm:$0xff]
        %v4559 = vld [vmem:[%s446 + $0x1858] sm:$0xff]
        %v4560 = vld [vmem:[%s446 + $0x1860] sm:$0xff]
        %v4561 = vld [vmem:[%s446 + $0x1868] sm:$0xff]
        %v4562 = vld [vmem:[%s446 + $0x1870] sm:$0xff]
        %v4563 = vld [vmem:[%s446 + $0x1878] sm:$0xff]
        %v4564 = vld [vmem:[%s446 + $0x1880] sm:$0xff]
        %v4565 = vld [vmem:[%s446 + $0x1888] sm:$0xff]
        %v4566 = vld [vmem:[%s446 + $0x1890] sm:$0xff]
        %v4567 = vld [vmem:[%s446 + $0x1898] sm:$0xff]
        %v4568 = vld [vmem:[%s446 + $0x18a0] sm:$0xff]
        %v4569 = vld [vmem:[%s446 + $0x18a8] sm:$0xff]
        %v4570 = vld [vmem:[%s446 + $0x18b0] sm:$0xff]
        %v4571 = vld [vmem:[%s446 + $0x18b8] sm:$0xff]
        %v4572 = vld [vmem:[%s446 + $0x18c0] sm:$0xff]
        %v4573 = vld [vmem:[%s446 + $0x18c8] sm:$0xff]
        %v4574 = vld [vmem:[%s446 + $0x18d0] sm:$0xff]
        %v4575 = vld [vmem:[%s446 + $0x18d8] sm:$0xff]
        %v4576 = vld [vmem:[%s446 + $0x18e0] sm:$0xff]
        %v4577 = vld [vmem:[%s446 + $0x18e8] sm:$0xff]
        %v4578 = vld [vmem:[%s446 + $0x18f0] sm:$0xff]
        %v4579 = vld [vmem:[%s446 + $0x18f8] sm:$0xff]
        %v4580 = vld [vmem:[%s446 + $0x1900] sm:$0xff]
        %v4581 = vld [vmem:[%s446 + $0x1908] sm:$0xff]
        %v4582 = vld [vmem:[%s446 + $0x1910] sm:$0xff]
        %v4583 = vld [vmem:[%s446 + $0x1918] sm:$0xff]
        %v4584 = vld [vmem:[%s446 + $0x1920] sm:$0xff]
        %v4585 = vld [vmem:[%s446 + $0x1928] sm:$0xff]
        %v4586 = vld [vmem:[%s446 + $0x1930] sm:$0xff]
        %v4587 = vld [vmem:[%s446 + $0x1938] sm:$0xff]
        %v4588 = vld [vmem:[%s446 + $0x1940] sm:$0xff]
        %v4589 = vld [vmem:[%s446 + $0x1948] sm:$0xff]
        %v4590 = vld [vmem:[%s446 + $0x1950] sm:$0xff]
        %v4591 = vld [vmem:[%s446 + $0x1958] sm:$0xff]
        %v4592 = vld [vmem:[%s446 + $0x1960] sm:$0xff]
        %v4593 = vld [vmem:[%s446 + $0x1968] sm:$0xff]
        %v4594 = vld [vmem:[%s446 + $0x1970] sm:$0xff]
        %v4595 = vld [vmem:[%s446 + $0x1978] sm:$0xff]
        %v4596 = vld [vmem:[%s446 + $0x1980] sm:$0xff]
        %v4597 = vld [vmem:[%s446 + $0x1988] sm:$0xff]
        %v4598 = vld [vmem:[%s446 + $0x1990] sm:$0xff]
        %v4599 = vld [vmem:[%s446 + $0x1998] sm:$0xff]
        %v4600 = vld [vmem:[%s446 + $0x19a0] sm:$0xff]
        %v4601 = vld [vmem:[%s446 + $0x19a8] sm:$0xff]
        %v4602 = vld [vmem:[%s446 + $0x19b0] sm:$0xff]
        %v4603 = vld [vmem:[%s446 + $0x19b8] sm:$0xff]
        %v4604 = vld [vmem:[%s446 + $0x19c0] sm:$0xff]
        %v4605 = vld [vmem:[%s446 + $0x19c8] sm:$0xff]
        %v4606 = vld [vmem:[%s446 + $0x19d0] sm:$0xff]
        %v4607 = vld [vmem:[%s446 + $0x19d8] sm:$0xff]
        %v4608 = vld [vmem:[%s446 + $0x19e0] sm:$0xff]
        %v4609 = vld [vmem:[%s446 + $0x19e8] sm:$0xff]
        %v4610 = vld [vmem:[%s446 + $0x19f0] sm:$0xff]
        %v4611 = vld [vmem:[%s446 + $0x19f8] sm:$0xff]
        %v4612 = vld [vmem:[%s446 + $0x1a00] sm:$0xff]
        %v4613 = vld [vmem:[%s446 + $0x1a08] sm:$0xff]
        %v4614 = vld [vmem:[%s446 + $0x1a10] sm:$0xff]
        %v4615 = vld [vmem:[%s446 + $0x1a18] sm:$0xff]
        %v4616 = vld [vmem:[%s446 + $0x1a20] sm:$0xff]
        %v4617 = vld [vmem:[%s446 + $0x1a28] sm:$0xff]
        %v4618 = vld [vmem:[%s446 + $0x1a30] sm:$0xff]
        %v4619 = vld [vmem:[%s446 + $0x1a38] sm:$0xff]
        %v4620 = vld [vmem:[%s446 + $0x1a40] sm:$0xff]
        %v4621 = vld [vmem:[%s446 + $0x1a48] sm:$0xff]
        %v4622 = vld [vmem:[%s446 + $0x1a50] sm:$0xff]
        %v4623 = vld [vmem:[%s446 + $0x1a58] sm:$0xff]
        %v4624 = vld [vmem:[%s446 + $0x1a60] sm:$0xff]
        %v4625 = vld [vmem:[%s446 + $0x1a68] sm:$0xff]
        %v4626 = vld [vmem:[%s446 + $0x1a70] sm:$0xff]
        %v4627 = vld [vmem:[%s446 + $0x1a78] sm:$0xff]
        %v4628 = vld [vmem:[%s446 + $0x1a80] sm:$0xff]
        %v4629 = vld [vmem:[%s446 + $0x1a88] sm:$0xff]
        %v4630 = vld [vmem:[%s446 + $0x1a90] sm:$0xff]
        %v4631 = vld [vmem:[%s446 + $0x1a98] sm:$0xff]
        %v4632 = vld [vmem:[%s446 + $0x1aa0] sm:$0xff]
        %v4633 = vld [vmem:[%s446 + $0x1aa8] sm:$0xff]
        %v4634 = vld [vmem:[%s446 + $0x1ab0] sm:$0xff]
        %v4635 = vld [vmem:[%s446 + $0x1ab8] sm:$0xff]
        %v4636 = vld [vmem:[%s446 + $0x1ac0] sm:$0xff]
        %v4637 = vld [vmem:[%s446 + $0x1ac8] sm:$0xff]
        %v4638 = vld [vmem:[%s446 + $0x1ad0] sm:$0xff]
        %v4639 = vld [vmem:[%s446 + $0x1ad8] sm:$0xff]
        %v4640 = vld [vmem:[%s446 + $0x1ae0] sm:$0xff]
        %v4641 = vld [vmem:[%s446 + $0x1ae8] sm:$0xff]
        %v4642 = vld [vmem:[%s446 + $0x1af0] sm:$0xff]
        %v4643 = vld [vmem:[%s446 + $0x1af8] sm:$0xff]
        %v4644 = vld [vmem:[%s446 + $0x1b00] sm:$0xff]
        %v4645 = vld [vmem:[%s446 + $0x1b08] sm:$0xff]
        %v4646 = vld [vmem:[%s446 + $0x1b10] sm:$0xff]
        %v4647 = vld [vmem:[%s446 + $0x1b18] sm:$0xff]
        %v4648 = vld [vmem:[%s446 + $0x1b20] sm:$0xff]
        %v4649 = vld [vmem:[%s446 + $0x1b28] sm:$0xff]
        %v4650 = vld [vmem:[%s446 + $0x1b30] sm:$0xff]
        %v4651 = vld [vmem:[%s446 + $0x1b38] sm:$0xff]
        %v4652 = vld [vmem:[%s446 + $0x1b40] sm:$0xff]
        %v4653 = vld [vmem:[%s446 + $0x1b48] sm:$0xff]
        %v4654 = vld [vmem:[%s446 + $0x1b50] sm:$0xff]
        %v4655 = vld [vmem:[%s446 + $0x1b58] sm:$0xff]
        %v4656 = vld [vmem:[%s446 + $0x1b60] sm:$0xff]
        %v4657 = vld [vmem:[%s446 + $0x1b68] sm:$0xff]
        %v4658 = vld [vmem:[%s446 + $0x1b70] sm:$0xff]
        %v4659 = vld [vmem:[%s446 + $0x1b78] sm:$0xff]
        %v4660 = vld [vmem:[%s446 + $0x1b80] sm:$0xff]
        %v4661 = vld [vmem:[%s446 + $0x1b88] sm:$0xff]
        %v4662 = vld [vmem:[%s446 + $0x1b90] sm:$0xff]
        %v4663 = vld [vmem:[%s446 + $0x1b98] sm:$0xff]
        %v4664 = vld [vmem:[%s446 + $0x1ba0] sm:$0xff]
        %v4665 = vld [vmem:[%s446 + $0x1ba8] sm:$0xff]
        %v4666 = vld [vmem:[%s446 + $0x1bb0] sm:$0xff]
        %v4667 = vld [vmem:[%s446 + $0x1bb8] sm:$0xff]
        %v4668 = vld [vmem:[%s446 + $0x1bc0] sm:$0xff]
        %v4669 = vld [vmem:[%s446 + $0x1bc8] sm:$0xff]
        %v4670 = vld [vmem:[%s446 + $0x1bd0] sm:$0xff]
        %v4671 = vld [vmem:[%s446 + $0x1bd8] sm:$0xff]
        %v4672 = vld [vmem:[%s446 + $0x1be0] sm:$0xff]
        %v4673 = vld [vmem:[%s446 + $0x1be8] sm:$0xff]
        %v4674 = vld [vmem:[%s446 + $0x1bf0] sm:$0xff]
        %v4675 = vld [vmem:[%s446 + $0x1bf8] sm:$0xff]
        %v4676 = vld [vmem:[%s446 + $0x1c00] sm:$0xff]
        %v4677 = vld [vmem:[%s446 + $0x1c08] sm:$0xff]
        %v4678 = vld [vmem:[%s446 + $0x1c10] sm:$0xff]
        %v4679 = vld [vmem:[%s446 + $0x1c18] sm:$0xff]
        %v4680 = vld [vmem:[%s446 + $0x1c20] sm:$0xff]
        %v4681 = vld [vmem:[%s446 + $0x1c28] sm:$0xff]
        %v4682 = vld [vmem:[%s446 + $0x1c30] sm:$0xff]
        %v4683 = vld [vmem:[%s446 + $0x1c38] sm:$0xff]
        %v4684 = vld [vmem:[%s446 + $0x1c40] sm:$0xff]
        %v4685 = vld [vmem:[%s446 + $0x1c48] sm:$0xff]
        %v4686 = vld [vmem:[%s446 + $0x1c50] sm:$0xff]
        %v4687 = vld [vmem:[%s446 + $0x1c58] sm:$0xff]
        %v4688 = vld [vmem:[%s446 + $0x1c60] sm:$0xff]
        %v4689 = vld [vmem:[%s446 + $0x1c68] sm:$0xff]
        %v4690 = vld [vmem:[%s446 + $0x1c70] sm:$0xff]
        %v4691 = vld [vmem:[%s446 + $0x1c78] sm:$0xff]
        %v4692 = vld [vmem:[%s446 + $0x1c80] sm:$0xff]
        %v4693 = vld [vmem:[%s446 + $0x1c88] sm:$0xff]
        %v4694 = vld [vmem:[%s446 + $0x1c90] sm:$0xff]
        %v4695 = vld [vmem:[%s446 + $0x1c98] sm:$0xff]
        %v4696 = vld [vmem:[%s446 + $0x1ca0] sm:$0xff]
        %v4697 = vld [vmem:[%s446 + $0x1ca8] sm:$0xff]
        %v4698 = vld [vmem:[%s446 + $0x1cb0] sm:$0xff]
        %v4699 = vld [vmem:[%s446 + $0x1cb8] sm:$0xff]
        %v4700 = vld [vmem:[%s446 + $0x1cc0] sm:$0xff]
        %v4701 = vld [vmem:[%s446 + $0x1cc8] sm:$0xff]
        %v4702 = vld [vmem:[%s446 + $0x1cd0] sm:$0xff]
        %v4703 = vld [vmem:[%s446 + $0x1cd8] sm:$0xff]
        %v4704 = vld [vmem:[%s446 + $0x1ce0] sm:$0xff]
        %v4705 = vld [vmem:[%s446 + $0x1ce8] sm:$0xff]
        %v4706 = vld [vmem:[%s446 + $0x1cf0] sm:$0xff]
        %v4707 = vld [vmem:[%s446 + $0x1cf8] sm:$0xff]
        %v4708 = vld [vmem:[%s446 + $0x1d00] sm:$0xff]
        %v4709 = vld [vmem:[%s446 + $0x1d08] sm:$0xff]
        %v4710 = vld [vmem:[%s446 + $0x1d10] sm:$0xff]
        %v4711 = vld [vmem:[%s446 + $0x1d18] sm:$0xff]
        %v4712 = vld [vmem:[%s446 + $0x1d20] sm:$0xff]
        %v4713 = vld [vmem:[%s446 + $0x1d28] sm:$0xff]
        %v4714 = vld [vmem:[%s446 + $0x1d30] sm:$0xff]
        %v4715 = vld [vmem:[%s446 + $0x1d38] sm:$0xff]
        %v4716 = vld [vmem:[%s446 + $0x1d40] sm:$0xff]
        %v4717 = vld [vmem:[%s446 + $0x1d48] sm:$0xff]
        %v4718 = vld [vmem:[%s446 + $0x1d50] sm:$0xff]
        %v4719 = vld [vmem:[%s446 + $0x1d58] sm:$0xff]
        %v4720 = vld [vmem:[%s446 + $0x1d60] sm:$0xff]
        %v4721 = vld [vmem:[%s446 + $0x1d68] sm:$0xff]
        %v4722 = vld [vmem:[%s446 + $0x1d70] sm:$0xff]
        %v4723 = vld [vmem:[%s446 + $0x1d78] sm:$0xff]
        %v4724 = vld [vmem:[%s446 + $0x1d80] sm:$0xff]
        %v4725 = vld [vmem:[%s446 + $0x1d88] sm:$0xff]
        %v4726 = vld [vmem:[%s446 + $0x1d90] sm:$0xff]
        %v4727 = vld [vmem:[%s446 + $0x1d98] sm:$0xff]
        %v4728 = vld [vmem:[%s446 + $0x1da0] sm:$0xff]
        %v4729 = vld [vmem:[%s446 + $0x1da8] sm:$0xff]
        %v4730 = vld [vmem:[%s446 + $0x1db0] sm:$0xff]
        %v4731 = vld [vmem:[%s446 + $0x1db8] sm:$0xff]
        %v4732 = vld [vmem:[%s446 + $0x1dc0] sm:$0xff]
        %v4733 = vld [vmem:[%s446 + $0x1dc8] sm:$0xff]
        %v4734 = vld [vmem:[%s446 + $0x1dd0] sm:$0xff]
        %v4735 = vld [vmem:[%s446 + $0x1dd8] sm:$0xff]
        %v4736 = vld [vmem:[%s446 + $0x1de0] sm:$0xff]
        %v4737 = vld [vmem:[%s446 + $0x1de8] sm:$0xff]
        %v4738 = vld [vmem:[%s446 + $0x1df0] sm:$0xff]
        %v4739 = vld [vmem:[%s446 + $0x1df8] sm:$0xff]
        %v4740 = vld [vmem:[%s446 + $0x1e00] sm:$0xff]
        %v4741 = vld [vmem:[%s446 + $0x1e08] sm:$0xff]
        %v4742 = vld [vmem:[%s446 + $0x1e10] sm:$0xff]
        %v4743 = vld [vmem:[%s446 + $0x1e18] sm:$0xff]
        %v4744 = vld [vmem:[%s446 + $0x1e20] sm:$0xff]
        %v4745 = vld [vmem:[%s446 + $0x1e28] sm:$0xff]
        %v4746 = vld [vmem:[%s446 + $0x1e30] sm:$0xff]
        %v4747 = vld [vmem:[%s446 + $0x1e38] sm:$0xff]
        %v4748 = vld [vmem:[%s446 + $0x1e40] sm:$0xff]
        %v4749 = vld [vmem:[%s446 + $0x1e48] sm:$0xff]
        %v4750 = vld [vmem:[%s446 + $0x1e50] sm:$0xff]
        %v4751 = vld [vmem:[%s446 + $0x1e58] sm:$0xff]
        %v4752 = vld [vmem:[%s446 + $0x1e60] sm:$0xff]
        %v4753 = vld [vmem:[%s446 + $0x1e68] sm:$0xff]
        %v4754 = vld [vmem:[%s446 + $0x1e70] sm:$0xff]
        %v4755 = vld [vmem:[%s446 + $0x1e78] sm:$0xff]
        %v4756 = vld [vmem:[%s446 + $0x1e80] sm:$0xff]
        %v4757 = vld [vmem:[%s446 + $0x1e88] sm:$0xff]
        %v4758 = vld [vmem:[%s446 + $0x1e90] sm:$0xff]
        %v4759 = vld [vmem:[%s446 + $0x1e98] sm:$0xff]
        %v4760 = vld [vmem:[%s446 + $0x1ea0] sm:$0xff]
        %v4761 = vld [vmem:[%s446 + $0x1ea8] sm:$0xff]
        %v4762 = vld [vmem:[%s446 + $0x1eb0] sm:$0xff]
        %v4763 = vld [vmem:[%s446 + $0x1eb8] sm:$0xff]
        %v4764 = vld [vmem:[%s446 + $0x1ec0] sm:$0xff]
        %v4765 = vld [vmem:[%s446 + $0x1ec8] sm:$0xff]
        %v4766 = vld [vmem:[%s446 + $0x1ed0] sm:$0xff]
        %v4767 = vld [vmem:[%s446 + $0x1ed8] sm:$0xff]
        %v4768 = vld [vmem:[%s446 + $0x1ee0] sm:$0xff]
        %v4769 = vld [vmem:[%s446 + $0x1ee8] sm:$0xff]
        %v4770 = vld [vmem:[%s446 + $0x1ef0] sm:$0xff]
        %v4771 = vld [vmem:[%s446 + $0x1ef8] sm:$0xff]
        %v4772 = vld [vmem:[%s446 + $0x1f00] sm:$0xff]
        %v4773 = vld [vmem:[%s446 + $0x1f08] sm:$0xff]
        %v4774 = vld [vmem:[%s446 + $0x1f10] sm:$0xff]
        %v4775 = vld [vmem:[%s446 + $0x1f18] sm:$0xff]
        %v4776 = vld [vmem:[%s446 + $0x1f20] sm:$0xff]
        %v4777 = vld [vmem:[%s446 + $0x1f28] sm:$0xff]
        %v4778 = vld [vmem:[%s446 + $0x1f30] sm:$0xff]
        %v4779 = vld [vmem:[%s446 + $0x1f38] sm:$0xff]
        %v4780 = vld [vmem:[%s446 + $0x1f40] sm:$0xff]
        %v4781 = vld [vmem:[%s446 + $0x1f48] sm:$0xff]
        %v4782 = vld [vmem:[%s446 + $0x1f50] sm:$0xff]
        %v4783 = vld [vmem:[%s446 + $0x1f58] sm:$0xff]
        %v4784 = vld [vmem:[%s446 + $0x1f60] sm:$0xff]
        %v4785 = vld [vmem:[%s446 + $0x1f68] sm:$0xff]
        %v4786 = vld [vmem:[%s446 + $0x1f70] sm:$0xff]
        %v4787 = vld [vmem:[%s446 + $0x1f78] sm:$0xff]
        %v4788 = vld [vmem:[%s446 + $0x1f80] sm:$0xff]
        %v4789 = vld [vmem:[%s446 + $0x1f88] sm:$0xff]
        %v4790 = vld [vmem:[%s446 + $0x1f90] sm:$0xff]
        %v4791 = vld [vmem:[%s446 + $0x1f98] sm:$0xff]
        %v4792 = vld [vmem:[%s446 + $0x1fa0] sm:$0xff]
        %v4793 = vld [vmem:[%s446 + $0x1fa8] sm:$0xff]
        %v4794 = vld [vmem:[%s446 + $0x1fb0] sm:$0xff]
        %v4795 = vld [vmem:[%s446 + $0x1fb8] sm:$0xff]
        %v4796 = vld [vmem:[%s446 + $0x1fc0] sm:$0xff]
        %v4797 = vld [vmem:[%s446 + $0x1fc8] sm:$0xff]
        %v4798 = vld [vmem:[%s446 + $0x1fd0] sm:$0xff]
        %v4799 = vld [vmem:[%s446 + $0x1fd8] sm:$0xff]
        %v4800 = vld [vmem:[%s446 + $0x1fe0] sm:$0xff]
        %v4801 = vld [vmem:[%s446 + $0x1fe8] sm:$0xff]
        %v4802 = vld [vmem:[%s446 + $0x1ff0] sm:$0xff]
        %v4803 = vld [vmem:[%s446 + $0x1ff8] sm:$0xff]
        %v4804 = vld [vmem:[%s456] sm:$0xff]
        %v4805 = vld [vmem:[%s456 + $0x8] sm:$0xff]
        %v4808 = vperm.slane %v4804, 0
        %v4809 = vperm.slane %v4804, 1
        %v4810 = vperm.slane %v4804, 2
        %v4811 = vperm.slane %v4804, 3
        %v4812 = vperm.slane %v4804, 4
        %v4813 = vperm.slane %v4804, 5
        %v4814 = vperm.slane %v4804, 6
        %v4815 = vperm.slane %v4804, 7
        %v4816 = vperm.slane %v4805, 0
        %v4817 = vperm.slane %v4805, 1
        %v4818 = vperm.slane %v4805, 2
        %v4819 = vperm.slane %v4805, 3
        %v4820 = vperm.slane %v4805, 4
        %v4821 = vperm.slane %v4805, 5
        %v4822 = vperm.slane %v4805, 6
        %v4823 = vperm.slane %v4805, 7
        %v5864 = vunpack.c.l.b16 %v3780
        %v5865 = vunpack.c.h.b16 %v3780
        %v5866 = vunpack.c.l.b16 %v3781
        %v5867 = vunpack.c.h.b16 %v3781
        %v5868 = vunpack.c.l.b16 %v3782
        %v5869 = vunpack.c.h.b16 %v3782
        %v5870 = vunpack.c.l.b16 %v3783
        %v5871 = vunpack.c.h.b16 %v3783
        %v5872 = vunpack.c.l.b16 %v3784
        %v5873 = vunpack.c.h.b16 %v3784
        %v5874 = vunpack.c.l.b16 %v3785
        %v5875 = vunpack.c.h.b16 %v3785
        %v5876 = vunpack.c.l.b16 %v3786
        %v5877 = vunpack.c.h.b16 %v3786
        %v5878 = vunpack.c.l.b16 %v3787
        %v5879 = vunpack.c.h.b16 %v3787
        %v5880 = vunpack.c.l.b16 %v3788
        %v5881 = vunpack.c.h.b16 %v3788
        %v5882 = vunpack.c.l.b16 %v3789
        %v5883 = vunpack.c.h.b16 %v3789
        %v5884 = vunpack.c.l.b16 %v3790
        %v5885 = vunpack.c.h.b16 %v3790
        %v5886 = vunpack.c.l.b16 %v3791
        %v5887 = vunpack.c.h.b16 %v3791
        %v5888 = vunpack.c.l.b16 %v3792
        %v5889 = vunpack.c.h.b16 %v3792
        %v5890 = vunpack.c.l.b16 %v3793
        %v5891 = vunpack.c.h.b16 %v3793
        %v5892 = vunpack.c.l.b16 %v3794
        %v5893 = vunpack.c.h.b16 %v3794
        %v5894 = vunpack.c.l.b16 %v3795
        %v5895 = vunpack.c.h.b16 %v3795
        %v5896 = vunpack.c.l.b16 %v3796
        %v5897 = vunpack.c.h.b16 %v3796
        %v5898 = vunpack.c.l.b16 %v3797
        %v5899 = vunpack.c.h.b16 %v3797
        %v5900 = vunpack.c.l.b16 %v3798
        %v5901 = vunpack.c.h.b16 %v3798
        %v5902 = vunpack.c.l.b16 %v3799
        %v5903 = vunpack.c.h.b16 %v3799
        %v5904 = vunpack.c.l.b16 %v3800
        %v5905 = vunpack.c.h.b16 %v3800
        %v5906 = vunpack.c.l.b16 %v3801
        %v5907 = vunpack.c.h.b16 %v3801
        %v5908 = vunpack.c.l.b16 %v3802
        %v5909 = vunpack.c.h.b16 %v3802
        %v5910 = vunpack.c.l.b16 %v3803
        %v5911 = vunpack.c.h.b16 %v3803
        %v5912 = vunpack.c.l.b16 %v3804
        %v5913 = vunpack.c.h.b16 %v3804
        %v5914 = vunpack.c.l.b16 %v3805
        %v5915 = vunpack.c.h.b16 %v3805
        %v5916 = vunpack.c.l.b16 %v3806
        %v5917 = vunpack.c.h.b16 %v3806
        %v5918 = vunpack.c.l.b16 %v3807
        %v5919 = vunpack.c.h.b16 %v3807
        %v5920 = vunpack.c.l.b16 %v3808
        %v5921 = vunpack.c.h.b16 %v3808
        %v5922 = vunpack.c.l.b16 %v3809
        %v5923 = vunpack.c.h.b16 %v3809
        %v5924 = vunpack.c.l.b16 %v3810
        %v5925 = vunpack.c.h.b16 %v3810
        %v5926 = vunpack.c.l.b16 %v3811
        %v5927 = vunpack.c.h.b16 %v3811
        %v5928 = vunpack.c.l.b16 %v3812
        %v5929 = vunpack.c.h.b16 %v3812
        %v5930 = vunpack.c.l.b16 %v3813
        %v5931 = vunpack.c.h.b16 %v3813
        %v5932 = vunpack.c.l.b16 %v3814
        %v5933 = vunpack.c.h.b16 %v3814
        %v5934 = vunpack.c.l.b16 %v3815
        %v5935 = vunpack.c.h.b16 %v3815
        %v5936 = vunpack.c.l.b16 %v3816
        %v5937 = vunpack.c.h.b16 %v3816
        %v5938 = vunpack.c.l.b16 %v3817
        %v5939 = vunpack.c.h.b16 %v3817
        %v5940 = vunpack.c.l.b16 %v3818
        %v5941 = vunpack.c.h.b16 %v3818
        %v5942 = vunpack.c.l.b16 %v3819
        %v5943 = vunpack.c.h.b16 %v3819
        %v5944 = vunpack.c.l.b16 %v3820
        %v5945 = vunpack.c.h.b16 %v3820
        %v5946 = vunpack.c.l.b16 %v3821
        %v5947 = vunpack.c.h.b16 %v3821
        %v5948 = vunpack.c.l.b16 %v3822
        %v5949 = vunpack.c.h.b16 %v3822
        %v5950 = vunpack.c.l.b16 %v3823
        %v5951 = vunpack.c.h.b16 %v3823
        %v5952 = vunpack.c.l.b16 %v3824
        %v5953 = vunpack.c.h.b16 %v3824
        %v5954 = vunpack.c.l.b16 %v3825
        %v5955 = vunpack.c.h.b16 %v3825
        %v5956 = vunpack.c.l.b16 %v3826
        %v5957 = vunpack.c.h.b16 %v3826
        %v5958 = vunpack.c.l.b16 %v3827
        %v5959 = vunpack.c.h.b16 %v3827
        %v5960 = vunpack.c.l.b16 %v3828
        %v5961 = vunpack.c.h.b16 %v3828
        %v5962 = vunpack.c.l.b16 %v3829
        %v5963 = vunpack.c.h.b16 %v3829
        %v5964 = vunpack.c.l.b16 %v3830
        %v5965 = vunpack.c.h.b16 %v3830
        %v5966 = vunpack.c.l.b16 %v3831
        %v5967 = vunpack.c.h.b16 %v3831
        %v5968 = vunpack.c.l.b16 %v3832
        %v5969 = vunpack.c.h.b16 %v3832
        %v5970 = vunpack.c.l.b16 %v3833
        %v5971 = vunpack.c.h.b16 %v3833
        %v5972 = vunpack.c.l.b16 %v3834
        %v5973 = vunpack.c.h.b16 %v3834
        %v5974 = vunpack.c.l.b16 %v3835
        %v5975 = vunpack.c.h.b16 %v3835
        %v5976 = vunpack.c.l.b16 %v3836
        %v5977 = vunpack.c.h.b16 %v3836
        %v5978 = vunpack.c.l.b16 %v3837
        %v5979 = vunpack.c.h.b16 %v3837
        %v5980 = vunpack.c.l.b16 %v3838
        %v5981 = vunpack.c.h.b16 %v3838
        %v5982 = vunpack.c.l.b16 %v3839
        %v5983 = vunpack.c.h.b16 %v3839
        %v5984 = vunpack.c.l.b16 %v3840
        %v5985 = vunpack.c.h.b16 %v3840
        %v5986 = vunpack.c.l.b16 %v3841
        %v5987 = vunpack.c.h.b16 %v3841
        %v5988 = vunpack.c.l.b16 %v3842
        %v5989 = vunpack.c.h.b16 %v3842
        %v5990 = vunpack.c.l.b16 %v3843
        %v5991 = vunpack.c.h.b16 %v3843
        %v5992 = vunpack.c.l.b16 %v3844
        %v5993 = vunpack.c.h.b16 %v3844
        %v5994 = vunpack.c.l.b16 %v3845
        %v5995 = vunpack.c.h.b16 %v3845
        %v5996 = vunpack.c.l.b16 %v3846
        %v5997 = vunpack.c.h.b16 %v3846
        %v5998 = vunpack.c.l.b16 %v3847
        %v5999 = vunpack.c.h.b16 %v3847
        %v6000 = vunpack.c.l.b16 %v3848
        %v6001 = vunpack.c.h.b16 %v3848
        %v6002 = vunpack.c.l.b16 %v3849
        %v6003 = vunpack.c.h.b16 %v3849
        %v6004 = vunpack.c.l.b16 %v3850
        %v6005 = vunpack.c.h.b16 %v3850
        %v6006 = vunpack.c.l.b16 %v3851
        %v6007 = vunpack.c.h.b16 %v3851
        %v6008 = vunpack.c.l.b16 %v3852
        %v6009 = vunpack.c.h.b16 %v3852
        %v6010 = vunpack.c.l.b16 %v3853
        %v6011 = vunpack.c.h.b16 %v3853
        %v6012 = vunpack.c.l.b16 %v3854
        %v6013 = vunpack.c.h.b16 %v3854
        %v6014 = vunpack.c.l.b16 %v3855
        %v6015 = vunpack.c.h.b16 %v3855
        %v6016 = vunpack.c.l.b16 %v3856
        %v6017 = vunpack.c.h.b16 %v3856
        %v6018 = vunpack.c.l.b16 %v3857
        %v6019 = vunpack.c.h.b16 %v3857
        %v6020 = vunpack.c.l.b16 %v3858
        %v6021 = vunpack.c.h.b16 %v3858
        %v6022 = vunpack.c.l.b16 %v3859
        %v6023 = vunpack.c.h.b16 %v3859
        %v6024 = vunpack.c.l.b16 %v3860
        %v6025 = vunpack.c.h.b16 %v3860
        %v6026 = vunpack.c.l.b16 %v3861
        %v6027 = vunpack.c.h.b16 %v3861
        %v6028 = vunpack.c.l.b16 %v3862
        %v6029 = vunpack.c.h.b16 %v3862
        %v6030 = vunpack.c.l.b16 %v3863
        %v6031 = vunpack.c.h.b16 %v3863
        %v6032 = vunpack.c.l.b16 %v3864
        %v6033 = vunpack.c.h.b16 %v3864
        %v6034 = vunpack.c.l.b16 %v3865
        %v6035 = vunpack.c.h.b16 %v3865
        %v6036 = vunpack.c.l.b16 %v3866
        %v6037 = vunpack.c.h.b16 %v3866
        %v6038 = vunpack.c.l.b16 %v3867
        %v6039 = vunpack.c.h.b16 %v3867
        %v6040 = vunpack.c.l.b16 %v3868
        %v6041 = vunpack.c.h.b16 %v3868
        %v6042 = vunpack.c.l.b16 %v3869
        %v6043 = vunpack.c.h.b16 %v3869
        %v6044 = vunpack.c.l.b16 %v3870
        %v6045 = vunpack.c.h.b16 %v3870
        %v6046 = vunpack.c.l.b16 %v3871
        %v6047 = vunpack.c.h.b16 %v3871
        %v6048 = vunpack.c.l.b16 %v3872
        %v6049 = vunpack.c.h.b16 %v3872
        %v6050 = vunpack.c.l.b16 %v3873
        %v6051 = vunpack.c.h.b16 %v3873
        %v6052 = vunpack.c.l.b16 %v3874
        %v6053 = vunpack.c.h.b16 %v3874
        %v6054 = vunpack.c.l.b16 %v3875
        %v6055 = vunpack.c.h.b16 %v3875
        %v6056 = vunpack.c.l.b16 %v3876
        %v6057 = vunpack.c.h.b16 %v3876
        %v6058 = vunpack.c.l.b16 %v3877
        %v6059 = vunpack.c.h.b16 %v3877
        %v6060 = vunpack.c.l.b16 %v3878
        %v6061 = vunpack.c.h.b16 %v3878
        %v6062 = vunpack.c.l.b16 %v3879
        %v6063 = vunpack.c.h.b16 %v3879
        %v6064 = vunpack.c.l.b16 %v3880
        %v6065 = vunpack.c.h.b16 %v3880
        %v6066 = vunpack.c.l.b16 %v3881
        %v6067 = vunpack.c.h.b16 %v3881
        %v6068 = vunpack.c.l.b16 %v3882
        %v6069 = vunpack.c.h.b16 %v3882
        %v6070 = vunpack.c.l.b16 %v3883
        %v6071 = vunpack.c.h.b16 %v3883
        %v6072 = vunpack.c.l.b16 %v3884
        %v6073 = vunpack.c.h.b16 %v3884
        %v6074 = vunpack.c.l.b16 %v3885
        %v6075 = vunpack.c.h.b16 %v3885
        %v6076 = vunpack.c.l.b16 %v3886
        %v6077 = vunpack.c.h.b16 %v3886
        %v6078 = vunpack.c.l.b16 %v3887
        %v6079 = vunpack.c.h.b16 %v3887
        %v6080 = vunpack.c.l.b16 %v3888
        %v6081 = vunpack.c.h.b16 %v3888
        %v6082 = vunpack.c.l.b16 %v3889
        %v6083 = vunpack.c.h.b16 %v3889
        %v6084 = vunpack.c.l.b16 %v3890
        %v6085 = vunpack.c.h.b16 %v3890
        %v6086 = vunpack.c.l.b16 %v3891
        %v6087 = vunpack.c.h.b16 %v3891
        %v6088 = vunpack.c.l.b16 %v3892
        %v6089 = vunpack.c.h.b16 %v3892
        %v6090 = vunpack.c.l.b16 %v3893
        %v6091 = vunpack.c.h.b16 %v3893
        %v6092 = vunpack.c.l.b16 %v3894
        %v6093 = vunpack.c.h.b16 %v3894
        %v6094 = vunpack.c.l.b16 %v3895
        %v6095 = vunpack.c.h.b16 %v3895
        %v6096 = vunpack.c.l.b16 %v3896
        %v6097 = vunpack.c.h.b16 %v3896
        %v6098 = vunpack.c.l.b16 %v3897
        %v6099 = vunpack.c.h.b16 %v3897
        %v6100 = vunpack.c.l.b16 %v3898
        %v6101 = vunpack.c.h.b16 %v3898
        %v6102 = vunpack.c.l.b16 %v3899
        %v6103 = vunpack.c.h.b16 %v3899
        %v6104 = vunpack.c.l.b16 %v3900
        %v6105 = vunpack.c.h.b16 %v3900
        %v6106 = vunpack.c.l.b16 %v3901
        %v6107 = vunpack.c.h.b16 %v3901
        %v6108 = vunpack.c.l.b16 %v3902
        %v6109 = vunpack.c.h.b16 %v3902
        %v6110 = vunpack.c.l.b16 %v3903
        %v6111 = vunpack.c.h.b16 %v3903
        %v6112 = vunpack.c.l.b16 %v3904
        %v6113 = vunpack.c.h.b16 %v3904
        %v6114 = vunpack.c.l.b16 %v3905
        %v6115 = vunpack.c.h.b16 %v3905
        %v6116 = vunpack.c.l.b16 %v3906
        %v6117 = vunpack.c.h.b16 %v3906
        %v6118 = vunpack.c.l.b16 %v3907
        %v6119 = vunpack.c.h.b16 %v3907
        %v6120 = vunpack.c.l.b16 %v3908
        %v6121 = vunpack.c.h.b16 %v3908
        %v6122 = vunpack.c.l.b16 %v3909
        %v6123 = vunpack.c.h.b16 %v3909
        %v6124 = vunpack.c.l.b16 %v3910
        %v6125 = vunpack.c.h.b16 %v3910
        %v6126 = vunpack.c.l.b16 %v3911
        %v6127 = vunpack.c.h.b16 %v3911
        %v6128 = vunpack.c.l.b16 %v3912
        %v6129 = vunpack.c.h.b16 %v3912
        %v6130 = vunpack.c.l.b16 %v3913
        %v6131 = vunpack.c.h.b16 %v3913
        %v6132 = vunpack.c.l.b16 %v3914
        %v6133 = vunpack.c.h.b16 %v3914
        %v6134 = vunpack.c.l.b16 %v3915
        %v6135 = vunpack.c.h.b16 %v3915
        %v6136 = vunpack.c.l.b16 %v3916
        %v6137 = vunpack.c.h.b16 %v3916
        %v6138 = vunpack.c.l.b16 %v3917
        %v6139 = vunpack.c.h.b16 %v3917
        %v6140 = vunpack.c.l.b16 %v3918
        %v6141 = vunpack.c.h.b16 %v3918
        %v6142 = vunpack.c.l.b16 %v3919
        %v6143 = vunpack.c.h.b16 %v3919
        %v6144 = vunpack.c.l.b16 %v3920
        %v6145 = vunpack.c.h.b16 %v3920
        %v6146 = vunpack.c.l.b16 %v3921
        %v6147 = vunpack.c.h.b16 %v3921
        %v6148 = vunpack.c.l.b16 %v3922
        %v6149 = vunpack.c.h.b16 %v3922
        %v6150 = vunpack.c.l.b16 %v3923
        %v6151 = vunpack.c.h.b16 %v3923
        %v6152 = vunpack.c.l.b16 %v3924
        %v6153 = vunpack.c.h.b16 %v3924
        %v6154 = vunpack.c.l.b16 %v3925
        %v6155 = vunpack.c.h.b16 %v3925
        %v6156 = vunpack.c.l.b16 %v3926
        %v6157 = vunpack.c.h.b16 %v3926
        %v6158 = vunpack.c.l.b16 %v3927
        %v6159 = vunpack.c.h.b16 %v3927
        %v6160 = vunpack.c.l.b16 %v3928
        %v6161 = vunpack.c.h.b16 %v3928
        %v6162 = vunpack.c.l.b16 %v3929
        %v6163 = vunpack.c.h.b16 %v3929
        %v6164 = vunpack.c.l.b16 %v3930
        %v6165 = vunpack.c.h.b16 %v3930
        %v6166 = vunpack.c.l.b16 %v3931
        %v6167 = vunpack.c.h.b16 %v3931
        %v6168 = vunpack.c.l.b16 %v3932
        %v6169 = vunpack.c.h.b16 %v3932
        %v6170 = vunpack.c.l.b16 %v3933
        %v6171 = vunpack.c.h.b16 %v3933
        %v6172 = vunpack.c.l.b16 %v3934
        %v6173 = vunpack.c.h.b16 %v3934
        %v6174 = vunpack.c.l.b16 %v3935
        %v6175 = vunpack.c.h.b16 %v3935
        %v6176 = vunpack.c.l.b16 %v3936
        %v6177 = vunpack.c.h.b16 %v3936
        %v6178 = vunpack.c.l.b16 %v3937
        %v6179 = vunpack.c.h.b16 %v3937
        %v6180 = vunpack.c.l.b16 %v3938
        %v6181 = vunpack.c.h.b16 %v3938
        %v6182 = vunpack.c.l.b16 %v3939
        %v6183 = vunpack.c.h.b16 %v3939
        %v6184 = vunpack.c.l.b16 %v3940
        %v6185 = vunpack.c.h.b16 %v3940
        %v6186 = vunpack.c.l.b16 %v3941
        %v6187 = vunpack.c.h.b16 %v3941
        %v6188 = vunpack.c.l.b16 %v3942
        %v6189 = vunpack.c.h.b16 %v3942
        %v6190 = vunpack.c.l.b16 %v3943
        %v6191 = vunpack.c.h.b16 %v3943
        %v6192 = vunpack.c.l.b16 %v3944
        %v6193 = vunpack.c.h.b16 %v3944
        %v6194 = vunpack.c.l.b16 %v3945
        %v6195 = vunpack.c.h.b16 %v3945
        %v6196 = vunpack.c.l.b16 %v3946
        %v6197 = vunpack.c.h.b16 %v3946
        %v6198 = vunpack.c.l.b16 %v3947
        %v6199 = vunpack.c.h.b16 %v3947
        %v6200 = vunpack.c.l.b16 %v3948
        %v6201 = vunpack.c.h.b16 %v3948
        %v6202 = vunpack.c.l.b16 %v3949
        %v6203 = vunpack.c.h.b16 %v3949
        %v6204 = vunpack.c.l.b16 %v3950
        %v6205 = vunpack.c.h.b16 %v3950
        %v6206 = vunpack.c.l.b16 %v3951
        %v6207 = vunpack.c.h.b16 %v3951
        %v6208 = vunpack.c.l.b16 %v3952
        %v6209 = vunpack.c.h.b16 %v3952
        %v6210 = vunpack.c.l.b16 %v3953
        %v6211 = vunpack.c.h.b16 %v3953
        %v6212 = vunpack.c.l.b16 %v3954
        %v6213 = vunpack.c.h.b16 %v3954
        %v6214 = vunpack.c.l.b16 %v3955
        %v6215 = vunpack.c.h.b16 %v3955
        %v6216 = vunpack.c.l.b16 %v3956
        %v6217 = vunpack.c.h.b16 %v3956
        %v6218 = vunpack.c.l.b16 %v3957
        %v6219 = vunpack.c.h.b16 %v3957
        %v6220 = vunpack.c.l.b16 %v3958
        %v6221 = vunpack.c.h.b16 %v3958
        %v6222 = vunpack.c.l.b16 %v3959
        %v6223 = vunpack.c.h.b16 %v3959
        %v6224 = vunpack.c.l.b16 %v3960
        %v6225 = vunpack.c.h.b16 %v3960
        %v6226 = vunpack.c.l.b16 %v3961
        %v6227 = vunpack.c.h.b16 %v3961
        %v6228 = vunpack.c.l.b16 %v3962
        %v6229 = vunpack.c.h.b16 %v3962
        %v6230 = vunpack.c.l.b16 %v3963
        %v6231 = vunpack.c.h.b16 %v3963
        %v6232 = vunpack.c.l.b16 %v3964
        %v6233 = vunpack.c.h.b16 %v3964
        %v6234 = vunpack.c.l.b16 %v3965
        %v6235 = vunpack.c.h.b16 %v3965
        %v6236 = vunpack.c.l.b16 %v3966
        %v6237 = vunpack.c.h.b16 %v3966
        %v6238 = vunpack.c.l.b16 %v3967
        %v6239 = vunpack.c.h.b16 %v3967
        %v6240 = vunpack.c.l.b16 %v3968
        %v6241 = vunpack.c.h.b16 %v3968
        %v6242 = vunpack.c.l.b16 %v3969
        %v6243 = vunpack.c.h.b16 %v3969
        %v6244 = vunpack.c.l.b16 %v3970
        %v6245 = vunpack.c.h.b16 %v3970
        %v6246 = vunpack.c.l.b16 %v3971
        %v6247 = vunpack.c.h.b16 %v3971
        %v6248 = vunpack.c.l.b16 %v3972
        %v6249 = vunpack.c.h.b16 %v3972
        %v6250 = vunpack.c.l.b16 %v3973
        %v6251 = vunpack.c.h.b16 %v3973
        %v6252 = vunpack.c.l.b16 %v3974
        %v6253 = vunpack.c.h.b16 %v3974
        %v6254 = vunpack.c.l.b16 %v3975
        %v6255 = vunpack.c.h.b16 %v3975
        %v6256 = vunpack.c.l.b16 %v3976
        %v6257 = vunpack.c.h.b16 %v3976
        %v6258 = vunpack.c.l.b16 %v3977
        %v6259 = vunpack.c.h.b16 %v3977
        %v6260 = vunpack.c.l.b16 %v3978
        %v6261 = vunpack.c.h.b16 %v3978
        %v6262 = vunpack.c.l.b16 %v3979
        %v6263 = vunpack.c.h.b16 %v3979
        %v6264 = vunpack.c.l.b16 %v3980
        %v6265 = vunpack.c.h.b16 %v3980
        %v6266 = vunpack.c.l.b16 %v3981
        %v6267 = vunpack.c.h.b16 %v3981
        %v6268 = vunpack.c.l.b16 %v3982
        %v6269 = vunpack.c.h.b16 %v3982
        %v6270 = vunpack.c.l.b16 %v3983
        %v6271 = vunpack.c.h.b16 %v3983
        %v6272 = vunpack.c.l.b16 %v3984
        %v6273 = vunpack.c.h.b16 %v3984
        %v6274 = vunpack.c.l.b16 %v3985
        %v6275 = vunpack.c.h.b16 %v3985
        %v6276 = vunpack.c.l.b16 %v3986
        %v6277 = vunpack.c.h.b16 %v3986
        %v6278 = vunpack.c.l.b16 %v3987
        %v6279 = vunpack.c.h.b16 %v3987
        %v6280 = vunpack.c.l.b16 %v3988
        %v6281 = vunpack.c.h.b16 %v3988
        %v6282 = vunpack.c.l.b16 %v3989
        %v6283 = vunpack.c.h.b16 %v3989
        %v6284 = vunpack.c.l.b16 %v3990
        %v6285 = vunpack.c.h.b16 %v3990
        %v6286 = vunpack.c.l.b16 %v3991
        %v6287 = vunpack.c.h.b16 %v3991
        %v6288 = vunpack.c.l.b16 %v3992
        %v6289 = vunpack.c.h.b16 %v3992
        %v6290 = vunpack.c.l.b16 %v3993
        %v6291 = vunpack.c.h.b16 %v3993
        %v6292 = vunpack.c.l.b16 %v3994
        %v6293 = vunpack.c.h.b16 %v3994
        %v6294 = vunpack.c.l.b16 %v3995
        %v6295 = vunpack.c.h.b16 %v3995
        %v6296 = vunpack.c.l.b16 %v3996
        %v6297 = vunpack.c.h.b16 %v3996
        %v6298 = vunpack.c.l.b16 %v3997
        %v6299 = vunpack.c.h.b16 %v3997
        %v6300 = vunpack.c.l.b16 %v3998
        %v6301 = vunpack.c.h.b16 %v3998
        %v6302 = vunpack.c.l.b16 %v3999
        %v6303 = vunpack.c.h.b16 %v3999
        %v6304 = vunpack.c.l.b16 %v4000
        %v6305 = vunpack.c.h.b16 %v4000
        %v6306 = vunpack.c.l.b16 %v4001
        %v6307 = vunpack.c.h.b16 %v4001
        %v6308 = vunpack.c.l.b16 %v4002
        %v6309 = vunpack.c.h.b16 %v4002
        %v6310 = vunpack.c.l.b16 %v4003
        %v6311 = vunpack.c.h.b16 %v4003
        %v6312 = vunpack.c.l.b16 %v4004
        %v6313 = vunpack.c.h.b16 %v4004
        %v6314 = vunpack.c.l.b16 %v4005
        %v6315 = vunpack.c.h.b16 %v4005
        %v6316 = vunpack.c.l.b16 %v4006
        %v6317 = vunpack.c.h.b16 %v4006
        %v6318 = vunpack.c.l.b16 %v4007
        %v6319 = vunpack.c.h.b16 %v4007
        %v6320 = vunpack.c.l.b16 %v4008
        %v6321 = vunpack.c.h.b16 %v4008
        %v6322 = vunpack.c.l.b16 %v4009
        %v6323 = vunpack.c.h.b16 %v4009
        %v6324 = vunpack.c.l.b16 %v4010
        %v6325 = vunpack.c.h.b16 %v4010
        %v6326 = vunpack.c.l.b16 %v4011
        %v6327 = vunpack.c.h.b16 %v4011
        %v6328 = vunpack.c.l.b16 %v4012
        %v6329 = vunpack.c.h.b16 %v4012
        %v6330 = vunpack.c.l.b16 %v4013
        %v6331 = vunpack.c.h.b16 %v4013
        %v6332 = vunpack.c.l.b16 %v4014
        %v6333 = vunpack.c.h.b16 %v4014
        %v6334 = vunpack.c.l.b16 %v4015
        %v6335 = vunpack.c.h.b16 %v4015
        %v6336 = vunpack.c.l.b16 %v4016
        %v6337 = vunpack.c.h.b16 %v4016
        %v6338 = vunpack.c.l.b16 %v4017
        %v6339 = vunpack.c.h.b16 %v4017
        %v6340 = vunpack.c.l.b16 %v4018
        %v6341 = vunpack.c.h.b16 %v4018
        %v6342 = vunpack.c.l.b16 %v4019
        %v6343 = vunpack.c.h.b16 %v4019
        %v6344 = vunpack.c.l.b16 %v4020
        %v6345 = vunpack.c.h.b16 %v4020
        %v6346 = vunpack.c.l.b16 %v4021
        %v6347 = vunpack.c.h.b16 %v4021
        %v6348 = vunpack.c.l.b16 %v4022
        %v6349 = vunpack.c.h.b16 %v4022
        %v6350 = vunpack.c.l.b16 %v4023
        %v6351 = vunpack.c.h.b16 %v4023
        %v6352 = vunpack.c.l.b16 %v4024
        %v6353 = vunpack.c.h.b16 %v4024
        %v6354 = vunpack.c.l.b16 %v4025
        %v6355 = vunpack.c.h.b16 %v4025
        %v6356 = vunpack.c.l.b16 %v4026
        %v6357 = vunpack.c.h.b16 %v4026
        %v6358 = vunpack.c.l.b16 %v4027
        %v6359 = vunpack.c.h.b16 %v4027
        %v6360 = vunpack.c.l.b16 %v4028
        %v6361 = vunpack.c.h.b16 %v4028
        %v6362 = vunpack.c.l.b16 %v4029
        %v6363 = vunpack.c.h.b16 %v4029
        %v6364 = vunpack.c.l.b16 %v4030
        %v6365 = vunpack.c.h.b16 %v4030
        %v6366 = vunpack.c.l.b16 %v4031
        %v6367 = vunpack.c.h.b16 %v4031
        %v6368 = vunpack.c.l.b16 %v4032
        %v6369 = vunpack.c.h.b16 %v4032
        %v6370 = vunpack.c.l.b16 %v4033
        %v6371 = vunpack.c.h.b16 %v4033
        %v6372 = vunpack.c.l.b16 %v4034
        %v6373 = vunpack.c.h.b16 %v4034
        %v6374 = vunpack.c.l.b16 %v4035
        %v6375 = vunpack.c.h.b16 %v4035
        %v6376 = vunpack.c.l.b16 %v4036
        %v6377 = vunpack.c.h.b16 %v4036
        %v6378 = vunpack.c.l.b16 %v4037
        %v6379 = vunpack.c.h.b16 %v4037
        %v6380 = vunpack.c.l.b16 %v4038
        %v6381 = vunpack.c.h.b16 %v4038
        %v6382 = vunpack.c.l.b16 %v4039
        %v6383 = vunpack.c.h.b16 %v4039
        %v6384 = vunpack.c.l.b16 %v4040
        %v6385 = vunpack.c.h.b16 %v4040
        %v6386 = vunpack.c.l.b16 %v4041
        %v6387 = vunpack.c.h.b16 %v4041
        %v6388 = vunpack.c.l.b16 %v4042
        %v6389 = vunpack.c.h.b16 %v4042
        %v6390 = vunpack.c.l.b16 %v4043
        %v6391 = vunpack.c.h.b16 %v4043
        %v6392 = vunpack.c.l.b16 %v4044
        %v6393 = vunpack.c.h.b16 %v4044
        %v6394 = vunpack.c.l.b16 %v4045
        %v6395 = vunpack.c.h.b16 %v4045
        %v6396 = vunpack.c.l.b16 %v4046
        %v6397 = vunpack.c.h.b16 %v4046
        %v6398 = vunpack.c.l.b16 %v4047
        %v6399 = vunpack.c.h.b16 %v4047
        %v6400 = vunpack.c.l.b16 %v4048
        %v6401 = vunpack.c.h.b16 %v4048
        %v6402 = vunpack.c.l.b16 %v4049
        %v6403 = vunpack.c.h.b16 %v4049
        %v6404 = vunpack.c.l.b16 %v4050
        %v6405 = vunpack.c.h.b16 %v4050
        %v6406 = vunpack.c.l.b16 %v4051
        %v6407 = vunpack.c.h.b16 %v4051
        %v6408 = vunpack.c.l.b16 %v4052
        %v6409 = vunpack.c.h.b16 %v4052
        %v6410 = vunpack.c.l.b16 %v4053
        %v6411 = vunpack.c.h.b16 %v4053
        %v6412 = vunpack.c.l.b16 %v4054
        %v6413 = vunpack.c.h.b16 %v4054
        %v6414 = vunpack.c.l.b16 %v4055
        %v6415 = vunpack.c.h.b16 %v4055
        %v6416 = vunpack.c.l.b16 %v4056
        %v6417 = vunpack.c.h.b16 %v4056
        %v6418 = vunpack.c.l.b16 %v4057
        %v6419 = vunpack.c.h.b16 %v4057
        %v6420 = vunpack.c.l.b16 %v4058
        %v6421 = vunpack.c.h.b16 %v4058
        %v6422 = vunpack.c.l.b16 %v4059
        %v6423 = vunpack.c.h.b16 %v4059
        %v6424 = vunpack.c.l.b16 %v4060
        %v6425 = vunpack.c.h.b16 %v4060
        %v6426 = vunpack.c.l.b16 %v4061
        %v6427 = vunpack.c.h.b16 %v4061
        %v6428 = vunpack.c.l.b16 %v4062
        %v6429 = vunpack.c.h.b16 %v4062
        %v6430 = vunpack.c.l.b16 %v4063
        %v6431 = vunpack.c.h.b16 %v4063
        %v6432 = vunpack.c.l.b16 %v4064
        %v6433 = vunpack.c.h.b16 %v4064
        %v6434 = vunpack.c.l.b16 %v4065
        %v6435 = vunpack.c.h.b16 %v4065
        %v6436 = vunpack.c.l.b16 %v4066
        %v6437 = vunpack.c.h.b16 %v4066
        %v6438 = vunpack.c.l.b16 %v4067
        %v6439 = vunpack.c.h.b16 %v4067
        %v6440 = vunpack.c.l.b16 %v4068
        %v6441 = vunpack.c.h.b16 %v4068
        %v6442 = vunpack.c.l.b16 %v4069
        %v6443 = vunpack.c.h.b16 %v4069
        %v6444 = vunpack.c.l.b16 %v4070
        %v6445 = vunpack.c.h.b16 %v4070
        %v6446 = vunpack.c.l.b16 %v4071
        %v6447 = vunpack.c.h.b16 %v4071
        %v6448 = vunpack.c.l.b16 %v4072
        %v6449 = vunpack.c.h.b16 %v4072
        %v6450 = vunpack.c.l.b16 %v4073
        %v6451 = vunpack.c.h.b16 %v4073
        %v6452 = vunpack.c.l.b16 %v4074
        %v6453 = vunpack.c.h.b16 %v4074
        %v6454 = vunpack.c.l.b16 %v4075
        %v6455 = vunpack.c.h.b16 %v4075
        %v6456 = vunpack.c.l.b16 %v4076
        %v6457 = vunpack.c.h.b16 %v4076
        %v6458 = vunpack.c.l.b16 %v4077
        %v6459 = vunpack.c.h.b16 %v4077
        %v6460 = vunpack.c.l.b16 %v4078
        %v6461 = vunpack.c.h.b16 %v4078
        %v6462 = vunpack.c.l.b16 %v4079
        %v6463 = vunpack.c.h.b16 %v4079
        %v6464 = vunpack.c.l.b16 %v4080
        %v6465 = vunpack.c.h.b16 %v4080
        %v6466 = vunpack.c.l.b16 %v4081
        %v6467 = vunpack.c.h.b16 %v4081
        %v6468 = vunpack.c.l.b16 %v4082
        %v6469 = vunpack.c.h.b16 %v4082
        %v6470 = vunpack.c.l.b16 %v4083
        %v6471 = vunpack.c.h.b16 %v4083
        %v6472 = vunpack.c.l.b16 %v4084
        %v6473 = vunpack.c.h.b16 %v4084
        %v6474 = vunpack.c.l.b16 %v4085
        %v6475 = vunpack.c.h.b16 %v4085
        %v6476 = vunpack.c.l.b16 %v4086
        %v6477 = vunpack.c.h.b16 %v4086
        %v6478 = vunpack.c.l.b16 %v4087
        %v6479 = vunpack.c.h.b16 %v4087
        %v6480 = vunpack.c.l.b16 %v4088
        %v6481 = vunpack.c.h.b16 %v4088
        %v6482 = vunpack.c.l.b16 %v4089
        %v6483 = vunpack.c.h.b16 %v4089
        %v6484 = vunpack.c.l.b16 %v4090
        %v6485 = vunpack.c.h.b16 %v4090
        %v6486 = vunpack.c.l.b16 %v4091
        %v6487 = vunpack.c.h.b16 %v4091
        %v6488 = vunpack.c.l.b16 %v4092
        %v6489 = vunpack.c.h.b16 %v4092
        %v6490 = vunpack.c.l.b16 %v4093
        %v6491 = vunpack.c.h.b16 %v4093
        %v6492 = vunpack.c.l.b16 %v4094
        %v6493 = vunpack.c.h.b16 %v4094
        %v6494 = vunpack.c.l.b16 %v4095
        %v6495 = vunpack.c.h.b16 %v4095
        %v6496 = vunpack.c.l.b16 %v4096
        %v6497 = vunpack.c.h.b16 %v4096
        %v6498 = vunpack.c.l.b16 %v4097
        %v6499 = vunpack.c.h.b16 %v4097
        %v6500 = vunpack.c.l.b16 %v4098
        %v6501 = vunpack.c.h.b16 %v4098
        %v6502 = vunpack.c.l.b16 %v4099
        %v6503 = vunpack.c.h.b16 %v4099
        %v6504 = vunpack.c.l.b16 %v4100
        %v6505 = vunpack.c.h.b16 %v4100
        %v6506 = vunpack.c.l.b16 %v4101
        %v6507 = vunpack.c.h.b16 %v4101
        %v6508 = vunpack.c.l.b16 %v4102
        %v6509 = vunpack.c.h.b16 %v4102
        %v6510 = vunpack.c.l.b16 %v4103
        %v6511 = vunpack.c.h.b16 %v4103
        %v6512 = vunpack.c.l.b16 %v4104
        %v6513 = vunpack.c.h.b16 %v4104
        %v6514 = vunpack.c.l.b16 %v4105
        %v6515 = vunpack.c.h.b16 %v4105
        %v6516 = vunpack.c.l.b16 %v4106
        %v6517 = vunpack.c.h.b16 %v4106
        %v6518 = vunpack.c.l.b16 %v4107
        %v6519 = vunpack.c.h.b16 %v4107
        %v6520 = vunpack.c.l.b16 %v4108
        %v6521 = vunpack.c.h.b16 %v4108
        %v6522 = vunpack.c.l.b16 %v4109
        %v6523 = vunpack.c.h.b16 %v4109
        %v6524 = vunpack.c.l.b16 %v4110
        %v6525 = vunpack.c.h.b16 %v4110
        %v6526 = vunpack.c.l.b16 %v4111
        %v6527 = vunpack.c.h.b16 %v4111
        %v6528 = vunpack.c.l.b16 %v4112
        %v6529 = vunpack.c.h.b16 %v4112
        %v6530 = vunpack.c.l.b16 %v4113
        %v6531 = vunpack.c.h.b16 %v4113
        %v6532 = vunpack.c.l.b16 %v4114
        %v6533 = vunpack.c.h.b16 %v4114
        %v6534 = vunpack.c.l.b16 %v4115
        %v6535 = vunpack.c.h.b16 %v4115
        %v6536 = vunpack.c.l.b16 %v4116
        %v6537 = vunpack.c.h.b16 %v4116
        %v6538 = vunpack.c.l.b16 %v4117
        %v6539 = vunpack.c.h.b16 %v4117
        %v6540 = vunpack.c.l.b16 %v4118
        %v6541 = vunpack.c.h.b16 %v4118
        %v6542 = vunpack.c.l.b16 %v4119
        %v6543 = vunpack.c.h.b16 %v4119
        %v6544 = vunpack.c.l.b16 %v4120
        %v6545 = vunpack.c.h.b16 %v4120
        %v6546 = vunpack.c.l.b16 %v4121
        %v6547 = vunpack.c.h.b16 %v4121
        %v6548 = vunpack.c.l.b16 %v4122
        %v6549 = vunpack.c.h.b16 %v4122
        %v6550 = vunpack.c.l.b16 %v4123
        %v6551 = vunpack.c.h.b16 %v4123
        %v6552 = vunpack.c.l.b16 %v4124
        %v6553 = vunpack.c.h.b16 %v4124
        %v6554 = vunpack.c.l.b16 %v4125
        %v6555 = vunpack.c.h.b16 %v4125
        %v6556 = vunpack.c.l.b16 %v4126
        %v6557 = vunpack.c.h.b16 %v4126
        %v6558 = vunpack.c.l.b16 %v4127
        %v6559 = vunpack.c.h.b16 %v4127
        %v6560 = vunpack.c.l.b16 %v4128
        %v6561 = vunpack.c.h.b16 %v4128
        %v6562 = vunpack.c.l.b16 %v4129
        %v6563 = vunpack.c.h.b16 %v4129
        %v6564 = vunpack.c.l.b16 %v4130
        %v6565 = vunpack.c.h.b16 %v4130
        %v6566 = vunpack.c.l.b16 %v4131
        %v6567 = vunpack.c.h.b16 %v4131
        %v6568 = vunpack.c.l.b16 %v4132
        %v6569 = vunpack.c.h.b16 %v4132
        %v6570 = vunpack.c.l.b16 %v4133
        %v6571 = vunpack.c.h.b16 %v4133
        %v6572 = vunpack.c.l.b16 %v4134
        %v6573 = vunpack.c.h.b16 %v4134
        %v6574 = vunpack.c.l.b16 %v4135
        %v6575 = vunpack.c.h.b16 %v4135
        %v6576 = vunpack.c.l.b16 %v4136
        %v6577 = vunpack.c.h.b16 %v4136
        %v6578 = vunpack.c.l.b16 %v4137
        %v6579 = vunpack.c.h.b16 %v4137
        %v6580 = vunpack.c.l.b16 %v4138
        %v6581 = vunpack.c.h.b16 %v4138
        %v6582 = vunpack.c.l.b16 %v4139
        %v6583 = vunpack.c.h.b16 %v4139
        %v6584 = vunpack.c.l.b16 %v4140
        %v6585 = vunpack.c.h.b16 %v4140
        %v6586 = vunpack.c.l.b16 %v4141
        %v6587 = vunpack.c.h.b16 %v4141
        %v6588 = vunpack.c.l.b16 %v4142
        %v6589 = vunpack.c.h.b16 %v4142
        %v6590 = vunpack.c.l.b16 %v4143
        %v6591 = vunpack.c.h.b16 %v4143
        %v6592 = vunpack.c.l.b16 %v4144
        %v6593 = vunpack.c.h.b16 %v4144
        %v6594 = vunpack.c.l.b16 %v4145
        %v6595 = vunpack.c.h.b16 %v4145
        %v6596 = vunpack.c.l.b16 %v4146
        %v6597 = vunpack.c.h.b16 %v4146
        %v6598 = vunpack.c.l.b16 %v4147
        %v6599 = vunpack.c.h.b16 %v4147
        %v6600 = vunpack.c.l.b16 %v4148
        %v6601 = vunpack.c.h.b16 %v4148
        %v6602 = vunpack.c.l.b16 %v4149
        %v6603 = vunpack.c.h.b16 %v4149
        %v6604 = vunpack.c.l.b16 %v4150
        %v6605 = vunpack.c.h.b16 %v4150
        %v6606 = vunpack.c.l.b16 %v4151
        %v6607 = vunpack.c.h.b16 %v4151
        %v6608 = vunpack.c.l.b16 %v4152
        %v6609 = vunpack.c.h.b16 %v4152
        %v6610 = vunpack.c.l.b16 %v4153
        %v6611 = vunpack.c.h.b16 %v4153
        %v6612 = vunpack.c.l.b16 %v4154
        %v6613 = vunpack.c.h.b16 %v4154
        %v6614 = vunpack.c.l.b16 %v4155
        %v6615 = vunpack.c.h.b16 %v4155
        %v6616 = vunpack.c.l.b16 %v4156
        %v6617 = vunpack.c.h.b16 %v4156
        %v6618 = vunpack.c.l.b16 %v4157
        %v6619 = vunpack.c.h.b16 %v4157
        %v6620 = vunpack.c.l.b16 %v4158
        %v6621 = vunpack.c.h.b16 %v4158
        %v6622 = vunpack.c.l.b16 %v4159
        %v6623 = vunpack.c.h.b16 %v4159
        %v6624 = vunpack.c.l.b16 %v4160
        %v6625 = vunpack.c.h.b16 %v4160
        %v6626 = vunpack.c.l.b16 %v4161
        %v6627 = vunpack.c.h.b16 %v4161
        %v6628 = vunpack.c.l.b16 %v4162
        %v6629 = vunpack.c.h.b16 %v4162
        %v6630 = vunpack.c.l.b16 %v4163
        %v6631 = vunpack.c.h.b16 %v4163
        %v6632 = vunpack.c.l.b16 %v4164
        %v6633 = vunpack.c.h.b16 %v4164
        %v6634 = vunpack.c.l.b16 %v4165
        %v6635 = vunpack.c.h.b16 %v4165
        %v6636 = vunpack.c.l.b16 %v4166
        %v6637 = vunpack.c.h.b16 %v4166
        %v6638 = vunpack.c.l.b16 %v4167
        %v6639 = vunpack.c.h.b16 %v4167
        %v6640 = vunpack.c.l.b16 %v4168
        %v6641 = vunpack.c.h.b16 %v4168
        %v6642 = vunpack.c.l.b16 %v4169
        %v6643 = vunpack.c.h.b16 %v4169
        %v6644 = vunpack.c.l.b16 %v4170
        %v6645 = vunpack.c.h.b16 %v4170
        %v6646 = vunpack.c.l.b16 %v4171
        %v6647 = vunpack.c.h.b16 %v4171
        %v6648 = vunpack.c.l.b16 %v4172
        %v6649 = vunpack.c.h.b16 %v4172
        %v6650 = vunpack.c.l.b16 %v4173
        %v6651 = vunpack.c.h.b16 %v4173
        %v6652 = vunpack.c.l.b16 %v4174
        %v6653 = vunpack.c.h.b16 %v4174
        %v6654 = vunpack.c.l.b16 %v4175
        %v6655 = vunpack.c.h.b16 %v4175
        %v6656 = vunpack.c.l.b16 %v4176
        %v6657 = vunpack.c.h.b16 %v4176
        %v6658 = vunpack.c.l.b16 %v4177
        %v6659 = vunpack.c.h.b16 %v4177
        %v6660 = vunpack.c.l.b16 %v4178
        %v6661 = vunpack.c.h.b16 %v4178
        %v6662 = vunpack.c.l.b16 %v4179
        %v6663 = vunpack.c.h.b16 %v4179
        %v6664 = vunpack.c.l.b16 %v4180
        %v6665 = vunpack.c.h.b16 %v4180
        %v6666 = vunpack.c.l.b16 %v4181
        %v6667 = vunpack.c.h.b16 %v4181
        %v6668 = vunpack.c.l.b16 %v4182
        %v6669 = vunpack.c.h.b16 %v4182
        %v6670 = vunpack.c.l.b16 %v4183
        %v6671 = vunpack.c.h.b16 %v4183
        %v6672 = vunpack.c.l.b16 %v4184
        %v6673 = vunpack.c.h.b16 %v4184
        %v6674 = vunpack.c.l.b16 %v4185
        %v6675 = vunpack.c.h.b16 %v4185
        %v6676 = vunpack.c.l.b16 %v4186
        %v6677 = vunpack.c.h.b16 %v4186
        %v6678 = vunpack.c.l.b16 %v4187
        %v6679 = vunpack.c.h.b16 %v4187
        %v6680 = vunpack.c.l.b16 %v4188
        %v6681 = vunpack.c.h.b16 %v4188
        %v6682 = vunpack.c.l.b16 %v4189
        %v6683 = vunpack.c.h.b16 %v4189
        %v6684 = vunpack.c.l.b16 %v4190
        %v6685 = vunpack.c.h.b16 %v4190
        %v6686 = vunpack.c.l.b16 %v4191
        %v6687 = vunpack.c.h.b16 %v4191
        %v6688 = vunpack.c.l.b16 %v4192
        %v6689 = vunpack.c.h.b16 %v4192
        %v6690 = vunpack.c.l.b16 %v4193
        %v6691 = vunpack.c.h.b16 %v4193
        %v6692 = vunpack.c.l.b16 %v4194
        %v6693 = vunpack.c.h.b16 %v4194
        %v6694 = vunpack.c.l.b16 %v4195
        %v6695 = vunpack.c.h.b16 %v4195
        %v6696 = vunpack.c.l.b16 %v4196
        %v6697 = vunpack.c.h.b16 %v4196
        %v6698 = vunpack.c.l.b16 %v4197
        %v6699 = vunpack.c.h.b16 %v4197
        %v6700 = vunpack.c.l.b16 %v4198
        %v6701 = vunpack.c.h.b16 %v4198
        %v6702 = vunpack.c.l.b16 %v4199
        %v6703 = vunpack.c.h.b16 %v4199
        %v6704 = vunpack.c.l.b16 %v4200
        %v6705 = vunpack.c.h.b16 %v4200
        %v6706 = vunpack.c.l.b16 %v4201
        %v6707 = vunpack.c.h.b16 %v4201
        %v6708 = vunpack.c.l.b16 %v4202
        %v6709 = vunpack.c.h.b16 %v4202
        %v6710 = vunpack.c.l.b16 %v4203
        %v6711 = vunpack.c.h.b16 %v4203
        %v6712 = vunpack.c.l.b16 %v4204
        %v6713 = vunpack.c.h.b16 %v4204
        %v6714 = vunpack.c.l.b16 %v4205
        %v6715 = vunpack.c.h.b16 %v4205
        %v6716 = vunpack.c.l.b16 %v4206
        %v6717 = vunpack.c.h.b16 %v4206
        %v6718 = vunpack.c.l.b16 %v4207
        %v6719 = vunpack.c.h.b16 %v4207
        %v6720 = vunpack.c.l.b16 %v4208
        %v6721 = vunpack.c.h.b16 %v4208
        %v6722 = vunpack.c.l.b16 %v4209
        %v6723 = vunpack.c.h.b16 %v4209
        %v6724 = vunpack.c.l.b16 %v4210
        %v6725 = vunpack.c.h.b16 %v4210
        %v6726 = vunpack.c.l.b16 %v4211
        %v6727 = vunpack.c.h.b16 %v4211
        %v6728 = vunpack.c.l.b16 %v4212
        %v6729 = vunpack.c.h.b16 %v4212
        %v6730 = vunpack.c.l.b16 %v4213
        %v6731 = vunpack.c.h.b16 %v4213
        %v6732 = vunpack.c.l.b16 %v4214
        %v6733 = vunpack.c.h.b16 %v4214
        %v6734 = vunpack.c.l.b16 %v4215
        %v6735 = vunpack.c.h.b16 %v4215
        %v6736 = vunpack.c.l.b16 %v4216
        %v6737 = vunpack.c.h.b16 %v4216
        %v6738 = vunpack.c.l.b16 %v4217
        %v6739 = vunpack.c.h.b16 %v4217
        %v6740 = vunpack.c.l.b16 %v4218
        %v6741 = vunpack.c.h.b16 %v4218
        %v6742 = vunpack.c.l.b16 %v4219
        %v6743 = vunpack.c.h.b16 %v4219
        %v6744 = vunpack.c.l.b16 %v4220
        %v6745 = vunpack.c.h.b16 %v4220
        %v6746 = vunpack.c.l.b16 %v4221
        %v6747 = vunpack.c.h.b16 %v4221
        %v6748 = vunpack.c.l.b16 %v4222
        %v6749 = vunpack.c.h.b16 %v4222
        %v6750 = vunpack.c.l.b16 %v4223
        %v6751 = vunpack.c.h.b16 %v4223
        %v6752 = vunpack.c.l.b16 %v4224
        %v6753 = vunpack.c.h.b16 %v4224
        %v6754 = vunpack.c.l.b16 %v4225
        %v6755 = vunpack.c.h.b16 %v4225
        %v6756 = vunpack.c.l.b16 %v4226
        %v6757 = vunpack.c.h.b16 %v4226
        %v6758 = vunpack.c.l.b16 %v4227
        %v6759 = vunpack.c.h.b16 %v4227
        %v6760 = vunpack.c.l.b16 %v4228
        %v6761 = vunpack.c.h.b16 %v4228
        %v6762 = vunpack.c.l.b16 %v4229
        %v6763 = vunpack.c.h.b16 %v4229
        %v6764 = vunpack.c.l.b16 %v4230
        %v6765 = vunpack.c.h.b16 %v4230
        %v6766 = vunpack.c.l.b16 %v4231
        %v6767 = vunpack.c.h.b16 %v4231
        %v6768 = vunpack.c.l.b16 %v4232
        %v6769 = vunpack.c.h.b16 %v4232
        %v6770 = vunpack.c.l.b16 %v4233
        %v6771 = vunpack.c.h.b16 %v4233
        %v6772 = vunpack.c.l.b16 %v4234
        %v6773 = vunpack.c.h.b16 %v4234
        %v6774 = vunpack.c.l.b16 %v4235
        %v6775 = vunpack.c.h.b16 %v4235
        %v6776 = vunpack.c.l.b16 %v4236
        %v6777 = vunpack.c.h.b16 %v4236
        %v6778 = vunpack.c.l.b16 %v4237
        %v6779 = vunpack.c.h.b16 %v4237
        %v6780 = vunpack.c.l.b16 %v4238
        %v6781 = vunpack.c.h.b16 %v4238
        %v6782 = vunpack.c.l.b16 %v4239
        %v6783 = vunpack.c.h.b16 %v4239
        %v6784 = vunpack.c.l.b16 %v4240
        %v6785 = vunpack.c.h.b16 %v4240
        %v6786 = vunpack.c.l.b16 %v4241
        %v6787 = vunpack.c.h.b16 %v4241
        %v6788 = vunpack.c.l.b16 %v4242
        %v6789 = vunpack.c.h.b16 %v4242
        %v6790 = vunpack.c.l.b16 %v4243
        %v6791 = vunpack.c.h.b16 %v4243
        %v6792 = vunpack.c.l.b16 %v4244
        %v6793 = vunpack.c.h.b16 %v4244
        %v6794 = vunpack.c.l.b16 %v4245
        %v6795 = vunpack.c.h.b16 %v4245
        %v6796 = vunpack.c.l.b16 %v4246
        %v6797 = vunpack.c.h.b16 %v4246
        %v6798 = vunpack.c.l.b16 %v4247
        %v6799 = vunpack.c.h.b16 %v4247
        %v6800 = vunpack.c.l.b16 %v4248
        %v6801 = vunpack.c.h.b16 %v4248
        %v6802 = vunpack.c.l.b16 %v4249
        %v6803 = vunpack.c.h.b16 %v4249
        %v6804 = vunpack.c.l.b16 %v4250
        %v6805 = vunpack.c.h.b16 %v4250
        %v6806 = vunpack.c.l.b16 %v4251
        %v6807 = vunpack.c.h.b16 %v4251
        %v6808 = vunpack.c.l.b16 %v4252
        %v6809 = vunpack.c.h.b16 %v4252
        %v6810 = vunpack.c.l.b16 %v4253
        %v6811 = vunpack.c.h.b16 %v4253
        %v6812 = vunpack.c.l.b16 %v4254
        %v6813 = vunpack.c.h.b16 %v4254
        %v6814 = vunpack.c.l.b16 %v4255
        %v6815 = vunpack.c.h.b16 %v4255
        %v6816 = vunpack.c.l.b16 %v4256
        %v6817 = vunpack.c.h.b16 %v4256
        %v6818 = vunpack.c.l.b16 %v4257
        %v6819 = vunpack.c.h.b16 %v4257
        %v6820 = vunpack.c.l.b16 %v4258
        %v6821 = vunpack.c.h.b16 %v4258
        %v6822 = vunpack.c.l.b16 %v4259
        %v6823 = vunpack.c.h.b16 %v4259
        %v6824 = vunpack.c.l.b16 %v4260
        %v6825 = vunpack.c.h.b16 %v4260
        %v6826 = vunpack.c.l.b16 %v4261
        %v6827 = vunpack.c.h.b16 %v4261
        %v6828 = vunpack.c.l.b16 %v4262
        %v6829 = vunpack.c.h.b16 %v4262
        %v6830 = vunpack.c.l.b16 %v4263
        %v6831 = vunpack.c.h.b16 %v4263
        %v6832 = vunpack.c.l.b16 %v4264
        %v6833 = vunpack.c.h.b16 %v4264
        %v6834 = vunpack.c.l.b16 %v4265
        %v6835 = vunpack.c.h.b16 %v4265
        %v6836 = vunpack.c.l.b16 %v4266
        %v6837 = vunpack.c.h.b16 %v4266
        %v6838 = vunpack.c.l.b16 %v4267
        %v6839 = vunpack.c.h.b16 %v4267
        %v6840 = vunpack.c.l.b16 %v4268
        %v6841 = vunpack.c.h.b16 %v4268
        %v6842 = vunpack.c.l.b16 %v4269
        %v6843 = vunpack.c.h.b16 %v4269
        %v6844 = vunpack.c.l.b16 %v4270
        %v6845 = vunpack.c.h.b16 %v4270
        %v6846 = vunpack.c.l.b16 %v4271
        %v6847 = vunpack.c.h.b16 %v4271
        %v6848 = vunpack.c.l.b16 %v4272
        %v6849 = vunpack.c.h.b16 %v4272
        %v6850 = vunpack.c.l.b16 %v4273
        %v6851 = vunpack.c.h.b16 %v4273
        %v6852 = vunpack.c.l.b16 %v4274
        %v6853 = vunpack.c.h.b16 %v4274
        %v6854 = vunpack.c.l.b16 %v4275
        %v6855 = vunpack.c.h.b16 %v4275
        %v6856 = vunpack.c.l.b16 %v4276
        %v6857 = vunpack.c.h.b16 %v4276
        %v6858 = vunpack.c.l.b16 %v4277
        %v6859 = vunpack.c.h.b16 %v4277
        %v6860 = vunpack.c.l.b16 %v4278
        %v6861 = vunpack.c.h.b16 %v4278
        %v6862 = vunpack.c.l.b16 %v4279
        %v6863 = vunpack.c.h.b16 %v4279
        %v6864 = vunpack.c.l.b16 %v4280
        %v6865 = vunpack.c.h.b16 %v4280
        %v6866 = vunpack.c.l.b16 %v4281
        %v6867 = vunpack.c.h.b16 %v4281
        %v6868 = vunpack.c.l.b16 %v4282
        %v6869 = vunpack.c.h.b16 %v4282
        %v6870 = vunpack.c.l.b16 %v4283
        %v6871 = vunpack.c.h.b16 %v4283
        %v6872 = vunpack.c.l.b16 %v4284
        %v6873 = vunpack.c.h.b16 %v4284
        %v6874 = vunpack.c.l.b16 %v4285
        %v6875 = vunpack.c.h.b16 %v4285
        %v6876 = vunpack.c.l.b16 %v4286
        %v6877 = vunpack.c.h.b16 %v4286
        %v6878 = vunpack.c.l.b16 %v4287
        %v6879 = vunpack.c.h.b16 %v4287
        %v6880 = vunpack.c.l.b16 %v4288
        %v6881 = vunpack.c.h.b16 %v4288
        %v6882 = vunpack.c.l.b16 %v4289
        %v6883 = vunpack.c.h.b16 %v4289
        %v6884 = vunpack.c.l.b16 %v4290
        %v6885 = vunpack.c.h.b16 %v4290
        %v6886 = vunpack.c.l.b16 %v4291
        %v6887 = vunpack.c.h.b16 %v4291
        %v6888 = vunpack.c.l.b16 %v4292
        %v6889 = vunpack.c.h.b16 %v4292
        %v6890 = vunpack.c.l.b16 %v4293
        %v6891 = vunpack.c.h.b16 %v4293
        %v6892 = vunpack.c.l.b16 %v4294
        %v6893 = vunpack.c.h.b16 %v4294
        %v6894 = vunpack.c.l.b16 %v4295
        %v6895 = vunpack.c.h.b16 %v4295
        %v6896 = vunpack.c.l.b16 %v4296
        %v6897 = vunpack.c.h.b16 %v4296
        %v6898 = vunpack.c.l.b16 %v4297
        %v6899 = vunpack.c.h.b16 %v4297
        %v6900 = vunpack.c.l.b16 %v4298
        %v6901 = vunpack.c.h.b16 %v4298
        %v6902 = vunpack.c.l.b16 %v4299
        %v6903 = vunpack.c.h.b16 %v4299
        %v6904 = vunpack.c.l.b16 %v4300
        %v6905 = vunpack.c.h.b16 %v4300
        %v6906 = vunpack.c.l.b16 %v4301
        %v6907 = vunpack.c.h.b16 %v4301
        %v6908 = vunpack.c.l.b16 %v4302
        %v6909 = vunpack.c.h.b16 %v4302
        %v6910 = vunpack.c.l.b16 %v4303
        %v6911 = vunpack.c.h.b16 %v4303
        %v6912 = vunpack.c.l.b16 %v4304
        %v6913 = vunpack.c.h.b16 %v4304
        %v6914 = vunpack.c.l.b16 %v4305
        %v6915 = vunpack.c.h.b16 %v4305
        %v6916 = vunpack.c.l.b16 %v4306
        %v6917 = vunpack.c.h.b16 %v4306
        %v6918 = vunpack.c.l.b16 %v4307
        %v6919 = vunpack.c.h.b16 %v4307
        %v6920 = vunpack.c.l.b16 %v4308
        %v6921 = vunpack.c.h.b16 %v4308
        %v6922 = vunpack.c.l.b16 %v4309
        %v6923 = vunpack.c.h.b16 %v4309
        %v6924 = vunpack.c.l.b16 %v4310
        %v6925 = vunpack.c.h.b16 %v4310
        %v6926 = vunpack.c.l.b16 %v4311
        %v6927 = vunpack.c.h.b16 %v4311
        %v6928 = vunpack.c.l.b16 %v4312
        %v6929 = vunpack.c.h.b16 %v4312
        %v6930 = vunpack.c.l.b16 %v4313
        %v6931 = vunpack.c.h.b16 %v4313
        %v6932 = vunpack.c.l.b16 %v4314
        %v6933 = vunpack.c.h.b16 %v4314
        %v6934 = vunpack.c.l.b16 %v4315
        %v6935 = vunpack.c.h.b16 %v4315
        %v6936 = vunpack.c.l.b16 %v4316
        %v6937 = vunpack.c.h.b16 %v4316
        %v6938 = vunpack.c.l.b16 %v4317
        %v6939 = vunpack.c.h.b16 %v4317
        %v6940 = vunpack.c.l.b16 %v4318
        %v6941 = vunpack.c.h.b16 %v4318
        %v6942 = vunpack.c.l.b16 %v4319
        %v6943 = vunpack.c.h.b16 %v4319
        %v6944 = vunpack.c.l.b16 %v4320
        %v6945 = vunpack.c.h.b16 %v4320
        %v6946 = vunpack.c.l.b16 %v4321
        %v6947 = vunpack.c.h.b16 %v4321
        %v6948 = vunpack.c.l.b16 %v4322
        %v6949 = vunpack.c.h.b16 %v4322
        %v6950 = vunpack.c.l.b16 %v4323
        %v6951 = vunpack.c.h.b16 %v4323
        %v6952 = vunpack.c.l.b16 %v4324
        %v6953 = vunpack.c.h.b16 %v4324
        %v6954 = vunpack.c.l.b16 %v4325
        %v6955 = vunpack.c.h.b16 %v4325
        %v6956 = vunpack.c.l.b16 %v4326
        %v6957 = vunpack.c.h.b16 %v4326
        %v6958 = vunpack.c.l.b16 %v4327
        %v6959 = vunpack.c.h.b16 %v4327
        %v6960 = vunpack.c.l.b16 %v4328
        %v6961 = vunpack.c.h.b16 %v4328
        %v6962 = vunpack.c.l.b16 %v4329
        %v6963 = vunpack.c.h.b16 %v4329
        %v6964 = vunpack.c.l.b16 %v4330
        %v6965 = vunpack.c.h.b16 %v4330
        %v6966 = vunpack.c.l.b16 %v4331
        %v6967 = vunpack.c.h.b16 %v4331
        %v6968 = vunpack.c.l.b16 %v4332
        %v6969 = vunpack.c.h.b16 %v4332
        %v6970 = vunpack.c.l.b16 %v4333
        %v6971 = vunpack.c.h.b16 %v4333
        %v6972 = vunpack.c.l.b16 %v4334
        %v6973 = vunpack.c.h.b16 %v4334
        %v6974 = vunpack.c.l.b16 %v4335
        %v6975 = vunpack.c.h.b16 %v4335
        %v6976 = vunpack.c.l.b16 %v4336
        %v6977 = vunpack.c.h.b16 %v4336
        %v6978 = vunpack.c.l.b16 %v4337
        %v6979 = vunpack.c.h.b16 %v4337
        %v6980 = vunpack.c.l.b16 %v4338
        %v6981 = vunpack.c.h.b16 %v4338
        %v6982 = vunpack.c.l.b16 %v4339
        %v6983 = vunpack.c.h.b16 %v4339
        %v6984 = vunpack.c.l.b16 %v4340
        %v6985 = vunpack.c.h.b16 %v4340
        %v6986 = vunpack.c.l.b16 %v4341
        %v6987 = vunpack.c.h.b16 %v4341
        %v6988 = vunpack.c.l.b16 %v4342
        %v6989 = vunpack.c.h.b16 %v4342
        %v6990 = vunpack.c.l.b16 %v4343
        %v6991 = vunpack.c.h.b16 %v4343
        %v6992 = vunpack.c.l.b16 %v4344
        %v6993 = vunpack.c.h.b16 %v4344
        %v6994 = vunpack.c.l.b16 %v4345
        %v6995 = vunpack.c.h.b16 %v4345
        %v6996 = vunpack.c.l.b16 %v4346
        %v6997 = vunpack.c.h.b16 %v4346
        %v6998 = vunpack.c.l.b16 %v4347
        %v6999 = vunpack.c.h.b16 %v4347
        %v7000 = vunpack.c.l.b16 %v4348
        %v7001 = vunpack.c.h.b16 %v4348
        %v7002 = vunpack.c.l.b16 %v4349
        %v7003 = vunpack.c.h.b16 %v4349
        %v7004 = vunpack.c.l.b16 %v4350
        %v7005 = vunpack.c.h.b16 %v4350
        %v7006 = vunpack.c.l.b16 %v4351
        %v7007 = vunpack.c.h.b16 %v4351
        %v7008 = vunpack.c.l.b16 %v4352
        %v7009 = vunpack.c.h.b16 %v4352
        %v7010 = vunpack.c.l.b16 %v4353
        %v7011 = vunpack.c.h.b16 %v4353
        %v7012 = vunpack.c.l.b16 %v4354
        %v7013 = vunpack.c.h.b16 %v4354
        %v7014 = vunpack.c.l.b16 %v4355
        %v7015 = vunpack.c.h.b16 %v4355
        %v7016 = vunpack.c.l.b16 %v4356
        %v7017 = vunpack.c.h.b16 %v4356
        %v7018 = vunpack.c.l.b16 %v4357
        %v7019 = vunpack.c.h.b16 %v4357
        %v7020 = vunpack.c.l.b16 %v4358
        %v7021 = vunpack.c.h.b16 %v4358
        %v7022 = vunpack.c.l.b16 %v4359
        %v7023 = vunpack.c.h.b16 %v4359
        %v7024 = vunpack.c.l.b16 %v4360
        %v7025 = vunpack.c.h.b16 %v4360
        %v7026 = vunpack.c.l.b16 %v4361
        %v7027 = vunpack.c.h.b16 %v4361
        %v7028 = vunpack.c.l.b16 %v4362
        %v7029 = vunpack.c.h.b16 %v4362
        %v7030 = vunpack.c.l.b16 %v4363
        %v7031 = vunpack.c.h.b16 %v4363
        %v7032 = vunpack.c.l.b16 %v4364
        %v7033 = vunpack.c.h.b16 %v4364
        %v7034 = vunpack.c.l.b16 %v4365
        %v7035 = vunpack.c.h.b16 %v4365
        %v7036 = vunpack.c.l.b16 %v4366
        %v7037 = vunpack.c.h.b16 %v4366
        %v7038 = vunpack.c.l.b16 %v4367
        %v7039 = vunpack.c.h.b16 %v4367
        %v7040 = vunpack.c.l.b16 %v4368
        %v7041 = vunpack.c.h.b16 %v4368
        %v7042 = vunpack.c.l.b16 %v4369
        %v7043 = vunpack.c.h.b16 %v4369
        %v7044 = vunpack.c.l.b16 %v4370
        %v7045 = vunpack.c.h.b16 %v4370
        %v7046 = vunpack.c.l.b16 %v4371
        %v7047 = vunpack.c.h.b16 %v4371
        %v7048 = vunpack.c.l.b16 %v4372
        %v7049 = vunpack.c.h.b16 %v4372
        %v7050 = vunpack.c.l.b16 %v4373
        %v7051 = vunpack.c.h.b16 %v4373
        %v7052 = vunpack.c.l.b16 %v4374
        %v7053 = vunpack.c.h.b16 %v4374
        %v7054 = vunpack.c.l.b16 %v4375
        %v7055 = vunpack.c.h.b16 %v4375
        %v7056 = vunpack.c.l.b16 %v4376
        %v7057 = vunpack.c.h.b16 %v4376
        %v7058 = vunpack.c.l.b16 %v4377
        %v7059 = vunpack.c.h.b16 %v4377
        %v7060 = vunpack.c.l.b16 %v4378
        %v7061 = vunpack.c.h.b16 %v4378
        %v7062 = vunpack.c.l.b16 %v4379
        %v7063 = vunpack.c.h.b16 %v4379
        %v7064 = vunpack.c.l.b16 %v4380
        %v7065 = vunpack.c.h.b16 %v4380
        %v7066 = vunpack.c.l.b16 %v4381
        %v7067 = vunpack.c.h.b16 %v4381
        %v7068 = vunpack.c.l.b16 %v4382
        %v7069 = vunpack.c.h.b16 %v4382
        %v7070 = vunpack.c.l.b16 %v4383
        %v7071 = vunpack.c.h.b16 %v4383
        %v7072 = vunpack.c.l.b16 %v4384
        %v7073 = vunpack.c.h.b16 %v4384
        %v7074 = vunpack.c.l.b16 %v4385
        %v7075 = vunpack.c.h.b16 %v4385
        %v7076 = vunpack.c.l.b16 %v4386
        %v7077 = vunpack.c.h.b16 %v4386
        %v7078 = vunpack.c.l.b16 %v4387
        %v7079 = vunpack.c.h.b16 %v4387
        %v7080 = vunpack.c.l.b16 %v4388
        %v7081 = vunpack.c.h.b16 %v4388
        %v7082 = vunpack.c.l.b16 %v4389
        %v7083 = vunpack.c.h.b16 %v4389
        %v7084 = vunpack.c.l.b16 %v4390
        %v7085 = vunpack.c.h.b16 %v4390
        %v7086 = vunpack.c.l.b16 %v4391
        %v7087 = vunpack.c.h.b16 %v4391
        %v7088 = vunpack.c.l.b16 %v4392
        %v7089 = vunpack.c.h.b16 %v4392
        %v7090 = vunpack.c.l.b16 %v4393
        %v7091 = vunpack.c.h.b16 %v4393
        %v7092 = vunpack.c.l.b16 %v4394
        %v7093 = vunpack.c.h.b16 %v4394
        %v7094 = vunpack.c.l.b16 %v4395
        %v7095 = vunpack.c.h.b16 %v4395
        %v7096 = vunpack.c.l.b16 %v4396
        %v7097 = vunpack.c.h.b16 %v4396
        %v7098 = vunpack.c.l.b16 %v4397
        %v7099 = vunpack.c.h.b16 %v4397
        %v7100 = vunpack.c.l.b16 %v4398
        %v7101 = vunpack.c.h.b16 %v4398
        %v7102 = vunpack.c.l.b16 %v4399
        %v7103 = vunpack.c.h.b16 %v4399
        %v7104 = vunpack.c.l.b16 %v4400
        %v7105 = vunpack.c.h.b16 %v4400
        %v7106 = vunpack.c.l.b16 %v4401
        %v7107 = vunpack.c.h.b16 %v4401
        %v7108 = vunpack.c.l.b16 %v4402
        %v7109 = vunpack.c.h.b16 %v4402
        %v7110 = vunpack.c.l.b16 %v4403
        %v7111 = vunpack.c.h.b16 %v4403
        %v7112 = vunpack.c.l.b16 %v4404
        %v7113 = vunpack.c.h.b16 %v4404
        %v7114 = vunpack.c.l.b16 %v4405
        %v7115 = vunpack.c.h.b16 %v4405
        %v7116 = vunpack.c.l.b16 %v4406
        %v7117 = vunpack.c.h.b16 %v4406
        %v7118 = vunpack.c.l.b16 %v4407
        %v7119 = vunpack.c.h.b16 %v4407
        %v7120 = vunpack.c.l.b16 %v4408
        %v7121 = vunpack.c.h.b16 %v4408
        %v7122 = vunpack.c.l.b16 %v4409
        %v7123 = vunpack.c.h.b16 %v4409
        %v7124 = vunpack.c.l.b16 %v4410
        %v7125 = vunpack.c.h.b16 %v4410
        %v7126 = vunpack.c.l.b16 %v4411
        %v7127 = vunpack.c.h.b16 %v4411
        %v7128 = vunpack.c.l.b16 %v4412
        %v7129 = vunpack.c.h.b16 %v4412
        %v7130 = vunpack.c.l.b16 %v4413
        %v7131 = vunpack.c.h.b16 %v4413
        %v7132 = vunpack.c.l.b16 %v4414
        %v7133 = vunpack.c.h.b16 %v4414
        %v7134 = vunpack.c.l.b16 %v4415
        %v7135 = vunpack.c.h.b16 %v4415
        %v7136 = vunpack.c.l.b16 %v4416
        %v7137 = vunpack.c.h.b16 %v4416
        %v7138 = vunpack.c.l.b16 %v4417
        %v7139 = vunpack.c.h.b16 %v4417
        %v7140 = vunpack.c.l.b16 %v4418
        %v7141 = vunpack.c.h.b16 %v4418
        %v7142 = vunpack.c.l.b16 %v4419
        %v7143 = vunpack.c.h.b16 %v4419
        %v7144 = vunpack.c.l.b16 %v4420
        %v7145 = vunpack.c.h.b16 %v4420
        %v7146 = vunpack.c.l.b16 %v4421
        %v7147 = vunpack.c.h.b16 %v4421
        %v7148 = vunpack.c.l.b16 %v4422
        %v7149 = vunpack.c.h.b16 %v4422
        %v7150 = vunpack.c.l.b16 %v4423
        %v7151 = vunpack.c.h.b16 %v4423
        %v7152 = vunpack.c.l.b16 %v4424
        %v7153 = vunpack.c.h.b16 %v4424
        %v7154 = vunpack.c.l.b16 %v4425
        %v7155 = vunpack.c.h.b16 %v4425
        %v7156 = vunpack.c.l.b16 %v4426
        %v7157 = vunpack.c.h.b16 %v4426
        %v7158 = vunpack.c.l.b16 %v4427
        %v7159 = vunpack.c.h.b16 %v4427
        %v7160 = vunpack.c.l.b16 %v4428
        %v7161 = vunpack.c.h.b16 %v4428
        %v7162 = vunpack.c.l.b16 %v4429
        %v7163 = vunpack.c.h.b16 %v4429
        %v7164 = vunpack.c.l.b16 %v4430
        %v7165 = vunpack.c.h.b16 %v4430
        %v7166 = vunpack.c.l.b16 %v4431
        %v7167 = vunpack.c.h.b16 %v4431
        %v7168 = vunpack.c.l.b16 %v4432
        %v7169 = vunpack.c.h.b16 %v4432
        %v7170 = vunpack.c.l.b16 %v4433
        %v7171 = vunpack.c.h.b16 %v4433
        %v7172 = vunpack.c.l.b16 %v4434
        %v7173 = vunpack.c.h.b16 %v4434
        %v7174 = vunpack.c.l.b16 %v4435
        %v7175 = vunpack.c.h.b16 %v4435
        %v7176 = vunpack.c.l.b16 %v4436
        %v7177 = vunpack.c.h.b16 %v4436
        %v7178 = vunpack.c.l.b16 %v4437
        %v7179 = vunpack.c.h.b16 %v4437
        %v7180 = vunpack.c.l.b16 %v4438
        %v7181 = vunpack.c.h.b16 %v4438
        %v7182 = vunpack.c.l.b16 %v4439
        %v7183 = vunpack.c.h.b16 %v4439
        %v7184 = vunpack.c.l.b16 %v4440
        %v7185 = vunpack.c.h.b16 %v4440
        %v7186 = vunpack.c.l.b16 %v4441
        %v7187 = vunpack.c.h.b16 %v4441
        %v7188 = vunpack.c.l.b16 %v4442
        %v7189 = vunpack.c.h.b16 %v4442
        %v7190 = vunpack.c.l.b16 %v4443
        %v7191 = vunpack.c.h.b16 %v4443
        %v7192 = vunpack.c.l.b16 %v4444
        %v7193 = vunpack.c.h.b16 %v4444
        %v7194 = vunpack.c.l.b16 %v4445
        %v7195 = vunpack.c.h.b16 %v4445
        %v7196 = vunpack.c.l.b16 %v4446
        %v7197 = vunpack.c.h.b16 %v4446
        %v7198 = vunpack.c.l.b16 %v4447
        %v7199 = vunpack.c.h.b16 %v4447
        %v7200 = vunpack.c.l.b16 %v4448
        %v7201 = vunpack.c.h.b16 %v4448
        %v7202 = vunpack.c.l.b16 %v4449
        %v7203 = vunpack.c.h.b16 %v4449
        %v7204 = vunpack.c.l.b16 %v4450
        %v7205 = vunpack.c.h.b16 %v4450
        %v7206 = vunpack.c.l.b16 %v4451
        %v7207 = vunpack.c.h.b16 %v4451
        %v7208 = vunpack.c.l.b16 %v4452
        %v7209 = vunpack.c.h.b16 %v4452
        %v7210 = vunpack.c.l.b16 %v4453
        %v7211 = vunpack.c.h.b16 %v4453
        %v7212 = vunpack.c.l.b16 %v4454
        %v7213 = vunpack.c.h.b16 %v4454
        %v7214 = vunpack.c.l.b16 %v4455
        %v7215 = vunpack.c.h.b16 %v4455
        %v7216 = vunpack.c.l.b16 %v4456
        %v7217 = vunpack.c.h.b16 %v4456
        %v7218 = vunpack.c.l.b16 %v4457
        %v7219 = vunpack.c.h.b16 %v4457
        %v7220 = vunpack.c.l.b16 %v4458
        %v7221 = vunpack.c.h.b16 %v4458
        %v7222 = vunpack.c.l.b16 %v4459
        %v7223 = vunpack.c.h.b16 %v4459
        %v7224 = vunpack.c.l.b16 %v4460
        %v7225 = vunpack.c.h.b16 %v4460
        %v7226 = vunpack.c.l.b16 %v4461
        %v7227 = vunpack.c.h.b16 %v4461
        %v7228 = vunpack.c.l.b16 %v4462
        %v7229 = vunpack.c.h.b16 %v4462
        %v7230 = vunpack.c.l.b16 %v4463
        %v7231 = vunpack.c.h.b16 %v4463
        %v7232 = vunpack.c.l.b16 %v4464
        %v7233 = vunpack.c.h.b16 %v4464
        %v7234 = vunpack.c.l.b16 %v4465
        %v7235 = vunpack.c.h.b16 %v4465
        %v7236 = vunpack.c.l.b16 %v4466
        %v7237 = vunpack.c.h.b16 %v4466
        %v7238 = vunpack.c.l.b16 %v4467
        %v7239 = vunpack.c.h.b16 %v4467
        %v7240 = vunpack.c.l.b16 %v4468
        %v7241 = vunpack.c.h.b16 %v4468
        %v7242 = vunpack.c.l.b16 %v4469
        %v7243 = vunpack.c.h.b16 %v4469
        %v7244 = vunpack.c.l.b16 %v4470
        %v7245 = vunpack.c.h.b16 %v4470
        %v7246 = vunpack.c.l.b16 %v4471
        %v7247 = vunpack.c.h.b16 %v4471
        %v7248 = vunpack.c.l.b16 %v4472
        %v7249 = vunpack.c.h.b16 %v4472
        %v7250 = vunpack.c.l.b16 %v4473
        %v7251 = vunpack.c.h.b16 %v4473
        %v7252 = vunpack.c.l.b16 %v4474
        %v7253 = vunpack.c.h.b16 %v4474
        %v7254 = vunpack.c.l.b16 %v4475
        %v7255 = vunpack.c.h.b16 %v4475
        %v7256 = vunpack.c.l.b16 %v4476
        %v7257 = vunpack.c.h.b16 %v4476
        %v7258 = vunpack.c.l.b16 %v4477
        %v7259 = vunpack.c.h.b16 %v4477
        %v7260 = vunpack.c.l.b16 %v4478
        %v7261 = vunpack.c.h.b16 %v4478
        %v7262 = vunpack.c.l.b16 %v4479
        %v7263 = vunpack.c.h.b16 %v4479
        %v7264 = vunpack.c.l.b16 %v4480
        %v7265 = vunpack.c.h.b16 %v4480
        %v7266 = vunpack.c.l.b16 %v4481
        %v7267 = vunpack.c.h.b16 %v4481
        %v7268 = vunpack.c.l.b16 %v4482
        %v7269 = vunpack.c.h.b16 %v4482
        %v7270 = vunpack.c.l.b16 %v4483
        %v7271 = vunpack.c.h.b16 %v4483
        %v7272 = vunpack.c.l.b16 %v4484
        %v7273 = vunpack.c.h.b16 %v4484
        %v7274 = vunpack.c.l.b16 %v4485
        %v7275 = vunpack.c.h.b16 %v4485
        %v7276 = vunpack.c.l.b16 %v4486
        %v7277 = vunpack.c.h.b16 %v4486
        %v7278 = vunpack.c.l.b16 %v4487
        %v7279 = vunpack.c.h.b16 %v4487
        %v7280 = vunpack.c.l.b16 %v4488
        %v7281 = vunpack.c.h.b16 %v4488
        %v7282 = vunpack.c.l.b16 %v4489
        %v7283 = vunpack.c.h.b16 %v4489
        %v7284 = vunpack.c.l.b16 %v4490
        %v7285 = vunpack.c.h.b16 %v4490
        %v7286 = vunpack.c.l.b16 %v4491
        %v7287 = vunpack.c.h.b16 %v4491
        %v7288 = vunpack.c.l.b16 %v4492
        %v7289 = vunpack.c.h.b16 %v4492
        %v7290 = vunpack.c.l.b16 %v4493
        %v7291 = vunpack.c.h.b16 %v4493
        %v7292 = vunpack.c.l.b16 %v4494
        %v7293 = vunpack.c.h.b16 %v4494
        %v7294 = vunpack.c.l.b16 %v4495
        %v7295 = vunpack.c.h.b16 %v4495
        %v7296 = vunpack.c.l.b16 %v4496
        %v7297 = vunpack.c.h.b16 %v4496
        %v7298 = vunpack.c.l.b16 %v4497
        %v7299 = vunpack.c.h.b16 %v4497
        %v7300 = vunpack.c.l.b16 %v4498
        %v7301 = vunpack.c.h.b16 %v4498
        %v7302 = vunpack.c.l.b16 %v4499
        %v7303 = vunpack.c.h.b16 %v4499
        %v7304 = vunpack.c.l.b16 %v4500
        %v7305 = vunpack.c.h.b16 %v4500
        %v7306 = vunpack.c.l.b16 %v4501
        %v7307 = vunpack.c.h.b16 %v4501
        %v7308 = vunpack.c.l.b16 %v4502
        %v7309 = vunpack.c.h.b16 %v4502
        %v7310 = vunpack.c.l.b16 %v4503
        %v7311 = vunpack.c.h.b16 %v4503
        %v7312 = vunpack.c.l.b16 %v4504
        %v7313 = vunpack.c.h.b16 %v4504
        %v7314 = vunpack.c.l.b16 %v4505
        %v7315 = vunpack.c.h.b16 %v4505
        %v7316 = vunpack.c.l.b16 %v4506
        %v7317 = vunpack.c.h.b16 %v4506
        %v7318 = vunpack.c.l.b16 %v4507
        %v7319 = vunpack.c.h.b16 %v4507
        %v7320 = vunpack.c.l.b16 %v4508
        %v7321 = vunpack.c.h.b16 %v4508
        %v7322 = vunpack.c.l.b16 %v4509
        %v7323 = vunpack.c.h.b16 %v4509
        %v7324 = vunpack.c.l.b16 %v4510
        %v7325 = vunpack.c.h.b16 %v4510
        %v7326 = vunpack.c.l.b16 %v4511
        %v7327 = vunpack.c.h.b16 %v4511
        %v7328 = vunpack.c.l.b16 %v4512
        %v7329 = vunpack.c.h.b16 %v4512
        %v7330 = vunpack.c.l.b16 %v4513
        %v7331 = vunpack.c.h.b16 %v4513
        %v7332 = vunpack.c.l.b16 %v4514
        %v7333 = vunpack.c.h.b16 %v4514
        %v7334 = vunpack.c.l.b16 %v4515
        %v7335 = vunpack.c.h.b16 %v4515
        %v7336 = vunpack.c.l.b16 %v4516
        %v7337 = vunpack.c.h.b16 %v4516
        %v7338 = vunpack.c.l.b16 %v4517
        %v7339 = vunpack.c.h.b16 %v4517
        %v7340 = vunpack.c.l.b16 %v4518
        %v7341 = vunpack.c.h.b16 %v4518
        %v7342 = vunpack.c.l.b16 %v4519
        %v7343 = vunpack.c.h.b16 %v4519
        %v7344 = vunpack.c.l.b16 %v4520
        %v7345 = vunpack.c.h.b16 %v4520
        %v7346 = vunpack.c.l.b16 %v4521
        %v7347 = vunpack.c.h.b16 %v4521
        %v7348 = vunpack.c.l.b16 %v4522
        %v7349 = vunpack.c.h.b16 %v4522
        %v7350 = vunpack.c.l.b16 %v4523
        %v7351 = vunpack.c.h.b16 %v4523
        %v7352 = vunpack.c.l.b16 %v4524
        %v7353 = vunpack.c.h.b16 %v4524
        %v7354 = vunpack.c.l.b16 %v4525
        %v7355 = vunpack.c.h.b16 %v4525
        %v7356 = vunpack.c.l.b16 %v4526
        %v7357 = vunpack.c.h.b16 %v4526
        %v7358 = vunpack.c.l.b16 %v4527
        %v7359 = vunpack.c.h.b16 %v4527
        %v7360 = vunpack.c.l.b16 %v4528
        %v7361 = vunpack.c.h.b16 %v4528
        %v7362 = vunpack.c.l.b16 %v4529
        %v7363 = vunpack.c.h.b16 %v4529
        %v7364 = vunpack.c.l.b16 %v4530
        %v7365 = vunpack.c.h.b16 %v4530
        %v7366 = vunpack.c.l.b16 %v4531
        %v7367 = vunpack.c.h.b16 %v4531
        %v7368 = vunpack.c.l.b16 %v4532
        %v7369 = vunpack.c.h.b16 %v4532
        %v7370 = vunpack.c.l.b16 %v4533
        %v7371 = vunpack.c.h.b16 %v4533
        %v7372 = vunpack.c.l.b16 %v4534
        %v7373 = vunpack.c.h.b16 %v4534
        %v7374 = vunpack.c.l.b16 %v4535
        %v7375 = vunpack.c.h.b16 %v4535
        %v7376 = vunpack.c.l.b16 %v4536
        %v7377 = vunpack.c.h.b16 %v4536
        %v7378 = vunpack.c.l.b16 %v4537
        %v7379 = vunpack.c.h.b16 %v4537
        %v7380 = vunpack.c.l.b16 %v4538
        %v7381 = vunpack.c.h.b16 %v4538
        %v7382 = vunpack.c.l.b16 %v4539
        %v7383 = vunpack.c.h.b16 %v4539
        %v7384 = vunpack.c.l.b16 %v4540
        %v7385 = vunpack.c.h.b16 %v4540
        %v7386 = vunpack.c.l.b16 %v4541
        %v7387 = vunpack.c.h.b16 %v4541
        %v7388 = vunpack.c.l.b16 %v4542
        %v7389 = vunpack.c.h.b16 %v4542
        %v7390 = vunpack.c.l.b16 %v4543
        %v7391 = vunpack.c.h.b16 %v4543
        %v7392 = vunpack.c.l.b16 %v4544
        %v7393 = vunpack.c.h.b16 %v4544
        %v7394 = vunpack.c.l.b16 %v4545
        %v7395 = vunpack.c.h.b16 %v4545
        %v7396 = vunpack.c.l.b16 %v4546
        %v7397 = vunpack.c.h.b16 %v4546
        %v7398 = vunpack.c.l.b16 %v4547
        %v7399 = vunpack.c.h.b16 %v4547
        %v7400 = vunpack.c.l.b16 %v4548
        %v7401 = vunpack.c.h.b16 %v4548
        %v7402 = vunpack.c.l.b16 %v4549
        %v7403 = vunpack.c.h.b16 %v4549
        %v7404 = vunpack.c.l.b16 %v4550
        %v7405 = vunpack.c.h.b16 %v4550
        %v7406 = vunpack.c.l.b16 %v4551
        %v7407 = vunpack.c.h.b16 %v4551
        %v7408 = vunpack.c.l.b16 %v4552
        %v7409 = vunpack.c.h.b16 %v4552
        %v7410 = vunpack.c.l.b16 %v4553
        %v7411 = vunpack.c.h.b16 %v4553
        %v7412 = vunpack.c.l.b16 %v4554
        %v7413 = vunpack.c.h.b16 %v4554
        %v7414 = vunpack.c.l.b16 %v4555
        %v7415 = vunpack.c.h.b16 %v4555
        %v7416 = vunpack.c.l.b16 %v4556
        %v7417 = vunpack.c.h.b16 %v4556
        %v7418 = vunpack.c.l.b16 %v4557
        %v7419 = vunpack.c.h.b16 %v4557
        %v7420 = vunpack.c.l.b16 %v4558
        %v7421 = vunpack.c.h.b16 %v4558
        %v7422 = vunpack.c.l.b16 %v4559
        %v7423 = vunpack.c.h.b16 %v4559
        %v7424 = vunpack.c.l.b16 %v4560
        %v7425 = vunpack.c.h.b16 %v4560
        %v7426 = vunpack.c.l.b16 %v4561
        %v7427 = vunpack.c.h.b16 %v4561
        %v7428 = vunpack.c.l.b16 %v4562
        %v7429 = vunpack.c.h.b16 %v4562
        %v7430 = vunpack.c.l.b16 %v4563
        %v7431 = vunpack.c.h.b16 %v4563
        %v7432 = vunpack.c.l.b16 %v4564
        %v7433 = vunpack.c.h.b16 %v4564
        %v7434 = vunpack.c.l.b16 %v4565
        %v7435 = vunpack.c.h.b16 %v4565
        %v7436 = vunpack.c.l.b16 %v4566
        %v7437 = vunpack.c.h.b16 %v4566
        %v7438 = vunpack.c.l.b16 %v4567
        %v7439 = vunpack.c.h.b16 %v4567
        %v7440 = vunpack.c.l.b16 %v4568
        %v7441 = vunpack.c.h.b16 %v4568
        %v7442 = vunpack.c.l.b16 %v4569
        %v7443 = vunpack.c.h.b16 %v4569
        %v7444 = vunpack.c.l.b16 %v4570
        %v7445 = vunpack.c.h.b16 %v4570
        %v7446 = vunpack.c.l.b16 %v4571
        %v7447 = vunpack.c.h.b16 %v4571
        %v7448 = vunpack.c.l.b16 %v4572
        %v7449 = vunpack.c.h.b16 %v4572
        %v7450 = vunpack.c.l.b16 %v4573
        %v7451 = vunpack.c.h.b16 %v4573
        %v7452 = vunpack.c.l.b16 %v4574
        %v7453 = vunpack.c.h.b16 %v4574
        %v7454 = vunpack.c.l.b16 %v4575
        %v7455 = vunpack.c.h.b16 %v4575
        %v7456 = vunpack.c.l.b16 %v4576
        %v7457 = vunpack.c.h.b16 %v4576
        %v7458 = vunpack.c.l.b16 %v4577
        %v7459 = vunpack.c.h.b16 %v4577
        %v7460 = vunpack.c.l.b16 %v4578
        %v7461 = vunpack.c.h.b16 %v4578
        %v7462 = vunpack.c.l.b16 %v4579
        %v7463 = vunpack.c.h.b16 %v4579
        %v7464 = vunpack.c.l.b16 %v4580
        %v7465 = vunpack.c.h.b16 %v4580
        %v7466 = vunpack.c.l.b16 %v4581
        %v7467 = vunpack.c.h.b16 %v4581
        %v7468 = vunpack.c.l.b16 %v4582
        %v7469 = vunpack.c.h.b16 %v4582
        %v7470 = vunpack.c.l.b16 %v4583
        %v7471 = vunpack.c.h.b16 %v4583
        %v7472 = vunpack.c.l.b16 %v4584
        %v7473 = vunpack.c.h.b16 %v4584
        %v7474 = vunpack.c.l.b16 %v4585
        %v7475 = vunpack.c.h.b16 %v4585
        %v7476 = vunpack.c.l.b16 %v4586
        %v7477 = vunpack.c.h.b16 %v4586
        %v7478 = vunpack.c.l.b16 %v4587
        %v7479 = vunpack.c.h.b16 %v4587
        %v7480 = vunpack.c.l.b16 %v4588
        %v7481 = vunpack.c.h.b16 %v4588
        %v7482 = vunpack.c.l.b16 %v4589
        %v7483 = vunpack.c.h.b16 %v4589
        %v7484 = vunpack.c.l.b16 %v4590
        %v7485 = vunpack.c.h.b16 %v4590
        %v7486 = vunpack.c.l.b16 %v4591
        %v7487 = vunpack.c.h.b16 %v4591
        %v7488 = vunpack.c.l.b16 %v4592
        %v7489 = vunpack.c.h.b16 %v4592
        %v7490 = vunpack.c.l.b16 %v4593
        %v7491 = vunpack.c.h.b16 %v4593
        %v7492 = vunpack.c.l.b16 %v4594
        %v7493 = vunpack.c.h.b16 %v4594
        %v7494 = vunpack.c.l.b16 %v4595
        %v7495 = vunpack.c.h.b16 %v4595
        %v7496 = vunpack.c.l.b16 %v4596
        %v7497 = vunpack.c.h.b16 %v4596
        %v7498 = vunpack.c.l.b16 %v4597
        %v7499 = vunpack.c.h.b16 %v4597
        %v7500 = vunpack.c.l.b16 %v4598
        %v7501 = vunpack.c.h.b16 %v4598
        %v7502 = vunpack.c.l.b16 %v4599
        %v7503 = vunpack.c.h.b16 %v4599
        %v7504 = vunpack.c.l.b16 %v4600
        %v7505 = vunpack.c.h.b16 %v4600
        %v7506 = vunpack.c.l.b16 %v4601
        %v7507 = vunpack.c.h.b16 %v4601
        %v7508 = vunpack.c.l.b16 %v4602
        %v7509 = vunpack.c.h.b16 %v4602
        %v7510 = vunpack.c.l.b16 %v4603
        %v7511 = vunpack.c.h.b16 %v4603
        %v7512 = vunpack.c.l.b16 %v4604
        %v7513 = vunpack.c.h.b16 %v4604
        %v7514 = vunpack.c.l.b16 %v4605
        %v7515 = vunpack.c.h.b16 %v4605
        %v7516 = vunpack.c.l.b16 %v4606
        %v7517 = vunpack.c.h.b16 %v4606
        %v7518 = vunpack.c.l.b16 %v4607
        %v7519 = vunpack.c.h.b16 %v4607
        %v7520 = vunpack.c.l.b16 %v4608
        %v7521 = vunpack.c.h.b16 %v4608
        %v7522 = vunpack.c.l.b16 %v4609
        %v7523 = vunpack.c.h.b16 %v4609
        %v7524 = vunpack.c.l.b16 %v4610
        %v7525 = vunpack.c.h.b16 %v4610
        %v7526 = vunpack.c.l.b16 %v4611
        %v7527 = vunpack.c.h.b16 %v4611
        %v7528 = vunpack.c.l.b16 %v4612
        %v7529 = vunpack.c.h.b16 %v4612
        %v7530 = vunpack.c.l.b16 %v4613
        %v7531 = vunpack.c.h.b16 %v4613
        %v7532 = vunpack.c.l.b16 %v4614
        %v7533 = vunpack.c.h.b16 %v4614
        %v7534 = vunpack.c.l.b16 %v4615
        %v7535 = vunpack.c.h.b16 %v4615
        %v7536 = vunpack.c.l.b16 %v4616
        %v7537 = vunpack.c.h.b16 %v4616
        %v7538 = vunpack.c.l.b16 %v4617
        %v7539 = vunpack.c.h.b16 %v4617
        %v7540 = vunpack.c.l.b16 %v4618
        %v7541 = vunpack.c.h.b16 %v4618
        %v7542 = vunpack.c.l.b16 %v4619
        %v7543 = vunpack.c.h.b16 %v4619
        %v7544 = vunpack.c.l.b16 %v4620
        %v7545 = vunpack.c.h.b16 %v4620
        %v7546 = vunpack.c.l.b16 %v4621
        %v7547 = vunpack.c.h.b16 %v4621
        %v7548 = vunpack.c.l.b16 %v4622
        %v7549 = vunpack.c.h.b16 %v4622
        %v7550 = vunpack.c.l.b16 %v4623
        %v7551 = vunpack.c.h.b16 %v4623
        %v7552 = vunpack.c.l.b16 %v4624
        %v7553 = vunpack.c.h.b16 %v4624
        %v7554 = vunpack.c.l.b16 %v4625
        %v7555 = vunpack.c.h.b16 %v4625
        %v7556 = vunpack.c.l.b16 %v4626
        %v7557 = vunpack.c.h.b16 %v4626
        %v7558 = vunpack.c.l.b16 %v4627
        %v7559 = vunpack.c.h.b16 %v4627
        %v7560 = vunpack.c.l.b16 %v4628
        %v7561 = vunpack.c.h.b16 %v4628
        %v7562 = vunpack.c.l.b16 %v4629
        %v7563 = vunpack.c.h.b16 %v4629
        %v7564 = vunpack.c.l.b16 %v4630
        %v7565 = vunpack.c.h.b16 %v4630
        %v7566 = vunpack.c.l.b16 %v4631
        %v7567 = vunpack.c.h.b16 %v4631
        %v7568 = vunpack.c.l.b16 %v4632
        %v7569 = vunpack.c.h.b16 %v4632
        %v7570 = vunpack.c.l.b16 %v4633
        %v7571 = vunpack.c.h.b16 %v4633
        %v7572 = vunpack.c.l.b16 %v4634
        %v7573 = vunpack.c.h.b16 %v4634
        %v7574 = vunpack.c.l.b16 %v4635
        %v7575 = vunpack.c.h.b16 %v4635
        %v7576 = vunpack.c.l.b16 %v4636
        %v7577 = vunpack.c.h.b16 %v4636
        %v7578 = vunpack.c.l.b16 %v4637
        %v7579 = vunpack.c.h.b16 %v4637
        %v7580 = vunpack.c.l.b16 %v4638
        %v7581 = vunpack.c.h.b16 %v4638
        %v7582 = vunpack.c.l.b16 %v4639
        %v7583 = vunpack.c.h.b16 %v4639
        %v7584 = vunpack.c.l.b16 %v4640
        %v7585 = vunpack.c.h.b16 %v4640
        %v7586 = vunpack.c.l.b16 %v4641
        %v7587 = vunpack.c.h.b16 %v4641
        %v7588 = vunpack.c.l.b16 %v4642
        %v7589 = vunpack.c.h.b16 %v4642
        %v7590 = vunpack.c.l.b16 %v4643
        %v7591 = vunpack.c.h.b16 %v4643
        %v7592 = vunpack.c.l.b16 %v4644
        %v7593 = vunpack.c.h.b16 %v4644
        %v7594 = vunpack.c.l.b16 %v4645
        %v7595 = vunpack.c.h.b16 %v4645
        %v7596 = vunpack.c.l.b16 %v4646
        %v7597 = vunpack.c.h.b16 %v4646
        %v7598 = vunpack.c.l.b16 %v4647
        %v7599 = vunpack.c.h.b16 %v4647
        %v7600 = vunpack.c.l.b16 %v4648
        %v7601 = vunpack.c.h.b16 %v4648
        %v7602 = vunpack.c.l.b16 %v4649
        %v7603 = vunpack.c.h.b16 %v4649
        %v7604 = vunpack.c.l.b16 %v4650
        %v7605 = vunpack.c.h.b16 %v4650
        %v7606 = vunpack.c.l.b16 %v4651
        %v7607 = vunpack.c.h.b16 %v4651
        %v7608 = vunpack.c.l.b16 %v4652
        %v7609 = vunpack.c.h.b16 %v4652
        %v7610 = vunpack.c.l.b16 %v4653
        %v7611 = vunpack.c.h.b16 %v4653
        %v7612 = vunpack.c.l.b16 %v4654
        %v7613 = vunpack.c.h.b16 %v4654
        %v7614 = vunpack.c.l.b16 %v4655
        %v7615 = vunpack.c.h.b16 %v4655
        %v7616 = vunpack.c.l.b16 %v4656
        %v7617 = vunpack.c.h.b16 %v4656
        %v7618 = vunpack.c.l.b16 %v4657
        %v7619 = vunpack.c.h.b16 %v4657
        %v7620 = vunpack.c.l.b16 %v4658
        %v7621 = vunpack.c.h.b16 %v4658
        %v7622 = vunpack.c.l.b16 %v4659
        %v7623 = vunpack.c.h.b16 %v4659
        %v7624 = vunpack.c.l.b16 %v4660
        %v7625 = vunpack.c.h.b16 %v4660
        %v7626 = vunpack.c.l.b16 %v4661
        %v7627 = vunpack.c.h.b16 %v4661
        %v7628 = vunpack.c.l.b16 %v4662
        %v7629 = vunpack.c.h.b16 %v4662
        %v7630 = vunpack.c.l.b16 %v4663
        %v7631 = vunpack.c.h.b16 %v4663
        %v7632 = vunpack.c.l.b16 %v4664
        %v7633 = vunpack.c.h.b16 %v4664
        %v7634 = vunpack.c.l.b16 %v4665
        %v7635 = vunpack.c.h.b16 %v4665
        %v7636 = vunpack.c.l.b16 %v4666
        %v7637 = vunpack.c.h.b16 %v4666
        %v7638 = vunpack.c.l.b16 %v4667
        %v7639 = vunpack.c.h.b16 %v4667
        %v7640 = vunpack.c.l.b16 %v4668
        %v7641 = vunpack.c.h.b16 %v4668
        %v7642 = vunpack.c.l.b16 %v4669
        %v7643 = vunpack.c.h.b16 %v4669
        %v7644 = vunpack.c.l.b16 %v4670
        %v7645 = vunpack.c.h.b16 %v4670
        %v7646 = vunpack.c.l.b16 %v4671
        %v7647 = vunpack.c.h.b16 %v4671
        %v7648 = vunpack.c.l.b16 %v4672
        %v7649 = vunpack.c.h.b16 %v4672
        %v7650 = vunpack.c.l.b16 %v4673
        %v7651 = vunpack.c.h.b16 %v4673
        %v7652 = vunpack.c.l.b16 %v4674
        %v7653 = vunpack.c.h.b16 %v4674
        %v7654 = vunpack.c.l.b16 %v4675
        %v7655 = vunpack.c.h.b16 %v4675
        %v7656 = vunpack.c.l.b16 %v4676
        %v7657 = vunpack.c.h.b16 %v4676
        %v7658 = vunpack.c.l.b16 %v4677
        %v7659 = vunpack.c.h.b16 %v4677
        %v7660 = vunpack.c.l.b16 %v4678
        %v7661 = vunpack.c.h.b16 %v4678
        %v7662 = vunpack.c.l.b16 %v4679
        %v7663 = vunpack.c.h.b16 %v4679
        %v7664 = vunpack.c.l.b16 %v4680
        %v7665 = vunpack.c.h.b16 %v4680
        %v7666 = vunpack.c.l.b16 %v4681
        %v7667 = vunpack.c.h.b16 %v4681
        %v7668 = vunpack.c.l.b16 %v4682
        %v7669 = vunpack.c.h.b16 %v4682
        %v7670 = vunpack.c.l.b16 %v4683
        %v7671 = vunpack.c.h.b16 %v4683
        %v7672 = vunpack.c.l.b16 %v4684
        %v7673 = vunpack.c.h.b16 %v4684
        %v7674 = vunpack.c.l.b16 %v4685
        %v7675 = vunpack.c.h.b16 %v4685
        %v7676 = vunpack.c.l.b16 %v4686
        %v7677 = vunpack.c.h.b16 %v4686
        %v7678 = vunpack.c.l.b16 %v4687
        %v7679 = vunpack.c.h.b16 %v4687
        %v7680 = vunpack.c.l.b16 %v4688
        %v7681 = vunpack.c.h.b16 %v4688
        %v7682 = vunpack.c.l.b16 %v4689
        %v7683 = vunpack.c.h.b16 %v4689
        %v7684 = vunpack.c.l.b16 %v4690
        %v7685 = vunpack.c.h.b16 %v4690
        %v7686 = vunpack.c.l.b16 %v4691
        %v7687 = vunpack.c.h.b16 %v4691
        %v7688 = vunpack.c.l.b16 %v4692
        %v7689 = vunpack.c.h.b16 %v4692
        %v7690 = vunpack.c.l.b16 %v4693
        %v7691 = vunpack.c.h.b16 %v4693
        %v7692 = vunpack.c.l.b16 %v4694
        %v7693 = vunpack.c.h.b16 %v4694
        %v7694 = vunpack.c.l.b16 %v4695
        %v7695 = vunpack.c.h.b16 %v4695
        %v7696 = vunpack.c.l.b16 %v4696
        %v7697 = vunpack.c.h.b16 %v4696
        %v7698 = vunpack.c.l.b16 %v4697
        %v7699 = vunpack.c.h.b16 %v4697
        %v7700 = vunpack.c.l.b16 %v4698
        %v7701 = vunpack.c.h.b16 %v4698
        %v7702 = vunpack.c.l.b16 %v4699
        %v7703 = vunpack.c.h.b16 %v4699
        %v7704 = vunpack.c.l.b16 %v4700
        %v7705 = vunpack.c.h.b16 %v4700
        %v7706 = vunpack.c.l.b16 %v4701
        %v7707 = vunpack.c.h.b16 %v4701
        %v7708 = vunpack.c.l.b16 %v4702
        %v7709 = vunpack.c.h.b16 %v4702
        %v7710 = vunpack.c.l.b16 %v4703
        %v7711 = vunpack.c.h.b16 %v4703
        %v7712 = vunpack.c.l.b16 %v4704
        %v7713 = vunpack.c.h.b16 %v4704
        %v7714 = vunpack.c.l.b16 %v4705
        %v7715 = vunpack.c.h.b16 %v4705
        %v7716 = vunpack.c.l.b16 %v4706
        %v7717 = vunpack.c.h.b16 %v4706
        %v7718 = vunpack.c.l.b16 %v4707
        %v7719 = vunpack.c.h.b16 %v4707
        %v7720 = vunpack.c.l.b16 %v4708
        %v7721 = vunpack.c.h.b16 %v4708
        %v7722 = vunpack.c.l.b16 %v4709
        %v7723 = vunpack.c.h.b16 %v4709
        %v7724 = vunpack.c.l.b16 %v4710
        %v7725 = vunpack.c.h.b16 %v4710
        %v7726 = vunpack.c.l.b16 %v4711
        %v7727 = vunpack.c.h.b16 %v4711
        %v7728 = vunpack.c.l.b16 %v4712
        %v7729 = vunpack.c.h.b16 %v4712
        %v7730 = vunpack.c.l.b16 %v4713
        %v7731 = vunpack.c.h.b16 %v4713
        %v7732 = vunpack.c.l.b16 %v4714
        %v7733 = vunpack.c.h.b16 %v4714
        %v7734 = vunpack.c.l.b16 %v4715
        %v7735 = vunpack.c.h.b16 %v4715
        %v7736 = vunpack.c.l.b16 %v4716
        %v7737 = vunpack.c.h.b16 %v4716
        %v7738 = vunpack.c.l.b16 %v4717
        %v7739 = vunpack.c.h.b16 %v4717
        %v7740 = vunpack.c.l.b16 %v4718
        %v7741 = vunpack.c.h.b16 %v4718
        %v7742 = vunpack.c.l.b16 %v4719
        %v7743 = vunpack.c.h.b16 %v4719
        %v7744 = vunpack.c.l.b16 %v4720
        %v7745 = vunpack.c.h.b16 %v4720
        %v7746 = vunpack.c.l.b16 %v4721
        %v7747 = vunpack.c.h.b16 %v4721
        %v7748 = vunpack.c.l.b16 %v4722
        %v7749 = vunpack.c.h.b16 %v4722
        %v7750 = vunpack.c.l.b16 %v4723
        %v7751 = vunpack.c.h.b16 %v4723
        %v7752 = vunpack.c.l.b16 %v4724
        %v7753 = vunpack.c.h.b16 %v4724
        %v7754 = vunpack.c.l.b16 %v4725
        %v7755 = vunpack.c.h.b16 %v4725
        %v7756 = vunpack.c.l.b16 %v4726
        %v7757 = vunpack.c.h.b16 %v4726
        %v7758 = vunpack.c.l.b16 %v4727
        %v7759 = vunpack.c.h.b16 %v4727
        %v7760 = vunpack.c.l.b16 %v4728
        %v7761 = vunpack.c.h.b16 %v4728
        %v7762 = vunpack.c.l.b16 %v4729
        %v7763 = vunpack.c.h.b16 %v4729
        %v7764 = vunpack.c.l.b16 %v4730
        %v7765 = vunpack.c.h.b16 %v4730
        %v7766 = vunpack.c.l.b16 %v4731
        %v7767 = vunpack.c.h.b16 %v4731
        %v7768 = vunpack.c.l.b16 %v4732
        %v7769 = vunpack.c.h.b16 %v4732
        %v7770 = vunpack.c.l.b16 %v4733
        %v7771 = vunpack.c.h.b16 %v4733
        %v7772 = vunpack.c.l.b16 %v4734
        %v7773 = vunpack.c.h.b16 %v4734
        %v7774 = vunpack.c.l.b16 %v4735
        %v7775 = vunpack.c.h.b16 %v4735
        %v7776 = vunpack.c.l.b16 %v4736
        %v7777 = vunpack.c.h.b16 %v4736
        %v7778 = vunpack.c.l.b16 %v4737
        %v7779 = vunpack.c.h.b16 %v4737
        %v7780 = vunpack.c.l.b16 %v4738
        %v7781 = vunpack.c.h.b16 %v4738
        %v7782 = vunpack.c.l.b16 %v4739
        %v7783 = vunpack.c.h.b16 %v4739
        %v7784 = vunpack.c.l.b16 %v4740
        %v7785 = vunpack.c.h.b16 %v4740
        %v7786 = vunpack.c.l.b16 %v4741
        %v7787 = vunpack.c.h.b16 %v4741
        %v7788 = vunpack.c.l.b16 %v4742
        %v7789 = vunpack.c.h.b16 %v4742
        %v7790 = vunpack.c.l.b16 %v4743
        %v7791 = vunpack.c.h.b16 %v4743
        %v7792 = vunpack.c.l.b16 %v4744
        %v7793 = vunpack.c.h.b16 %v4744
        %v7794 = vunpack.c.l.b16 %v4745
        %v7795 = vunpack.c.h.b16 %v4745
        %v7796 = vunpack.c.l.b16 %v4746
        %v7797 = vunpack.c.h.b16 %v4746
        %v7798 = vunpack.c.l.b16 %v4747
        %v7799 = vunpack.c.h.b16 %v4747
        %v7800 = vunpack.c.l.b16 %v4748
        %v7801 = vunpack.c.h.b16 %v4748
        %v7802 = vunpack.c.l.b16 %v4749
        %v7803 = vunpack.c.h.b16 %v4749
        %v7804 = vunpack.c.l.b16 %v4750
        %v7805 = vunpack.c.h.b16 %v4750
        %v7806 = vunpack.c.l.b16 %v4751
        %v7807 = vunpack.c.h.b16 %v4751
        %v7808 = vunpack.c.l.b16 %v4752
        %v7809 = vunpack.c.h.b16 %v4752
        %v7810 = vunpack.c.l.b16 %v4753
        %v7811 = vunpack.c.h.b16 %v4753
        %v7812 = vunpack.c.l.b16 %v4754
        %v7813 = vunpack.c.h.b16 %v4754
        %v7814 = vunpack.c.l.b16 %v4755
        %v7815 = vunpack.c.h.b16 %v4755
        %v7816 = vunpack.c.l.b16 %v4756
        %v7817 = vunpack.c.h.b16 %v4756
        %v7818 = vunpack.c.l.b16 %v4757
        %v7819 = vunpack.c.h.b16 %v4757
        %v7820 = vunpack.c.l.b16 %v4758
        %v7821 = vunpack.c.h.b16 %v4758
        %v7822 = vunpack.c.l.b16 %v4759
        %v7823 = vunpack.c.h.b16 %v4759
        %v7824 = vunpack.c.l.b16 %v4760
        %v7825 = vunpack.c.h.b16 %v4760
        %v7826 = vunpack.c.l.b16 %v4761
        %v7827 = vunpack.c.h.b16 %v4761
        %v7828 = vunpack.c.l.b16 %v4762
        %v7829 = vunpack.c.h.b16 %v4762
        %v7830 = vunpack.c.l.b16 %v4763
        %v7831 = vunpack.c.h.b16 %v4763
        %v7832 = vunpack.c.l.b16 %v4764
        %v7833 = vunpack.c.h.b16 %v4764
        %v7834 = vunpack.c.l.b16 %v4765
        %v7835 = vunpack.c.h.b16 %v4765
        %v7836 = vunpack.c.l.b16 %v4766
        %v7837 = vunpack.c.h.b16 %v4766
        %v7838 = vunpack.c.l.b16 %v4767
        %v7839 = vunpack.c.h.b16 %v4767
        %v7840 = vunpack.c.l.b16 %v4768
        %v7841 = vunpack.c.h.b16 %v4768
        %v7842 = vunpack.c.l.b16 %v4769
        %v7843 = vunpack.c.h.b16 %v4769
        %v7844 = vunpack.c.l.b16 %v4770
        %v7845 = vunpack.c.h.b16 %v4770
        %v7846 = vunpack.c.l.b16 %v4771
        %v7847 = vunpack.c.h.b16 %v4771
        %v7848 = vunpack.c.l.b16 %v4772
        %v7849 = vunpack.c.h.b16 %v4772
        %v7850 = vunpack.c.l.b16 %v4773
        %v7851 = vunpack.c.h.b16 %v4773
        %v7852 = vunpack.c.l.b16 %v4774
        %v7853 = vunpack.c.h.b16 %v4774
        %v7854 = vunpack.c.l.b16 %v4775
        %v7855 = vunpack.c.h.b16 %v4775
        %v7856 = vunpack.c.l.b16 %v4776
        %v7857 = vunpack.c.h.b16 %v4776
        %v7858 = vunpack.c.l.b16 %v4777
        %v7859 = vunpack.c.h.b16 %v4777
        %v7860 = vunpack.c.l.b16 %v4778
        %v7861 = vunpack.c.h.b16 %v4778
        %v7862 = vunpack.c.l.b16 %v4779
        %v7863 = vunpack.c.h.b16 %v4779
        %v7864 = vunpack.c.l.b16 %v4780
        %v7865 = vunpack.c.h.b16 %v4780
        %v7866 = vunpack.c.l.b16 %v4781
        %v7867 = vunpack.c.h.b16 %v4781
        %v7868 = vunpack.c.l.b16 %v4782
        %v7869 = vunpack.c.h.b16 %v4782
        %v7870 = vunpack.c.l.b16 %v4783
        %v7871 = vunpack.c.h.b16 %v4783
        %v7872 = vunpack.c.l.b16 %v4784
        %v7873 = vunpack.c.h.b16 %v4784
        %v7874 = vunpack.c.l.b16 %v4785
        %v7875 = vunpack.c.h.b16 %v4785
        %v7876 = vunpack.c.l.b16 %v4786
        %v7877 = vunpack.c.h.b16 %v4786
        %v7878 = vunpack.c.l.b16 %v4787
        %v7879 = vunpack.c.h.b16 %v4787
        %v7880 = vunpack.c.l.b16 %v4788
        %v7881 = vunpack.c.h.b16 %v4788
        %v7882 = vunpack.c.l.b16 %v4789
        %v7883 = vunpack.c.h.b16 %v4789
        %v7884 = vunpack.c.l.b16 %v4790
        %v7885 = vunpack.c.h.b16 %v4790
        %v7886 = vunpack.c.l.b16 %v4791
        %v7887 = vunpack.c.h.b16 %v4791
        %v7888 = vunpack.c.l.b16 %v4792
        %v7889 = vunpack.c.h.b16 %v4792
        %v7890 = vunpack.c.l.b16 %v4793
        %v7891 = vunpack.c.h.b16 %v4793
        %v7892 = vunpack.c.l.b16 %v4794
        %v7893 = vunpack.c.h.b16 %v4794
        %v7894 = vunpack.c.l.b16 %v4795
        %v7895 = vunpack.c.h.b16 %v4795
        %v7896 = vunpack.c.l.b16 %v4796
        %v7897 = vunpack.c.h.b16 %v4796
        %v7898 = vunpack.c.l.b16 %v4797
        %v7899 = vunpack.c.h.b16 %v4797
        %v7900 = vunpack.c.l.b16 %v4798
        %v7901 = vunpack.c.h.b16 %v4798
        %v7902 = vunpack.c.l.b16 %v4799
        %v7903 = vunpack.c.h.b16 %v4799
        %v7904 = vunpack.c.l.b16 %v4800
        %v7905 = vunpack.c.h.b16 %v4800
        %v7906 = vunpack.c.l.b16 %v4801
        %v7907 = vunpack.c.h.b16 %v4801
        %v7908 = vunpack.c.l.b16 %v4802
        %v7909 = vunpack.c.h.b16 %v4802
        %v7910 = vunpack.c.l.b16 %v4803
        %v7911 = vunpack.c.h.b16 %v4803
        %v7912 = vpack.c.b16 %v5880, %v5864
        %v7913 = vpack.c.b16 %v5881, %v5865
        %v7914 = vpack.c.b16 %v5882, %v5866
        %v7915 = vpack.c.b16 %v5883, %v5867
        %v7916 = vpack.c.b16 %v5884, %v5868
        %v7917 = vpack.c.b16 %v5885, %v5869
        %v7918 = vpack.c.b16 %v5886, %v5870
        %v7919 = vpack.c.b16 %v5887, %v5871
        %v7920 = vpack.c.b16 %v5888, %v5872
        %v7921 = vpack.c.b16 %v5889, %v5873
        %v7922 = vpack.c.b16 %v5890, %v5874
        %v7923 = vpack.c.b16 %v5891, %v5875
        %v7924 = vpack.c.b16 %v5892, %v5876
        %v7925 = vpack.c.b16 %v5893, %v5877
        %v7926 = vpack.c.b16 %v5894, %v5878
        %v7927 = vpack.c.b16 %v5895, %v5879
        %v7928 = vpack.c.b16 %v5912, %v5896
        %v7929 = vpack.c.b16 %v5913, %v5897
        %v7930 = vpack.c.b16 %v5914, %v5898
        %v7931 = vpack.c.b16 %v5915, %v5899
        %v7932 = vpack.c.b16 %v5916, %v5900
        %v7933 = vpack.c.b16 %v5917, %v5901
        %v7934 = vpack.c.b16 %v5918, %v5902
        %v7935 = vpack.c.b16 %v5919, %v5903
        %v7936 = vpack.c.b16 %v5920, %v5904
        %v7937 = vpack.c.b16 %v5921, %v5905
        %v7938 = vpack.c.b16 %v5922, %v5906
        %v7939 = vpack.c.b16 %v5923, %v5907
        %v7940 = vpack.c.b16 %v5924, %v5908
        %v7941 = vpack.c.b16 %v5925, %v5909
        %v7942 = vpack.c.b16 %v5926, %v5910
        %v7943 = vpack.c.b16 %v5927, %v5911
        %v7944 = vpack.c.b16 %v5944, %v5928
        %v7945 = vpack.c.b16 %v5945, %v5929
        %v7946 = vpack.c.b16 %v5946, %v5930
        %v7947 = vpack.c.b16 %v5947, %v5931
        %v7948 = vpack.c.b16 %v5948, %v5932
        %v7949 = vpack.c.b16 %v5949, %v5933
        %v7950 = vpack.c.b16 %v5950, %v5934
        %v7951 = vpack.c.b16 %v5951, %v5935
        %v7952 = vpack.c.b16 %v5952, %v5936
        %v7953 = vpack.c.b16 %v5953, %v5937
        %v7954 = vpack.c.b16 %v5954, %v5938
        %v7955 = vpack.c.b16 %v5955, %v5939
        %v7956 = vpack.c.b16 %v5956, %v5940
        %v7957 = vpack.c.b16 %v5957, %v5941
        %v7958 = vpack.c.b16 %v5958, %v5942
        %v7959 = vpack.c.b16 %v5959, %v5943
        %v7960 = vpack.c.b16 %v5976, %v5960
        %v7961 = vpack.c.b16 %v5977, %v5961
        %v7962 = vpack.c.b16 %v5978, %v5962
        %v7963 = vpack.c.b16 %v5979, %v5963
        %v7964 = vpack.c.b16 %v5980, %v5964
        %v7965 = vpack.c.b16 %v5981, %v5965
        %v7966 = vpack.c.b16 %v5982, %v5966
        %v7967 = vpack.c.b16 %v5983, %v5967
        %v7968 = vpack.c.b16 %v5984, %v5968
        %v7969 = vpack.c.b16 %v5985, %v5969
        %v7970 = vpack.c.b16 %v5986, %v5970
        %v7971 = vpack.c.b16 %v5987, %v5971
        %v7972 = vpack.c.b16 %v5988, %v5972
        %v7973 = vpack.c.b16 %v5989, %v5973
        %v7974 = vpack.c.b16 %v5990, %v5974
        %v7975 = vpack.c.b16 %v5991, %v5975
        %v7976 = vpack.c.b16 %v6008, %v5992
        %v7977 = vpack.c.b16 %v6009, %v5993
        %v7978 = vpack.c.b16 %v6010, %v5994
        %v7979 = vpack.c.b16 %v6011, %v5995
        %v7980 = vpack.c.b16 %v6012, %v5996
        %v7981 = vpack.c.b16 %v6013, %v5997
        %v7982 = vpack.c.b16 %v6014, %v5998
        %v7983 = vpack.c.b16 %v6015, %v5999
        %v7984 = vpack.c.b16 %v6016, %v6000
        %v7985 = vpack.c.b16 %v6017, %v6001
        %v7986 = vpack.c.b16 %v6018, %v6002
        %v7987 = vpack.c.b16 %v6019, %v6003
        %v7988 = vpack.c.b16 %v6020, %v6004
        %v7989 = vpack.c.b16 %v6021, %v6005
        %v7990 = vpack.c.b16 %v6022, %v6006
        %v7991 = vpack.c.b16 %v6023, %v6007
        %v7992 = vpack.c.b16 %v6040, %v6024
        %v7993 = vpack.c.b16 %v6041, %v6025
        %v7994 = vpack.c.b16 %v6042, %v6026
        %v7995 = vpack.c.b16 %v6043, %v6027
        %v7996 = vpack.c.b16 %v6044, %v6028
        %v7997 = vpack.c.b16 %v6045, %v6029
        %v7998 = vpack.c.b16 %v6046, %v6030
        %v7999 = vpack.c.b16 %v6047, %v6031
        %v8000 = vpack.c.b16 %v6048, %v6032
        %v8001 = vpack.c.b16 %v6049, %v6033
        %v8002 = vpack.c.b16 %v6050, %v6034
        %v8003 = vpack.c.b16 %v6051, %v6035
        %v8004 = vpack.c.b16 %v6052, %v6036
        %v8005 = vpack.c.b16 %v6053, %v6037
        %v8006 = vpack.c.b16 %v6054, %v6038
        %v8007 = vpack.c.b16 %v6055, %v6039
        %v8008 = vpack.c.b16 %v6072, %v6056
        %v8009 = vpack.c.b16 %v6073, %v6057
        %v8010 = vpack.c.b16 %v6074, %v6058
        %v8011 = vpack.c.b16 %v6075, %v6059
        %v8012 = vpack.c.b16 %v6076, %v6060
        %v8013 = vpack.c.b16 %v6077, %v6061
        %v8014 = vpack.c.b16 %v6078, %v6062
        %v8015 = vpack.c.b16 %v6079, %v6063
        %v8016 = vpack.c.b16 %v6080, %v6064
        %v8017 = vpack.c.b16 %v6081, %v6065
        %v8018 = vpack.c.b16 %v6082, %v6066
        %v8019 = vpack.c.b16 %v6083, %v6067
        %v8020 = vpack.c.b16 %v6084, %v6068
        %v8021 = vpack.c.b16 %v6085, %v6069
        %v8022 = vpack.c.b16 %v6086, %v6070
        %v8023 = vpack.c.b16 %v6087, %v6071
        %v8024 = vpack.c.b16 %v6104, %v6088
        %v8025 = vpack.c.b16 %v6105, %v6089
        %v8026 = vpack.c.b16 %v6106, %v6090
        %v8027 = vpack.c.b16 %v6107, %v6091
        %v8028 = vpack.c.b16 %v6108, %v6092
        %v8029 = vpack.c.b16 %v6109, %v6093
        %v8030 = vpack.c.b16 %v6110, %v6094
        %v8031 = vpack.c.b16 %v6111, %v6095
        %v8032 = vpack.c.b16 %v6112, %v6096
        %v8033 = vpack.c.b16 %v6113, %v6097
        %v8034 = vpack.c.b16 %v6114, %v6098
        %v8035 = vpack.c.b16 %v6115, %v6099
        %v8036 = vpack.c.b16 %v6116, %v6100
        %v8037 = vpack.c.b16 %v6117, %v6101
        %v8038 = vpack.c.b16 %v6118, %v6102
        %v8039 = vpack.c.b16 %v6119, %v6103
        %v8040 = vpack.c.b16 %v6136, %v6120
        %v8041 = vpack.c.b16 %v6137, %v6121
        %v8042 = vpack.c.b16 %v6138, %v6122
        %v8043 = vpack.c.b16 %v6139, %v6123
        %v8044 = vpack.c.b16 %v6140, %v6124
        %v8045 = vpack.c.b16 %v6141, %v6125
        %v8046 = vpack.c.b16 %v6142, %v6126
        %v8047 = vpack.c.b16 %v6143, %v6127
        %v8048 = vpack.c.b16 %v6144, %v6128
        %v8049 = vpack.c.b16 %v6145, %v6129
        %v8050 = vpack.c.b16 %v6146, %v6130
        %v8051 = vpack.c.b16 %v6147, %v6131
        %v8052 = vpack.c.b16 %v6148, %v6132
        %v8053 = vpack.c.b16 %v6149, %v6133
        %v8054 = vpack.c.b16 %v6150, %v6134
        %v8055 = vpack.c.b16 %v6151, %v6135
        %v8056 = vpack.c.b16 %v6168, %v6152
        %v8057 = vpack.c.b16 %v6169, %v6153
        %v8058 = vpack.c.b16 %v6170, %v6154
        %v8059 = vpack.c.b16 %v6171, %v6155
        %v8060 = vpack.c.b16 %v6172, %v6156
        %v8061 = vpack.c.b16 %v6173, %v6157
        %v8062 = vpack.c.b16 %v6174, %v6158
        %v8063 = vpack.c.b16 %v6175, %v6159
        %v8064 = vpack.c.b16 %v6176, %v6160
        %v8065 = vpack.c.b16 %v6177, %v6161
        %v8066 = vpack.c.b16 %v6178, %v6162
        %v8067 = vpack.c.b16 %v6179, %v6163
        %v8068 = vpack.c.b16 %v6180, %v6164
        %v8069 = vpack.c.b16 %v6181, %v6165
        %v8070 = vpack.c.b16 %v6182, %v6166
        %v8071 = vpack.c.b16 %v6183, %v6167
        %v8072 = vpack.c.b16 %v6200, %v6184
        %v8073 = vpack.c.b16 %v6201, %v6185
        %v8074 = vpack.c.b16 %v6202, %v6186
        %v8075 = vpack.c.b16 %v6203, %v6187
        %v8076 = vpack.c.b16 %v6204, %v6188
        %v8077 = vpack.c.b16 %v6205, %v6189
        %v8078 = vpack.c.b16 %v6206, %v6190
        %v8079 = vpack.c.b16 %v6207, %v6191
        %v8080 = vpack.c.b16 %v6208, %v6192
        %v8081 = vpack.c.b16 %v6209, %v6193
        %v8082 = vpack.c.b16 %v6210, %v6194
        %v8083 = vpack.c.b16 %v6211, %v6195
        %v8084 = vpack.c.b16 %v6212, %v6196
        %v8085 = vpack.c.b16 %v6213, %v6197
        %v8086 = vpack.c.b16 %v6214, %v6198
        %v8087 = vpack.c.b16 %v6215, %v6199
        %v8088 = vpack.c.b16 %v6232, %v6216
        %v8089 = vpack.c.b16 %v6233, %v6217
        %v8090 = vpack.c.b16 %v6234, %v6218
        %v8091 = vpack.c.b16 %v6235, %v6219
        %v8092 = vpack.c.b16 %v6236, %v6220
        %v8093 = vpack.c.b16 %v6237, %v6221
        %v8094 = vpack.c.b16 %v6238, %v6222
        %v8095 = vpack.c.b16 %v6239, %v6223
        %v8096 = vpack.c.b16 %v6240, %v6224
        %v8097 = vpack.c.b16 %v6241, %v6225
        %v8098 = vpack.c.b16 %v6242, %v6226
        %v8099 = vpack.c.b16 %v6243, %v6227
        %v8100 = vpack.c.b16 %v6244, %v6228
        %v8101 = vpack.c.b16 %v6245, %v6229
        %v8102 = vpack.c.b16 %v6246, %v6230
        %v8103 = vpack.c.b16 %v6247, %v6231
        %v8104 = vpack.c.b16 %v6264, %v6248
        %v8105 = vpack.c.b16 %v6265, %v6249
        %v8106 = vpack.c.b16 %v6266, %v6250
        %v8107 = vpack.c.b16 %v6267, %v6251
        %v8108 = vpack.c.b16 %v6268, %v6252
        %v8109 = vpack.c.b16 %v6269, %v6253
        %v8110 = vpack.c.b16 %v6270, %v6254
        %v8111 = vpack.c.b16 %v6271, %v6255
        %v8112 = vpack.c.b16 %v6272, %v6256
        %v8113 = vpack.c.b16 %v6273, %v6257
        %v8114 = vpack.c.b16 %v6274, %v6258
        %v8115 = vpack.c.b16 %v6275, %v6259
        %v8116 = vpack.c.b16 %v6276, %v6260
        %v8117 = vpack.c.b16 %v6277, %v6261
        %v8118 = vpack.c.b16 %v6278, %v6262
        %v8119 = vpack.c.b16 %v6279, %v6263
        %v8120 = vpack.c.b16 %v6296, %v6280
        %v8121 = vpack.c.b16 %v6297, %v6281
        %v8122 = vpack.c.b16 %v6298, %v6282
        %v8123 = vpack.c.b16 %v6299, %v6283
        %v8124 = vpack.c.b16 %v6300, %v6284
        %v8125 = vpack.c.b16 %v6301, %v6285
        %v8126 = vpack.c.b16 %v6302, %v6286
        %v8127 = vpack.c.b16 %v6303, %v6287
        %v8128 = vpack.c.b16 %v6304, %v6288
        %v8129 = vpack.c.b16 %v6305, %v6289
        %v8130 = vpack.c.b16 %v6306, %v6290
        %v8131 = vpack.c.b16 %v6307, %v6291
        %v8132 = vpack.c.b16 %v6308, %v6292
        %v8133 = vpack.c.b16 %v6309, %v6293
        %v8134 = vpack.c.b16 %v6310, %v6294
        %v8135 = vpack.c.b16 %v6311, %v6295
        %v8136 = vpack.c.b16 %v6328, %v6312
        %v8137 = vpack.c.b16 %v6329, %v6313
        %v8138 = vpack.c.b16 %v6330, %v6314
        %v8139 = vpack.c.b16 %v6331, %v6315
        %v8140 = vpack.c.b16 %v6332, %v6316
        %v8141 = vpack.c.b16 %v6333, %v6317
        %v8142 = vpack.c.b16 %v6334, %v6318
        %v8143 = vpack.c.b16 %v6335, %v6319
        %v8144 = vpack.c.b16 %v6336, %v6320
        %v8145 = vpack.c.b16 %v6337, %v6321
        %v8146 = vpack.c.b16 %v6338, %v6322
        %v8147 = vpack.c.b16 %v6339, %v6323
        %v8148 = vpack.c.b16 %v6340, %v6324
        %v8149 = vpack.c.b16 %v6341, %v6325
        %v8150 = vpack.c.b16 %v6342, %v6326
        %v8151 = vpack.c.b16 %v6343, %v6327
        %v8152 = vpack.c.b16 %v6360, %v6344
        %v8153 = vpack.c.b16 %v6361, %v6345
        %v8154 = vpack.c.b16 %v6362, %v6346
        %v8155 = vpack.c.b16 %v6363, %v6347
        %v8156 = vpack.c.b16 %v6364, %v6348
        %v8157 = vpack.c.b16 %v6365, %v6349
        %v8158 = vpack.c.b16 %v6366, %v6350
        %v8159 = vpack.c.b16 %v6367, %v6351
        %v8160 = vpack.c.b16 %v6368, %v6352
        %v8161 = vpack.c.b16 %v6369, %v6353
        %v8162 = vpack.c.b16 %v6370, %v6354
        %v8163 = vpack.c.b16 %v6371, %v6355
        %v8164 = vpack.c.b16 %v6372, %v6356
        %v8165 = vpack.c.b16 %v6373, %v6357
        %v8166 = vpack.c.b16 %v6374, %v6358
        %v8167 = vpack.c.b16 %v6375, %v6359
        %v8168 = vpack.c.b16 %v6392, %v6376
        %v8169 = vpack.c.b16 %v6393, %v6377
        %v8170 = vpack.c.b16 %v6394, %v6378
        %v8171 = vpack.c.b16 %v6395, %v6379
        %v8172 = vpack.c.b16 %v6396, %v6380
        %v8173 = vpack.c.b16 %v6397, %v6381
        %v8174 = vpack.c.b16 %v6398, %v6382
        %v8175 = vpack.c.b16 %v6399, %v6383
        %v8176 = vpack.c.b16 %v6400, %v6384
        %v8177 = vpack.c.b16 %v6401, %v6385
        %v8178 = vpack.c.b16 %v6402, %v6386
        %v8179 = vpack.c.b16 %v6403, %v6387
        %v8180 = vpack.c.b16 %v6404, %v6388
        %v8181 = vpack.c.b16 %v6405, %v6389
        %v8182 = vpack.c.b16 %v6406, %v6390
        %v8183 = vpack.c.b16 %v6407, %v6391
        %v8184 = vpack.c.b16 %v6424, %v6408
        %v8185 = vpack.c.b16 %v6425, %v6409
        %v8186 = vpack.c.b16 %v6426, %v6410
        %v8187 = vpack.c.b16 %v6427, %v6411
        %v8188 = vpack.c.b16 %v6428, %v6412
        %v8189 = vpack.c.b16 %v6429, %v6413
        %v8190 = vpack.c.b16 %v6430, %v6414
        %v8191 = vpack.c.b16 %v6431, %v6415
        %v8192 = vpack.c.b16 %v6432, %v6416
        %v8193 = vpack.c.b16 %v6433, %v6417
        %v8194 = vpack.c.b16 %v6434, %v6418
        %v8195 = vpack.c.b16 %v6435, %v6419
        %v8196 = vpack.c.b16 %v6436, %v6420
        %v8197 = vpack.c.b16 %v6437, %v6421
        %v8198 = vpack.c.b16 %v6438, %v6422
        %v8199 = vpack.c.b16 %v6439, %v6423
        %v8200 = vpack.c.b16 %v6456, %v6440
        %v8201 = vpack.c.b16 %v6457, %v6441
        %v8202 = vpack.c.b16 %v6458, %v6442
        %v8203 = vpack.c.b16 %v6459, %v6443
        %v8204 = vpack.c.b16 %v6460, %v6444
        %v8205 = vpack.c.b16 %v6461, %v6445
        %v8206 = vpack.c.b16 %v6462, %v6446
        %v8207 = vpack.c.b16 %v6463, %v6447
        %v8208 = vpack.c.b16 %v6464, %v6448
        %v8209 = vpack.c.b16 %v6465, %v6449
        %v8210 = vpack.c.b16 %v6466, %v6450
        %v8211 = vpack.c.b16 %v6467, %v6451
        %v8212 = vpack.c.b16 %v6468, %v6452
        %v8213 = vpack.c.b16 %v6469, %v6453
        %v8214 = vpack.c.b16 %v6470, %v6454
        %v8215 = vpack.c.b16 %v6471, %v6455
        %v8216 = vpack.c.b16 %v6488, %v6472
        %v8217 = vpack.c.b16 %v6489, %v6473
        %v8218 = vpack.c.b16 %v6490, %v6474
        %v8219 = vpack.c.b16 %v6491, %v6475
        %v8220 = vpack.c.b16 %v6492, %v6476
        %v8221 = vpack.c.b16 %v6493, %v6477
        %v8222 = vpack.c.b16 %v6494, %v6478
        %v8223 = vpack.c.b16 %v6495, %v6479
        %v8224 = vpack.c.b16 %v6496, %v6480
        %v8225 = vpack.c.b16 %v6497, %v6481
        %v8226 = vpack.c.b16 %v6498, %v6482
        %v8227 = vpack.c.b16 %v6499, %v6483
        %v8228 = vpack.c.b16 %v6500, %v6484
        %v8229 = vpack.c.b16 %v6501, %v6485
        %v8230 = vpack.c.b16 %v6502, %v6486
        %v8231 = vpack.c.b16 %v6503, %v6487
        %v8232 = vpack.c.b16 %v6520, %v6504
        %v8233 = vpack.c.b16 %v6521, %v6505
        %v8234 = vpack.c.b16 %v6522, %v6506
        %v8235 = vpack.c.b16 %v6523, %v6507
        %v8236 = vpack.c.b16 %v6524, %v6508
        %v8237 = vpack.c.b16 %v6525, %v6509
        %v8238 = vpack.c.b16 %v6526, %v6510
        %v8239 = vpack.c.b16 %v6527, %v6511
        %v8240 = vpack.c.b16 %v6528, %v6512
        %v8241 = vpack.c.b16 %v6529, %v6513
        %v8242 = vpack.c.b16 %v6530, %v6514
        %v8243 = vpack.c.b16 %v6531, %v6515
        %v8244 = vpack.c.b16 %v6532, %v6516
        %v8245 = vpack.c.b16 %v6533, %v6517
        %v8246 = vpack.c.b16 %v6534, %v6518
        %v8247 = vpack.c.b16 %v6535, %v6519
        %v8248 = vpack.c.b16 %v6552, %v6536
        %v8249 = vpack.c.b16 %v6553, %v6537
        %v8250 = vpack.c.b16 %v6554, %v6538
        %v8251 = vpack.c.b16 %v6555, %v6539
        %v8252 = vpack.c.b16 %v6556, %v6540
        %v8253 = vpack.c.b16 %v6557, %v6541
        %v8254 = vpack.c.b16 %v6558, %v6542
        %v8255 = vpack.c.b16 %v6559, %v6543
        %v8256 = vpack.c.b16 %v6560, %v6544
        %v8257 = vpack.c.b16 %v6561, %v6545
        %v8258 = vpack.c.b16 %v6562, %v6546
        %v8259 = vpack.c.b16 %v6563, %v6547
        %v8260 = vpack.c.b16 %v6564, %v6548
        %v8261 = vpack.c.b16 %v6565, %v6549
        %v8262 = vpack.c.b16 %v6566, %v6550
        %v8263 = vpack.c.b16 %v6567, %v6551
        %v8264 = vpack.c.b16 %v6584, %v6568
        %v8265 = vpack.c.b16 %v6585, %v6569
        %v8266 = vpack.c.b16 %v6586, %v6570
        %v8267 = vpack.c.b16 %v6587, %v6571
        %v8268 = vpack.c.b16 %v6588, %v6572
        %v8269 = vpack.c.b16 %v6589, %v6573
        %v8270 = vpack.c.b16 %v6590, %v6574
        %v8271 = vpack.c.b16 %v6591, %v6575
        %v8272 = vpack.c.b16 %v6592, %v6576
        %v8273 = vpack.c.b16 %v6593, %v6577
        %v8274 = vpack.c.b16 %v6594, %v6578
        %v8275 = vpack.c.b16 %v6595, %v6579
        %v8276 = vpack.c.b16 %v6596, %v6580
        %v8277 = vpack.c.b16 %v6597, %v6581
        %v8278 = vpack.c.b16 %v6598, %v6582
        %v8279 = vpack.c.b16 %v6599, %v6583
        %v8280 = vpack.c.b16 %v6616, %v6600
        %v8281 = vpack.c.b16 %v6617, %v6601
        %v8282 = vpack.c.b16 %v6618, %v6602
        %v8283 = vpack.c.b16 %v6619, %v6603
        %v8284 = vpack.c.b16 %v6620, %v6604
        %v8285 = vpack.c.b16 %v6621, %v6605
        %v8286 = vpack.c.b16 %v6622, %v6606
        %v8287 = vpack.c.b16 %v6623, %v6607
        %v8288 = vpack.c.b16 %v6624, %v6608
        %v8289 = vpack.c.b16 %v6625, %v6609
        %v8290 = vpack.c.b16 %v6626, %v6610
        %v8291 = vpack.c.b16 %v6627, %v6611
        %v8292 = vpack.c.b16 %v6628, %v6612
        %v8293 = vpack.c.b16 %v6629, %v6613
        %v8294 = vpack.c.b16 %v6630, %v6614
        %v8295 = vpack.c.b16 %v6631, %v6615
        %v8296 = vpack.c.b16 %v6648, %v6632
        %v8297 = vpack.c.b16 %v6649, %v6633
        %v8298 = vpack.c.b16 %v6650, %v6634
        %v8299 = vpack.c.b16 %v6651, %v6635
        %v8300 = vpack.c.b16 %v6652, %v6636
        %v8301 = vpack.c.b16 %v6653, %v6637
        %v8302 = vpack.c.b16 %v6654, %v6638
        %v8303 = vpack.c.b16 %v6655, %v6639
        %v8304 = vpack.c.b16 %v6656, %v6640
        %v8305 = vpack.c.b16 %v6657, %v6641
        %v8306 = vpack.c.b16 %v6658, %v6642
        %v8307 = vpack.c.b16 %v6659, %v6643
        %v8308 = vpack.c.b16 %v6660, %v6644
        %v8309 = vpack.c.b16 %v6661, %v6645
        %v8310 = vpack.c.b16 %v6662, %v6646
        %v8311 = vpack.c.b16 %v6663, %v6647
        %v8312 = vpack.c.b16 %v6680, %v6664
        %v8313 = vpack.c.b16 %v6681, %v6665
        %v8314 = vpack.c.b16 %v6682, %v6666
        %v8315 = vpack.c.b16 %v6683, %v6667
        %v8316 = vpack.c.b16 %v6684, %v6668
        %v8317 = vpack.c.b16 %v6685, %v6669
        %v8318 = vpack.c.b16 %v6686, %v6670
        %v8319 = vpack.c.b16 %v6687, %v6671
        %v8320 = vpack.c.b16 %v6688, %v6672
        %v8321 = vpack.c.b16 %v6689, %v6673
        %v8322 = vpack.c.b16 %v6690, %v6674
        %v8323 = vpack.c.b16 %v6691, %v6675
        %v8324 = vpack.c.b16 %v6692, %v6676
        %v8325 = vpack.c.b16 %v6693, %v6677
        %v8326 = vpack.c.b16 %v6694, %v6678
        %v8327 = vpack.c.b16 %v6695, %v6679
        %v8328 = vpack.c.b16 %v6712, %v6696
        %v8329 = vpack.c.b16 %v6713, %v6697
        %v8330 = vpack.c.b16 %v6714, %v6698
        %v8331 = vpack.c.b16 %v6715, %v6699
        %v8332 = vpack.c.b16 %v6716, %v6700
        %v8333 = vpack.c.b16 %v6717, %v6701
        %v8334 = vpack.c.b16 %v6718, %v6702
        %v8335 = vpack.c.b16 %v6719, %v6703
        %v8336 = vpack.c.b16 %v6720, %v6704
        %v8337 = vpack.c.b16 %v6721, %v6705
        %v8338 = vpack.c.b16 %v6722, %v6706
        %v8339 = vpack.c.b16 %v6723, %v6707
        %v8340 = vpack.c.b16 %v6724, %v6708
        %v8341 = vpack.c.b16 %v6725, %v6709
        %v8342 = vpack.c.b16 %v6726, %v6710
        %v8343 = vpack.c.b16 %v6727, %v6711
        %v8344 = vpack.c.b16 %v6744, %v6728
        %v8345 = vpack.c.b16 %v6745, %v6729
        %v8346 = vpack.c.b16 %v6746, %v6730
        %v8347 = vpack.c.b16 %v6747, %v6731
        %v8348 = vpack.c.b16 %v6748, %v6732
        %v8349 = vpack.c.b16 %v6749, %v6733
        %v8350 = vpack.c.b16 %v6750, %v6734
        %v8351 = vpack.c.b16 %v6751, %v6735
        %v8352 = vpack.c.b16 %v6752, %v6736
        %v8353 = vpack.c.b16 %v6753, %v6737
        %v8354 = vpack.c.b16 %v6754, %v6738
        %v8355 = vpack.c.b16 %v6755, %v6739
        %v8356 = vpack.c.b16 %v6756, %v6740
        %v8357 = vpack.c.b16 %v6757, %v6741
        %v8358 = vpack.c.b16 %v6758, %v6742
        %v8359 = vpack.c.b16 %v6759, %v6743
        %v8360 = vpack.c.b16 %v6776, %v6760
        %v8361 = vpack.c.b16 %v6777, %v6761
        %v8362 = vpack.c.b16 %v6778, %v6762
        %v8363 = vpack.c.b16 %v6779, %v6763
        %v8364 = vpack.c.b16 %v6780, %v6764
        %v8365 = vpack.c.b16 %v6781, %v6765
        %v8366 = vpack.c.b16 %v6782, %v6766
        %v8367 = vpack.c.b16 %v6783, %v6767
        %v8368 = vpack.c.b16 %v6784, %v6768
        %v8369 = vpack.c.b16 %v6785, %v6769
        %v8370 = vpack.c.b16 %v6786, %v6770
        %v8371 = vpack.c.b16 %v6787, %v6771
        %v8372 = vpack.c.b16 %v6788, %v6772
        %v8373 = vpack.c.b16 %v6789, %v6773
        %v8374 = vpack.c.b16 %v6790, %v6774
        %v8375 = vpack.c.b16 %v6791, %v6775
        %v8376 = vpack.c.b16 %v6808, %v6792
        %v8377 = vpack.c.b16 %v6809, %v6793
        %v8378 = vpack.c.b16 %v6810, %v6794
        %v8379 = vpack.c.b16 %v6811, %v6795
        %v8380 = vpack.c.b16 %v6812, %v6796
        %v8381 = vpack.c.b16 %v6813, %v6797
        %v8382 = vpack.c.b16 %v6814, %v6798
        %v8383 = vpack.c.b16 %v6815, %v6799
        %v8384 = vpack.c.b16 %v6816, %v6800
        %v8385 = vpack.c.b16 %v6817, %v6801
        %v8386 = vpack.c.b16 %v6818, %v6802
        %v8387 = vpack.c.b16 %v6819, %v6803
        %v8388 = vpack.c.b16 %v6820, %v6804
        %v8389 = vpack.c.b16 %v6821, %v6805
        %v8390 = vpack.c.b16 %v6822, %v6806
        %v8391 = vpack.c.b16 %v6823, %v6807
        %v8392 = vpack.c.b16 %v6840, %v6824
        %v8393 = vpack.c.b16 %v6841, %v6825
        %v8394 = vpack.c.b16 %v6842, %v6826
        %v8395 = vpack.c.b16 %v6843, %v6827
        %v8396 = vpack.c.b16 %v6844, %v6828
        %v8397 = vpack.c.b16 %v6845, %v6829
        %v8398 = vpack.c.b16 %v6846, %v6830
        %v8399 = vpack.c.b16 %v6847, %v6831
        %v8400 = vpack.c.b16 %v6848, %v6832
        %v8401 = vpack.c.b16 %v6849, %v6833
        %v8402 = vpack.c.b16 %v6850, %v6834
        %v8403 = vpack.c.b16 %v6851, %v6835
        %v8404 = vpack.c.b16 %v6852, %v6836
        %v8405 = vpack.c.b16 %v6853, %v6837
        %v8406 = vpack.c.b16 %v6854, %v6838
        %v8407 = vpack.c.b16 %v6855, %v6839
        %v8408 = vpack.c.b16 %v6872, %v6856
        %v8409 = vpack.c.b16 %v6873, %v6857
        %v8410 = vpack.c.b16 %v6874, %v6858
        %v8411 = vpack.c.b16 %v6875, %v6859
        %v8412 = vpack.c.b16 %v6876, %v6860
        %v8413 = vpack.c.b16 %v6877, %v6861
        %v8414 = vpack.c.b16 %v6878, %v6862
        %v8415 = vpack.c.b16 %v6879, %v6863
        %v8416 = vpack.c.b16 %v6880, %v6864
        %v8417 = vpack.c.b16 %v6881, %v6865
        %v8418 = vpack.c.b16 %v6882, %v6866
        %v8419 = vpack.c.b16 %v6883, %v6867
        %v8420 = vpack.c.b16 %v6884, %v6868
        %v8421 = vpack.c.b16 %v6885, %v6869
        %v8422 = vpack.c.b16 %v6886, %v6870
        %v8423 = vpack.c.b16 %v6887, %v6871
        %v8424 = vpack.c.b16 %v6904, %v6888
        %v8425 = vpack.c.b16 %v6905, %v6889
        %v8426 = vpack.c.b16 %v6906, %v6890
        %v8427 = vpack.c.b16 %v6907, %v6891
        %v8428 = vpack.c.b16 %v6908, %v6892
        %v8429 = vpack.c.b16 %v6909, %v6893
        %v8430 = vpack.c.b16 %v6910, %v6894
        %v8431 = vpack.c.b16 %v6911, %v6895
        %v8432 = vpack.c.b16 %v6912, %v6896
        %v8433 = vpack.c.b16 %v6913, %v6897
        %v8434 = vpack.c.b16 %v6914, %v6898
        %v8435 = vpack.c.b16 %v6915, %v6899
        %v8436 = vpack.c.b16 %v6916, %v6900
        %v8437 = vpack.c.b16 %v6917, %v6901
        %v8438 = vpack.c.b16 %v6918, %v6902
        %v8439 = vpack.c.b16 %v6919, %v6903
        %v8440 = vpack.c.b16 %v6936, %v6920
        %v8441 = vpack.c.b16 %v6937, %v6921
        %v8442 = vpack.c.b16 %v6938, %v6922
        %v8443 = vpack.c.b16 %v6939, %v6923
        %v8444 = vpack.c.b16 %v6940, %v6924
        %v8445 = vpack.c.b16 %v6941, %v6925
        %v8446 = vpack.c.b16 %v6942, %v6926
        %v8447 = vpack.c.b16 %v6943, %v6927
        %v8448 = vpack.c.b16 %v6944, %v6928
        %v8449 = vpack.c.b16 %v6945, %v6929
        %v8450 = vpack.c.b16 %v6946, %v6930
        %v8451 = vpack.c.b16 %v6947, %v6931
        %v8452 = vpack.c.b16 %v6948, %v6932
        %v8453 = vpack.c.b16 %v6949, %v6933
        %v8454 = vpack.c.b16 %v6950, %v6934
        %v8455 = vpack.c.b16 %v6951, %v6935
        %v8456 = vpack.c.b16 %v6968, %v6952
        %v8457 = vpack.c.b16 %v6969, %v6953
        %v8458 = vpack.c.b16 %v6970, %v6954
        %v8459 = vpack.c.b16 %v6971, %v6955
        %v8460 = vpack.c.b16 %v6972, %v6956
        %v8461 = vpack.c.b16 %v6973, %v6957
        %v8462 = vpack.c.b16 %v6974, %v6958
        %v8463 = vpack.c.b16 %v6975, %v6959
        %v8464 = vpack.c.b16 %v6976, %v6960
        %v8465 = vpack.c.b16 %v6977, %v6961
        %v8466 = vpack.c.b16 %v6978, %v6962
        %v8467 = vpack.c.b16 %v6979, %v6963
        %v8468 = vpack.c.b16 %v6980, %v6964
        %v8469 = vpack.c.b16 %v6981, %v6965
        %v8470 = vpack.c.b16 %v6982, %v6966
        %v8471 = vpack.c.b16 %v6983, %v6967
        %v8472 = vpack.c.b16 %v7000, %v6984
        %v8473 = vpack.c.b16 %v7001, %v6985
        %v8474 = vpack.c.b16 %v7002, %v6986
        %v8475 = vpack.c.b16 %v7003, %v6987
        %v8476 = vpack.c.b16 %v7004, %v6988
        %v8477 = vpack.c.b16 %v7005, %v6989
        %v8478 = vpack.c.b16 %v7006, %v6990
        %v8479 = vpack.c.b16 %v7007, %v6991
        %v8480 = vpack.c.b16 %v7008, %v6992
        %v8481 = vpack.c.b16 %v7009, %v6993
        %v8482 = vpack.c.b16 %v7010, %v6994
        %v8483 = vpack.c.b16 %v7011, %v6995
        %v8484 = vpack.c.b16 %v7012, %v6996
        %v8485 = vpack.c.b16 %v7013, %v6997
        %v8486 = vpack.c.b16 %v7014, %v6998
        %v8487 = vpack.c.b16 %v7015, %v6999
        %v8488 = vpack.c.b16 %v7032, %v7016
        %v8489 = vpack.c.b16 %v7033, %v7017
        %v8490 = vpack.c.b16 %v7034, %v7018
        %v8491 = vpack.c.b16 %v7035, %v7019
        %v8492 = vpack.c.b16 %v7036, %v7020
        %v8493 = vpack.c.b16 %v7037, %v7021
        %v8494 = vpack.c.b16 %v7038, %v7022
        %v8495 = vpack.c.b16 %v7039, %v7023
        %v8496 = vpack.c.b16 %v7040, %v7024
        %v8497 = vpack.c.b16 %v7041, %v7025
        %v8498 = vpack.c.b16 %v7042, %v7026
        %v8499 = vpack.c.b16 %v7043, %v7027
        %v8500 = vpack.c.b16 %v7044, %v7028
        %v8501 = vpack.c.b16 %v7045, %v7029
        %v8502 = vpack.c.b16 %v7046, %v7030
        %v8503 = vpack.c.b16 %v7047, %v7031
        %v8504 = vpack.c.b16 %v7064, %v7048
        %v8505 = vpack.c.b16 %v7065, %v7049
        %v8506 = vpack.c.b16 %v7066, %v7050
        %v8507 = vpack.c.b16 %v7067, %v7051
        %v8508 = vpack.c.b16 %v7068, %v7052
        %v8509 = vpack.c.b16 %v7069, %v7053
        %v8510 = vpack.c.b16 %v7070, %v7054
        %v8511 = vpack.c.b16 %v7071, %v7055
        %v8512 = vpack.c.b16 %v7072, %v7056
        %v8513 = vpack.c.b16 %v7073, %v7057
        %v8514 = vpack.c.b16 %v7074, %v7058
        %v8515 = vpack.c.b16 %v7075, %v7059
        %v8516 = vpack.c.b16 %v7076, %v7060
        %v8517 = vpack.c.b16 %v7077, %v7061
        %v8518 = vpack.c.b16 %v7078, %v7062
        %v8519 = vpack.c.b16 %v7079, %v7063
        %v8520 = vpack.c.b16 %v7096, %v7080
        %v8521 = vpack.c.b16 %v7097, %v7081
        %v8522 = vpack.c.b16 %v7098, %v7082
        %v8523 = vpack.c.b16 %v7099, %v7083
        %v8524 = vpack.c.b16 %v7100, %v7084
        %v8525 = vpack.c.b16 %v7101, %v7085
        %v8526 = vpack.c.b16 %v7102, %v7086
        %v8527 = vpack.c.b16 %v7103, %v7087
        %v8528 = vpack.c.b16 %v7104, %v7088
        %v8529 = vpack.c.b16 %v7105, %v7089
        %v8530 = vpack.c.b16 %v7106, %v7090
        %v8531 = vpack.c.b16 %v7107, %v7091
        %v8532 = vpack.c.b16 %v7108, %v7092
        %v8533 = vpack.c.b16 %v7109, %v7093
        %v8534 = vpack.c.b16 %v7110, %v7094
        %v8535 = vpack.c.b16 %v7111, %v7095
        %v8536 = vpack.c.b16 %v7128, %v7112
        %v8537 = vpack.c.b16 %v7129, %v7113
        %v8538 = vpack.c.b16 %v7130, %v7114
        %v8539 = vpack.c.b16 %v7131, %v7115
        %v8540 = vpack.c.b16 %v7132, %v7116
        %v8541 = vpack.c.b16 %v7133, %v7117
        %v8542 = vpack.c.b16 %v7134, %v7118
        %v8543 = vpack.c.b16 %v7135, %v7119
        %v8544 = vpack.c.b16 %v7136, %v7120
        %v8545 = vpack.c.b16 %v7137, %v7121
        %v8546 = vpack.c.b16 %v7138, %v7122
        %v8547 = vpack.c.b16 %v7139, %v7123
        %v8548 = vpack.c.b16 %v7140, %v7124
        %v8549 = vpack.c.b16 %v7141, %v7125
        %v8550 = vpack.c.b16 %v7142, %v7126
        %v8551 = vpack.c.b16 %v7143, %v7127
        %v8552 = vpack.c.b16 %v7160, %v7144
        %v8553 = vpack.c.b16 %v7161, %v7145
        %v8554 = vpack.c.b16 %v7162, %v7146
        %v8555 = vpack.c.b16 %v7163, %v7147
        %v8556 = vpack.c.b16 %v7164, %v7148
        %v8557 = vpack.c.b16 %v7165, %v7149
        %v8558 = vpack.c.b16 %v7166, %v7150
        %v8559 = vpack.c.b16 %v7167, %v7151
        %v8560 = vpack.c.b16 %v7168, %v7152
        %v8561 = vpack.c.b16 %v7169, %v7153
        %v8562 = vpack.c.b16 %v7170, %v7154
        %v8563 = vpack.c.b16 %v7171, %v7155
        %v8564 = vpack.c.b16 %v7172, %v7156
        %v8565 = vpack.c.b16 %v7173, %v7157
        %v8566 = vpack.c.b16 %v7174, %v7158
        %v8567 = vpack.c.b16 %v7175, %v7159
        %v8568 = vpack.c.b16 %v7192, %v7176
        %v8569 = vpack.c.b16 %v7193, %v7177
        %v8570 = vpack.c.b16 %v7194, %v7178
        %v8571 = vpack.c.b16 %v7195, %v7179
        %v8572 = vpack.c.b16 %v7196, %v7180
        %v8573 = vpack.c.b16 %v7197, %v7181
        %v8574 = vpack.c.b16 %v7198, %v7182
        %v8575 = vpack.c.b16 %v7199, %v7183
        %v8576 = vpack.c.b16 %v7200, %v7184
        %v8577 = vpack.c.b16 %v7201, %v7185
        %v8578 = vpack.c.b16 %v7202, %v7186
        %v8579 = vpack.c.b16 %v7203, %v7187
        %v8580 = vpack.c.b16 %v7204, %v7188
        %v8581 = vpack.c.b16 %v7205, %v7189
        %v8582 = vpack.c.b16 %v7206, %v7190
        %v8583 = vpack.c.b16 %v7207, %v7191
        %v8584 = vpack.c.b16 %v7224, %v7208
        %v8585 = vpack.c.b16 %v7225, %v7209
        %v8586 = vpack.c.b16 %v7226, %v7210
        %v8587 = vpack.c.b16 %v7227, %v7211
        %v8588 = vpack.c.b16 %v7228, %v7212
        %v8589 = vpack.c.b16 %v7229, %v7213
        %v8590 = vpack.c.b16 %v7230, %v7214
        %v8591 = vpack.c.b16 %v7231, %v7215
        %v8592 = vpack.c.b16 %v7232, %v7216
        %v8593 = vpack.c.b16 %v7233, %v7217
        %v8594 = vpack.c.b16 %v7234, %v7218
        %v8595 = vpack.c.b16 %v7235, %v7219
        %v8596 = vpack.c.b16 %v7236, %v7220
        %v8597 = vpack.c.b16 %v7237, %v7221
        %v8598 = vpack.c.b16 %v7238, %v7222
        %v8599 = vpack.c.b16 %v7239, %v7223
        %v8600 = vpack.c.b16 %v7256, %v7240
        %v8601 = vpack.c.b16 %v7257, %v7241
        %v8602 = vpack.c.b16 %v7258, %v7242
        %v8603 = vpack.c.b16 %v7259, %v7243
        %v8604 = vpack.c.b16 %v7260, %v7244
        %v8605 = vpack.c.b16 %v7261, %v7245
        %v8606 = vpack.c.b16 %v7262, %v7246
        %v8607 = vpack.c.b16 %v7263, %v7247
        %v8608 = vpack.c.b16 %v7264, %v7248
        %v8609 = vpack.c.b16 %v7265, %v7249
        %v8610 = vpack.c.b16 %v7266, %v7250
        %v8611 = vpack.c.b16 %v7267, %v7251
        %v8612 = vpack.c.b16 %v7268, %v7252
        %v8613 = vpack.c.b16 %v7269, %v7253
        %v8614 = vpack.c.b16 %v7270, %v7254
        %v8615 = vpack.c.b16 %v7271, %v7255
        %v8616 = vpack.c.b16 %v7288, %v7272
        %v8617 = vpack.c.b16 %v7289, %v7273
        %v8618 = vpack.c.b16 %v7290, %v7274
        %v8619 = vpack.c.b16 %v7291, %v7275
        %v8620 = vpack.c.b16 %v7292, %v7276
        %v8621 = vpack.c.b16 %v7293, %v7277
        %v8622 = vpack.c.b16 %v7294, %v7278
        %v8623 = vpack.c.b16 %v7295, %v7279
        %v8624 = vpack.c.b16 %v7296, %v7280
        %v8625 = vpack.c.b16 %v7297, %v7281
        %v8626 = vpack.c.b16 %v7298, %v7282
        %v8627 = vpack.c.b16 %v7299, %v7283
        %v8628 = vpack.c.b16 %v7300, %v7284
        %v8629 = vpack.c.b16 %v7301, %v7285
        %v8630 = vpack.c.b16 %v7302, %v7286
        %v8631 = vpack.c.b16 %v7303, %v7287
        %v8632 = vpack.c.b16 %v7320, %v7304
        %v8633 = vpack.c.b16 %v7321, %v7305
        %v8634 = vpack.c.b16 %v7322, %v7306
        %v8635 = vpack.c.b16 %v7323, %v7307
        %v8636 = vpack.c.b16 %v7324, %v7308
        %v8637 = vpack.c.b16 %v7325, %v7309
        %v8638 = vpack.c.b16 %v7326, %v7310
        %v8639 = vpack.c.b16 %v7327, %v7311
        %v8640 = vpack.c.b16 %v7328, %v7312
        %v8641 = vpack.c.b16 %v7329, %v7313
        %v8642 = vpack.c.b16 %v7330, %v7314
        %v8643 = vpack.c.b16 %v7331, %v7315
        %v8644 = vpack.c.b16 %v7332, %v7316
        %v8645 = vpack.c.b16 %v7333, %v7317
        %v8646 = vpack.c.b16 %v7334, %v7318
        %v8647 = vpack.c.b16 %v7335, %v7319
        %v8648 = vpack.c.b16 %v7352, %v7336
        %v8649 = vpack.c.b16 %v7353, %v7337
        %v8650 = vpack.c.b16 %v7354, %v7338
        %v8651 = vpack.c.b16 %v7355, %v7339
        %v8652 = vpack.c.b16 %v7356, %v7340
        %v8653 = vpack.c.b16 %v7357, %v7341
        %v8654 = vpack.c.b16 %v7358, %v7342
        %v8655 = vpack.c.b16 %v7359, %v7343
        %v8656 = vpack.c.b16 %v7360, %v7344
        %v8657 = vpack.c.b16 %v7361, %v7345
        %v8658 = vpack.c.b16 %v7362, %v7346
        %v8659 = vpack.c.b16 %v7363, %v7347
        %v8660 = vpack.c.b16 %v7364, %v7348
        %v8661 = vpack.c.b16 %v7365, %v7349
        %v8662 = vpack.c.b16 %v7366, %v7350
        %v8663 = vpack.c.b16 %v7367, %v7351
        %v8664 = vpack.c.b16 %v7384, %v7368
        %v8665 = vpack.c.b16 %v7385, %v7369
        %v8666 = vpack.c.b16 %v7386, %v7370
        %v8667 = vpack.c.b16 %v7387, %v7371
        %v8668 = vpack.c.b16 %v7388, %v7372
        %v8669 = vpack.c.b16 %v7389, %v7373
        %v8670 = vpack.c.b16 %v7390, %v7374
        %v8671 = vpack.c.b16 %v7391, %v7375
        %v8672 = vpack.c.b16 %v7392, %v7376
        %v8673 = vpack.c.b16 %v7393, %v7377
        %v8674 = vpack.c.b16 %v7394, %v7378
        %v8675 = vpack.c.b16 %v7395, %v7379
        %v8676 = vpack.c.b16 %v7396, %v7380
        %v8677 = vpack.c.b16 %v7397, %v7381
        %v8678 = vpack.c.b16 %v7398, %v7382
        %v8679 = vpack.c.b16 %v7399, %v7383
        %v8680 = vpack.c.b16 %v7416, %v7400
        %v8681 = vpack.c.b16 %v7417, %v7401
        %v8682 = vpack.c.b16 %v7418, %v7402
        %v8683 = vpack.c.b16 %v7419, %v7403
        %v8684 = vpack.c.b16 %v7420, %v7404
        %v8685 = vpack.c.b16 %v7421, %v7405
        %v8686 = vpack.c.b16 %v7422, %v7406
        %v8687 = vpack.c.b16 %v7423, %v7407
        %v8688 = vpack.c.b16 %v7424, %v7408
        %v8689 = vpack.c.b16 %v7425, %v7409
        %v8690 = vpack.c.b16 %v7426, %v7410
        %v8691 = vpack.c.b16 %v7427, %v7411
        %v8692 = vpack.c.b16 %v7428, %v7412
        %v8693 = vpack.c.b16 %v7429, %v7413
        %v8694 = vpack.c.b16 %v7430, %v7414
        %v8695 = vpack.c.b16 %v7431, %v7415
        %v8696 = vpack.c.b16 %v7448, %v7432
        %v8697 = vpack.c.b16 %v7449, %v7433
        %v8698 = vpack.c.b16 %v7450, %v7434
        %v8699 = vpack.c.b16 %v7451, %v7435
        %v8700 = vpack.c.b16 %v7452, %v7436
        %v8701 = vpack.c.b16 %v7453, %v7437
        %v8702 = vpack.c.b16 %v7454, %v7438
        %v8703 = vpack.c.b16 %v7455, %v7439
        %v8704 = vpack.c.b16 %v7456, %v7440
        %v8705 = vpack.c.b16 %v7457, %v7441
        %v8706 = vpack.c.b16 %v7458, %v7442
        %v8707 = vpack.c.b16 %v7459, %v7443
        %v8708 = vpack.c.b16 %v7460, %v7444
        %v8709 = vpack.c.b16 %v7461, %v7445
        %v8710 = vpack.c.b16 %v7462, %v7446
        %v8711 = vpack.c.b16 %v7463, %v7447
        %v8712 = vpack.c.b16 %v7480, %v7464
        %v8713 = vpack.c.b16 %v7481, %v7465
        %v8714 = vpack.c.b16 %v7482, %v7466
        %v8715 = vpack.c.b16 %v7483, %v7467
        %v8716 = vpack.c.b16 %v7484, %v7468
        %v8717 = vpack.c.b16 %v7485, %v7469
        %v8718 = vpack.c.b16 %v7486, %v7470
        %v8719 = vpack.c.b16 %v7487, %v7471
        %v8720 = vpack.c.b16 %v7488, %v7472
        %v8721 = vpack.c.b16 %v7489, %v7473
        %v8722 = vpack.c.b16 %v7490, %v7474
        %v8723 = vpack.c.b16 %v7491, %v7475
        %v8724 = vpack.c.b16 %v7492, %v7476
        %v8725 = vpack.c.b16 %v7493, %v7477
        %v8726 = vpack.c.b16 %v7494, %v7478
        %v8727 = vpack.c.b16 %v7495, %v7479
        %v8728 = vpack.c.b16 %v7512, %v7496
        %v8729 = vpack.c.b16 %v7513, %v7497
        %v8730 = vpack.c.b16 %v7514, %v7498
        %v8731 = vpack.c.b16 %v7515, %v7499
        %v8732 = vpack.c.b16 %v7516, %v7500
        %v8733 = vpack.c.b16 %v7517, %v7501
        %v8734 = vpack.c.b16 %v7518, %v7502
        %v8735 = vpack.c.b16 %v7519, %v7503
        %v8736 = vpack.c.b16 %v7520, %v7504
        %v8737 = vpack.c.b16 %v7521, %v7505
        %v8738 = vpack.c.b16 %v7522, %v7506
        %v8739 = vpack.c.b16 %v7523, %v7507
        %v8740 = vpack.c.b16 %v7524, %v7508
        %v8741 = vpack.c.b16 %v7525, %v7509
        %v8742 = vpack.c.b16 %v7526, %v7510
        %v8743 = vpack.c.b16 %v7527, %v7511
        %v8744 = vpack.c.b16 %v7544, %v7528
        %v8745 = vpack.c.b16 %v7545, %v7529
        %v8746 = vpack.c.b16 %v7546, %v7530
        %v8747 = vpack.c.b16 %v7547, %v7531
        %v8748 = vpack.c.b16 %v7548, %v7532
        %v8749 = vpack.c.b16 %v7549, %v7533
        %v8750 = vpack.c.b16 %v7550, %v7534
        %v8751 = vpack.c.b16 %v7551, %v7535
        %v8752 = vpack.c.b16 %v7552, %v7536
        %v8753 = vpack.c.b16 %v7553, %v7537
        %v8754 = vpack.c.b16 %v7554, %v7538
        %v8755 = vpack.c.b16 %v7555, %v7539
        %v8756 = vpack.c.b16 %v7556, %v7540
        %v8757 = vpack.c.b16 %v7557, %v7541
        %v8758 = vpack.c.b16 %v7558, %v7542
        %v8759 = vpack.c.b16 %v7559, %v7543
        %v8760 = vpack.c.b16 %v7576, %v7560
        %v8761 = vpack.c.b16 %v7577, %v7561
        %v8762 = vpack.c.b16 %v7578, %v7562
        %v8763 = vpack.c.b16 %v7579, %v7563
        %v8764 = vpack.c.b16 %v7580, %v7564
        %v8765 = vpack.c.b16 %v7581, %v7565
        %v8766 = vpack.c.b16 %v7582, %v7566
        %v8767 = vpack.c.b16 %v7583, %v7567
        %v8768 = vpack.c.b16 %v7584, %v7568
        %v8769 = vpack.c.b16 %v7585, %v7569
        %v8770 = vpack.c.b16 %v7586, %v7570
        %v8771 = vpack.c.b16 %v7587, %v7571
        %v8772 = vpack.c.b16 %v7588, %v7572
        %v8773 = vpack.c.b16 %v7589, %v7573
        %v8774 = vpack.c.b16 %v7590, %v7574
        %v8775 = vpack.c.b16 %v7591, %v7575
        %v8776 = vpack.c.b16 %v7608, %v7592
        %v8777 = vpack.c.b16 %v7609, %v7593
        %v8778 = vpack.c.b16 %v7610, %v7594
        %v8779 = vpack.c.b16 %v7611, %v7595
        %v8780 = vpack.c.b16 %v7612, %v7596
        %v8781 = vpack.c.b16 %v7613, %v7597
        %v8782 = vpack.c.b16 %v7614, %v7598
        %v8783 = vpack.c.b16 %v7615, %v7599
        %v8784 = vpack.c.b16 %v7616, %v7600
        %v8785 = vpack.c.b16 %v7617, %v7601
        %v8786 = vpack.c.b16 %v7618, %v7602
        %v8787 = vpack.c.b16 %v7619, %v7603
        %v8788 = vpack.c.b16 %v7620, %v7604
        %v8789 = vpack.c.b16 %v7621, %v7605
        %v8790 = vpack.c.b16 %v7622, %v7606
        %v8791 = vpack.c.b16 %v7623, %v7607
        %v8792 = vpack.c.b16 %v7640, %v7624
        %v8793 = vpack.c.b16 %v7641, %v7625
        %v8794 = vpack.c.b16 %v7642, %v7626
        %v8795 = vpack.c.b16 %v7643, %v7627
        %v8796 = vpack.c.b16 %v7644, %v7628
        %v8797 = vpack.c.b16 %v7645, %v7629
        %v8798 = vpack.c.b16 %v7646, %v7630
        %v8799 = vpack.c.b16 %v7647, %v7631
        %v8800 = vpack.c.b16 %v7648, %v7632
        %v8801 = vpack.c.b16 %v7649, %v7633
        %v8802 = vpack.c.b16 %v7650, %v7634
        %v8803 = vpack.c.b16 %v7651, %v7635
        %v8804 = vpack.c.b16 %v7652, %v7636
        %v8805 = vpack.c.b16 %v7653, %v7637
        %v8806 = vpack.c.b16 %v7654, %v7638
        %v8807 = vpack.c.b16 %v7655, %v7639
        %v8808 = vpack.c.b16 %v7672, %v7656
        %v8809 = vpack.c.b16 %v7673, %v7657
        %v8810 = vpack.c.b16 %v7674, %v7658
        %v8811 = vpack.c.b16 %v7675, %v7659
        %v8812 = vpack.c.b16 %v7676, %v7660
        %v8813 = vpack.c.b16 %v7677, %v7661
        %v8814 = vpack.c.b16 %v7678, %v7662
        %v8815 = vpack.c.b16 %v7679, %v7663
        %v8816 = vpack.c.b16 %v7680, %v7664
        %v8817 = vpack.c.b16 %v7681, %v7665
        %v8818 = vpack.c.b16 %v7682, %v7666
        %v8819 = vpack.c.b16 %v7683, %v7667
        %v8820 = vpack.c.b16 %v7684, %v7668
        %v8821 = vpack.c.b16 %v7685, %v7669
        %v8822 = vpack.c.b16 %v7686, %v7670
        %v8823 = vpack.c.b16 %v7687, %v7671
        %v8824 = vpack.c.b16 %v7704, %v7688
        %v8825 = vpack.c.b16 %v7705, %v7689
        %v8826 = vpack.c.b16 %v7706, %v7690
        %v8827 = vpack.c.b16 %v7707, %v7691
        %v8828 = vpack.c.b16 %v7708, %v7692
        %v8829 = vpack.c.b16 %v7709, %v7693
        %v8830 = vpack.c.b16 %v7710, %v7694
        %v8831 = vpack.c.b16 %v7711, %v7695
        %v8832 = vpack.c.b16 %v7712, %v7696
        %v8833 = vpack.c.b16 %v7713, %v7697
        %v8834 = vpack.c.b16 %v7714, %v7698
        %v8835 = vpack.c.b16 %v7715, %v7699
        %v8836 = vpack.c.b16 %v7716, %v7700
        %v8837 = vpack.c.b16 %v7717, %v7701
        %v8838 = vpack.c.b16 %v7718, %v7702
        %v8839 = vpack.c.b16 %v7719, %v7703
        %v8840 = vpack.c.b16 %v7736, %v7720
        %v8841 = vpack.c.b16 %v7737, %v7721
        %v8842 = vpack.c.b16 %v7738, %v7722
        %v8843 = vpack.c.b16 %v7739, %v7723
        %v8844 = vpack.c.b16 %v7740, %v7724
        %v8845 = vpack.c.b16 %v7741, %v7725
        %v8846 = vpack.c.b16 %v7742, %v7726
        %v8847 = vpack.c.b16 %v7743, %v7727
        %v8848 = vpack.c.b16 %v7744, %v7728
        %v8849 = vpack.c.b16 %v7745, %v7729
        %v8850 = vpack.c.b16 %v7746, %v7730
        %v8851 = vpack.c.b16 %v7747, %v7731
        %v8852 = vpack.c.b16 %v7748, %v7732
        %v8853 = vpack.c.b16 %v7749, %v7733
        %v8854 = vpack.c.b16 %v7750, %v7734
        %v8855 = vpack.c.b16 %v7751, %v7735
        %v8856 = vpack.c.b16 %v7768, %v7752
        %v8857 = vpack.c.b16 %v7769, %v7753
        %v8858 = vpack.c.b16 %v7770, %v7754
        %v8859 = vpack.c.b16 %v7771, %v7755
        %v8860 = vpack.c.b16 %v7772, %v7756
        %v8861 = vpack.c.b16 %v7773, %v7757
        %v8862 = vpack.c.b16 %v7774, %v7758
        %v8863 = vpack.c.b16 %v7775, %v7759
        %v8864 = vpack.c.b16 %v7776, %v7760
        %v8865 = vpack.c.b16 %v7777, %v7761
        %v8866 = vpack.c.b16 %v7778, %v7762
        %v8867 = vpack.c.b16 %v7779, %v7763
        %v8868 = vpack.c.b16 %v7780, %v7764
        %v8869 = vpack.c.b16 %v7781, %v7765
        %v8870 = vpack.c.b16 %v7782, %v7766
        %v8871 = vpack.c.b16 %v7783, %v7767
        %v8872 = vpack.c.b16 %v7800, %v7784
        %v8873 = vpack.c.b16 %v7801, %v7785
        %v8874 = vpack.c.b16 %v7802, %v7786
        %v8875 = vpack.c.b16 %v7803, %v7787
        %v8876 = vpack.c.b16 %v7804, %v7788
        %v8877 = vpack.c.b16 %v7805, %v7789
        %v8878 = vpack.c.b16 %v7806, %v7790
        %v8879 = vpack.c.b16 %v7807, %v7791
        %v8880 = vpack.c.b16 %v7808, %v7792
        %v8881 = vpack.c.b16 %v7809, %v7793
        %v8882 = vpack.c.b16 %v7810, %v7794
        %v8883 = vpack.c.b16 %v7811, %v7795
        %v8884 = vpack.c.b16 %v7812, %v7796
        %v8885 = vpack.c.b16 %v7813, %v7797
        %v8886 = vpack.c.b16 %v7814, %v7798
        %v8887 = vpack.c.b16 %v7815, %v7799
        %v8888 = vpack.c.b16 %v7832, %v7816
        %v8889 = vpack.c.b16 %v7833, %v7817
        %v8890 = vpack.c.b16 %v7834, %v7818
        %v8891 = vpack.c.b16 %v7835, %v7819
        %v8892 = vpack.c.b16 %v7836, %v7820
        %v8893 = vpack.c.b16 %v7837, %v7821
        %v8894 = vpack.c.b16 %v7838, %v7822
        %v8895 = vpack.c.b16 %v7839, %v7823
        %v8896 = vpack.c.b16 %v7840, %v7824
        %v8897 = vpack.c.b16 %v7841, %v7825
        %v8898 = vpack.c.b16 %v7842, %v7826
        %v8899 = vpack.c.b16 %v7843, %v7827
        %v8900 = vpack.c.b16 %v7844, %v7828
        %v8901 = vpack.c.b16 %v7845, %v7829
        %v8902 = vpack.c.b16 %v7846, %v7830
        %v8903 = vpack.c.b16 %v7847, %v7831
        %v8904 = vpack.c.b16 %v7864, %v7848
        %v8905 = vpack.c.b16 %v7865, %v7849
        %v8906 = vpack.c.b16 %v7866, %v7850
        %v8907 = vpack.c.b16 %v7867, %v7851
        %v8908 = vpack.c.b16 %v7868, %v7852
        %v8909 = vpack.c.b16 %v7869, %v7853
        %v8910 = vpack.c.b16 %v7870, %v7854
        %v8911 = vpack.c.b16 %v7871, %v7855
        %v8912 = vpack.c.b16 %v7872, %v7856
        %v8913 = vpack.c.b16 %v7873, %v7857
        %v8914 = vpack.c.b16 %v7874, %v7858
        %v8915 = vpack.c.b16 %v7875, %v7859
        %v8916 = vpack.c.b16 %v7876, %v7860
        %v8917 = vpack.c.b16 %v7877, %v7861
        %v8918 = vpack.c.b16 %v7878, %v7862
        %v8919 = vpack.c.b16 %v7879, %v7863
        %v8920 = vpack.c.b16 %v7896, %v7880
        %v8921 = vpack.c.b16 %v7897, %v7881
        %v8922 = vpack.c.b16 %v7898, %v7882
        %v8923 = vpack.c.b16 %v7899, %v7883
        %v8924 = vpack.c.b16 %v7900, %v7884
        %v8925 = vpack.c.b16 %v7901, %v7885
        %v8926 = vpack.c.b16 %v7902, %v7886
        %v8927 = vpack.c.b16 %v7903, %v7887
        %v8928 = vpack.c.b16 %v7904, %v7888
        %v8929 = vpack.c.b16 %v7905, %v7889
        %v8930 = vpack.c.b16 %v7906, %v7890
        %v8931 = vpack.c.b16 %v7907, %v7891
        %v8932 = vpack.c.b16 %v7908, %v7892
        %v8933 = vpack.c.b16 %v7909, %v7893
        %v8934 = vpack.c.b16 %v7910, %v7894
        %v8935 = vpack.c.b16 %v7911, %v7895
        %9960 = vmatpush.bf16.msra.mxu0 %v8024
        %9961 = vmatpush.bf16.msra.mxu0 %v8008
        %9962 = vmatpush.bf16.msra.mxu0 %v7992
        %9963 = vmatpush.bf16.msra.mxu0 %v7976
        %9964 = vmatpush.bf16.msra.mxu0 %v7960
        %9965 = vmatpush.bf16.msra.mxu0 %v7944
        %9966 = vmatpush.bf16.msra.mxu0 %v7928
        %9967 = vmatpush.bf16.msra.mxu0 %v7912
        %9968 = vmatmul.bf16.gmra.mxu0 %v3772
        %v9969 = vpop.f32.mrf.mxu0
        %v9970 = vadd.f32 %v4808, %v9969
        %v9971 = vpop.f32.mrf.mxu0
        %9972 = vdwg.mxu0
        %9973 = vmatpush.bf16.msra.mxu0 %v8152
        %9974 = vmatpush.bf16.msra.mxu0 %v8136
        %9975 = vmatpush.bf16.msra.mxu0 %v8120
        %9976 = vmatpush.bf16.msra.mxu0 %v8104
        %9977 = vmatpush.bf16.msra.mxu0 %v8088
        %9978 = vmatpush.bf16.msra.mxu0 %v8072
        %9979 = vmatpush.bf16.msra.mxu0 %v8056
        %9980 = vmatpush.bf16.msra.mxu0 %v8040
        %9981 = vmatmul.bf16.gmra.mxu0 %v3773
        %v9982 = vpop.f32.mrf.mxu0
        %v9983 = vadd.f32 %v9970, %v9982
        %v9984 = vpop.f32.mrf.mxu0
        %9985 = vdwg.mxu0
        %9986 = vmatpush.bf16.msra.mxu0 %v8280
        %9987 = vmatpush.bf16.msra.mxu0 %v8264
        %9988 = vmatpush.bf16.msra.mxu0 %v8248
        %9989 = vmatpush.bf16.msra.mxu0 %v8232
        %9990 = vmatpush.bf16.msra.mxu0 %v8216
        %9991 = vmatpush.bf16.msra.mxu0 %v8200
        %9992 = vmatpush.bf16.msra.mxu0 %v8184
        %9993 = vmatpush.bf16.msra.mxu0 %v8168
        %9994 = vmatmul.bf16.gmra.mxu0 %v3774
        %v9995 = vpop.f32.mrf.mxu0
        %v9996 = vadd.f32 %v9983, %v9995
        %v9997 = vpop.f32.mrf.mxu0
        %9998 = vdwg.mxu0
        %9999 = vmatpush.bf16.msra.mxu0 %v8408
        %10000 = vmatpush.bf16.msra.mxu0 %v8392
        %10001 = vmatpush.bf16.msra.mxu0 %v8376
        %10002 = vmatpush.bf16.msra.mxu0 %v8360
        %10003 = vmatpush.bf16.msra.mxu0 %v8344
        %10004 = vmatpush.bf16.msra.mxu0 %v8328
        %10005 = vmatpush.bf16.msra.mxu0 %v8312
        %10006 = vmatpush.bf16.msra.mxu0 %v8296
        %10007 = vmatmul.bf16.gmra.mxu0 %v3775
        %v10008 = vpop.f32.mrf.mxu0
        %v10009 = vadd.f32 %v9996, %v10008
        %v10010 = vpop.f32.mrf.mxu0
        %10011 = vdwg.mxu0
        %10012 = vmatpush.bf16.msra.mxu0 %v8536
        %10013 = vmatpush.bf16.msra.mxu0 %v8520
        %10014 = vmatpush.bf16.msra.mxu0 %v8504
        %10015 = vmatpush.bf16.msra.mxu0 %v8488
        %10016 = vmatpush.bf16.msra.mxu0 %v8472
        %10017 = vmatpush.bf16.msra.mxu0 %v8456
        %10018 = vmatpush.bf16.msra.mxu0 %v8440
        %10019 = vmatpush.bf16.msra.mxu0 %v8424
        %10020 = vmatmul.bf16.gmra.mxu0 %v3776
        %v10021 = vpop.f32.mrf.mxu0
        %v10022 = vadd.f32 %v10009, %v10021
        %v10023 = vpop.f32.mrf.mxu0
        %10024 = vdwg.mxu0
        %10025 = vmatpush.bf16.msra.mxu0 %v8664
        %10026 = vmatpush.bf16.msra.mxu0 %v8648
        %10027 = vmatpush.bf16.msra.mxu0 %v8632
        %10028 = vmatpush.bf16.msra.mxu0 %v8616
        %10029 = vmatpush.bf16.msra.mxu0 %v8600
        %10030 = vmatpush.bf16.msra.mxu0 %v8584
        %10031 = vmatpush.bf16.msra.mxu0 %v8568
        %10032 = vmatpush.bf16.msra.mxu0 %v8552
        %10033 = vmatmul.bf16.gmra.mxu0 %v3777
        %v10034 = vpop.f32.mrf.mxu0
        %v10035 = vadd.f32 %v10022, %v10034
        %v10036 = vpop.f32.mrf.mxu0
        %10037 = vdwg.mxu0
        %10038 = vmatpush.bf16.msra.mxu0 %v8792
        %10039 = vmatpush.bf16.msra.mxu0 %v8776
        %10040 = vmatpush.bf16.msra.mxu0 %v8760
        %10041 = vmatpush.bf16.msra.mxu0 %v8744
        %10042 = vmatpush.bf16.msra.mxu0 %v8728
        %10043 = vmatpush.bf16.msra.mxu0 %v8712
        %10044 = vmatpush.bf16.msra.mxu0 %v8696
        %10045 = vmatpush.bf16.msra.mxu0 %v8680
        %10046 = vmatmul.bf16.gmra.mxu0 %v3778
        %v10047 = vpop.f32.mrf.mxu0
        %v10048 = vadd.f32 %v10035, %v10047
        %v10049 = vpop.f32.mrf.mxu0
        %10050 = vdwg.mxu0
        %10051 = vmatpush.bf16.msra.mxu0 %v8920
        %10052 = vmatpush.bf16.msra.mxu0 %v8904
        %10053 = vmatpush.bf16.msra.mxu0 %v8888
        %10054 = vmatpush.bf16.msra.mxu0 %v8872
        %10055 = vmatpush.bf16.msra.mxu0 %v8856
        %10056 = vmatpush.bf16.msra.mxu0 %v8840
        %10057 = vmatpush.bf16.msra.mxu0 %v8824
        %10058 = vmatpush.bf16.msra.mxu0 %v8808
        %10059 = vmatmul.bf16.gmra.mxu0 %v3779
        %v10060 = vpop.f32.mrf.mxu0
        %v10061 = vadd.f32 %v10048, %v10060
        %v10062 = vpop.f32.mrf.mxu0
        %10063 = vdwg.mxu0
        %10064 = vmatpush.bf16.msra.mxu0 %v8025
        %10065 = vmatpush.bf16.msra.mxu0 %v8009
        %10066 = vmatpush.bf16.msra.mxu0 %v7993
        %10067 = vmatpush.bf16.msra.mxu0 %v7977
        %10068 = vmatpush.bf16.msra.mxu0 %v7961
        %10069 = vmatpush.bf16.msra.mxu0 %v7945
        %10070 = vmatpush.bf16.msra.mxu0 %v7929
        %10071 = vmatpush.bf16.msra.mxu0 %v7913
        %10072 = vmatmul.bf16.gmra.mxu0 %v3772
        %v10073 = vpop.f32.mrf.mxu0
        %v10074 = vadd.f32 %v4809, %v10073
        %v10075 = vpop.f32.mrf.mxu0
        %10076 = vdwg.mxu0
        %10077 = vmatpush.bf16.msra.mxu0 %v8153
        %10078 = vmatpush.bf16.msra.mxu0 %v8137
        %10079 = vmatpush.bf16.msra.mxu0 %v8121
        %10080 = vmatpush.bf16.msra.mxu0 %v8105
        %10081 = vmatpush.bf16.msra.mxu0 %v8089
        %10082 = vmatpush.bf16.msra.mxu0 %v8073
        %10083 = vmatpush.bf16.msra.mxu0 %v8057
        %10084 = vmatpush.bf16.msra.mxu0 %v8041
        %10085 = vmatmul.bf16.gmra.mxu0 %v3773
        %v10086 = vpop.f32.mrf.mxu0
        %v10087 = vadd.f32 %v10074, %v10086
        %v10088 = vpop.f32.mrf.mxu0
        %10089 = vdwg.mxu0
        %10090 = vmatpush.bf16.msra.mxu0 %v8281
        %10091 = vmatpush.bf16.msra.mxu0 %v8265
        %10092 = vmatpush.bf16.msra.mxu0 %v8249
        %10093 = vmatpush.bf16.msra.mxu0 %v8233
        %10094 = vmatpush.bf16.msra.mxu0 %v8217
        %10095 = vmatpush.bf16.msra.mxu0 %v8201
        %10096 = vmatpush.bf16.msra.mxu0 %v8185
        %10097 = vmatpush.bf16.msra.mxu0 %v8169
        %10098 = vmatmul.bf16.gmra.mxu0 %v3774
        %v10099 = vpop.f32.mrf.mxu0
        %v10100 = vadd.f32 %v10087, %v10099
        %v10101 = vpop.f32.mrf.mxu0
        %10102 = vdwg.mxu0
        %10103 = vmatpush.bf16.msra.mxu0 %v8409
        %10104 = vmatpush.bf16.msra.mxu0 %v8393
        %10105 = vmatpush.bf16.msra.mxu0 %v8377
        %10106 = vmatpush.bf16.msra.mxu0 %v8361
        %10107 = vmatpush.bf16.msra.mxu0 %v8345
        %10108 = vmatpush.bf16.msra.mxu0 %v8329
        %10109 = vmatpush.bf16.msra.mxu0 %v8313
        %10110 = vmatpush.bf16.msra.mxu0 %v8297
        %10111 = vmatmul.bf16.gmra.mxu0 %v3775
        %v10112 = vpop.f32.mrf.mxu0
        %v10113 = vadd.f32 %v10100, %v10112
        %v10114 = vpop.f32.mrf.mxu0
        %10115 = vdwg.mxu0
        %10116 = vmatpush.bf16.msra.mxu0 %v8537
        %10117 = vmatpush.bf16.msra.mxu0 %v8521
        %10118 = vmatpush.bf16.msra.mxu0 %v8505
        %10119 = vmatpush.bf16.msra.mxu0 %v8489
        %10120 = vmatpush.bf16.msra.mxu0 %v8473
        %10121 = vmatpush.bf16.msra.mxu0 %v8457
        %10122 = vmatpush.bf16.msra.mxu0 %v8441
        %10123 = vmatpush.bf16.msra.mxu0 %v8425
        %10124 = vmatmul.bf16.gmra.mxu0 %v3776
        %v10125 = vpop.f32.mrf.mxu0
        %v10126 = vadd.f32 %v10113, %v10125
        %v10127 = vpop.f32.mrf.mxu0
        %10128 = vdwg.mxu0
        %10129 = vmatpush.bf16.msra.mxu0 %v8665
        %10130 = vmatpush.bf16.msra.mxu0 %v8649
        %10131 = vmatpush.bf16.msra.mxu0 %v8633
        %10132 = vmatpush.bf16.msra.mxu0 %v8617
        %10133 = vmatpush.bf16.msra.mxu0 %v8601
        %10134 = vmatpush.bf16.msra.mxu0 %v8585
        %10135 = vmatpush.bf16.msra.mxu0 %v8569
        %10136 = vmatpush.bf16.msra.mxu0 %v8553
        %10137 = vmatmul.bf16.gmra.mxu0 %v3777
        %v10138 = vpop.f32.mrf.mxu0
        %v10139 = vadd.f32 %v10126, %v10138
        %v10140 = vpop.f32.mrf.mxu0
        %10141 = vdwg.mxu0
        %10142 = vmatpush.bf16.msra.mxu0 %v8793
        %10143 = vmatpush.bf16.msra.mxu0 %v8777
        %10144 = vmatpush.bf16.msra.mxu0 %v8761
        %10145 = vmatpush.bf16.msra.mxu0 %v8745
        %10146 = vmatpush.bf16.msra.mxu0 %v8729
        %10147 = vmatpush.bf16.msra.mxu0 %v8713
        %10148 = vmatpush.bf16.msra.mxu0 %v8697
        %10149 = vmatpush.bf16.msra.mxu0 %v8681
        %10150 = vmatmul.bf16.gmra.mxu0 %v3778
        %v10151 = vpop.f32.mrf.mxu0
        %v10152 = vadd.f32 %v10139, %v10151
        %v10153 = vpop.f32.mrf.mxu0
        %10154 = vdwg.mxu0
        %10155 = vmatpush.bf16.msra.mxu0 %v8921
        %10156 = vmatpush.bf16.msra.mxu0 %v8905
        %10157 = vmatpush.bf16.msra.mxu0 %v8889
        %10158 = vmatpush.bf16.msra.mxu0 %v8873
        %10159 = vmatpush.bf16.msra.mxu0 %v8857
        %10160 = vmatpush.bf16.msra.mxu0 %v8841
        %10161 = vmatpush.bf16.msra.mxu0 %v8825
        %10162 = vmatpush.bf16.msra.mxu0 %v8809
        %10163 = vmatmul.bf16.gmra.mxu0 %v3779
        %v10164 = vpop.f32.mrf.mxu0
        %v10165 = vadd.f32 %v10152, %v10164
        %v10166 = vpop.f32.mrf.mxu0
        %10167 = vdwg.mxu0
        %10168 = vmatpush.bf16.msra.mxu0 %v8026
        %10169 = vmatpush.bf16.msra.mxu0 %v8010
        %10170 = vmatpush.bf16.msra.mxu0 %v7994
        %10171 = vmatpush.bf16.msra.mxu0 %v7978
        %10172 = vmatpush.bf16.msra.mxu0 %v7962
        %10173 = vmatpush.bf16.msra.mxu0 %v7946
        %10174 = vmatpush.bf16.msra.mxu0 %v7930
        %10175 = vmatpush.bf16.msra.mxu0 %v7914
        %10176 = vmatmul.bf16.gmra.mxu0 %v3772
        %v10177 = vpop.f32.mrf.mxu0
        %v10178 = vadd.f32 %v4810, %v10177
        %v10179 = vpop.f32.mrf.mxu0
        %10180 = vdwg.mxu0
        %10181 = vmatpush.bf16.msra.mxu0 %v8154
        %10182 = vmatpush.bf16.msra.mxu0 %v8138
        %10183 = vmatpush.bf16.msra.mxu0 %v8122
        %10184 = vmatpush.bf16.msra.mxu0 %v8106
        %10185 = vmatpush.bf16.msra.mxu0 %v8090
        %10186 = vmatpush.bf16.msra.mxu0 %v8074
        %10187 = vmatpush.bf16.msra.mxu0 %v8058
        %10188 = vmatpush.bf16.msra.mxu0 %v8042
        %10189 = vmatmul.bf16.gmra.mxu0 %v3773
        %v10190 = vpop.f32.mrf.mxu0
        %v10191 = vadd.f32 %v10178, %v10190
        %v10192 = vpop.f32.mrf.mxu0
        %10193 = vdwg.mxu0
        %10194 = vmatpush.bf16.msra.mxu0 %v8282
        %10195 = vmatpush.bf16.msra.mxu0 %v8266
        %10196 = vmatpush.bf16.msra.mxu0 %v8250
        %10197 = vmatpush.bf16.msra.mxu0 %v8234
        %10198 = vmatpush.bf16.msra.mxu0 %v8218
        %10199 = vmatpush.bf16.msra.mxu0 %v8202
        %10200 = vmatpush.bf16.msra.mxu0 %v8186
        %10201 = vmatpush.bf16.msra.mxu0 %v8170
        %10202 = vmatmul.bf16.gmra.mxu0 %v3774
        %v10203 = vpop.f32.mrf.mxu0
        %v10204 = vadd.f32 %v10191, %v10203
        %v10205 = vpop.f32.mrf.mxu0
        %10206 = vdwg.mxu0
        %10207 = vmatpush.bf16.msra.mxu0 %v8410
        %10208 = vmatpush.bf16.msra.mxu0 %v8394
        %10209 = vmatpush.bf16.msra.mxu0 %v8378
        %10210 = vmatpush.bf16.msra.mxu0 %v8362
        %10211 = vmatpush.bf16.msra.mxu0 %v8346
        %10212 = vmatpush.bf16.msra.mxu0 %v8330
        %10213 = vmatpush.bf16.msra.mxu0 %v8314
        %10214 = vmatpush.bf16.msra.mxu0 %v8298
        %10215 = vmatmul.bf16.gmra.mxu0 %v3775
        %v10216 = vpop.f32.mrf.mxu0
        %v10217 = vadd.f32 %v10204, %v10216
        %v10218 = vpop.f32.mrf.mxu0
        %10219 = vdwg.mxu0
        %10220 = vmatpush.bf16.msra.mxu0 %v8538
        %10221 = vmatpush.bf16.msra.mxu0 %v8522
        %10222 = vmatpush.bf16.msra.mxu0 %v8506
        %10223 = vmatpush.bf16.msra.mxu0 %v8490
        %10224 = vmatpush.bf16.msra.mxu0 %v8474
        %10225 = vmatpush.bf16.msra.mxu0 %v8458
        %10226 = vmatpush.bf16.msra.mxu0 %v8442
        %10227 = vmatpush.bf16.msra.mxu0 %v8426
        %10228 = vmatmul.bf16.gmra.mxu0 %v3776
        %v10229 = vpop.f32.mrf.mxu0
        %v10230 = vadd.f32 %v10217, %v10229
        %v10231 = vpop.f32.mrf.mxu0
        %10232 = vdwg.mxu0
        %10233 = vmatpush.bf16.msra.mxu0 %v8666
        %10234 = vmatpush.bf16.msra.mxu0 %v8650
        %10235 = vmatpush.bf16.msra.mxu0 %v8634
        %10236 = vmatpush.bf16.msra.mxu0 %v8618
        %10237 = vmatpush.bf16.msra.mxu0 %v8602
        %10238 = vmatpush.bf16.msra.mxu0 %v8586
        %10239 = vmatpush.bf16.msra.mxu0 %v8570
        %10240 = vmatpush.bf16.msra.mxu0 %v8554
        %10241 = vmatmul.bf16.gmra.mxu0 %v3777
        %v10242 = vpop.f32.mrf.mxu0
        %v10243 = vadd.f32 %v10230, %v10242
        %v10244 = vpop.f32.mrf.mxu0
        %10245 = vdwg.mxu0
        %10246 = vmatpush.bf16.msra.mxu0 %v8794
        %10247 = vmatpush.bf16.msra.mxu0 %v8778
        %10248 = vmatpush.bf16.msra.mxu0 %v8762
        %10249 = vmatpush.bf16.msra.mxu0 %v8746
        %10250 = vmatpush.bf16.msra.mxu0 %v8730
        %10251 = vmatpush.bf16.msra.mxu0 %v8714
        %10252 = vmatpush.bf16.msra.mxu0 %v8698
        %10253 = vmatpush.bf16.msra.mxu0 %v8682
        %10254 = vmatmul.bf16.gmra.mxu0 %v3778
        %v10255 = vpop.f32.mrf.mxu0
        %v10256 = vadd.f32 %v10243, %v10255
        %v10257 = vpop.f32.mrf.mxu0
        %10258 = vdwg.mxu0
        %10259 = vmatpush.bf16.msra.mxu0 %v8922
        %10260 = vmatpush.bf16.msra.mxu0 %v8906
        %10261 = vmatpush.bf16.msra.mxu0 %v8890
        %10262 = vmatpush.bf16.msra.mxu0 %v8874
        %10263 = vmatpush.bf16.msra.mxu0 %v8858
        %10264 = vmatpush.bf16.msra.mxu0 %v8842
        %10265 = vmatpush.bf16.msra.mxu0 %v8826
        %10266 = vmatpush.bf16.msra.mxu0 %v8810
        %10267 = vmatmul.bf16.gmra.mxu0 %v3779
        %v10268 = vpop.f32.mrf.mxu0
        %v10269 = vadd.f32 %v10256, %v10268
        %v10270 = vpop.f32.mrf.mxu0
        %10271 = vdwg.mxu0
        %10272 = vmatpush.bf16.msra.mxu0 %v8027
        %10273 = vmatpush.bf16.msra.mxu0 %v8011
        %10274 = vmatpush.bf16.msra.mxu0 %v7995
        %10275 = vmatpush.bf16.msra.mxu0 %v7979
        %10276 = vmatpush.bf16.msra.mxu0 %v7963
        %10277 = vmatpush.bf16.msra.mxu0 %v7947
        %10278 = vmatpush.bf16.msra.mxu0 %v7931
        %10279 = vmatpush.bf16.msra.mxu0 %v7915
        %10280 = vmatmul.bf16.gmra.mxu0 %v3772
        %v10281 = vpop.f32.mrf.mxu0
        %v10282 = vadd.f32 %v4811, %v10281
        %v10283 = vpop.f32.mrf.mxu0
        %10284 = vdwg.mxu0
        %10285 = vmatpush.bf16.msra.mxu0 %v8155
        %10286 = vmatpush.bf16.msra.mxu0 %v8139
        %10287 = vmatpush.bf16.msra.mxu0 %v8123
        %10288 = vmatpush.bf16.msra.mxu0 %v8107
        %10289 = vmatpush.bf16.msra.mxu0 %v8091
        %10290 = vmatpush.bf16.msra.mxu0 %v8075
        %10291 = vmatpush.bf16.msra.mxu0 %v8059
        %10292 = vmatpush.bf16.msra.mxu0 %v8043
        %10293 = vmatmul.bf16.gmra.mxu0 %v3773
        %v10294 = vpop.f32.mrf.mxu0
        %v10295 = vadd.f32 %v10282, %v10294
        %v10296 = vpop.f32.mrf.mxu0
        %10297 = vdwg.mxu0
        %10298 = vmatpush.bf16.msra.mxu0 %v8283
        %10299 = vmatpush.bf16.msra.mxu0 %v8267
        %10300 = vmatpush.bf16.msra.mxu0 %v8251
        %10301 = vmatpush.bf16.msra.mxu0 %v8235
        %10302 = vmatpush.bf16.msra.mxu0 %v8219
        %10303 = vmatpush.bf16.msra.mxu0 %v8203
        %10304 = vmatpush.bf16.msra.mxu0 %v8187
        %10305 = vmatpush.bf16.msra.mxu0 %v8171
        %10306 = vmatmul.bf16.gmra.mxu0 %v3774
        %v10307 = vpop.f32.mrf.mxu0
        %v10308 = vadd.f32 %v10295, %v10307
        %v10309 = vpop.f32.mrf.mxu0
        %10310 = vdwg.mxu0
        %10311 = vmatpush.bf16.msra.mxu0 %v8411
        %10312 = vmatpush.bf16.msra.mxu0 %v8395
        %10313 = vmatpush.bf16.msra.mxu0 %v8379
        %10314 = vmatpush.bf16.msra.mxu0 %v8363
        %10315 = vmatpush.bf16.msra.mxu0 %v8347
        %10316 = vmatpush.bf16.msra.mxu0 %v8331
        %10317 = vmatpush.bf16.msra.mxu0 %v8315
        %10318 = vmatpush.bf16.msra.mxu0 %v8299
        %10319 = vmatmul.bf16.gmra.mxu0 %v3775
        %v10320 = vpop.f32.mrf.mxu0
        %v10321 = vadd.f32 %v10308, %v10320
        %v10322 = vpop.f32.mrf.mxu0
        %10323 = vdwg.mxu0
        %10324 = vmatpush.bf16.msra.mxu0 %v8539
        %10325 = vmatpush.bf16.msra.mxu0 %v8523
        %10326 = vmatpush.bf16.msra.mxu0 %v8507
        %10327 = vmatpush.bf16.msra.mxu0 %v8491
        %10328 = vmatpush.bf16.msra.mxu0 %v8475
        %10329 = vmatpush.bf16.msra.mxu0 %v8459
        %10330 = vmatpush.bf16.msra.mxu0 %v8443
        %10331 = vmatpush.bf16.msra.mxu0 %v8427
        %10332 = vmatmul.bf16.gmra.mxu0 %v3776
        %v10333 = vpop.f32.mrf.mxu0
        %v10334 = vadd.f32 %v10321, %v10333
        %v10335 = vpop.f32.mrf.mxu0
        %10336 = vdwg.mxu0
        %10337 = vmatpush.bf16.msra.mxu0 %v8667
        %10338 = vmatpush.bf16.msra.mxu0 %v8651
        %10339 = vmatpush.bf16.msra.mxu0 %v8635
        %10340 = vmatpush.bf16.msra.mxu0 %v8619
        %10341 = vmatpush.bf16.msra.mxu0 %v8603
        %10342 = vmatpush.bf16.msra.mxu0 %v8587
        %10343 = vmatpush.bf16.msra.mxu0 %v8571
        %10344 = vmatpush.bf16.msra.mxu0 %v8555
        %10345 = vmatmul.bf16.gmra.mxu0 %v3777
        %v10346 = vpop.f32.mrf.mxu0
        %v10347 = vadd.f32 %v10334, %v10346
        %v10348 = vpop.f32.mrf.mxu0
        %10349 = vdwg.mxu0
        %10350 = vmatpush.bf16.msra.mxu0 %v8795
        %10351 = vmatpush.bf16.msra.mxu0 %v8779
        %10352 = vmatpush.bf16.msra.mxu0 %v8763
        %10353 = vmatpush.bf16.msra.mxu0 %v8747
        %10354 = vmatpush.bf16.msra.mxu0 %v8731
        %10355 = vmatpush.bf16.msra.mxu0 %v8715
        %10356 = vmatpush.bf16.msra.mxu0 %v8699
        %10357 = vmatpush.bf16.msra.mxu0 %v8683
        %10358 = vmatmul.bf16.gmra.mxu0 %v3778
        %v10359 = vpop.f32.mrf.mxu0
        %v10360 = vadd.f32 %v10347, %v10359
        %v10361 = vpop.f32.mrf.mxu0
        %10362 = vdwg.mxu0
        %10363 = vmatpush.bf16.msra.mxu0 %v8923
        %10364 = vmatpush.bf16.msra.mxu0 %v8907
        %10365 = vmatpush.bf16.msra.mxu0 %v8891
        %10366 = vmatpush.bf16.msra.mxu0 %v8875
        %10367 = vmatpush.bf16.msra.mxu0 %v8859
        %10368 = vmatpush.bf16.msra.mxu0 %v8843
        %10369 = vmatpush.bf16.msra.mxu0 %v8827
        %10370 = vmatpush.bf16.msra.mxu0 %v8811
        %10371 = vmatmul.bf16.gmra.mxu0 %v3779
        %v10372 = vpop.f32.mrf.mxu0
        %v10373 = vadd.f32 %v10360, %v10372
        %v10374 = vpop.f32.mrf.mxu0
        %10375 = vdwg.mxu0
        %10376 = vmatpush.bf16.msra.mxu0 %v8028
        %10377 = vmatpush.bf16.msra.mxu0 %v8012
        %10378 = vmatpush.bf16.msra.mxu0 %v7996
        %10379 = vmatpush.bf16.msra.mxu0 %v7980
        %10380 = vmatpush.bf16.msra.mxu0 %v7964
        %10381 = vmatpush.bf16.msra.mxu0 %v7948
        %10382 = vmatpush.bf16.msra.mxu0 %v7932
        %10383 = vmatpush.bf16.msra.mxu0 %v7916
        %10384 = vmatmul.bf16.gmra.mxu0 %v3772
        %v10385 = vpop.f32.mrf.mxu0
        %v10386 = vadd.f32 %v4812, %v10385
        %v10387 = vpop.f32.mrf.mxu0
        %10388 = vdwg.mxu0
        %10389 = vmatpush.bf16.msra.mxu0 %v8156
        %10390 = vmatpush.bf16.msra.mxu0 %v8140
        %10391 = vmatpush.bf16.msra.mxu0 %v8124
        %10392 = vmatpush.bf16.msra.mxu0 %v8108
        %10393 = vmatpush.bf16.msra.mxu0 %v8092
        %10394 = vmatpush.bf16.msra.mxu0 %v8076
        %10395 = vmatpush.bf16.msra.mxu0 %v8060
        %10396 = vmatpush.bf16.msra.mxu0 %v8044
        %10397 = vmatmul.bf16.gmra.mxu0 %v3773
        %v10398 = vpop.f32.mrf.mxu0
        %v10399 = vadd.f32 %v10386, %v10398
        %v10400 = vpop.f32.mrf.mxu0
        %10401 = vdwg.mxu0
        %10402 = vmatpush.bf16.msra.mxu0 %v8284
        %10403 = vmatpush.bf16.msra.mxu0 %v8268
        %10404 = vmatpush.bf16.msra.mxu0 %v8252
        %10405 = vmatpush.bf16.msra.mxu0 %v8236
        %10406 = vmatpush.bf16.msra.mxu0 %v8220
        %10407 = vmatpush.bf16.msra.mxu0 %v8204
        %10408 = vmatpush.bf16.msra.mxu0 %v8188
        %10409 = vmatpush.bf16.msra.mxu0 %v8172
        %10410 = vmatmul.bf16.gmra.mxu0 %v3774
        %v10411 = vpop.f32.mrf.mxu0
        %v10412 = vadd.f32 %v10399, %v10411
        %v10413 = vpop.f32.mrf.mxu0
        %10414 = vdwg.mxu0
        %10415 = vmatpush.bf16.msra.mxu0 %v8412
        %10416 = vmatpush.bf16.msra.mxu0 %v8396
        %10417 = vmatpush.bf16.msra.mxu0 %v8380
        %10418 = vmatpush.bf16.msra.mxu0 %v8364
        %10419 = vmatpush.bf16.msra.mxu0 %v8348
        %10420 = vmatpush.bf16.msra.mxu0 %v8332
        %10421 = vmatpush.bf16.msra.mxu0 %v8316
        %10422 = vmatpush.bf16.msra.mxu0 %v8300
        %10423 = vmatmul.bf16.gmra.mxu0 %v3775
        %v10424 = vpop.f32.mrf.mxu0
        %v10425 = vadd.f32 %v10412, %v10424
        %v10426 = vpop.f32.mrf.mxu0
        %10427 = vdwg.mxu0
        %10428 = vmatpush.bf16.msra.mxu0 %v8540
        %10429 = vmatpush.bf16.msra.mxu0 %v8524
        %10430 = vmatpush.bf16.msra.mxu0 %v8508
        %10431 = vmatpush.bf16.msra.mxu0 %v8492
        %10432 = vmatpush.bf16.msra.mxu0 %v8476
        %10433 = vmatpush.bf16.msra.mxu0 %v8460
        %10434 = vmatpush.bf16.msra.mxu0 %v8444
        %10435 = vmatpush.bf16.msra.mxu0 %v8428
        %10436 = vmatmul.bf16.gmra.mxu0 %v3776
        %v10437 = vpop.f32.mrf.mxu0
        %v10438 = vadd.f32 %v10425, %v10437
        %v10439 = vpop.f32.mrf.mxu0
        %10440 = vdwg.mxu0
        %10441 = vmatpush.bf16.msra.mxu0 %v8668
        %10442 = vmatpush.bf16.msra.mxu0 %v8652
        %10443 = vmatpush.bf16.msra.mxu0 %v8636
        %10444 = vmatpush.bf16.msra.mxu0 %v8620
        %10445 = vmatpush.bf16.msra.mxu0 %v8604
        %10446 = vmatpush.bf16.msra.mxu0 %v8588
        %10447 = vmatpush.bf16.msra.mxu0 %v8572
        %10448 = vmatpush.bf16.msra.mxu0 %v8556
        %10449 = vmatmul.bf16.gmra.mxu0 %v3777
        %v10450 = vpop.f32.mrf.mxu0
        %v10451 = vadd.f32 %v10438, %v10450
        %v10452 = vpop.f32.mrf.mxu0
        %10453 = vdwg.mxu0
        %10454 = vmatpush.bf16.msra.mxu0 %v8796
        %10455 = vmatpush.bf16.msra.mxu0 %v8780
        %10456 = vmatpush.bf16.msra.mxu0 %v8764
        %10457 = vmatpush.bf16.msra.mxu0 %v8748
        %10458 = vmatpush.bf16.msra.mxu0 %v8732
        %10459 = vmatpush.bf16.msra.mxu0 %v8716
        %10460 = vmatpush.bf16.msra.mxu0 %v8700
        %10461 = vmatpush.bf16.msra.mxu0 %v8684
        %10462 = vmatmul.bf16.gmra.mxu0 %v3778
        %v10463 = vpop.f32.mrf.mxu0
        %v10464 = vadd.f32 %v10451, %v10463
        %v10465 = vpop.f32.mrf.mxu0
        %10466 = vdwg.mxu0
        %10467 = vmatpush.bf16.msra.mxu0 %v8924
        %10468 = vmatpush.bf16.msra.mxu0 %v8908
        %10469 = vmatpush.bf16.msra.mxu0 %v8892
        %10470 = vmatpush.bf16.msra.mxu0 %v8876
        %10471 = vmatpush.bf16.msra.mxu0 %v8860
        %10472 = vmatpush.bf16.msra.mxu0 %v8844
        %10473 = vmatpush.bf16.msra.mxu0 %v8828
        %10474 = vmatpush.bf16.msra.mxu0 %v8812
        %10475 = vmatmul.bf16.gmra.mxu0 %v3779
        %v10476 = vpop.f32.mrf.mxu0
        %v10477 = vadd.f32 %v10464, %v10476
        %v10478 = vpop.f32.mrf.mxu0
        %10479 = vdwg.mxu0
        %10480 = vmatpush.bf16.msra.mxu0 %v8029
        %10481 = vmatpush.bf16.msra.mxu0 %v8013
        %10482 = vmatpush.bf16.msra.mxu0 %v7997
        %10483 = vmatpush.bf16.msra.mxu0 %v7981
        %10484 = vmatpush.bf16.msra.mxu0 %v7965
        %10485 = vmatpush.bf16.msra.mxu0 %v7949
        %10486 = vmatpush.bf16.msra.mxu0 %v7933
        %10487 = vmatpush.bf16.msra.mxu0 %v7917
        %10488 = vmatmul.bf16.gmra.mxu0 %v3772
        %v10489 = vpop.f32.mrf.mxu0
        %v10490 = vadd.f32 %v4813, %v10489
        %v10491 = vpop.f32.mrf.mxu0
        %10492 = vdwg.mxu0
        %10493 = vmatpush.bf16.msra.mxu0 %v8157
        %10494 = vmatpush.bf16.msra.mxu0 %v8141
        %10495 = vmatpush.bf16.msra.mxu0 %v8125
        %10496 = vmatpush.bf16.msra.mxu0 %v8109
        %10497 = vmatpush.bf16.msra.mxu0 %v8093
        %10498 = vmatpush.bf16.msra.mxu0 %v8077
        %10499 = vmatpush.bf16.msra.mxu0 %v8061
        %10500 = vmatpush.bf16.msra.mxu0 %v8045
        %10501 = vmatmul.bf16.gmra.mxu0 %v3773
        %v10502 = vpop.f32.mrf.mxu0
        %v10503 = vadd.f32 %v10490, %v10502
        %v10504 = vpop.f32.mrf.mxu0
        %10505 = vdwg.mxu0
        %10506 = vmatpush.bf16.msra.mxu0 %v8285
        %10507 = vmatpush.bf16.msra.mxu0 %v8269
        %10508 = vmatpush.bf16.msra.mxu0 %v8253
        %10509 = vmatpush.bf16.msra.mxu0 %v8237
        %10510 = vmatpush.bf16.msra.mxu0 %v8221
        %10511 = vmatpush.bf16.msra.mxu0 %v8205
        %10512 = vmatpush.bf16.msra.mxu0 %v8189
        %10513 = vmatpush.bf16.msra.mxu0 %v8173
        %10514 = vmatmul.bf16.gmra.mxu0 %v3774
        %v10515 = vpop.f32.mrf.mxu0
        %v10516 = vadd.f32 %v10503, %v10515
        %v10517 = vpop.f32.mrf.mxu0
        %10518 = vdwg.mxu0
        %10519 = vmatpush.bf16.msra.mxu0 %v8413
        %10520 = vmatpush.bf16.msra.mxu0 %v8397
        %10521 = vmatpush.bf16.msra.mxu0 %v8381
        %10522 = vmatpush.bf16.msra.mxu0 %v8365
        %10523 = vmatpush.bf16.msra.mxu0 %v8349
        %10524 = vmatpush.bf16.msra.mxu0 %v8333
        %10525 = vmatpush.bf16.msra.mxu0 %v8317
        %10526 = vmatpush.bf16.msra.mxu0 %v8301
        %10527 = vmatmul.bf16.gmra.mxu0 %v3775
        %v10528 = vpop.f32.mrf.mxu0
        %v10529 = vadd.f32 %v10516, %v10528
        %v10530 = vpop.f32.mrf.mxu0
        %10531 = vdwg.mxu0
        %10532 = vmatpush.bf16.msra.mxu0 %v8541
        %10533 = vmatpush.bf16.msra.mxu0 %v8525
        %10534 = vmatpush.bf16.msra.mxu0 %v8509
        %10535 = vmatpush.bf16.msra.mxu0 %v8493
        %10536 = vmatpush.bf16.msra.mxu0 %v8477
        %10537 = vmatpush.bf16.msra.mxu0 %v8461
        %10538 = vmatpush.bf16.msra.mxu0 %v8445
        %10539 = vmatpush.bf16.msra.mxu0 %v8429
        %10540 = vmatmul.bf16.gmra.mxu0 %v3776
        %v10541 = vpop.f32.mrf.mxu0
        %v10542 = vadd.f32 %v10529, %v10541
        %v10543 = vpop.f32.mrf.mxu0
        %10544 = vdwg.mxu0
        %10545 = vmatpush.bf16.msra.mxu0 %v8669
        %10546 = vmatpush.bf16.msra.mxu0 %v8653
        %10547 = vmatpush.bf16.msra.mxu0 %v8637
        %10548 = vmatpush.bf16.msra.mxu0 %v8621
        %10549 = vmatpush.bf16.msra.mxu0 %v8605
        %10550 = vmatpush.bf16.msra.mxu0 %v8589
        %10551 = vmatpush.bf16.msra.mxu0 %v8573
        %10552 = vmatpush.bf16.msra.mxu0 %v8557
        %10553 = vmatmul.bf16.gmra.mxu0 %v3777
        %v10554 = vpop.f32.mrf.mxu0
        %v10555 = vadd.f32 %v10542, %v10554
        %v10556 = vpop.f32.mrf.mxu0
        %10557 = vdwg.mxu0
        %10558 = vmatpush.bf16.msra.mxu0 %v8797
        %10559 = vmatpush.bf16.msra.mxu0 %v8781
        %10560 = vmatpush.bf16.msra.mxu0 %v8765
        %10561 = vmatpush.bf16.msra.mxu0 %v8749
        %10562 = vmatpush.bf16.msra.mxu0 %v8733
        %10563 = vmatpush.bf16.msra.mxu0 %v8717
        %10564 = vmatpush.bf16.msra.mxu0 %v8701
        %10565 = vmatpush.bf16.msra.mxu0 %v8685
        %10566 = vmatmul.bf16.gmra.mxu0 %v3778
        %v10567 = vpop.f32.mrf.mxu0
        %v10568 = vadd.f32 %v10555, %v10567
        %v10569 = vpop.f32.mrf.mxu0
        %10570 = vdwg.mxu0
        %10571 = vmatpush.bf16.msra.mxu0 %v8925
        %10572 = vmatpush.bf16.msra.mxu0 %v8909
        %10573 = vmatpush.bf16.msra.mxu0 %v8893
        %10574 = vmatpush.bf16.msra.mxu0 %v8877
        %10575 = vmatpush.bf16.msra.mxu0 %v8861
        %10576 = vmatpush.bf16.msra.mxu0 %v8845
        %10577 = vmatpush.bf16.msra.mxu0 %v8829
        %10578 = vmatpush.bf16.msra.mxu0 %v8813
        %10579 = vmatmul.bf16.gmra.mxu0 %v3779
        %v10580 = vpop.f32.mrf.mxu0
        %v10581 = vadd.f32 %v10568, %v10580
        %v10582 = vpop.f32.mrf.mxu0
        %10583 = vdwg.mxu0
        %10584 = vmatpush.bf16.msra.mxu0 %v8030
        %10585 = vmatpush.bf16.msra.mxu0 %v8014
        %10586 = vmatpush.bf16.msra.mxu0 %v7998
        %10587 = vmatpush.bf16.msra.mxu0 %v7982
        %10588 = vmatpush.bf16.msra.mxu0 %v7966
        %10589 = vmatpush.bf16.msra.mxu0 %v7950
        %10590 = vmatpush.bf16.msra.mxu0 %v7934
        %10591 = vmatpush.bf16.msra.mxu0 %v7918
        %10592 = vmatmul.bf16.gmra.mxu0 %v3772
        %v10593 = vpop.f32.mrf.mxu0
        %v10594 = vadd.f32 %v4814, %v10593
        %v10595 = vpop.f32.mrf.mxu0
        %10596 = vdwg.mxu0
        %10597 = vmatpush.bf16.msra.mxu0 %v8158
        %10598 = vmatpush.bf16.msra.mxu0 %v8142
        %10599 = vmatpush.bf16.msra.mxu0 %v8126
        %10600 = vmatpush.bf16.msra.mxu0 %v8110
        %10601 = vmatpush.bf16.msra.mxu0 %v8094
        %10602 = vmatpush.bf16.msra.mxu0 %v8078
        %10603 = vmatpush.bf16.msra.mxu0 %v8062
        %10604 = vmatpush.bf16.msra.mxu0 %v8046
        %10605 = vmatmul.bf16.gmra.mxu0 %v3773
        %v10606 = vpop.f32.mrf.mxu0
        %v10607 = vadd.f32 %v10594, %v10606
        %v10608 = vpop.f32.mrf.mxu0
        %10609 = vdwg.mxu0
        %10610 = vmatpush.bf16.msra.mxu0 %v8286
        %10611 = vmatpush.bf16.msra.mxu0 %v8270
        %10612 = vmatpush.bf16.msra.mxu0 %v8254
        %10613 = vmatpush.bf16.msra.mxu0 %v8238
        %10614 = vmatpush.bf16.msra.mxu0 %v8222
        %10615 = vmatpush.bf16.msra.mxu0 %v8206
        %10616 = vmatpush.bf16.msra.mxu0 %v8190
        %10617 = vmatpush.bf16.msra.mxu0 %v8174
        %10618 = vmatmul.bf16.gmra.mxu0 %v3774
        %v10619 = vpop.f32.mrf.mxu0
        %v10620 = vadd.f32 %v10607, %v10619
        %v10621 = vpop.f32.mrf.mxu0
        %10622 = vdwg.mxu0
        %10623 = vmatpush.bf16.msra.mxu0 %v8414
        %10624 = vmatpush.bf16.msra.mxu0 %v8398
        %10625 = vmatpush.bf16.msra.mxu0 %v8382
        %10626 = vmatpush.bf16.msra.mxu0 %v8366
        %10627 = vmatpush.bf16.msra.mxu0 %v8350
        %10628 = vmatpush.bf16.msra.mxu0 %v8334
        %10629 = vmatpush.bf16.msra.mxu0 %v8318
        %10630 = vmatpush.bf16.msra.mxu0 %v8302
        %10631 = vmatmul.bf16.gmra.mxu0 %v3775
        %v10632 = vpop.f32.mrf.mxu0
        %v10633 = vadd.f32 %v10620, %v10632
        %v10634 = vpop.f32.mrf.mxu0
        %10635 = vdwg.mxu0
        %10636 = vmatpush.bf16.msra.mxu0 %v8542
        %10637 = vmatpush.bf16.msra.mxu0 %v8526
        %10638 = vmatpush.bf16.msra.mxu0 %v8510
        %10639 = vmatpush.bf16.msra.mxu0 %v8494
        %10640 = vmatpush.bf16.msra.mxu0 %v8478
        %10641 = vmatpush.bf16.msra.mxu0 %v8462
        %10642 = vmatpush.bf16.msra.mxu0 %v8446
        %10643 = vmatpush.bf16.msra.mxu0 %v8430
        %10644 = vmatmul.bf16.gmra.mxu0 %v3776
        %v10645 = vpop.f32.mrf.mxu0
        %v10646 = vadd.f32 %v10633, %v10645
        %v10647 = vpop.f32.mrf.mxu0
        %10648 = vdwg.mxu0
        %10649 = vmatpush.bf16.msra.mxu0 %v8670
        %10650 = vmatpush.bf16.msra.mxu0 %v8654
        %10651 = vmatpush.bf16.msra.mxu0 %v8638
        %10652 = vmatpush.bf16.msra.mxu0 %v8622
        %10653 = vmatpush.bf16.msra.mxu0 %v8606
        %10654 = vmatpush.bf16.msra.mxu0 %v8590
        %10655 = vmatpush.bf16.msra.mxu0 %v8574
        %10656 = vmatpush.bf16.msra.mxu0 %v8558
        %10657 = vmatmul.bf16.gmra.mxu0 %v3777
        %v10658 = vpop.f32.mrf.mxu0
        %v10659 = vadd.f32 %v10646, %v10658
        %v10660 = vpop.f32.mrf.mxu0
        %10661 = vdwg.mxu0
        %10662 = vmatpush.bf16.msra.mxu0 %v8798
        %10663 = vmatpush.bf16.msra.mxu0 %v8782
        %10664 = vmatpush.bf16.msra.mxu0 %v8766
        %10665 = vmatpush.bf16.msra.mxu0 %v8750
        %10666 = vmatpush.bf16.msra.mxu0 %v8734
        %10667 = vmatpush.bf16.msra.mxu0 %v8718
        %10668 = vmatpush.bf16.msra.mxu0 %v8702
        %10669 = vmatpush.bf16.msra.mxu0 %v8686
        %10670 = vmatmul.bf16.gmra.mxu0 %v3778
        %v10671 = vpop.f32.mrf.mxu0
        %v10672 = vadd.f32 %v10659, %v10671
        %v10673 = vpop.f32.mrf.mxu0
        %10674 = vdwg.mxu0
        %10675 = vmatpush.bf16.msra.mxu0 %v8926
        %10676 = vmatpush.bf16.msra.mxu0 %v8910
        %10677 = vmatpush.bf16.msra.mxu0 %v8894
        %10678 = vmatpush.bf16.msra.mxu0 %v8878
        %10679 = vmatpush.bf16.msra.mxu0 %v8862
        %10680 = vmatpush.bf16.msra.mxu0 %v8846
        %10681 = vmatpush.bf16.msra.mxu0 %v8830
        %10682 = vmatpush.bf16.msra.mxu0 %v8814
        %10683 = vmatmul.bf16.gmra.mxu0 %v3779
        %v10684 = vpop.f32.mrf.mxu0
        %v10685 = vadd.f32 %v10672, %v10684
        %v10686 = vpop.f32.mrf.mxu0
        %10687 = vdwg.mxu0
        %10688 = vmatpush.bf16.msra.mxu0 %v8031
        %10689 = vmatpush.bf16.msra.mxu0 %v8015
        %10690 = vmatpush.bf16.msra.mxu0 %v7999
        %10691 = vmatpush.bf16.msra.mxu0 %v7983
        %10692 = vmatpush.bf16.msra.mxu0 %v7967
        %10693 = vmatpush.bf16.msra.mxu0 %v7951
        %10694 = vmatpush.bf16.msra.mxu0 %v7935
        %10695 = vmatpush.bf16.msra.mxu0 %v7919
        %10696 = vmatmul.bf16.gmra.mxu0 %v3772
        %v10697 = vpop.f32.mrf.mxu0
        %v10698 = vadd.f32 %v4815, %v10697
        %v10699 = vpop.f32.mrf.mxu0
        %10700 = vdwg.mxu0
        %10701 = vmatpush.bf16.msra.mxu0 %v8159
        %10702 = vmatpush.bf16.msra.mxu0 %v8143
        %10703 = vmatpush.bf16.msra.mxu0 %v8127
        %10704 = vmatpush.bf16.msra.mxu0 %v8111
        %10705 = vmatpush.bf16.msra.mxu0 %v8095
        %10706 = vmatpush.bf16.msra.mxu0 %v8079
        %10707 = vmatpush.bf16.msra.mxu0 %v8063
        %10708 = vmatpush.bf16.msra.mxu0 %v8047
        %10709 = vmatmul.bf16.gmra.mxu0 %v3773
        %v10710 = vpop.f32.mrf.mxu0
        %v10711 = vadd.f32 %v10698, %v10710
        %v10712 = vpop.f32.mrf.mxu0
        %10713 = vdwg.mxu0
        %10714 = vmatpush.bf16.msra.mxu0 %v8287
        %10715 = vmatpush.bf16.msra.mxu0 %v8271
        %10716 = vmatpush.bf16.msra.mxu0 %v8255
        %10717 = vmatpush.bf16.msra.mxu0 %v8239
        %10718 = vmatpush.bf16.msra.mxu0 %v8223
        %10719 = vmatpush.bf16.msra.mxu0 %v8207
        %10720 = vmatpush.bf16.msra.mxu0 %v8191
        %10721 = vmatpush.bf16.msra.mxu0 %v8175
        %10722 = vmatmul.bf16.gmra.mxu0 %v3774
        %v10723 = vpop.f32.mrf.mxu0
        %v10724 = vadd.f32 %v10711, %v10723
        %v10725 = vpop.f32.mrf.mxu0
        %10726 = vdwg.mxu0
        %10727 = vmatpush.bf16.msra.mxu0 %v8415
        %10728 = vmatpush.bf16.msra.mxu0 %v8399
        %10729 = vmatpush.bf16.msra.mxu0 %v8383
        %10730 = vmatpush.bf16.msra.mxu0 %v8367
        %10731 = vmatpush.bf16.msra.mxu0 %v8351
        %10732 = vmatpush.bf16.msra.mxu0 %v8335
        %10733 = vmatpush.bf16.msra.mxu0 %v8319
        %10734 = vmatpush.bf16.msra.mxu0 %v8303
        %10735 = vmatmul.bf16.gmra.mxu0 %v3775
        %v10736 = vpop.f32.mrf.mxu0
        %v10737 = vadd.f32 %v10724, %v10736
        %v10738 = vpop.f32.mrf.mxu0
        %10739 = vdwg.mxu0
        %10740 = vmatpush.bf16.msra.mxu0 %v8543
        %10741 = vmatpush.bf16.msra.mxu0 %v8527
        %10742 = vmatpush.bf16.msra.mxu0 %v8511
        %10743 = vmatpush.bf16.msra.mxu0 %v8495
        %10744 = vmatpush.bf16.msra.mxu0 %v8479
        %10745 = vmatpush.bf16.msra.mxu0 %v8463
        %10746 = vmatpush.bf16.msra.mxu0 %v8447
        %10747 = vmatpush.bf16.msra.mxu0 %v8431
        %10748 = vmatmul.bf16.gmra.mxu0 %v3776
        %v10749 = vpop.f32.mrf.mxu0
        %v10750 = vadd.f32 %v10737, %v10749
        %v10751 = vpop.f32.mrf.mxu0
        %10752 = vdwg.mxu0
        %10753 = vmatpush.bf16.msra.mxu0 %v8671
        %10754 = vmatpush.bf16.msra.mxu0 %v8655
        %10755 = vmatpush.bf16.msra.mxu0 %v8639
        %10756 = vmatpush.bf16.msra.mxu0 %v8623
        %10757 = vmatpush.bf16.msra.mxu0 %v8607
        %10758 = vmatpush.bf16.msra.mxu0 %v8591
        %10759 = vmatpush.bf16.msra.mxu0 %v8575
        %10760 = vmatpush.bf16.msra.mxu0 %v8559
        %10761 = vmatmul.bf16.gmra.mxu0 %v3777
        %v10762 = vpop.f32.mrf.mxu0
        %v10763 = vadd.f32 %v10750, %v10762
        %v10764 = vpop.f32.mrf.mxu0
        %10765 = vdwg.mxu0
        %10766 = vmatpush.bf16.msra.mxu0 %v8799
        %10767 = vmatpush.bf16.msra.mxu0 %v8783
        %10768 = vmatpush.bf16.msra.mxu0 %v8767
        %10769 = vmatpush.bf16.msra.mxu0 %v8751
        %10770 = vmatpush.bf16.msra.mxu0 %v8735
        %10771 = vmatpush.bf16.msra.mxu0 %v8719
        %10772 = vmatpush.bf16.msra.mxu0 %v8703
        %10773 = vmatpush.bf16.msra.mxu0 %v8687
        %10774 = vmatmul.bf16.gmra.mxu0 %v3778
        %v10775 = vpop.f32.mrf.mxu0
        %v10776 = vadd.f32 %v10763, %v10775
        %v10777 = vpop.f32.mrf.mxu0
        %10778 = vdwg.mxu0
        %10779 = vmatpush.bf16.msra.mxu0 %v8927
        %10780 = vmatpush.bf16.msra.mxu0 %v8911
        %10781 = vmatpush.bf16.msra.mxu0 %v8895
        %10782 = vmatpush.bf16.msra.mxu0 %v8879
        %10783 = vmatpush.bf16.msra.mxu0 %v8863
        %10784 = vmatpush.bf16.msra.mxu0 %v8847
        %10785 = vmatpush.bf16.msra.mxu0 %v8831
        %10786 = vmatpush.bf16.msra.mxu0 %v8815
        %10787 = vmatmul.bf16.gmra.mxu0 %v3779
        %v10788 = vpop.f32.mrf.mxu0
        %v10789 = vadd.f32 %v10776, %v10788
        %v10790 = vpop.f32.mrf.mxu0
        %10791 = vdwg.mxu0
        %10792 = vmatpush.bf16.msra.mxu0 %v8032
        %10793 = vmatpush.bf16.msra.mxu0 %v8016
        %10794 = vmatpush.bf16.msra.mxu0 %v8000
        %10795 = vmatpush.bf16.msra.mxu0 %v7984
        %10796 = vmatpush.bf16.msra.mxu0 %v7968
        %10797 = vmatpush.bf16.msra.mxu0 %v7952
        %10798 = vmatpush.bf16.msra.mxu0 %v7936
        %10799 = vmatpush.bf16.msra.mxu0 %v7920
        %10800 = vmatmul.bf16.gmra.mxu0 %v3772
        %v10801 = vpop.f32.mrf.mxu0
        %v10802 = vadd.f32 %v4816, %v10801
        %v10803 = vpop.f32.mrf.mxu0
        %10804 = vdwg.mxu0
        %10805 = vmatpush.bf16.msra.mxu0 %v8160
        %10806 = vmatpush.bf16.msra.mxu0 %v8144
        %10807 = vmatpush.bf16.msra.mxu0 %v8128
        %10808 = vmatpush.bf16.msra.mxu0 %v8112
        %10809 = vmatpush.bf16.msra.mxu0 %v8096
        %10810 = vmatpush.bf16.msra.mxu0 %v8080
        %10811 = vmatpush.bf16.msra.mxu0 %v8064
        %10812 = vmatpush.bf16.msra.mxu0 %v8048
        %10813 = vmatmul.bf16.gmra.mxu0 %v3773
        %v10814 = vpop.f32.mrf.mxu0
        %v10815 = vadd.f32 %v10802, %v10814
        %v10816 = vpop.f32.mrf.mxu0
        %10817 = vdwg.mxu0
        %10818 = vmatpush.bf16.msra.mxu0 %v8288
        %10819 = vmatpush.bf16.msra.mxu0 %v8272
        %10820 = vmatpush.bf16.msra.mxu0 %v8256
        %10821 = vmatpush.bf16.msra.mxu0 %v8240
        %10822 = vmatpush.bf16.msra.mxu0 %v8224
        %10823 = vmatpush.bf16.msra.mxu0 %v8208
        %10824 = vmatpush.bf16.msra.mxu0 %v8192
        %10825 = vmatpush.bf16.msra.mxu0 %v8176
        %10826 = vmatmul.bf16.gmra.mxu0 %v3774
        %v10827 = vpop.f32.mrf.mxu0
        %v10828 = vadd.f32 %v10815, %v10827
        %v10829 = vpop.f32.mrf.mxu0
        %10830 = vdwg.mxu0
        %10831 = vmatpush.bf16.msra.mxu0 %v8416
        %10832 = vmatpush.bf16.msra.mxu0 %v8400
        %10833 = vmatpush.bf16.msra.mxu0 %v8384
        %10834 = vmatpush.bf16.msra.mxu0 %v8368
        %10835 = vmatpush.bf16.msra.mxu0 %v8352
        %10836 = vmatpush.bf16.msra.mxu0 %v8336
        %10837 = vmatpush.bf16.msra.mxu0 %v8320
        %10838 = vmatpush.bf16.msra.mxu0 %v8304
        %10839 = vmatmul.bf16.gmra.mxu0 %v3775
        %v10840 = vpop.f32.mrf.mxu0
        %v10841 = vadd.f32 %v10828, %v10840
        %v10842 = vpop.f32.mrf.mxu0
        %10843 = vdwg.mxu0
        %10844 = vmatpush.bf16.msra.mxu0 %v8544
        %10845 = vmatpush.bf16.msra.mxu0 %v8528
        %10846 = vmatpush.bf16.msra.mxu0 %v8512
        %10847 = vmatpush.bf16.msra.mxu0 %v8496
        %10848 = vmatpush.bf16.msra.mxu0 %v8480
        %10849 = vmatpush.bf16.msra.mxu0 %v8464
        %10850 = vmatpush.bf16.msra.mxu0 %v8448
        %10851 = vmatpush.bf16.msra.mxu0 %v8432
        %10852 = vmatmul.bf16.gmra.mxu0 %v3776
        %v10853 = vpop.f32.mrf.mxu0
        %v10854 = vadd.f32 %v10841, %v10853
        %v10855 = vpop.f32.mrf.mxu0
        %10856 = vdwg.mxu0
        %10857 = vmatpush.bf16.msra.mxu0 %v8672
        %10858 = vmatpush.bf16.msra.mxu0 %v8656
        %10859 = vmatpush.bf16.msra.mxu0 %v8640
        %10860 = vmatpush.bf16.msra.mxu0 %v8624
        %10861 = vmatpush.bf16.msra.mxu0 %v8608
        %10862 = vmatpush.bf16.msra.mxu0 %v8592
        %10863 = vmatpush.bf16.msra.mxu0 %v8576
        %10864 = vmatpush.bf16.msra.mxu0 %v8560
        %10865 = vmatmul.bf16.gmra.mxu0 %v3777
        %v10866 = vpop.f32.mrf.mxu0
        %v10867 = vadd.f32 %v10854, %v10866
        %v10868 = vpop.f32.mrf.mxu0
        %10869 = vdwg.mxu0
        %10870 = vmatpush.bf16.msra.mxu0 %v8800
        %10871 = vmatpush.bf16.msra.mxu0 %v8784
        %10872 = vmatpush.bf16.msra.mxu0 %v8768
        %10873 = vmatpush.bf16.msra.mxu0 %v8752
        %10874 = vmatpush.bf16.msra.mxu0 %v8736
        %10875 = vmatpush.bf16.msra.mxu0 %v8720
        %10876 = vmatpush.bf16.msra.mxu0 %v8704
        %10877 = vmatpush.bf16.msra.mxu0 %v8688
        %10878 = vmatmul.bf16.gmra.mxu0 %v3778
        %v10879 = vpop.f32.mrf.mxu0
        %v10880 = vadd.f32 %v10867, %v10879
        %v10881 = vpop.f32.mrf.mxu0
        %10882 = vdwg.mxu0
        %10883 = vmatpush.bf16.msra.mxu0 %v8928
        %10884 = vmatpush.bf16.msra.mxu0 %v8912
        %10885 = vmatpush.bf16.msra.mxu0 %v8896
        %10886 = vmatpush.bf16.msra.mxu0 %v8880
        %10887 = vmatpush.bf16.msra.mxu0 %v8864
        %10888 = vmatpush.bf16.msra.mxu0 %v8848
        %10889 = vmatpush.bf16.msra.mxu0 %v8832
        %10890 = vmatpush.bf16.msra.mxu0 %v8816
        %10891 = vmatmul.bf16.gmra.mxu0 %v3779
        %v10892 = vpop.f32.mrf.mxu0
        %v10893 = vadd.f32 %v10880, %v10892
        %v10894 = vpop.f32.mrf.mxu0
        %10895 = vdwg.mxu0
        %10896 = vmatpush.bf16.msra.mxu0 %v8033
        %10897 = vmatpush.bf16.msra.mxu0 %v8017
        %10898 = vmatpush.bf16.msra.mxu0 %v8001
        %10899 = vmatpush.bf16.msra.mxu0 %v7985
        %10900 = vmatpush.bf16.msra.mxu0 %v7969
        %10901 = vmatpush.bf16.msra.mxu0 %v7953
        %10902 = vmatpush.bf16.msra.mxu0 %v7937
        %10903 = vmatpush.bf16.msra.mxu0 %v7921
        %10904 = vmatmul.bf16.gmra.mxu0 %v3772
        %v10905 = vpop.f32.mrf.mxu0
        %v10906 = vadd.f32 %v4817, %v10905
        %v10907 = vpop.f32.mrf.mxu0
        %10908 = vdwg.mxu0
        %10909 = vmatpush.bf16.msra.mxu0 %v8161
        %10910 = vmatpush.bf16.msra.mxu0 %v8145
        %10911 = vmatpush.bf16.msra.mxu0 %v8129
        %10912 = vmatpush.bf16.msra.mxu0 %v8113
        %10913 = vmatpush.bf16.msra.mxu0 %v8097
        %10914 = vmatpush.bf16.msra.mxu0 %v8081
        %10915 = vmatpush.bf16.msra.mxu0 %v8065
        %10916 = vmatpush.bf16.msra.mxu0 %v8049
        %10917 = vmatmul.bf16.gmra.mxu0 %v3773
        %v10918 = vpop.f32.mrf.mxu0
        %v10919 = vadd.f32 %v10906, %v10918
        %v10920 = vpop.f32.mrf.mxu0
        %10921 = vdwg.mxu0
        %10922 = vmatpush.bf16.msra.mxu0 %v8289
        %10923 = vmatpush.bf16.msra.mxu0 %v8273
        %10924 = vmatpush.bf16.msra.mxu0 %v8257
        %10925 = vmatpush.bf16.msra.mxu0 %v8241
        %10926 = vmatpush.bf16.msra.mxu0 %v8225
        %10927 = vmatpush.bf16.msra.mxu0 %v8209
        %10928 = vmatpush.bf16.msra.mxu0 %v8193
        %10929 = vmatpush.bf16.msra.mxu0 %v8177
        %10930 = vmatmul.bf16.gmra.mxu0 %v3774
        %v10931 = vpop.f32.mrf.mxu0
        %v10932 = vadd.f32 %v10919, %v10931
        %v10933 = vpop.f32.mrf.mxu0
        %10934 = vdwg.mxu0
        %10935 = vmatpush.bf16.msra.mxu0 %v8417
        %10936 = vmatpush.bf16.msra.mxu0 %v8401
        %10937 = vmatpush.bf16.msra.mxu0 %v8385
        %10938 = vmatpush.bf16.msra.mxu0 %v8369
        %10939 = vmatpush.bf16.msra.mxu0 %v8353
        %10940 = vmatpush.bf16.msra.mxu0 %v8337
        %10941 = vmatpush.bf16.msra.mxu0 %v8321
        %10942 = vmatpush.bf16.msra.mxu0 %v8305
        %10943 = vmatmul.bf16.gmra.mxu0 %v3775
        %v10944 = vpop.f32.mrf.mxu0
        %v10945 = vadd.f32 %v10932, %v10944
        %v10946 = vpop.f32.mrf.mxu0
        %10947 = vdwg.mxu0
        %10948 = vmatpush.bf16.msra.mxu0 %v8545
        %10949 = vmatpush.bf16.msra.mxu0 %v8529
        %10950 = vmatpush.bf16.msra.mxu0 %v8513
        %10951 = vmatpush.bf16.msra.mxu0 %v8497
        %10952 = vmatpush.bf16.msra.mxu0 %v8481
        %10953 = vmatpush.bf16.msra.mxu0 %v8465
        %10954 = vmatpush.bf16.msra.mxu0 %v8449
        %10955 = vmatpush.bf16.msra.mxu0 %v8433
        %10956 = vmatmul.bf16.gmra.mxu0 %v3776
        %v10957 = vpop.f32.mrf.mxu0
        %v10958 = vadd.f32 %v10945, %v10957
        %v10959 = vpop.f32.mrf.mxu0
        %10960 = vdwg.mxu0
        %10961 = vmatpush.bf16.msra.mxu0 %v8673
        %10962 = vmatpush.bf16.msra.mxu0 %v8657
        %10963 = vmatpush.bf16.msra.mxu0 %v8641
        %10964 = vmatpush.bf16.msra.mxu0 %v8625
        %10965 = vmatpush.bf16.msra.mxu0 %v8609
        %10966 = vmatpush.bf16.msra.mxu0 %v8593
        %10967 = vmatpush.bf16.msra.mxu0 %v8577
        %10968 = vmatpush.bf16.msra.mxu0 %v8561
        %10969 = vmatmul.bf16.gmra.mxu0 %v3777
        %v10970 = vpop.f32.mrf.mxu0
        %v10971 = vadd.f32 %v10958, %v10970
        %v10972 = vpop.f32.mrf.mxu0
        %10973 = vdwg.mxu0
        %10974 = vmatpush.bf16.msra.mxu0 %v8801
        %10975 = vmatpush.bf16.msra.mxu0 %v8785
        %10976 = vmatpush.bf16.msra.mxu0 %v8769
        %10977 = vmatpush.bf16.msra.mxu0 %v8753
        %10978 = vmatpush.bf16.msra.mxu0 %v8737
        %10979 = vmatpush.bf16.msra.mxu0 %v8721
        %10980 = vmatpush.bf16.msra.mxu0 %v8705
        %10981 = vmatpush.bf16.msra.mxu0 %v8689
        %10982 = vmatmul.bf16.gmra.mxu0 %v3778
        %v10983 = vpop.f32.mrf.mxu0
        %v10984 = vadd.f32 %v10971, %v10983
        %v10985 = vpop.f32.mrf.mxu0
        %10986 = vdwg.mxu0
        %10987 = vmatpush.bf16.msra.mxu0 %v8929
        %10988 = vmatpush.bf16.msra.mxu0 %v8913
        %10989 = vmatpush.bf16.msra.mxu0 %v8897
        %10990 = vmatpush.bf16.msra.mxu0 %v8881
        %10991 = vmatpush.bf16.msra.mxu0 %v8865
        %10992 = vmatpush.bf16.msra.mxu0 %v8849
        %10993 = vmatpush.bf16.msra.mxu0 %v8833
        %10994 = vmatpush.bf16.msra.mxu0 %v8817
        %10995 = vmatmul.bf16.gmra.mxu0 %v3779
        %v10996 = vpop.f32.mrf.mxu0
        %v10997 = vadd.f32 %v10984, %v10996
        %v10998 = vpop.f32.mrf.mxu0
        %10999 = vdwg.mxu0
        %11000 = vmatpush.bf16.msra.mxu0 %v8034
        %11001 = vmatpush.bf16.msra.mxu0 %v8018
        %11002 = vmatpush.bf16.msra.mxu0 %v8002
        %11003 = vmatpush.bf16.msra.mxu0 %v7986
        %11004 = vmatpush.bf16.msra.mxu0 %v7970
        %11005 = vmatpush.bf16.msra.mxu0 %v7954
        %11006 = vmatpush.bf16.msra.mxu0 %v7938
        %11007 = vmatpush.bf16.msra.mxu0 %v7922
        %11008 = vmatmul.bf16.gmra.mxu0 %v3772
        %v11009 = vpop.f32.mrf.mxu0
        %v11010 = vadd.f32 %v4818, %v11009
        %v11011 = vpop.f32.mrf.mxu0
        %11012 = vdwg.mxu0
        %11013 = vmatpush.bf16.msra.mxu0 %v8162
        %11014 = vmatpush.bf16.msra.mxu0 %v8146
        %11015 = vmatpush.bf16.msra.mxu0 %v8130
        %11016 = vmatpush.bf16.msra.mxu0 %v8114
        %11017 = vmatpush.bf16.msra.mxu0 %v8098
        %11018 = vmatpush.bf16.msra.mxu0 %v8082
        %11019 = vmatpush.bf16.msra.mxu0 %v8066
        %11020 = vmatpush.bf16.msra.mxu0 %v8050
        %11021 = vmatmul.bf16.gmra.mxu0 %v3773
        %v11022 = vpop.f32.mrf.mxu0
        %v11023 = vadd.f32 %v11010, %v11022
        %v11024 = vpop.f32.mrf.mxu0
        %11025 = vdwg.mxu0
        %11026 = vmatpush.bf16.msra.mxu0 %v8290
        %11027 = vmatpush.bf16.msra.mxu0 %v8274
        %11028 = vmatpush.bf16.msra.mxu0 %v8258
        %11029 = vmatpush.bf16.msra.mxu0 %v8242
        %11030 = vmatpush.bf16.msra.mxu0 %v8226
        %11031 = vmatpush.bf16.msra.mxu0 %v8210
        %11032 = vmatpush.bf16.msra.mxu0 %v8194
        %11033 = vmatpush.bf16.msra.mxu0 %v8178
        %11034 = vmatmul.bf16.gmra.mxu0 %v3774
        %v11035 = vpop.f32.mrf.mxu0
        %v11036 = vadd.f32 %v11023, %v11035
        %v11037 = vpop.f32.mrf.mxu0
        %11038 = vdwg.mxu0
        %11039 = vmatpush.bf16.msra.mxu0 %v8418
        %11040 = vmatpush.bf16.msra.mxu0 %v8402
        %11041 = vmatpush.bf16.msra.mxu0 %v8386
        %11042 = vmatpush.bf16.msra.mxu0 %v8370
        %11043 = vmatpush.bf16.msra.mxu0 %v8354
        %11044 = vmatpush.bf16.msra.mxu0 %v8338
        %11045 = vmatpush.bf16.msra.mxu0 %v8322
        %11046 = vmatpush.bf16.msra.mxu0 %v8306
        %11047 = vmatmul.bf16.gmra.mxu0 %v3775
        %v11048 = vpop.f32.mrf.mxu0
        %v11049 = vadd.f32 %v11036, %v11048
        %v11050 = vpop.f32.mrf.mxu0
        %11051 = vdwg.mxu0
        %11052 = vmatpush.bf16.msra.mxu0 %v8546
        %11053 = vmatpush.bf16.msra.mxu0 %v8530
        %11054 = vmatpush.bf16.msra.mxu0 %v8514
        %11055 = vmatpush.bf16.msra.mxu0 %v8498
        %11056 = vmatpush.bf16.msra.mxu0 %v8482
        %11057 = vmatpush.bf16.msra.mxu0 %v8466
        %11058 = vmatpush.bf16.msra.mxu0 %v8450
        %11059 = vmatpush.bf16.msra.mxu0 %v8434
        %11060 = vmatmul.bf16.gmra.mxu0 %v3776
        %v11061 = vpop.f32.mrf.mxu0
        %v11062 = vadd.f32 %v11049, %v11061
        %v11063 = vpop.f32.mrf.mxu0
        %11064 = vdwg.mxu0
        %11065 = vmatpush.bf16.msra.mxu0 %v8674
        %11066 = vmatpush.bf16.msra.mxu0 %v8658
        %11067 = vmatpush.bf16.msra.mxu0 %v8642
        %11068 = vmatpush.bf16.msra.mxu0 %v8626
        %11069 = vmatpush.bf16.msra.mxu0 %v8610
        %11070 = vmatpush.bf16.msra.mxu0 %v8594
        %11071 = vmatpush.bf16.msra.mxu0 %v8578
        %11072 = vmatpush.bf16.msra.mxu0 %v8562
        %11073 = vmatmul.bf16.gmra.mxu0 %v3777
        %v11074 = vpop.f32.mrf.mxu0
        %v11075 = vadd.f32 %v11062, %v11074
        %v11076 = vpop.f32.mrf.mxu0
        %11077 = vdwg.mxu0
        %11078 = vmatpush.bf16.msra.mxu0 %v8802
        %11079 = vmatpush.bf16.msra.mxu0 %v8786
        %11080 = vmatpush.bf16.msra.mxu0 %v8770
        %11081 = vmatpush.bf16.msra.mxu0 %v8754
        %11082 = vmatpush.bf16.msra.mxu0 %v8738
        %11083 = vmatpush.bf16.msra.mxu0 %v8722
        %11084 = vmatpush.bf16.msra.mxu0 %v8706
        %11085 = vmatpush.bf16.msra.mxu0 %v8690
        %11086 = vmatmul.bf16.gmra.mxu0 %v3778
        %v11087 = vpop.f32.mrf.mxu0
        %v11088 = vadd.f32 %v11075, %v11087
        %v11089 = vpop.f32.mrf.mxu0
        %11090 = vdwg.mxu0
        %11091 = vmatpush.bf16.msra.mxu0 %v8930
        %11092 = vmatpush.bf16.msra.mxu0 %v8914
        %11093 = vmatpush.bf16.msra.mxu0 %v8898
        %11094 = vmatpush.bf16.msra.mxu0 %v8882
        %11095 = vmatpush.bf16.msra.mxu0 %v8866
        %11096 = vmatpush.bf16.msra.mxu0 %v8850
        %11097 = vmatpush.bf16.msra.mxu0 %v8834
        %11098 = vmatpush.bf16.msra.mxu0 %v8818
        %11099 = vmatmul.bf16.gmra.mxu0 %v3779
        %v11100 = vpop.f32.mrf.mxu0
        %v11101 = vadd.f32 %v11088, %v11100
        %v11102 = vpop.f32.mrf.mxu0
        %11103 = vdwg.mxu0
        %11104 = vmatpush.bf16.msra.mxu0 %v8035
        %11105 = vmatpush.bf16.msra.mxu0 %v8019
        %11106 = vmatpush.bf16.msra.mxu0 %v8003
        %11107 = vmatpush.bf16.msra.mxu0 %v7987
        %11108 = vmatpush.bf16.msra.mxu0 %v7971
        %11109 = vmatpush.bf16.msra.mxu0 %v7955
        %11110 = vmatpush.bf16.msra.mxu0 %v7939
        %11111 = vmatpush.bf16.msra.mxu0 %v7923
        %11112 = vmatmul.bf16.gmra.mxu0 %v3772
        %v11113 = vpop.f32.mrf.mxu0
        %v11114 = vadd.f32 %v4819, %v11113
        %v11115 = vpop.f32.mrf.mxu0
        %11116 = vdwg.mxu0
        %11117 = vmatpush.bf16.msra.mxu0 %v8163
        %11118 = vmatpush.bf16.msra.mxu0 %v8147
        %11119 = vmatpush.bf16.msra.mxu0 %v8131
        %11120 = vmatpush.bf16.msra.mxu0 %v8115
        %11121 = vmatpush.bf16.msra.mxu0 %v8099
        %11122 = vmatpush.bf16.msra.mxu0 %v8083
        %11123 = vmatpush.bf16.msra.mxu0 %v8067
        %11124 = vmatpush.bf16.msra.mxu0 %v8051
        %11125 = vmatmul.bf16.gmra.mxu0 %v3773
        %v11126 = vpop.f32.mrf.mxu0
        %v11127 = vadd.f32 %v11114, %v11126
        %v11128 = vpop.f32.mrf.mxu0
        %11129 = vdwg.mxu0
        %11130 = vmatpush.bf16.msra.mxu0 %v8291
        %11131 = vmatpush.bf16.msra.mxu0 %v8275
        %11132 = vmatpush.bf16.msra.mxu0 %v8259
        %11133 = vmatpush.bf16.msra.mxu0 %v8243
        %11134 = vmatpush.bf16.msra.mxu0 %v8227
        %11135 = vmatpush.bf16.msra.mxu0 %v8211
        %11136 = vmatpush.bf16.msra.mxu0 %v8195
        %11137 = vmatpush.bf16.msra.mxu0 %v8179
        %11138 = vmatmul.bf16.gmra.mxu0 %v3774
        %v11139 = vpop.f32.mrf.mxu0
        %v11140 = vadd.f32 %v11127, %v11139
        %v11141 = vpop.f32.mrf.mxu0
        %11142 = vdwg.mxu0
        %11143 = vmatpush.bf16.msra.mxu0 %v8419
        %11144 = vmatpush.bf16.msra.mxu0 %v8403
        %11145 = vmatpush.bf16.msra.mxu0 %v8387
        %11146 = vmatpush.bf16.msra.mxu0 %v8371
        %11147 = vmatpush.bf16.msra.mxu0 %v8355
        %11148 = vmatpush.bf16.msra.mxu0 %v8339
        %11149 = vmatpush.bf16.msra.mxu0 %v8323
        %11150 = vmatpush.bf16.msra.mxu0 %v8307
        %11151 = vmatmul.bf16.gmra.mxu0 %v3775
        %v11152 = vpop.f32.mrf.mxu0
        %v11153 = vadd.f32 %v11140, %v11152
        %v11154 = vpop.f32.mrf.mxu0
        %11155 = vdwg.mxu0
        %11156 = vmatpush.bf16.msra.mxu0 %v8547
        %11157 = vmatpush.bf16.msra.mxu0 %v8531
        %11158 = vmatpush.bf16.msra.mxu0 %v8515
        %11159 = vmatpush.bf16.msra.mxu0 %v8499
        %11160 = vmatpush.bf16.msra.mxu0 %v8483
        %11161 = vmatpush.bf16.msra.mxu0 %v8467
        %11162 = vmatpush.bf16.msra.mxu0 %v8451
        %11163 = vmatpush.bf16.msra.mxu0 %v8435
        %11164 = vmatmul.bf16.gmra.mxu0 %v3776
        %v11165 = vpop.f32.mrf.mxu0
        %v11166 = vadd.f32 %v11153, %v11165
        %v11167 = vpop.f32.mrf.mxu0
        %11168 = vdwg.mxu0
        %11169 = vmatpush.bf16.msra.mxu0 %v8675
        %11170 = vmatpush.bf16.msra.mxu0 %v8659
        %11171 = vmatpush.bf16.msra.mxu0 %v8643
        %11172 = vmatpush.bf16.msra.mxu0 %v8627
        %11173 = vmatpush.bf16.msra.mxu0 %v8611
        %11174 = vmatpush.bf16.msra.mxu0 %v8595
        %11175 = vmatpush.bf16.msra.mxu0 %v8579
        %11176 = vmatpush.bf16.msra.mxu0 %v8563
        %11177 = vmatmul.bf16.gmra.mxu0 %v3777
        %v11178 = vpop.f32.mrf.mxu0
        %v11179 = vadd.f32 %v11166, %v11178
        %v11180 = vpop.f32.mrf.mxu0
        %11181 = vdwg.mxu0
        %11182 = vmatpush.bf16.msra.mxu0 %v8803
        %11183 = vmatpush.bf16.msra.mxu0 %v8787
        %11184 = vmatpush.bf16.msra.mxu0 %v8771
        %11185 = vmatpush.bf16.msra.mxu0 %v8755
        %11186 = vmatpush.bf16.msra.mxu0 %v8739
        %11187 = vmatpush.bf16.msra.mxu0 %v8723
        %11188 = vmatpush.bf16.msra.mxu0 %v8707
        %11189 = vmatpush.bf16.msra.mxu0 %v8691
        %11190 = vmatmul.bf16.gmra.mxu0 %v3778
        %v11191 = vpop.f32.mrf.mxu0
        %v11192 = vadd.f32 %v11179, %v11191
        %v11193 = vpop.f32.mrf.mxu0
        %11194 = vdwg.mxu0
        %11195 = vmatpush.bf16.msra.mxu0 %v8931
        %11196 = vmatpush.bf16.msra.mxu0 %v8915
        %11197 = vmatpush.bf16.msra.mxu0 %v8899
        %11198 = vmatpush.bf16.msra.mxu0 %v8883
        %11199 = vmatpush.bf16.msra.mxu0 %v8867
        %11200 = vmatpush.bf16.msra.mxu0 %v8851
        %11201 = vmatpush.bf16.msra.mxu0 %v8835
        %11202 = vmatpush.bf16.msra.mxu0 %v8819
        %11203 = vmatmul.bf16.gmra.mxu0 %v3779
        %v11204 = vpop.f32.mrf.mxu0
        %v11205 = vadd.f32 %v11192, %v11204
        %v11206 = vpop.f32.mrf.mxu0
        %11207 = vdwg.mxu0
        %11208 = vmatpush.bf16.msra.mxu0 %v8036
        %11209 = vmatpush.bf16.msra.mxu0 %v8020
        %11210 = vmatpush.bf16.msra.mxu0 %v8004
        %11211 = vmatpush.bf16.msra.mxu0 %v7988
        %11212 = vmatpush.bf16.msra.mxu0 %v7972
        %11213 = vmatpush.bf16.msra.mxu0 %v7956
        %11214 = vmatpush.bf16.msra.mxu0 %v7940
        %11215 = vmatpush.bf16.msra.mxu0 %v7924
        %11216 = vmatmul.bf16.gmra.mxu0 %v3772
        %v11217 = vpop.f32.mrf.mxu0
        %v11218 = vadd.f32 %v4820, %v11217
        %v11219 = vpop.f32.mrf.mxu0
        %11220 = vdwg.mxu0
        %11221 = vmatpush.bf16.msra.mxu0 %v8164
        %11222 = vmatpush.bf16.msra.mxu0 %v8148
        %11223 = vmatpush.bf16.msra.mxu0 %v8132
        %11224 = vmatpush.bf16.msra.mxu0 %v8116
        %11225 = vmatpush.bf16.msra.mxu0 %v8100
        %11226 = vmatpush.bf16.msra.mxu0 %v8084
        %11227 = vmatpush.bf16.msra.mxu0 %v8068
        %11228 = vmatpush.bf16.msra.mxu0 %v8052
        %11229 = vmatmul.bf16.gmra.mxu0 %v3773
        %v11230 = vpop.f32.mrf.mxu0
        %v11231 = vadd.f32 %v11218, %v11230
        %v11232 = vpop.f32.mrf.mxu0
        %11233 = vdwg.mxu0
        %11234 = vmatpush.bf16.msra.mxu0 %v8292
        %11235 = vmatpush.bf16.msra.mxu0 %v8276
        %11236 = vmatpush.bf16.msra.mxu0 %v8260
        %11237 = vmatpush.bf16.msra.mxu0 %v8244
        %11238 = vmatpush.bf16.msra.mxu0 %v8228
        %11239 = vmatpush.bf16.msra.mxu0 %v8212
        %11240 = vmatpush.bf16.msra.mxu0 %v8196
        %11241 = vmatpush.bf16.msra.mxu0 %v8180
        %11242 = vmatmul.bf16.gmra.mxu0 %v3774
        %v11243 = vpop.f32.mrf.mxu0
        %v11244 = vadd.f32 %v11231, %v11243
        %v11245 = vpop.f32.mrf.mxu0
        %11246 = vdwg.mxu0
        %11247 = vmatpush.bf16.msra.mxu0 %v8420
        %11248 = vmatpush.bf16.msra.mxu0 %v8404
        %11249 = vmatpush.bf16.msra.mxu0 %v8388
        %11250 = vmatpush.bf16.msra.mxu0 %v8372
        %11251 = vmatpush.bf16.msra.mxu0 %v8356
        %11252 = vmatpush.bf16.msra.mxu0 %v8340
        %11253 = vmatpush.bf16.msra.mxu0 %v8324
        %11254 = vmatpush.bf16.msra.mxu0 %v8308
        %11255 = vmatmul.bf16.gmra.mxu0 %v3775
        %v11256 = vpop.f32.mrf.mxu0
        %v11257 = vadd.f32 %v11244, %v11256
        %v11258 = vpop.f32.mrf.mxu0
        %11259 = vdwg.mxu0
        %11260 = vmatpush.bf16.msra.mxu0 %v8548
        %11261 = vmatpush.bf16.msra.mxu0 %v8532
        %11262 = vmatpush.bf16.msra.mxu0 %v8516
        %11263 = vmatpush.bf16.msra.mxu0 %v8500
        %11264 = vmatpush.bf16.msra.mxu0 %v8484
        %11265 = vmatpush.bf16.msra.mxu0 %v8468
        %11266 = vmatpush.bf16.msra.mxu0 %v8452
        %11267 = vmatpush.bf16.msra.mxu0 %v8436
        %11268 = vmatmul.bf16.gmra.mxu0 %v3776
        %v11269 = vpop.f32.mrf.mxu0
        %v11270 = vadd.f32 %v11257, %v11269
        %v11271 = vpop.f32.mrf.mxu0
        %11272 = vdwg.mxu0
        %11273 = vmatpush.bf16.msra.mxu0 %v8676
        %11274 = vmatpush.bf16.msra.mxu0 %v8660
        %11275 = vmatpush.bf16.msra.mxu0 %v8644
        %11276 = vmatpush.bf16.msra.mxu0 %v8628
        %11277 = vmatpush.bf16.msra.mxu0 %v8612
        %11278 = vmatpush.bf16.msra.mxu0 %v8596
        %11279 = vmatpush.bf16.msra.mxu0 %v8580
        %11280 = vmatpush.bf16.msra.mxu0 %v8564
        %11281 = vmatmul.bf16.gmra.mxu0 %v3777
        %v11282 = vpop.f32.mrf.mxu0
        %v11283 = vadd.f32 %v11270, %v11282
        %v11284 = vpop.f32.mrf.mxu0
        %11285 = vdwg.mxu0
        %11286 = vmatpush.bf16.msra.mxu0 %v8804
        %11287 = vmatpush.bf16.msra.mxu0 %v8788
        %11288 = vmatpush.bf16.msra.mxu0 %v8772
        %11289 = vmatpush.bf16.msra.mxu0 %v8756
        %11290 = vmatpush.bf16.msra.mxu0 %v8740
        %11291 = vmatpush.bf16.msra.mxu0 %v8724
        %11292 = vmatpush.bf16.msra.mxu0 %v8708
        %11293 = vmatpush.bf16.msra.mxu0 %v8692
        %11294 = vmatmul.bf16.gmra.mxu0 %v3778
        %v11295 = vpop.f32.mrf.mxu0
        %v11296 = vadd.f32 %v11283, %v11295
        %v11297 = vpop.f32.mrf.mxu0
        %11298 = vdwg.mxu0
        %11299 = vmatpush.bf16.msra.mxu0 %v8932
        %11300 = vmatpush.bf16.msra.mxu0 %v8916
        %11301 = vmatpush.bf16.msra.mxu0 %v8900
        %11302 = vmatpush.bf16.msra.mxu0 %v8884
        %11303 = vmatpush.bf16.msra.mxu0 %v8868
        %11304 = vmatpush.bf16.msra.mxu0 %v8852
        %11305 = vmatpush.bf16.msra.mxu0 %v8836
        %11306 = vmatpush.bf16.msra.mxu0 %v8820
        %11307 = vmatmul.bf16.gmra.mxu0 %v3779
        %v11308 = vpop.f32.mrf.mxu0
        %v11309 = vadd.f32 %v11296, %v11308
        %v11310 = vpop.f32.mrf.mxu0
        %11311 = vdwg.mxu0
        %11312 = vmatpush.bf16.msra.mxu0 %v8037
        %11313 = vmatpush.bf16.msra.mxu0 %v8021
        %11314 = vmatpush.bf16.msra.mxu0 %v8005
        %11315 = vmatpush.bf16.msra.mxu0 %v7989
        %11316 = vmatpush.bf16.msra.mxu0 %v7973
        %11317 = vmatpush.bf16.msra.mxu0 %v7957
        %11318 = vmatpush.bf16.msra.mxu0 %v7941
        %11319 = vmatpush.bf16.msra.mxu0 %v7925
        %11320 = vmatmul.bf16.gmra.mxu0 %v3772
        %v11321 = vpop.f32.mrf.mxu0
        %v11322 = vadd.f32 %v4821, %v11321
        %v11323 = vpop.f32.mrf.mxu0
        %11324 = vdwg.mxu0
        %11325 = vmatpush.bf16.msra.mxu0 %v8165
        %11326 = vmatpush.bf16.msra.mxu0 %v8149
        %11327 = vmatpush.bf16.msra.mxu0 %v8133
        %11328 = vmatpush.bf16.msra.mxu0 %v8117
        %11329 = vmatpush.bf16.msra.mxu0 %v8101
        %11330 = vmatpush.bf16.msra.mxu0 %v8085
        %11331 = vmatpush.bf16.msra.mxu0 %v8069
        %11332 = vmatpush.bf16.msra.mxu0 %v8053
        %11333 = vmatmul.bf16.gmra.mxu0 %v3773
        %v11334 = vpop.f32.mrf.mxu0
        %v11335 = vadd.f32 %v11322, %v11334
        %v11336 = vpop.f32.mrf.mxu0
        %11337 = vdwg.mxu0
        %11338 = vmatpush.bf16.msra.mxu0 %v8293
        %11339 = vmatpush.bf16.msra.mxu0 %v8277
        %11340 = vmatpush.bf16.msra.mxu0 %v8261
        %11341 = vmatpush.bf16.msra.mxu0 %v8245
        %11342 = vmatpush.bf16.msra.mxu0 %v8229
        %11343 = vmatpush.bf16.msra.mxu0 %v8213
        %11344 = vmatpush.bf16.msra.mxu0 %v8197
        %11345 = vmatpush.bf16.msra.mxu0 %v8181
        %11346 = vmatmul.bf16.gmra.mxu0 %v3774
        %v11347 = vpop.f32.mrf.mxu0
        %v11348 = vadd.f32 %v11335, %v11347
        %v11349 = vpop.f32.mrf.mxu0
        %11350 = vdwg.mxu0
        %11351 = vmatpush.bf16.msra.mxu0 %v8421
        %11352 = vmatpush.bf16.msra.mxu0 %v8405
        %11353 = vmatpush.bf16.msra.mxu0 %v8389
        %11354 = vmatpush.bf16.msra.mxu0 %v8373
        %11355 = vmatpush.bf16.msra.mxu0 %v8357
        %11356 = vmatpush.bf16.msra.mxu0 %v8341
        %11357 = vmatpush.bf16.msra.mxu0 %v8325
        %11358 = vmatpush.bf16.msra.mxu0 %v8309
        %11359 = vmatmul.bf16.gmra.mxu0 %v3775
        %v11360 = vpop.f32.mrf.mxu0
        %v11361 = vadd.f32 %v11348, %v11360
        %v11362 = vpop.f32.mrf.mxu0
        %11363 = vdwg.mxu0
        %11364 = vmatpush.bf16.msra.mxu0 %v8549
        %11365 = vmatpush.bf16.msra.mxu0 %v8533
        %11366 = vmatpush.bf16.msra.mxu0 %v8517
        %11367 = vmatpush.bf16.msra.mxu0 %v8501
        %11368 = vmatpush.bf16.msra.mxu0 %v8485
        %11369 = vmatpush.bf16.msra.mxu0 %v8469
        %11370 = vmatpush.bf16.msra.mxu0 %v8453
        %11371 = vmatpush.bf16.msra.mxu0 %v8437
        %11372 = vmatmul.bf16.gmra.mxu0 %v3776
        %v11373 = vpop.f32.mrf.mxu0
        %v11374 = vadd.f32 %v11361, %v11373
        %v11375 = vpop.f32.mrf.mxu0
        %11376 = vdwg.mxu0
        %11377 = vmatpush.bf16.msra.mxu0 %v8677
        %11378 = vmatpush.bf16.msra.mxu0 %v8661
        %11379 = vmatpush.bf16.msra.mxu0 %v8645
        %11380 = vmatpush.bf16.msra.mxu0 %v8629
        %11381 = vmatpush.bf16.msra.mxu0 %v8613
        %11382 = vmatpush.bf16.msra.mxu0 %v8597
        %11383 = vmatpush.bf16.msra.mxu0 %v8581
        %11384 = vmatpush.bf16.msra.mxu0 %v8565
        %11385 = vmatmul.bf16.gmra.mxu0 %v3777
        %v11386 = vpop.f32.mrf.mxu0
        %v11387 = vadd.f32 %v11374, %v11386
        %v11388 = vpop.f32.mrf.mxu0
        %11389 = vdwg.mxu0
        %11390 = vmatpush.bf16.msra.mxu0 %v8805
        %11391 = vmatpush.bf16.msra.mxu0 %v8789
        %11392 = vmatpush.bf16.msra.mxu0 %v8773
        %11393 = vmatpush.bf16.msra.mxu0 %v8757
        %11394 = vmatpush.bf16.msra.mxu0 %v8741
        %11395 = vmatpush.bf16.msra.mxu0 %v8725
        %11396 = vmatpush.bf16.msra.mxu0 %v8709
        %11397 = vmatpush.bf16.msra.mxu0 %v8693
        %11398 = vmatmul.bf16.gmra.mxu0 %v3778
        %v11399 = vpop.f32.mrf.mxu0
        %v11400 = vadd.f32 %v11387, %v11399
        %v11401 = vpop.f32.mrf.mxu0
        %11402 = vdwg.mxu0
        %11403 = vmatpush.bf16.msra.mxu0 %v8933
        %11404 = vmatpush.bf16.msra.mxu0 %v8917
        %11405 = vmatpush.bf16.msra.mxu0 %v8901
        %11406 = vmatpush.bf16.msra.mxu0 %v8885
        %11407 = vmatpush.bf16.msra.mxu0 %v8869
        %11408 = vmatpush.bf16.msra.mxu0 %v8853
        %11409 = vmatpush.bf16.msra.mxu0 %v8837
        %11410 = vmatpush.bf16.msra.mxu0 %v8821
        %11411 = vmatmul.bf16.gmra.mxu0 %v3779
        %v11412 = vpop.f32.mrf.mxu0
        %v11413 = vadd.f32 %v11400, %v11412
        %v11414 = vpop.f32.mrf.mxu0
        %11415 = vdwg.mxu0
        %11416 = vmatpush.bf16.msra.mxu0 %v8038
        %11417 = vmatpush.bf16.msra.mxu0 %v8022
        %11418 = vmatpush.bf16.msra.mxu0 %v8006
        %11419 = vmatpush.bf16.msra.mxu0 %v7990
        %11420 = vmatpush.bf16.msra.mxu0 %v7974
        %11421 = vmatpush.bf16.msra.mxu0 %v7958
        %11422 = vmatpush.bf16.msra.mxu0 %v7942
        %11423 = vmatpush.bf16.msra.mxu0 %v7926
        %11424 = vmatmul.bf16.gmra.mxu0 %v3772
        %v11425 = vpop.f32.mrf.mxu0
        %v11426 = vadd.f32 %v4822, %v11425
        %v11427 = vpop.f32.mrf.mxu0
        %11428 = vdwg.mxu0
        %11429 = vmatpush.bf16.msra.mxu0 %v8166
        %11430 = vmatpush.bf16.msra.mxu0 %v8150
        %11431 = vmatpush.bf16.msra.mxu0 %v8134
        %11432 = vmatpush.bf16.msra.mxu0 %v8118
        %11433 = vmatpush.bf16.msra.mxu0 %v8102
        %11434 = vmatpush.bf16.msra.mxu0 %v8086
        %11435 = vmatpush.bf16.msra.mxu0 %v8070
        %11436 = vmatpush.bf16.msra.mxu0 %v8054
        %11437 = vmatmul.bf16.gmra.mxu0 %v3773
        %v11438 = vpop.f32.mrf.mxu0
        %v11439 = vadd.f32 %v11426, %v11438
        %v11440 = vpop.f32.mrf.mxu0
        %11441 = vdwg.mxu0
        %11442 = vmatpush.bf16.msra.mxu0 %v8294
        %11443 = vmatpush.bf16.msra.mxu0 %v8278
        %11444 = vmatpush.bf16.msra.mxu0 %v8262
        %11445 = vmatpush.bf16.msra.mxu0 %v8246
        %11446 = vmatpush.bf16.msra.mxu0 %v8230
        %11447 = vmatpush.bf16.msra.mxu0 %v8214
        %11448 = vmatpush.bf16.msra.mxu0 %v8198
        %11449 = vmatpush.bf16.msra.mxu0 %v8182
        %11450 = vmatmul.bf16.gmra.mxu0 %v3774
        %v11451 = vpop.f32.mrf.mxu0
        %v11452 = vadd.f32 %v11439, %v11451
        %v11453 = vpop.f32.mrf.mxu0
        %11454 = vdwg.mxu0
        %11455 = vmatpush.bf16.msra.mxu0 %v8422
        %11456 = vmatpush.bf16.msra.mxu0 %v8406
        %11457 = vmatpush.bf16.msra.mxu0 %v8390
        %11458 = vmatpush.bf16.msra.mxu0 %v8374
        %11459 = vmatpush.bf16.msra.mxu0 %v8358
        %11460 = vmatpush.bf16.msra.mxu0 %v8342
        %11461 = vmatpush.bf16.msra.mxu0 %v8326
        %11462 = vmatpush.bf16.msra.mxu0 %v8310
        %11463 = vmatmul.bf16.gmra.mxu0 %v3775
        %v11464 = vpop.f32.mrf.mxu0
        %v11465 = vadd.f32 %v11452, %v11464
        %v11466 = vpop.f32.mrf.mxu0
        %11467 = vdwg.mxu0
        %11468 = vmatpush.bf16.msra.mxu0 %v8550
        %11469 = vmatpush.bf16.msra.mxu0 %v8534
        %11470 = vmatpush.bf16.msra.mxu0 %v8518
        %11471 = vmatpush.bf16.msra.mxu0 %v8502
        %11472 = vmatpush.bf16.msra.mxu0 %v8486
        %11473 = vmatpush.bf16.msra.mxu0 %v8470
        %11474 = vmatpush.bf16.msra.mxu0 %v8454
        %11475 = vmatpush.bf16.msra.mxu0 %v8438
        %11476 = vmatmul.bf16.gmra.mxu0 %v3776
        %v11477 = vpop.f32.mrf.mxu0
        %v11478 = vadd.f32 %v11465, %v11477
        %v11479 = vpop.f32.mrf.mxu0
        %11480 = vdwg.mxu0
        %11481 = vmatpush.bf16.msra.mxu0 %v8678
        %11482 = vmatpush.bf16.msra.mxu0 %v8662
        %11483 = vmatpush.bf16.msra.mxu0 %v8646
        %11484 = vmatpush.bf16.msra.mxu0 %v8630
        %11485 = vmatpush.bf16.msra.mxu0 %v8614
        %11486 = vmatpush.bf16.msra.mxu0 %v8598
        %11487 = vmatpush.bf16.msra.mxu0 %v8582
        %11488 = vmatpush.bf16.msra.mxu0 %v8566
        %11489 = vmatmul.bf16.gmra.mxu0 %v3777
        %v11490 = vpop.f32.mrf.mxu0
        %v11491 = vadd.f32 %v11478, %v11490
        %v11492 = vpop.f32.mrf.mxu0
        %11493 = vdwg.mxu0
        %11494 = vmatpush.bf16.msra.mxu0 %v8806
        %11495 = vmatpush.bf16.msra.mxu0 %v8790
        %11496 = vmatpush.bf16.msra.mxu0 %v8774
        %11497 = vmatpush.bf16.msra.mxu0 %v8758
        %11498 = vmatpush.bf16.msra.mxu0 %v8742
        %11499 = vmatpush.bf16.msra.mxu0 %v8726
        %11500 = vmatpush.bf16.msra.mxu0 %v8710
        %11501 = vmatpush.bf16.msra.mxu0 %v8694
        %11502 = vmatmul.bf16.gmra.mxu0 %v3778
        %v11503 = vpop.f32.mrf.mxu0
        %v11504 = vadd.f32 %v11491, %v11503
        %v11505 = vpop.f32.mrf.mxu0
        %11506 = vdwg.mxu0
        %11507 = vmatpush.bf16.msra.mxu0 %v8934
        %11508 = vmatpush.bf16.msra.mxu0 %v8918
        %11509 = vmatpush.bf16.msra.mxu0 %v8902
        %11510 = vmatpush.bf16.msra.mxu0 %v8886
        %11511 = vmatpush.bf16.msra.mxu0 %v8870
        %11512 = vmatpush.bf16.msra.mxu0 %v8854
        %11513 = vmatpush.bf16.msra.mxu0 %v8838
        %11514 = vmatpush.bf16.msra.mxu0 %v8822
        %11515 = vmatmul.bf16.gmra.mxu0 %v3779
        %v11516 = vpop.f32.mrf.mxu0
        %v11517 = vadd.f32 %v11504, %v11516
        %v11518 = vpop.f32.mrf.mxu0
        %11519 = vdwg.mxu0
        %11520 = vmatpush.bf16.msra.mxu0 %v8039
        %11521 = vmatpush.bf16.msra.mxu0 %v8023
        %11522 = vmatpush.bf16.msra.mxu0 %v8007
        %11523 = vmatpush.bf16.msra.mxu0 %v7991
        %11524 = vmatpush.bf16.msra.mxu0 %v7975
        %11525 = vmatpush.bf16.msra.mxu0 %v7959
        %11526 = vmatpush.bf16.msra.mxu0 %v7943
        %11527 = vmatpush.bf16.msra.mxu0 %v7927
        %11528 = vmatmul.bf16.gmra.mxu0 %v3772
        %v11529 = vpop.f32.mrf.mxu0
        %v11530 = vadd.f32 %v4823, %v11529
        %v11531 = vpop.f32.mrf.mxu0
        %11532 = vdwg.mxu0
        %11533 = vmatpush.bf16.msra.mxu0 %v8167
        %11534 = vmatpush.bf16.msra.mxu0 %v8151
        %11535 = vmatpush.bf16.msra.mxu0 %v8135
        %11536 = vmatpush.bf16.msra.mxu0 %v8119
        %11537 = vmatpush.bf16.msra.mxu0 %v8103
        %11538 = vmatpush.bf16.msra.mxu0 %v8087
        %11539 = vmatpush.bf16.msra.mxu0 %v8071
        %11540 = vmatpush.bf16.msra.mxu0 %v8055
        %11541 = vmatmul.bf16.gmra.mxu0 %v3773
        %v11542 = vpop.f32.mrf.mxu0
        %v11543 = vadd.f32 %v11530, %v11542
        %v11544 = vpop.f32.mrf.mxu0
        %11545 = vdwg.mxu0
        %11546 = vmatpush.bf16.msra.mxu0 %v8295
        %11547 = vmatpush.bf16.msra.mxu0 %v8279
        %11548 = vmatpush.bf16.msra.mxu0 %v8263
        %11549 = vmatpush.bf16.msra.mxu0 %v8247
        %11550 = vmatpush.bf16.msra.mxu0 %v8231
        %11551 = vmatpush.bf16.msra.mxu0 %v8215
        %11552 = vmatpush.bf16.msra.mxu0 %v8199
        %11553 = vmatpush.bf16.msra.mxu0 %v8183
        %11554 = vmatmul.bf16.gmra.mxu0 %v3774
        %v11555 = vpop.f32.mrf.mxu0
        %v11556 = vadd.f32 %v11543, %v11555
        %v11557 = vpop.f32.mrf.mxu0
        %11558 = vdwg.mxu0
        %11559 = vmatpush.bf16.msra.mxu0 %v8423
        %11560 = vmatpush.bf16.msra.mxu0 %v8407
        %11561 = vmatpush.bf16.msra.mxu0 %v8391
        %11562 = vmatpush.bf16.msra.mxu0 %v8375
        %11563 = vmatpush.bf16.msra.mxu0 %v8359
        %11564 = vmatpush.bf16.msra.mxu0 %v8343
        %11565 = vmatpush.bf16.msra.mxu0 %v8327
        %11566 = vmatpush.bf16.msra.mxu0 %v8311
        %11567 = vmatmul.bf16.gmra.mxu0 %v3775
        %v11568 = vpop.f32.mrf.mxu0
        %v11569 = vadd.f32 %v11556, %v11568
        %v11570 = vpop.f32.mrf.mxu0
        %11571 = vdwg.mxu0
        %11572 = vmatpush.bf16.msra.mxu0 %v8551
        %11573 = vmatpush.bf16.msra.mxu0 %v8535
        %11574 = vmatpush.bf16.msra.mxu0 %v8519
        %11575 = vmatpush.bf16.msra.mxu0 %v8503
        %11576 = vmatpush.bf16.msra.mxu0 %v8487
        %11577 = vmatpush.bf16.msra.mxu0 %v8471
        %11578 = vmatpush.bf16.msra.mxu0 %v8455
        %11579 = vmatpush.bf16.msra.mxu0 %v8439
        %11580 = vmatmul.bf16.gmra.mxu0 %v3776
        %v11581 = vpop.f32.mrf.mxu0
        %v11582 = vadd.f32 %v11569, %v11581
        %v11583 = vpop.f32.mrf.mxu0
        %11584 = vdwg.mxu0
        %11585 = vmatpush.bf16.msra.mxu0 %v8679
        %11586 = vmatpush.bf16.msra.mxu0 %v8663
        %11587 = vmatpush.bf16.msra.mxu0 %v8647
        %11588 = vmatpush.bf16.msra.mxu0 %v8631
        %11589 = vmatpush.bf16.msra.mxu0 %v8615
        %11590 = vmatpush.bf16.msra.mxu0 %v8599
        %11591 = vmatpush.bf16.msra.mxu0 %v8583
        %11592 = vmatpush.bf16.msra.mxu0 %v8567
        %11593 = vmatmul.bf16.gmra.mxu0 %v3777
        %v11594 = vpop.f32.mrf.mxu0
        %v11595 = vadd.f32 %v11582, %v11594
        %v11596 = vpop.f32.mrf.mxu0
        %11597 = vdwg.mxu0
        %11598 = vmatpush.bf16.msra.mxu0 %v8807
        %11599 = vmatpush.bf16.msra.mxu0 %v8791
        %11600 = vmatpush.bf16.msra.mxu0 %v8775
        %11601 = vmatpush.bf16.msra.mxu0 %v8759
        %11602 = vmatpush.bf16.msra.mxu0 %v8743
        %11603 = vmatpush.bf16.msra.mxu0 %v8727
        %11604 = vmatpush.bf16.msra.mxu0 %v8711
        %11605 = vmatpush.bf16.msra.mxu0 %v8695
        %11606 = vmatmul.bf16.gmra.mxu0 %v3778
        %v11607 = vpop.f32.mrf.mxu0
        %v11608 = vadd.f32 %v11595, %v11607
        %v11609 = vpop.f32.mrf.mxu0
        %11610 = vdwg.mxu0
        %11611 = vmatpush.bf16.msra.mxu0 %v8935
        %11612 = vmatpush.bf16.msra.mxu0 %v8919
        %11613 = vmatpush.bf16.msra.mxu0 %v8903
        %11614 = vmatpush.bf16.msra.mxu0 %v8887
        %11615 = vmatpush.bf16.msra.mxu0 %v8871
        %11616 = vmatpush.bf16.msra.mxu0 %v8855
        %11617 = vmatpush.bf16.msra.mxu0 %v8839
        %11618 = vmatpush.bf16.msra.mxu0 %v8823
        %11619 = vmatmul.bf16.gmra.mxu0 %v3779
        %v11620 = vpop.f32.mrf.mxu0
        %v11621 = vadd.f32 %v11608, %v11620
        %v11622 = vpop.f32.mrf.mxu0
        %11623 = vdwg.mxu0
        %11624 = vst [vmem:[%s496] sm:$0xff] %v10061
        %11625 = vst [vmem:[%s496 + $0x8] sm:$0xff] %v10165
        %11626 = vst [vmem:[%s496 + $0x10] sm:$0xff] %v10269
        %11627 = vst [vmem:[%s496 + $0x18] sm:$0xff] %v10373
        %11628 = vst [vmem:[%s496 + $0x20] sm:$0xff] %v10477
        %11629 = vst [vmem:[%s496 + $0x28] sm:$0xff] %v10581
        %11630 = vst [vmem:[%s496 + $0x30] sm:$0xff] %v10685
        %11631 = vst [vmem:[%s496 + $0x38] sm:$0xff] %v10789
        %11632 = vst [vmem:[%s496 + $0x40] sm:$0xff] %v10893
        %11633 = vst [vmem:[%s496 + $0x48] sm:$0xff] %v10997
        %11634 = vst [vmem:[%s496 + $0x50] sm:$0xff] %v11101
        %11635 = vst [vmem:[%s496 + $0x58] sm:$0xff] %v11205
        %11636 = vst [vmem:[%s496 + $0x60] sm:$0xff] %v11309
        %11637 = vst [vmem:[%s496 + $0x68] sm:$0xff] %v11413
        %11638 = vst [vmem:[%s496 + $0x70] sm:$0xff] %v11517
        %11639 = vst [vmem:[%s496 + $0x78] sm:$0xff] %v11621
        %s11640 = sand.u32 %s237, 1
        %s11641 = scalar_lea.sflag [#allocation4], %s11640
        %s11642 = sand.u32 %s237, 1
        %s11643 = smul.addr %s11642, 128
        %s11644 = scalar_lea.vmem [#allocation17], %s11643
        // Predicated region
        $region93: #{mlpzxy_pallas.1} parent=55 // pred_check
          %p11645 = pneg %p247
        $region94: #{mlpzxy_pallas.1} parent=55 // pred_check_branch
          %11647 = sbr.rel (%p11645) target = $region96
        $region95: #{mlpzxy_pallas.1} parent=55 // pred_region
          %s11648 = smul.u32 16, %s30
          %11650 = vsyncadd %s11641, 0
          %s11651 = smul.addr %s11648, 8
          %s11652 = scalar_lea.hbm %s9, %s11651
          %s11654 = sshll.u32 %s11644, 4
          %s11655 = int_to_ptr.vmem [resolvable:$true] %s11654
          %s11656 = sshll.u32 %s11652, 4
          %s11657 = int_to_ptr.hbm [resolvable:$true] %s11656
          %11659 = dma.vmem_to_hbm [thread:$0]  %s11655, 2048, %s11657, %s11641
        $region96: #{mlpzxy_pallas.1} parent=55 // pred_fallthru
          _
      $region56: #{mlpzxy_pallas.1} parent=5 // pred_fallthru
        _
      %p11660 = scmp.le.s32.totalorder 2, %s25
      // Predicated region
      $region97: #{mlpzxy_pallas.1} parent=5 // pred_check
        %p11661 = pneg %p11660
      $region98: #{mlpzxy_pallas.1} parent=5 // pred_check_branch
        %11663 = sbr.rel (%p11661) target = $region100
      $region99: #{mlpzxy_pallas.1} parent=5 // pred_region
        %s11664 = ssub.s32 %s25, 2
        // Predicated region
        $region101: #{mlpzxy_pallas.1} parent=99 // pred_check
          %p11665 = pneg %p253
        $region102: #{mlpzxy_pallas.1} parent=99 // pred_check_branch
          %11667 = sbr.rel (%p11665) target = $region104
        $region103: #{mlpzxy_pallas.1} parent=99 // pred_region
          %s11668 = sand.u32 %s238, 1
          %s11669 = scalar_lea.sflag [#allocation4], %s11668
          %s11670 = sand.u32 %s238, 1
          %s11671 = smul.addr %s11670, 128
          %s11672 = scalar_lea.vmem [#allocation17], %s11671
          %11674 = dma.done %s11669, 2048
        $region104: #{mlpzxy_pallas.1} parent=99 // pred_fallthru
          _
      $region100: #{mlpzxy_pallas.1} parent=5 // pred_fallthru
        _
    $region6: #{mlpzxy_pallas.1} parent=1 // loop_footer
      %s29 = sadd.s32 1, %s25
    $region7: #{mlpzxy_pallas.1} parent=1 // loop_footer_branch
      %24 = sbr.rel target = $region3
    $region8: #{mlpzxy_pallas.1} parent=1 // loop_exit
      _
    %11675 = vsyncpa [#allocation3], 1
    %s11676 = scalar_lea.sflag [#allocation3], 1
    %11677 = vsyncpa %s11676, 1
    %11678 = vsyncpa [#allocation6], 1
    %11679 = vsyncpa [#allocation9], 1
    %11680 = vsyncpa [#allocation12], 1
    %11681 = vsyncpa [#allocation15], 1
    %s11682 = scalar_lea.sflag [#allocation15], 1
    %11683 = vsyncpa %s11682, 1
    %11684 = vsyncpa [#allocation4], 1
    %s11685 = scalar_lea.sflag [#allocation4], 1
    %11686 = vsyncpa %s11685, 1

</llo_original>
